<compile_context>
chip_gen: v7x
topology: tpu7x:2x2x1
jax: 0.10.0
libtpu: 0.0.40
codegen_flags: <defaults>
</compile_context>

<pallas_src>
import jax
import jax.numpy as jnp
from jax import lax
from jax.experimental import pallas as pl
from jax.experimental.pallas import tpu as pltpu

LANE = 128


def _round_up(x, m):
    return ((x + m - 1) // m) * m


# ----------------------------------------------------------------------------
# Pallas kernel: Bt batch elements per grid step, everything resident in VMEM.
# ----------------------------------------------------------------------------
def _inception_kernel(
    x_ref,        # (Bt, H, W, Cin)                bf16
    wf_ref,       # (Cin, C2rp + C3rp + C1)        bf16  fused 1x1 (BN folded)
    bf_ref,       # (1,   C2rp + C3rp + C1)        f32
    w2b_ref,      # (9*C2rp, C2)                   bf16  branch2 3x3, im2col
    b2b_ref,      # (1, C2)                        f32
    w3b_ref,      # (9*C3rp, C3)                   bf16  branch3 3x3, im2col
    b3b_ref,      # (1, C3)                        f32
    w4_ref,       # (Cin, C4)                      bf16  branch4 1x1 after pool
    b4_ref,       # (1, C4)                        f32
    out_ref,      # (Bt, H, W, C1+C2+C3+C4)        bf16
):
    Bt, H, W, Cin = x_ref.shape
    M = Bt * H * W

    c2r_p = w2b_ref.shape[0] // 9
    c3r_p = w3b_ref.shape[0] // 9
    c1 = wf_ref.shape[1] - c2r_p - c3r_p
    c2 = w2b_ref.shape[1]
    c3 = w3b_ref.shape[1]
    c4 = w4_ref.shape[1]

    x = x_ref[...]                                  # (Bt, H, W, Cin) bf16
    x_flat = x.reshape(M, Cin)

    # ---- fused matmul for the three input-facing 1x1 convs (BN folded).
    # Column order: [branch2-reduce (padded to 128) | branch3-reduce (padded)
    # | branch1], so every downstream slice is 128-lane aligned.
    fused = jnp.dot(x_flat, wf_ref[...], preferred_element_type=jnp.float32)
    fused = jnp.maximum(fused + bf_ref[...], 0.0)

    r2 = fused[:, :c2r_p].astype(jnp.bfloat16).reshape(Bt, H, W, c2r_p)
    r3 = fused[:, c2r_p:c2r_p + c3r_p].astype(jnp.bfloat16).reshape(
        Bt, H, W, c3r_p)
    br1 = fused[:, c2r_p + c3r_p:]                  # (M, c1) f32

    def conv3x3_relu(inp, w_flat, b):
        # inp: (Bt, H, W, Cp) bf16 (Cp is a 128 multiple, padded rows of
        # w_flat are zero) -> single im2col matmul with K = 9*Cp.
        bt, h, w, c = inp.shape
        xp = jnp.pad(inp, ((0, 0), (1, 1), (1, 1), (0, 0)))
        cols = [xp[:, dy:dy + h, dx:dx + w, :]
                for dy in range(3) for dx in range(3)]
        patches = jnp.concatenate(cols, axis=-1).reshape(bt * h * w, 9 * c)
        y = jnp.dot(patches, w_flat, preferred_element_type=jnp.float32)
        return jnp.maximum(y + b, 0.0)

    br2 = conv3x3_relu(r2, w2b_ref[...], b2b_ref[...])   # (M, c2) f32
    br3 = conv3x3_relu(r3, w3b_ref[...], b3b_ref[...])   # (M, c3) f32

    # ---- branch4: maxpool 3x3 / stride 1 / pad 1 (ceil_mode is a no-op at
    # stride 1; PyTorch pads with -inf), done separably, then 1x1 conv.
    neg = jnp.finfo(x.dtype).min
    xp = jnp.pad(x, ((0, 0), (1, 1), (1, 1), (0, 0)), constant_values=neg)
    row = jnp.maximum(jnp.maximum(xp[:, :, 0:W, :], xp[:, :, 1:W + 1, :]),
                      xp[:, :, 2:W + 2, :])               # (Bt, H+2, W, Cin)
    pooled = jnp.maximum(jnp.maximum(row[:, 0:H], row[:, 1:H + 1]),
                         row[:, 2:H + 2])                 # (Bt, H, W, Cin)
    br4 = jnp.dot(pooled.reshape(M, Cin), w4_ref[...],
                  preferred_element_type=jnp.float32)
    br4 = jnp.maximum(br4 + b4_ref[...], 0.0)             # (M, c4) f32

    # ---- single full-block bf16 store of the concatenated result.
    out = jnp.concatenate([br1, br2, br3, br4], axis=-1).astype(out_ref.dtype)
    out_ref[...] = out.reshape(Bt, H, W, c1 + c2 + c3 + c4)


# ----------------------------------------------------------------------------
# Parameter construction (deterministic, in-script) with BN folded into the
# conv weights (scale) + a per-channel shift.
# ----------------------------------------------------------------------------
def _fold_bn(gamma, beta, mean, var, eps=1e-3):
    scale = gamma / jnp.sqrt(var + eps)
    shift = beta - mean * scale
    return scale, shift


def _make_basic_conv(key, cin, cout, ksize):
    kw, kg, kb, km, kv = jax.random.split(key, 5)
    # PyTorch conv weight layout (cout, cin, kh, kw).
    w = 0.1 * jax.random.normal(kw, (cout, cin, ksize, ksize), jnp.float32)
    gamma = 0.5 + jax.random.uniform(kg, (cout,), jnp.float32)
    beta = 0.1 * jax.random.normal(kb, (cout,), jnp.float32)
    mean = 0.1 * jax.random.normal(km, (cout,), jnp.float32)
    var = 0.5 + jax.random.uniform(kv, (cout,), jnp.float32)
    scale, shift = _fold_bn(gamma, beta, mean, var)
    if ksize == 1:
        wk = jnp.transpose(w[:, :, 0, 0], (1, 0)) * scale[None, :]        # (cin, cout)
    else:
        wk = jnp.transpose(w, (2, 3, 1, 0)) * scale[None, None, None, :]  # (kh,kw,cin,cout)
    return wk, shift


def make_inception_params(key, cin, ch1x1, ch3x3red, ch3x3,
                          ch5x5red, ch5x5, pool_proj):
    ks = jax.random.split(key, 6)
    w1, b1 = _make_basic_conv(ks[0], cin, ch1x1, 1)
    w2a, b2a = _make_basic_conv(ks[1], cin, ch3x3red, 1)
    w2b, b2b = _make_basic_conv(ks[2], ch3x3red, ch3x3, 3)
    w3a, b3a = _make_basic_conv(ks[3], cin, ch5x5red, 1)
    w3b, b3b = _make_basic_conv(ks[4], ch5x5red, ch5x5, 3)   # spec uses k=3 here too
    w4, b4 = _make_basic_conv(ks[5], cin, pool_proj, 1)
    return dict(w1=w1, b1=b1, w2a=w2a, b2a=b2a, w2b=w2b, b2b=b2b,
                w3a=w3a, b3a=b3a, w3b=w3b, b3b=b3b, w4=w4, b4=b4)


def _prep_kernel_params(p):
    """Fuse the three 1x1 convs, zero-pad reduce widths to 128-lane multiples,
    and im2col-flatten the 3x3 weights (padded rows are zero)."""
    c2r = p['b2a'].shape[0]
    c3r = p['b3a'].shape[0]
    c2r_p = _round_up(c2r, LANE)
    c3r_p = _round_up(c3r, LANE)

    def pad_cols(w, b, cp):
        c = w.shape[1]
        return (jnp.pad(w, ((0, 0), (0, cp - c))),
                jnp.pad(b, ((0, cp - c),)))

    w2a_p, b2a_p = pad_cols(p['w2a'], p['b2a'], c2r_p)
    w3a_p, b3a_p = pad_cols(p['w3a'], p['b3a'], c3r_p)

    # Column order: [branch2-reduce | branch3-reduce | branch1].
    wf = jnp.concatenate([w2a_p, w3a_p, p['w1']], axis=1).astype(jnp.bfloat16)
    bf = jnp.concatenate([b2a_p, b3a_p, p['b1']])[None, :].astype(jnp.float32)

    def flat3x3(w, cin_p):
        # (3,3,cin,cout) -> zero-pad cin -> (9*cin_p, cout), (dy,dx) major.
        kh, kw, ci, co = w.shape
        wp = jnp.pad(w, ((0, 0), (0, 0), (0, cin_p - ci), (0, 0)))
        return wp.reshape(kh * kw * cin_p, co).astype(jnp.bfloat16)

    return (wf, bf,
            flat3x3(p['w2b'], c2r_p), p['b2b'][None, :].astype(jnp.float32),
            flat3x3(p['w3b'], c3r_p), p['b3b'][None, :].astype(jnp.float32),
            p['w4'].astype(jnp.bfloat16), p['b4'][None, :].astype(jnp.float32))


def _pick_batch_tile(N, H, W, Cin, cf, c2r_p, c3r_p, ctot, weight_bytes,
                     budget=24 * 1024 * 1024):
    """Largest divisor of N whose per-step working set fits the VMEM budget
    (conservative estimate; keeps v7x's 64 MiB VMEM / 32 MiB scoped safe)."""
    P = H * W
    per = (P * Cin * 2 * 2 +                 # input block, double-buffered bf16
           P * ctot * 2 * 2 +                # output block, double-buffered bf16
           P * cf * 4 +                      # fused activation f32
           P * 9 * (c2r_p + c3r_p) * 2 +     # im2col patch buffers bf16
           P * (c2r_p + c3r_p) * 2 * 2 +     # padded r2/r3 windows bf16
           P * (Cin + ctot + max(LANE, ctot)) * 4)  # pool / branch temporaries
    for bt in range(N, 0, -1):
        if N % bt == 0 and bt * per + 2 * weight_bytes <= budget:
            return bt
    return 1


# ----------------------------------------------------------------------------
# Wrapper: NCHW in / NCHW out (bf16), grid over batch tiles, pipelined specs.
# ----------------------------------------------------------------------------
@jax.jit
def inception_forward(x_nchw, params):
    x = jnp.transpose(x_nchw, (0, 2, 3, 1)).astype(jnp.bfloat16)  # NHWC bf16
    N, H, W, Cin = x.shape
    kparams = _prep_kernel_params(params)

    c1 = params['b1'].shape[0]
    c2 = params['b2b'].shape[0]
    c3 = params['b3b'].shape[0]
    c4 = params['b4'].shape[0]
    ctot = c1 + c2 + c3 + c4

    cf = kparams[0].shape[1]
    c2r_p = kparams[2].shape[0] // 9
    c3r_p = kparams[4].shape[0] // 9
    weight_bytes = sum(int(k.size) * k.dtype.itemsize for k in kparams)

    Bt = _pick_batch_tile(N, H, W, Cin, cf, c2r_p, c3r_p, ctot, weight_bytes)
    grid = (N // Bt,)

    param_specs = [pl.BlockSpec(kp.shape, lambda n: (0, 0)) for kp in kparams]
    grid_spec = pltpu.PrefetchScalarGridSpec(
        num_scalar_prefetch=0,
        grid=grid,
        in_specs=[pl.BlockSpec((Bt, H, W, Cin), lambda n: (n, 0, 0, 0))]
        + param_specs,
        out_specs=pl.BlockSpec((Bt, H, W, ctot), lambda n: (n, 0, 0, 0)),
    )

    M_total = N * H * W
    flops = 2 * M_total * (Cin * cf + 9 * c2r_p * c2 + 9 * c3r_p * c3 + Cin * c4)
    bytes_accessed = int(x.size) * 2 + weight_bytes + M_total * ctot * 2
    cost = pl.CostEstimate(flops=int(flops), transcendentals=0,
                           bytes_accessed=int(bytes_accessed))

    out = pl.pallas_call(
        _inception_kernel,
        out_shape=jax.ShapeDtypeStruct((N, H, W, ctot), jnp.bfloat16),
        grid_spec=grid_spec,
        compiler_params=pltpu.CompilerParams(
            dimension_semantics=("parallel",),
            vmem_limit_bytes=32 * 1024 * 1024),
        cost_estimate=cost,
    )(x, *kparams)
    return jnp.transpose(out, (0, 3, 1, 2))  # back to NCHW (bf16)


# ----------------------------------------------------------------------------
# Pure-JAX (f32) reference for a numerical sanity check.
# ----------------------------------------------------------------------------
def inception_reference(x_nchw, p):
    x = jnp.transpose(x_nchw, (0, 2, 3, 1)).astype(jnp.float32)
    relu = lambda v: jnp.maximum(v, 0.0)
    conv3x3 = lambda a, w: lax.conv_general_dilated(
        a, w, (1, 1), 'SAME', dimension_numbers=('NHWC', 'HWIO', 'NHWC'))
    br1 = relu(jnp.einsum('nhwc,cd->nhwd', x, p['w1']) + p['b1'])
    r2 = relu(jnp.einsum('nhwc,cd->nhwd', x, p['w2a']) + p['b2a'])
    br2 = relu(conv3x3(r2, p['w2b']) + p['b2b'])
    r3 = relu(jnp.einsum('nhwc,cd->nhwd', x, p['w3a']) + p['b3a'])
    br3 = relu(conv3x3(r3, p['w3b']) + p['b3b'])
    pooled = lax.reduce_window(x, -jnp.inf, lax.max, (1, 3, 3, 1), (1, 1, 1, 1),
                               [(0, 0), (1, 1), (1, 1), (0, 0)])
    br4 = relu(jnp.einsum('nhwc,cd->nhwd', pooled, p['w4']) + p['b4'])
    out = jnp.concatenate([br1, br2, br3, br4], axis=-1)
    return jnp.transpose(out, (0, 3, 1, 2))


if __name__ == "__main__":
    key = jax.random.PRNGKey(0)
    kx, kp = jax.random.split(key)

    # Small Inception config: Inception(4, 8, 4, 8, 4, 8, 8)
    in_channels, ch1x1, ch3x3red, ch3x3, ch5x5red, ch5x5, pool_proj = 4, 8, 4, 8, 4, 8, 8
    N, H, W = 2, 16, 16

    x = jax.random.normal(kx, (N, in_channels, H, W), jnp.float32)
    params = make_inception_params(kp, in_channels, ch1x1, ch3x3red, ch3x3,
                                   ch5x5red, ch5x5, pool_proj)

    y = inception_forward(x, params)
    jax.block_until_ready(y)

    expected_cout = ch1x1 + ch3x3 + ch5x5 + pool_proj
    assert y.shape == (N, expected_cout, H, W), y.shape
    assert bool(jnp.all(y >= 0.0))  # ReLU outputs

    y_ref = inception_reference(x, params)
    assert bool(jnp.allclose(y.astype(jnp.float32), y_ref,
                             rtol=5e-2, atol=5e-2)), (
        float(jnp.max(jnp.abs(y.astype(jnp.float32) - y_ref))))
    print("KERNEL_OK")
</pallas_src>

<mosaic_0001>
module attributes {stable_mosaic.version = 11 : i64} {
  func.func @_inception_kernel(%arg0: i32, %arg1: memref<2x16x16x4xbf16, #tpu.memory_space<vmem>>, %arg2: memref<4x264xbf16, #tpu.memory_space<vmem>>, %arg3: memref<1x264xf32, #tpu.memory_space<vmem>>, %arg4: memref<1152x8xbf16, #tpu.memory_space<vmem>>, %arg5: memref<1x8xf32, #tpu.memory_space<vmem>>, %arg6: memref<1152x8xbf16, #tpu.memory_space<vmem>>, %arg7: memref<1x8xf32, #tpu.memory_space<vmem>>, %arg8: memref<4x8xbf16, #tpu.memory_space<vmem>>, %arg9: memref<1x8xf32, #tpu.memory_space<vmem>>, %arg10: memref<2x16x16x32xbf16, #tpu.memory_space<vmem>>) attributes {dimension_semantics = [#tpu.dimension_semantics<parallel>], iteration_bounds = array<i64: 1>, scalar_prefetch = 0 : i64, scratch_operands = 0 : i64, tpu.core_type = #tpu.core_type<tc>, window_params = [{transform_indices = @transform_0, window_bounds = array<i64: 2, 16, 16, 4>}, {pipeline_mode = #tpu.pipeline_mode<synchronous>, transform_indices = @transform_1, window_bounds = array<i64: 4, 264>}, {pipeline_mode = #tpu.pipeline_mode<synchronous>, transform_indices = @transform_2, window_bounds = array<i64: 1, 264>}, {pipeline_mode = #tpu.pipeline_mode<synchronous>, transform_indices = @transform_3, window_bounds = array<i64: 1152, 8>}, {pipeline_mode = #tpu.pipeline_mode<synchronous>, transform_indices = @transform_4, window_bounds = array<i64: 1, 8>}, {pipeline_mode = #tpu.pipeline_mode<synchronous>, transform_indices = @transform_5, window_bounds = array<i64: 1152, 8>}, {pipeline_mode = #tpu.pipeline_mode<synchronous>, transform_indices = @transform_6, window_bounds = array<i64: 1, 8>}, {pipeline_mode = #tpu.pipeline_mode<synchronous>, transform_indices = @transform_7, window_bounds = array<i64: 4, 8>}, {pipeline_mode = #tpu.pipeline_mode<synchronous>, transform_indices = @transform_8, window_bounds = array<i64: 1, 8>}, {transform_indices = @transform_9, window_bounds = array<i64: 2, 16, 16, 32>}]} {
    %c0 = arith.constant 0 : index
    %c0_0 = arith.constant 0 : index
    %c0_1 = arith.constant 0 : index
    %c0_2 = arith.constant 0 : index
    %0 = vector.load %arg1[%c0, %c0_0, %c0_1, %c0_2] : memref<2x16x16x4xbf16, #tpu.memory_space<vmem>>, vector<2x16x16x4xbf16>
    %1 = vector.shape_cast %0 : vector<2x16x16x4xbf16> to vector<512x4xbf16>
    %c0_3 = arith.constant 0 : index
    %c0_4 = arith.constant 0 : index
    %2 = vector.load %arg2[%c0_3, %c0_4] : memref<4x264xbf16, #tpu.memory_space<vmem>>, vector<4x264xbf16>
    %cst = arith.constant dense<0.000000e+00> : vector<512x264xf32>
    %3 = tpu.matmul %1, %2, %cst {dimension_numbers = #tpu.dot_dimension_numbers<[1], [0], [0], [1], [0, 0, 1, 1], [], []>} : vector<512x4xbf16>, vector<4x264xbf16>, vector<512x264xf32> -> vector<512x264xf32>
    %c0_5 = arith.constant 0 : index
    %c0_6 = arith.constant 0 : index
    %4 = vector.load %arg3[%c0_5, %c0_6] : memref<1x264xf32, #tpu.memory_space<vmem>>, vector<1x264xf32>
    %5 = vector.broadcast %4 : vector<1x264xf32> to vector<512x264xf32>
    %6 = arith.addf %3, %5 : vector<512x264xf32>
    %cst_7 = arith.constant 0.000000e+00 : f32
    %7 = vector.broadcast %cst_7 : f32 to vector<512x264xf32>
    %8 = arith.maximumf %6, %7 : vector<512x264xf32>
    %9 = vector.extract_strided_slice %8 {offsets = [0, 0], sizes = [512, 128], strides = [1, 1]} : vector<512x264xf32> to vector<512x128xf32>
    %10 = arith.truncf %9 : vector<512x128xf32> to vector<512x128xbf16>
    %11 = vector.shape_cast %10 : vector<512x128xbf16> to vector<2x16x16x128xbf16>
    %12 = vector.extract_strided_slice %8 {offsets = [0, 128], sizes = [512, 128], strides = [1, 1]} : vector<512x264xf32> to vector<512x128xf32>
    %13 = arith.truncf %12 : vector<512x128xf32> to vector<512x128xbf16>
    %14 = vector.shape_cast %13 : vector<512x128xbf16> to vector<2x16x16x128xbf16>
    %15 = vector.extract_strided_slice %8 {offsets = [0, 256], sizes = [512, 8], strides = [1, 1]} : vector<512x264xf32> to vector<512x8xf32>
    %c0_8 = arith.constant 0 : index
    %c0_9 = arith.constant 0 : index
    %16 = vector.load %arg4[%c0_8, %c0_9] : memref<1152x8xbf16, #tpu.memory_space<vmem>>, vector<1152x8xbf16>
    %c0_10 = arith.constant 0 : index
    %c0_11 = arith.constant 0 : index
    %17 = vector.load %arg5[%c0_10, %c0_11] : memref<1x8xf32, #tpu.memory_space<vmem>>, vector<1x8xf32>
    %c0_i32 = arith.constant 0 : i32
    %18 = arith.sitofp %c0_i32 : i32 to bf16
    %19 = vector.broadcast %18 : bf16 to vector<2x1x16x128xbf16>
    %20 = tpu.concatenate %19, %11 in 1 : vector<2x1x16x128xbf16>, vector<2x16x16x128xbf16> -> vector<2x17x16x128xbf16>
    %21 = vector.broadcast %18 : bf16 to vector<2x1x16x128xbf16>
    %22 = tpu.concatenate %20, %21 in 1 : vector<2x17x16x128xbf16>, vector<2x1x16x128xbf16> -> vector<2x18x16x128xbf16>
    %23 = vector.broadcast %18 : bf16 to vector<2x18x1x128xbf16>
    %24 = tpu.concatenate %23, %22 in 2 : vector<2x18x1x128xbf16>, vector<2x18x16x128xbf16> -> vector<2x18x17x128xbf16>
    %25 = vector.broadcast %18 : bf16 to vector<2x18x1x128xbf16>
    %26 = tpu.concatenate %24, %25 in 2 : vector<2x18x17x128xbf16>, vector<2x18x1x128xbf16> -> vector<2x18x18x128xbf16>
    %27 = vector.extract_strided_slice %26 {offsets = [0, 0, 0, 0], sizes = [2, 16, 16, 128], strides = [1, 1, 1, 1]} : vector<2x18x18x128xbf16> to vector<2x16x16x128xbf16>
    %28 = vector.extract_strided_slice %26 {offsets = [0, 0, 1, 0], sizes = [2, 16, 16, 128], strides = [1, 1, 1, 1]} : vector<2x18x18x128xbf16> to vector<2x16x16x128xbf16>
    %29 = vector.extract_strided_slice %26 {offsets = [0, 0, 2, 0], sizes = [2, 16, 16, 128], strides = [1, 1, 1, 1]} : vector<2x18x18x128xbf16> to vector<2x16x16x128xbf16>
    %30 = vector.extract_strided_slice %26 {offsets = [0, 1, 0, 0], sizes = [2, 16, 16, 128], strides = [1, 1, 1, 1]} : vector<2x18x18x128xbf16> to vector<2x16x16x128xbf16>
    %31 = vector.extract_strided_slice %26 {offsets = [0, 1, 1, 0], sizes = [2, 16, 16, 128], strides = [1, 1, 1, 1]} : vector<2x18x18x128xbf16> to vector<2x16x16x128xbf16>
    %32 = vector.extract_strided_slice %26 {offsets = [0, 1, 2, 0], sizes = [2, 16, 16, 128], strides = [1, 1, 1, 1]} : vector<2x18x18x128xbf16> to vector<2x16x16x128xbf16>
    %33 = vector.extract_strided_slice %26 {offsets = [0, 2, 0, 0], sizes = [2, 16, 16, 128], strides = [1, 1, 1, 1]} : vector<2x18x18x128xbf16> to vector<2x16x16x128xbf16>
    %34 = vector.extract_strided_slice %26 {offsets = [0, 2, 1, 0], sizes = [2, 16, 16, 128], strides = [1, 1, 1, 1]} : vector<2x18x18x128xbf16> to vector<2x16x16x128xbf16>
    %35 = vector.extract_strided_slice %26 {offsets = [0, 2, 2, 0], sizes = [2, 16, 16, 128], strides = [1, 1, 1, 1]} : vector<2x18x18x128xbf16> to vector<2x16x16x128xbf16>
    %36 = tpu.concatenate %27, %28, %29, %30, %31, %32, %33, %34, %35 in 3 : vector<2x16x16x128xbf16>, vector<2x16x16x128xbf16>, vector<2x16x16x128xbf16>, vector<2x16x16x128xbf16>, vector<2x16x16x128xbf16>, vector<2x16x16x128xbf16>, vector<2x16x16x128xbf16>, vector<2x16x16x128xbf16>, vector<2x16x16x128xbf16> -> vector<2x16x16x1152xbf16>
    %37 = vector.shape_cast %36 : vector<2x16x16x1152xbf16> to vector<512x1152xbf16>
    %cst_12 = arith.constant dense<0.000000e+00> : vector<512x8xf32>
    %38 = tpu.matmul %37, %16, %cst_12 {dimension_numbers = #tpu.dot_dimension_numbers<[1], [0], [0], [1], [0, 0, 1, 1], [], []>} : vector<512x1152xbf16>, vector<1152x8xbf16>, vector<512x8xf32> -> vector<512x8xf32>
    %39 = vector.broadcast %17 : vector<1x8xf32> to vector<512x8xf32>
    %40 = arith.addf %38, %39 : vector<512x8xf32>
    %cst_13 = arith.constant 0.000000e+00 : f32
    %41 = vector.broadcast %cst_13 : f32 to vector<512x8xf32>
    %42 = arith.maximumf %40, %41 : vector<512x8xf32>
    %c0_14 = arith.constant 0 : index
    %c0_15 = arith.constant 0 : index
    %43 = vector.load %arg6[%c0_14, %c0_15] : memref<1152x8xbf16, #tpu.memory_space<vmem>>, vector<1152x8xbf16>
    %c0_16 = arith.constant 0 : index
    %c0_17 = arith.constant 0 : index
    %44 = vector.load %arg7[%c0_16, %c0_17] : memref<1x8xf32, #tpu.memory_space<vmem>>, vector<1x8xf32>
    %c0_i32_18 = arith.constant 0 : i32
    %45 = arith.sitofp %c0_i32_18 : i32 to bf16
    %46 = vector.broadcast %45 : bf16 to vector<2x1x16x128xbf16>
    %47 = tpu.concatenate %46, %14 in 1 : vector<2x1x16x128xbf16>, vector<2x16x16x128xbf16> -> vector<2x17x16x128xbf16>
    %48 = vector.broadcast %45 : bf16 to vector<2x1x16x128xbf16>
    %49 = tpu.concatenate %47, %48 in 1 : vector<2x17x16x128xbf16>, vector<2x1x16x128xbf16> -> vector<2x18x16x128xbf16>
    %50 = vector.broadcast %45 : bf16 to vector<2x18x1x128xbf16>
    %51 = tpu.concatenate %50, %49 in 2 : vector<2x18x1x128xbf16>, vector<2x18x16x128xbf16> -> vector<2x18x17x128xbf16>
    %52 = vector.broadcast %45 : bf16 to vector<2x18x1x128xbf16>
    %53 = tpu.concatenate %51, %52 in 2 : vector<2x18x17x128xbf16>, vector<2x18x1x128xbf16> -> vector<2x18x18x128xbf16>
    %54 = vector.extract_strided_slice %53 {offsets = [0, 0, 0, 0], sizes = [2, 16, 16, 128], strides = [1, 1, 1, 1]} : vector<2x18x18x128xbf16> to vector<2x16x16x128xbf16>
    %55 = vector.extract_strided_slice %53 {offsets = [0, 0, 1, 0], sizes = [2, 16, 16, 128], strides = [1, 1, 1, 1]} : vector<2x18x18x128xbf16> to vector<2x16x16x128xbf16>
    %56 = vector.extract_strided_slice %53 {offsets = [0, 0, 2, 0], sizes = [2, 16, 16, 128], strides = [1, 1, 1, 1]} : vector<2x18x18x128xbf16> to vector<2x16x16x128xbf16>
    %57 = vector.extract_strided_slice %53 {offsets = [0, 1, 0, 0], sizes = [2, 16, 16, 128], strides = [1, 1, 1, 1]} : vector<2x18x18x128xbf16> to vector<2x16x16x128xbf16>
    %58 = vector.extract_strided_slice %53 {offsets = [0, 1, 1, 0], sizes = [2, 16, 16, 128], strides = [1, 1, 1, 1]} : vector<2x18x18x128xbf16> to vector<2x16x16x128xbf16>
    %59 = vector.extract_strided_slice %53 {offsets = [0, 1, 2, 0], sizes = [2, 16, 16, 128], strides = [1, 1, 1, 1]} : vector<2x18x18x128xbf16> to vector<2x16x16x128xbf16>
    %60 = vector.extract_strided_slice %53 {offsets = [0, 2, 0, 0], sizes = [2, 16, 16, 128], strides = [1, 1, 1, 1]} : vector<2x18x18x128xbf16> to vector<2x16x16x128xbf16>
    %61 = vector.extract_strided_slice %53 {offsets = [0, 2, 1, 0], sizes = [2, 16, 16, 128], strides = [1, 1, 1, 1]} : vector<2x18x18x128xbf16> to vector<2x16x16x128xbf16>
    %62 = vector.extract_strided_slice %53 {offsets = [0, 2, 2, 0], sizes = [2, 16, 16, 128], strides = [1, 1, 1, 1]} : vector<2x18x18x128xbf16> to vector<2x16x16x128xbf16>
    %63 = tpu.concatenate %54, %55, %56, %57, %58, %59, %60, %61, %62 in 3 : vector<2x16x16x128xbf16>, vector<2x16x16x128xbf16>, vector<2x16x16x128xbf16>, vector<2x16x16x128xbf16>, vector<2x16x16x128xbf16>, vector<2x16x16x128xbf16>, vector<2x16x16x128xbf16>, vector<2x16x16x128xbf16>, vector<2x16x16x128xbf16> -> vector<2x16x16x1152xbf16>
    %64 = vector.shape_cast %63 : vector<2x16x16x1152xbf16> to vector<512x1152xbf16>
    %cst_19 = arith.constant dense<0.000000e+00> : vector<512x8xf32>
    %65 = tpu.matmul %64, %43, %cst_19 {dimension_numbers = #tpu.dot_dimension_numbers<[1], [0], [0], [1], [0, 0, 1, 1], [], []>} : vector<512x1152xbf16>, vector<1152x8xbf16>, vector<512x8xf32> -> vector<512x8xf32>
    %66 = vector.broadcast %44 : vector<1x8xf32> to vector<512x8xf32>
    %67 = arith.addf %65, %66 : vector<512x8xf32>
    %cst_20 = arith.constant 0.000000e+00 : f32
    %68 = vector.broadcast %cst_20 : f32 to vector<512x8xf32>
    %69 = arith.maximumf %67, %68 : vector<512x8xf32>
    %cst_21 = arith.constant -3.389530e+38 : bf16
    %70 = vector.broadcast %cst_21 : bf16 to vector<2x1x16x4xbf16>
    %71 = tpu.concatenate %70, %0 in 1 : vector<2x1x16x4xbf16>, vector<2x16x16x4xbf16> -> vector<2x17x16x4xbf16>
    %72 = vector.broadcast %cst_21 : bf16 to vector<2x1x16x4xbf16>
    %73 = tpu.concatenate %71, %72 in 1 : vector<2x17x16x4xbf16>, vector<2x1x16x4xbf16> -> vector<2x18x16x4xbf16>
    %74 = vector.broadcast %cst_21 : bf16 to vector<2x18x1x4xbf16>
    %75 = tpu.concatenate %74, %73 in 2 : vector<2x18x1x4xbf16>, vector<2x18x16x4xbf16> -> vector<2x18x17x4xbf16>
    %76 = vector.broadcast %cst_21 : bf16 to vector<2x18x1x4xbf16>
    %77 = tpu.concatenate %75, %76 in 2 : vector<2x18x17x4xbf16>, vector<2x18x1x4xbf16> -> vector<2x18x18x4xbf16>
    %78 = vector.extract_strided_slice %77 {offsets = [0, 0, 0, 0], sizes = [2, 18, 16, 4], strides = [1, 1, 1, 1]} : vector<2x18x18x4xbf16> to vector<2x18x16x4xbf16>
    %79 = vector.extract_strided_slice %77 {offsets = [0, 0, 1, 0], sizes = [2, 18, 16, 4], strides = [1, 1, 1, 1]} : vector<2x18x18x4xbf16> to vector<2x18x16x4xbf16>
    %80 = arith.maximumf %78, %79 : vector<2x18x16x4xbf16>
    %81 = vector.extract_strided_slice %77 {offsets = [0, 0, 2, 0], sizes = [2, 18, 16, 4], strides = [1, 1, 1, 1]} : vector<2x18x18x4xbf16> to vector<2x18x16x4xbf16>
    %82 = arith.maximumf %80, %81 : vector<2x18x16x4xbf16>
    %83 = vector.extract_strided_slice %82 {offsets = [0, 0, 0, 0], sizes = [2, 16, 16, 4], strides = [1, 1, 1, 1]} : vector<2x18x16x4xbf16> to vector<2x16x16x4xbf16>
    %84 = vector.extract_strided_slice %82 {offsets = [0, 1, 0, 0], sizes = [2, 16, 16, 4], strides = [1, 1, 1, 1]} : vector<2x18x16x4xbf16> to vector<2x16x16x4xbf16>
    %85 = arith.maximumf %83, %84 : vector<2x16x16x4xbf16>
    %86 = vector.extract_strided_slice %82 {offsets = [0, 2, 0, 0], sizes = [2, 16, 16, 4], strides = [1, 1, 1, 1]} : vector<2x18x16x4xbf16> to vector<2x16x16x4xbf16>
    %87 = arith.maximumf %85, %86 : vector<2x16x16x4xbf16>
    %88 = vector.shape_cast %87 : vector<2x16x16x4xbf16> to vector<512x4xbf16>
    %c0_22 = arith.constant 0 : index
    %c0_23 = arith.constant 0 : index
    %89 = vector.load %arg8[%c0_22, %c0_23] : memref<4x8xbf16, #tpu.memory_space<vmem>>, vector<4x8xbf16>
    %cst_24 = arith.constant dense<0.000000e+00> : vector<512x8xf32>
    %90 = tpu.matmul %88, %89, %cst_24 {dimension_numbers = #tpu.dot_dimension_numbers<[1], [0], [0], [1], [0, 0, 1, 1], [], []>} : vector<512x4xbf16>, vector<4x8xbf16>, vector<512x8xf32> -> vector<512x8xf32>
    %c0_25 = arith.constant 0 : index
    %c0_26 = arith.constant 0 : index
    %91 = vector.load %arg9[%c0_25, %c0_26] : memref<1x8xf32, #tpu.memory_space<vmem>>, vector<1x8xf32>
    %92 = vector.broadcast %91 : vector<1x8xf32> to vector<512x8xf32>
    %93 = arith.addf %90, %92 : vector<512x8xf32>
    %cst_27 = arith.constant 0.000000e+00 : f32
    %94 = vector.broadcast %cst_27 : f32 to vector<512x8xf32>
    %95 = arith.maximumf %93, %94 : vector<512x8xf32>
    %96 = tpu.concatenate %15, %42, %69, %95 in 1 : vector<512x8xf32>, vector<512x8xf32>, vector<512x8xf32>, vector<512x8xf32> -> vector<512x32xf32>
    %97 = arith.truncf %96 : vector<512x32xf32> to vector<512x32xbf16>
    %98 = vector.shape_cast %97 : vector<512x32xbf16> to vector<2x16x16x32xbf16>
    %c0_28 = arith.constant 0 : index
    %c0_29 = arith.constant 0 : index
    %c0_30 = arith.constant 0 : index
    %c0_31 = arith.constant 0 : index
    %99 = vector.load %arg10[%c0_28, %c0_29, %c0_30, %c0_31] : memref<2x16x16x32xbf16, #tpu.memory_space<vmem>>, vector<2x16x16x32xbf16>
    tpu.vector_store %arg10[%c0_28, %c0_29, %c0_30, %c0_31], %98 {strides = array<i32>} : memref<2x16x16x32xbf16, #tpu.memory_space<vmem>>, vector<2x16x16x32xbf16>,
    return
  }
  func.func @transform_0(%arg0: i32) -> (i32, i32, i32, i32) {
    %c0_i32 = arith.constant 0 : i32
    %c0_i32_0 = arith.constant 0 : i32
    %c0_i32_1 = arith.constant 0 : i32
    %c0_i32_2 = arith.constant 0 : i32
    return %arg0, %c0_i32, %c0_i32_0, %c0_i32_1 : i32, i32, i32, i32
  }
  func.func @transform_1(%arg0: i32) -> (i32, i32) {
    %c0_i32 = arith.constant 0 : i32
    %c0_i32_0 = arith.constant 0 : i32
    %c0_i32_1 = arith.constant 0 : i32
    return %c0_i32, %c0_i32_0 : i32, i32
  }
  func.func @transform_2(%arg0: i32) -> (i32, i32) {
    %c0_i32 = arith.constant 0 : i32
    %c0_i32_0 = arith.constant 0 : i32
    %c0_i32_1 = arith.constant 0 : i32
    return %c0_i32, %c0_i32_0 : i32, i32
  }
  func.func @transform_3(%arg0: i32) -> (i32, i32) {
    %c0_i32 = arith.constant 0 : i32
    %c0_i32_0 = arith.constant 0 : i32
    %c0_i32_1 = arith.constant 0 : i32
    return %c0_i32, %c0_i32_0 : i32, i32
  }
  func.func @transform_4(%arg0: i32) -> (i32, i32) {
    %c0_i32 = arith.constant 0 : i32
    %c0_i32_0 = arith.constant 0 : i32
    %c0_i32_1 = arith.constant 0 : i32
    return %c0_i32, %c0_i32_0 : i32, i32
  }
  func.func @transform_5(%arg0: i32) -> (i32, i32) {
    %c0_i32 = arith.constant 0 : i32
    %c0_i32_0 = arith.constant 0 : i32
    %c0_i32_1 = arith.constant 0 : i32
    return %c0_i32, %c0_i32_0 : i32, i32
  }
  func.func @transform_6(%arg0: i32) -> (i32, i32) {
    %c0_i32 = arith.constant 0 : i32
    %c0_i32_0 = arith.constant 0 : i32
    %c0_i32_1 = arith.constant 0 : i32
    return %c0_i32, %c0_i32_0 : i32, i32
  }
  func.func @transform_7(%arg0: i32) -> (i32, i32) {
    %c0_i32 = arith.constant 0 : i32
    %c0_i32_0 = arith.constant 0 : i32
    %c0_i32_1 = arith.constant 0 : i32
    return %c0_i32, %c0_i32_0 : i32, i32
  }
  func.func @transform_8(%arg0: i32) -> (i32, i32) {
    %c0_i32 = arith.constant 0 : i32
    %c0_i32_0 = arith.constant 0 : i32
    %c0_i32_1 = arith.constant 0 : i32
    return %c0_i32, %c0_i32_0 : i32, i32
  }
  func.func @transform_9(%arg0: i32) -> (i32, i32, i32, i32) {
    %c0_i32 = arith.constant 0 : i32
    %c0_i32_0 = arith.constant 0 : i32
    %c0_i32_1 = arith.constant 0 : i32
    %c0_i32_2 = arith.constant 0 : i32
    return %arg0, %c0_i32, %c0_i32_0, %c0_i32_1 : i32, i32, i32, i32
  }
}

</mosaic_0001>

<llo_original>
// kernel: inception_forward.1
$region0: #{inception_forward.1}
  #allocation0 [shape = 'u32[]', space=smem, size = 0x4, offset = 0x4, fixed_abs, tag = 'smem constant byte address 0x4 - core index']
  #allocation1 [shape = 'u32[144,128]{1,0:T(1,128)}', space=vmem, size = 0x12000, scoped, tag = 'internal scratch']
  %s0 = inlined_call_operand.vmem [shape: bf16[2,16,16,4], index: 0, kind: input, shape index: {}]
  %s1 = inlined_call_operand.vmem [shape: bf16[4,264], index: 1, kind: input, shape index: {}]
  %s2 = inlined_call_operand.vmem [shape: f32[1,264], index: 2, kind: input, shape index: {}]
  %s3 = inlined_call_operand.vmem [shape: bf16[1152,8], index: 3, kind: input, shape index: {}]
  %s4 = inlined_call_operand.vmem [shape: f32[1,8], index: 4, kind: input, shape index: {}]
  %s5 = inlined_call_operand.vmem [shape: bf16[1152,8], index: 5, kind: input, shape index: {}]
  %s6 = inlined_call_operand.vmem [shape: f32[1,8], index: 6, kind: input, shape index: {}]
  %s7 = inlined_call_operand.vmem [shape: bf16[4,8], index: 7, kind: input, shape index: {}]
  %s8 = inlined_call_operand.vmem [shape: f32[1,8], index: 8, kind: input, shape index: {}]
  %s9 = inlined_call_operand.hbm [shape: bf16[2,16,16,32], index: 9, kind: output, shape index: {}]
  %s10 = sld [smem:[#allocation0]]
  $region46: #{inception_forward.1} parent=0
    _
  %s12 = ssub.s32 1, %s10
  %s13 = scalar_select 0, %s12, %s10
  $region1: #{inception_forward.1} parent=0
    #allocation2 [shape = 'u8[131072]{0}', space=vmem, size = 0x20000, scoped, tag = 'output window, operand 0, single buffered']
    #allocation3 [shape = 's32[1]{0}', space=sflag, size = 0x4, scoped, tag = 'scoped memory for inception_forward.1']
    %14 = vsyncpa [#allocation3], 0
    // Predicated region
    $region2: #{inception_forward.1} parent=1 // pred_check
      _
    $region3: #{inception_forward.1} parent=1 // pred_check_branch
      %16 = sbr.rel (0) target = $region5
    $region4: #{inception_forward.1} parent=1 // pred_region
      _
    $region5: #{inception_forward.1} parent=1 // pred_fallthru
      _
    // Predicated region
    $region6: #{inception_forward.1} parent=1 // pred_check
      _
    $region7: #{inception_forward.1} parent=1 // pred_check_branch
      %18 = sbr.rel (0) target = $region9
    $region8: #{inception_forward.1} parent=1 // pred_region
      _
    $region9: #{inception_forward.1} parent=1 // pred_fallthru
      _
    // Predicated region
    $region10: #{inception_forward.1} parent=1 // pred_check
      _
    $region11: #{inception_forward.1} parent=1 // pred_check_branch
      %20 = sbr.rel (0) target = $region13
    $region12: #{inception_forward.1} parent=1 // pred_region
      _
    $region13: #{inception_forward.1} parent=1 // pred_fallthru
      _
    // Predicated region
    $region14: #{inception_forward.1} parent=1 // pred_check
      _
    $region15: #{inception_forward.1} parent=1 // pred_check_branch
      %22 = sbr.rel (0) target = $region17
    $region16: #{inception_forward.1} parent=1 // pred_region
      _
    $region17: #{inception_forward.1} parent=1 // pred_fallthru
      _
    // Predicated region
    $region18: #{inception_forward.1} parent=1 // pred_check
      _
    $region19: #{inception_forward.1} parent=1 // pred_check_branch
      %24 = sbr.rel (0) target = $region21
    $region20: #{inception_forward.1} parent=1 // pred_region
      _
    $region21: #{inception_forward.1} parent=1 // pred_fallthru
      _
    // Predicated region
    $region22: #{inception_forward.1} parent=1 // pred_check
      _
    $region23: #{inception_forward.1} parent=1 // pred_check_branch
      %26 = sbr.rel (0) target = $region25
    $region24: #{inception_forward.1} parent=1 // pred_region
      _
    $region25: #{inception_forward.1} parent=1 // pred_fallthru
      _
    // Predicated region
    $region26: #{inception_forward.1} parent=1 // pred_check
      _
    $region27: #{inception_forward.1} parent=1 // pred_check_branch
      %28 = sbr.rel (0) target = $region29
    $region28: #{inception_forward.1} parent=1 // pred_region
      _
    $region29: #{inception_forward.1} parent=1 // pred_fallthru
      _
    // Predicated region
    $region30: #{inception_forward.1} parent=1 // pred_check
      _
    $region31: #{inception_forward.1} parent=1 // pred_check_branch
      %30 = sbr.rel (0) target = $region33
    $region32: #{inception_forward.1} parent=1 // pred_region
      _
    $region33: #{inception_forward.1} parent=1 // pred_fallthru
      _
    // Predicated region
    $region34: #{inception_forward.1} parent=1 // pred_check
      _
    $region35: #{inception_forward.1} parent=1 // pred_check_branch
      %32 = sbr.rel (0) target = $region37
    $region36: #{inception_forward.1} parent=1 // pred_region
      _
    $region37: #{inception_forward.1} parent=1 // pred_fallthru
      _
    %v35 = vld [vmem:[%s0] sm:$0xf]
    %v36 = vld [vmem:[%s0 + $0x4] sm:$0xf]
    %v37 = vld [vmem:[%s0 + $0x8] sm:$0xf]
    %v38 = vld [vmem:[%s0 + $0xc] sm:$0xf]
    %v39 = vld [vmem:[%s0 + $0x10] sm:$0xf]
    %v40 = vld [vmem:[%s0 + $0x14] sm:$0xf]
    %v41 = vld [vmem:[%s0 + $0x18] sm:$0xf]
    %v42 = vld [vmem:[%s0 + $0x1c] sm:$0xf]
    %v43 = vld [vmem:[%s0 + $0x20] sm:$0xf]
    %v44 = vld [vmem:[%s0 + $0x24] sm:$0xf]
    %v45 = vld [vmem:[%s0 + $0x28] sm:$0xf]
    %v46 = vld [vmem:[%s0 + $0x2c] sm:$0xf]
    %v47 = vld [vmem:[%s0 + $0x30] sm:$0xf]
    %v48 = vld [vmem:[%s0 + $0x34] sm:$0xf]
    %v49 = vld [vmem:[%s0 + $0x38] sm:$0xf]
    %v50 = vld [vmem:[%s0 + $0x3c] sm:$0xf]
    %v51 = vld [vmem:[%s0 + $0x40] sm:$0xf]
    %v52 = vld [vmem:[%s0 + $0x44] sm:$0xf]
    %v53 = vld [vmem:[%s0 + $0x48] sm:$0xf]
    %v54 = vld [vmem:[%s0 + $0x4c] sm:$0xf]
    %v55 = vld [vmem:[%s0 + $0x50] sm:$0xf]
    %v56 = vld [vmem:[%s0 + $0x54] sm:$0xf]
    %v57 = vld [vmem:[%s0 + $0x58] sm:$0xf]
    %v58 = vld [vmem:[%s0 + $0x5c] sm:$0xf]
    %v59 = vld [vmem:[%s0 + $0x60] sm:$0xf]
    %v60 = vld [vmem:[%s0 + $0x64] sm:$0xf]
    %v61 = vld [vmem:[%s0 + $0x68] sm:$0xf]
    %v62 = vld [vmem:[%s0 + $0x6c] sm:$0xf]
    %v63 = vld [vmem:[%s0 + $0x70] sm:$0xf]
    %v64 = vld [vmem:[%s0 + $0x74] sm:$0xf]
    %v65 = vld [vmem:[%s0 + $0x78] sm:$0xf]
    %v66 = vld [vmem:[%s0 + $0x7c] sm:$0xf]
    %v67 = vld [vmem:[%s0 + $0x80] sm:$0xf]
    %v68 = vld [vmem:[%s0 + $0x84] sm:$0xf]
    %v69 = vld [vmem:[%s0 + $0x88] sm:$0xf]
    %v70 = vld [vmem:[%s0 + $0x8c] sm:$0xf]
    %v71 = vld [vmem:[%s0 + $0x90] sm:$0xf]
    %v72 = vld [vmem:[%s0 + $0x94] sm:$0xf]
    %v73 = vld [vmem:[%s0 + $0x98] sm:$0xf]
    %v74 = vld [vmem:[%s0 + $0x9c] sm:$0xf]
    %v75 = vld [vmem:[%s0 + $0xa0] sm:$0xf]
    %v76 = vld [vmem:[%s0 + $0xa4] sm:$0xf]
    %v77 = vld [vmem:[%s0 + $0xa8] sm:$0xf]
    %v78 = vld [vmem:[%s0 + $0xac] sm:$0xf]
    %v79 = vld [vmem:[%s0 + $0xb0] sm:$0xf]
    %v80 = vld [vmem:[%s0 + $0xb4] sm:$0xf]
    %v81 = vld [vmem:[%s0 + $0xb8] sm:$0xf]
    %v82 = vld [vmem:[%s0 + $0xbc] sm:$0xf]
    %v83 = vld [vmem:[%s0 + $0xc0] sm:$0xf]
    %v84 = vld [vmem:[%s0 + $0xc4] sm:$0xf]
    %v85 = vld [vmem:[%s0 + $0xc8] sm:$0xf]
    %v86 = vld [vmem:[%s0 + $0xcc] sm:$0xf]
    %v87 = vld [vmem:[%s0 + $0xd0] sm:$0xf]
    %v88 = vld [vmem:[%s0 + $0xd4] sm:$0xf]
    %v89 = vld [vmem:[%s0 + $0xd8] sm:$0xf]
    %v90 = vld [vmem:[%s0 + $0xdc] sm:$0xf]
    %v91 = vld [vmem:[%s0 + $0xe0] sm:$0xf]
    %v92 = vld [vmem:[%s0 + $0xe4] sm:$0xf]
    %v93 = vld [vmem:[%s0 + $0xe8] sm:$0xf]
    %v94 = vld [vmem:[%s0 + $0xec] sm:$0xf]
    %v95 = vld [vmem:[%s0 + $0xf0] sm:$0xf]
    %v96 = vld [vmem:[%s0 + $0xf4] sm:$0xf]
    %v97 = vld [vmem:[%s0 + $0xf8] sm:$0xf]
    %v98 = vld [vmem:[%s0 + $0xfc] sm:$0xf]
    %v99 = vld [vmem:[%s1] sm:$0x3f]
    %v100 = vld [vmem:[%s2] sm:$0x7]
    %v102 = vlaneseq
    %v103 = vshrl.u32 %v102, 7
    %v104 = vsub.s32 0, %v103
    %v105 = vrot.slane %v100, %v104
    %v106 = vlaneseq
    %v107 = vshrl.u32 %v106, 7
    %v108 = vsub.s32 1, %v107
    %v109 = vrot.slane %v100, %v108
    %v110 = vlaneseq
    %v111 = vshrl.u32 %v110, 7
    %v112 = vsub.s32 2, %v111
    %v113 = vrot.slane %v100, %v112
    %v181 = vunpack.c.l.b16 %v35
    %v182 = vunpack.c.l.b16 %v36
    %v183 = vunpack.c.l.b16 %v37
    %v184 = vunpack.c.l.b16 %v38
    %v185 = vunpack.c.l.b16 %v39
    %v186 = vunpack.c.l.b16 %v40
    %v187 = vunpack.c.l.b16 %v41
    %v188 = vunpack.c.l.b16 %v42
    %v189 = vunpack.c.l.b16 %v43
    %v190 = vunpack.c.l.b16 %v44
    %v191 = vunpack.c.l.b16 %v45
    %v192 = vunpack.c.l.b16 %v46
    %v193 = vunpack.c.l.b16 %v47
    %v194 = vunpack.c.l.b16 %v48
    %v195 = vunpack.c.l.b16 %v49
    %v196 = vunpack.c.l.b16 %v50
    %v197 = vunpack.c.l.b16 %v51
    %v198 = vunpack.c.l.b16 %v52
    %v199 = vunpack.c.l.b16 %v53
    %v200 = vunpack.c.l.b16 %v54
    %v201 = vunpack.c.l.b16 %v55
    %v202 = vunpack.c.l.b16 %v56
    %v203 = vunpack.c.l.b16 %v57
    %v204 = vunpack.c.l.b16 %v58
    %v205 = vunpack.c.l.b16 %v59
    %v206 = vunpack.c.l.b16 %v60
    %v207 = vunpack.c.l.b16 %v61
    %v208 = vunpack.c.l.b16 %v62
    %v209 = vunpack.c.l.b16 %v63
    %v210 = vunpack.c.l.b16 %v64
    %v211 = vunpack.c.l.b16 %v65
    %v212 = vunpack.c.l.b16 %v66
    %v213 = vunpack.c.l.b16 %v67
    %v214 = vunpack.c.l.b16 %v68
    %v215 = vunpack.c.l.b16 %v69
    %v216 = vunpack.c.l.b16 %v70
    %v217 = vunpack.c.l.b16 %v71
    %v218 = vunpack.c.l.b16 %v72
    %v219 = vunpack.c.l.b16 %v73
    %v220 = vunpack.c.l.b16 %v74
    %v221 = vunpack.c.l.b16 %v75
    %v222 = vunpack.c.l.b16 %v76
    %v223 = vunpack.c.l.b16 %v77
    %v224 = vunpack.c.l.b16 %v78
    %v225 = vunpack.c.l.b16 %v79
    %v226 = vunpack.c.l.b16 %v80
    %v227 = vunpack.c.l.b16 %v81
    %v228 = vunpack.c.l.b16 %v82
    %v229 = vunpack.c.l.b16 %v83
    %v230 = vunpack.c.l.b16 %v84
    %v231 = vunpack.c.l.b16 %v85
    %v232 = vunpack.c.l.b16 %v86
    %v233 = vunpack.c.l.b16 %v87
    %v234 = vunpack.c.l.b16 %v88
    %v235 = vunpack.c.l.b16 %v89
    %v236 = vunpack.c.l.b16 %v90
    %v237 = vunpack.c.l.b16 %v91
    %v238 = vunpack.c.l.b16 %v92
    %v239 = vunpack.c.l.b16 %v93
    %v240 = vunpack.c.l.b16 %v94
    %v241 = vunpack.c.l.b16 %v95
    %v242 = vunpack.c.l.b16 %v96
    %v243 = vunpack.c.l.b16 %v97
    %v244 = vunpack.c.l.b16 %v98
    %v245 = vpack.c.b16 %v182, %v181
    %v246 = vpack.c.b16 %v184, %v183
    %v247 = vpack.c.b16 %v186, %v185
    %v248 = vpack.c.b16 %v188, %v187
    %v249 = vpack.c.b16 %v190, %v189
    %v250 = vpack.c.b16 %v192, %v191
    %v251 = vpack.c.b16 %v194, %v193
    %v252 = vpack.c.b16 %v196, %v195
    %v253 = vpack.c.b16 %v198, %v197
    %v254 = vpack.c.b16 %v200, %v199
    %v255 = vpack.c.b16 %v202, %v201
    %v256 = vpack.c.b16 %v204, %v203
    %v257 = vpack.c.b16 %v206, %v205
    %v258 = vpack.c.b16 %v208, %v207
    %v259 = vpack.c.b16 %v210, %v209
    %v260 = vpack.c.b16 %v212, %v211
    %v261 = vpack.c.b16 %v214, %v213
    %v262 = vpack.c.b16 %v216, %v215
    %v263 = vpack.c.b16 %v218, %v217
    %v264 = vpack.c.b16 %v220, %v219
    %v265 = vpack.c.b16 %v222, %v221
    %v266 = vpack.c.b16 %v224, %v223
    %v267 = vpack.c.b16 %v226, %v225
    %v268 = vpack.c.b16 %v228, %v227
    %v269 = vpack.c.b16 %v230, %v229
    %v270 = vpack.c.b16 %v232, %v231
    %v271 = vpack.c.b16 %v234, %v233
    %v272 = vpack.c.b16 %v236, %v235
    %v273 = vpack.c.b16 %v238, %v237
    %v274 = vpack.c.b16 %v240, %v239
    %v275 = vpack.c.b16 %v242, %v241
    %v276 = vpack.c.b16 %v244, %v243
    %v278 = vcombine.high %v99, %v99
    %v280 = vunpack.c.l.s4 1983009808
    %v281 = vunpack.c.0.s8 %v280
    %v282 = vlaneseq
    %v283 = vshrl.u32 %v282, 7
    %v284 = vsub.s32 %v281, %v283
    %v285 = vrot.slane %v99, %v284
    %v287 = vunpack.c.l.s4 1983009808
    %v288 = vunpack.c.0.s8 %v287
    %v289 = vlaneseq
    %v290 = vshrl.u32 %v289, 7
    %v291 = vsub.s32 %v288, %v290
    %v292 = vrot.slane %v278, %v291
    %v293 = vcombine.high %v285, %v285
    %vm294 = vcmask 31744
    %v296 = vsel %vm294, %v245, 0
    %v299 = vsel %vm294, %v246, 0
    %v302 = vsel %vm294, %v247, 0
    %v305 = vsel %vm294, %v248, 0
    %v308 = vsel %vm294, %v249, 0
    %v311 = vsel %vm294, %v250, 0
    %v314 = vsel %vm294, %v251, 0
    %v317 = vsel %vm294, %v252, 0
    %v320 = vsel %vm294, %v253, 0
    %v323 = vsel %vm294, %v254, 0
    %v326 = vsel %vm294, %v255, 0
    %v329 = vsel %vm294, %v256, 0
    %v332 = vsel %vm294, %v257, 0
    %v335 = vsel %vm294, %v258, 0
    %v338 = vsel %vm294, %v259, 0
    %v341 = vsel %vm294, %v260, 0
    %v344 = vsel %vm294, %v261, 0
    %v347 = vsel %vm294, %v262, 0
    %v350 = vsel %vm294, %v263, 0
    %v353 = vsel %vm294, %v264, 0
    %v356 = vsel %vm294, %v265, 0
    %v359 = vsel %vm294, %v266, 0
    %v362 = vsel %vm294, %v267, 0
    %v365 = vsel %vm294, %v268, 0
    %v368 = vsel %vm294, %v269, 0
    %v371 = vsel %vm294, %v270, 0
    %v374 = vsel %vm294, %v271, 0
    %v377 = vsel %vm294, %v272, 0
    %v380 = vsel %vm294, %v273, 0
    %v383 = vsel %vm294, %v274, 0
    %v386 = vsel %vm294, %v275, 0
    %v389 = vsel %vm294, %v276, 0
    %vm391 = vcmask 1041408
    %v393 = vsel %vm391, %v285, 0
    %v396 = vsel %vm391, %v293, 0
    %v399 = vsel %vm391, %v292, 0
    %401 = vmatprep.subr.bf16.mxu0 %v396
    %402 = vmatpush1.bf16.msra.mxu0 %v393
    %403 = vmatprep.subr.bf16.mxu0 0
    %404 = vmatpush1.bf16.msra.mxu0 0
    %405 = vmatprep.subr.bf16.mxu0 0
    %406 = vmatpush1.bf16.msra.mxu0 0
    %407 = vmatprep.subr.bf16.mxu0 0
    %408 = vmatpush1.bf16.msra.mxu0 0
    %409 = vmatprep.subr.bf16.mxu0 0
    %410 = vmatpush1.bf16.msra.mxu0 0
    %411 = vmatprep.subr.bf16.mxu0 0
    %412 = vmatpush1.bf16.msra.mxu0 0
    %413 = vmatprep.subr.bf16.mxu0 0
    %414 = vmatpush1.bf16.msra.mxu0 0
    %415 = vmatprep.subr.bf16.mxu0 0
    %416 = vmatpush1.bf16.msra.mxu0 0
    %417 = vmatprep.subr.bf16.mxu0 0
    %418 = vmatpush1.bf16.msra.mxu0 0
    %419 = vmatprep.subr.bf16.mxu0 0
    %420 = vmatpush1.bf16.msra.mxu0 0
    %421 = vmatprep.subr.bf16.mxu0 0
    %422 = vmatpush1.bf16.msra.mxu0 0
    %423 = vmatprep.subr.bf16.mxu0 0
    %424 = vmatpush1.bf16.msra.mxu0 0
    %425 = vmatprep.subr.bf16.mxu0 0
    %426 = vmatpush1.bf16.msra.mxu0 0
    %427 = vmatprep.subr.bf16.mxu0 0
    %428 = vmatpush1.bf16.msra.mxu0 0
    %429 = vmatprep.subr.bf16.mxu0 0
    %430 = vmatpush1.bf16.msra.mxu0 0
    %431 = vmatprep.subr.bf16.mxu0 0
    %432 = vmatpush1.bf16.msra.mxu0 0
    %433 = vmatprep.mubr.bf16.mxu0 0
    %434 = vmatmul.mubr.bf16.gmra.mrb[0].mxu0 %v296
    %v435 = vpop.f32.mrb[0].mxu0
    %v436 = vadd.f32 %v105, %v435
    %v437 = vpop.f32.mrb[0].mxu0
    %v438 = vadd.f32 %v109, %v437
    %v439 = vpop.f32.mrb[0].mxu0
    %v440 = vadd.f32 %v105, %v439
    %v441 = vpop.f32.mrb[0].mxu0
    %v442 = vadd.f32 %v109, %v441
    %443 = vmatprep.mubr.bf16.mxu0 0
    %444 = vmatmul.mubr.bf16.gmra.mrb[0].mxu0 %v299
    %v445 = vpop.f32.mrb[0].mxu0
    %v446 = vadd.f32 %v105, %v445
    %v447 = vpop.f32.mrb[0].mxu0
    %v448 = vadd.f32 %v109, %v447
    %v449 = vpop.f32.mrb[0].mxu0
    %v450 = vadd.f32 %v105, %v449
    %v451 = vpop.f32.mrb[0].mxu0
    %v452 = vadd.f32 %v109, %v451
    %453 = vmatprep.mubr.bf16.mxu0 0
    %454 = vmatmul.mubr.bf16.gmra.mrb[0].mxu0 %v302
    %v455 = vpop.f32.mrb[0].mxu0
    %v456 = vadd.f32 %v105, %v455
    %v457 = vpop.f32.mrb[0].mxu0
    %v458 = vadd.f32 %v109, %v457
    %v459 = vpop.f32.mrb[0].mxu0
    %v460 = vadd.f32 %v105, %v459
    %v461 = vpop.f32.mrb[0].mxu0
    %v462 = vadd.f32 %v109, %v461
    %463 = vmatprep.mubr.bf16.mxu0 0
    %464 = vmatmul.mubr.bf16.gmra.mrb[0].mxu0 %v305
    %v465 = vpop.f32.mrb[0].mxu0
    %v466 = vadd.f32 %v105, %v465
    %v467 = vpop.f32.mrb[0].mxu0
    %v468 = vadd.f32 %v109, %v467
    %v469 = vpop.f32.mrb[0].mxu0
    %v470 = vadd.f32 %v105, %v469
    %v471 = vpop.f32.mrb[0].mxu0
    %v472 = vadd.f32 %v109, %v471
    %473 = vmatprep.mubr.bf16.mxu0 0
    %474 = vmatmul.mubr.bf16.gmra.mrb[0].mxu0 %v308
    %v475 = vpop.f32.mrb[0].mxu0
    %v476 = vadd.f32 %v105, %v475
    %v477 = vpop.f32.mrb[0].mxu0
    %v478 = vadd.f32 %v109, %v477
    %v479 = vpop.f32.mrb[0].mxu0
    %v480 = vadd.f32 %v105, %v479
    %v481 = vpop.f32.mrb[0].mxu0
    %v482 = vadd.f32 %v109, %v481
    %483 = vmatprep.mubr.bf16.mxu0 0
    %484 = vmatmul.mubr.bf16.gmra.mrb[0].mxu0 %v311
    %v485 = vpop.f32.mrb[0].mxu0
    %v486 = vadd.f32 %v105, %v485
    %v487 = vpop.f32.mrb[0].mxu0
    %v488 = vadd.f32 %v109, %v487
    %v489 = vpop.f32.mrb[0].mxu0
    %v490 = vadd.f32 %v105, %v489
    %v491 = vpop.f32.mrb[0].mxu0
    %v492 = vadd.f32 %v109, %v491
    %493 = vmatprep.mubr.bf16.mxu0 0
    %494 = vmatmul.mubr.bf16.gmra.mrb[0].mxu0 %v314
    %v495 = vpop.f32.mrb[0].mxu0
    %v496 = vadd.f32 %v105, %v495
    %v497 = vpop.f32.mrb[0].mxu0
    %v498 = vadd.f32 %v109, %v497
    %v499 = vpop.f32.mrb[0].mxu0
    %v500 = vadd.f32 %v105, %v499
    %v501 = vpop.f32.mrb[0].mxu0
    %v502 = vadd.f32 %v109, %v501
    %503 = vmatprep.mubr.bf16.mxu0 0
    %504 = vmatmul.mubr.bf16.gmra.mrb[0].mxu0 %v317
    %v505 = vpop.f32.mrb[0].mxu0
    %v506 = vadd.f32 %v105, %v505
    %v507 = vpop.f32.mrb[0].mxu0
    %v508 = vadd.f32 %v109, %v507
    %v509 = vpop.f32.mrb[0].mxu0
    %v510 = vadd.f32 %v105, %v509
    %v511 = vpop.f32.mrb[0].mxu0
    %v512 = vadd.f32 %v109, %v511
    %513 = vmatprep.mubr.bf16.mxu0 0
    %514 = vmatmul.mubr.bf16.gmra.mrb[0].mxu0 %v320
    %v515 = vpop.f32.mrb[0].mxu0
    %v516 = vadd.f32 %v105, %v515
    %v517 = vpop.f32.mrb[0].mxu0
    %v518 = vadd.f32 %v109, %v517
    %v519 = vpop.f32.mrb[0].mxu0
    %v520 = vadd.f32 %v105, %v519
    %v521 = vpop.f32.mrb[0].mxu0
    %v522 = vadd.f32 %v109, %v521
    %523 = vmatprep.mubr.bf16.mxu0 0
    %524 = vmatmul.mubr.bf16.gmra.mrb[0].mxu0 %v323
    %v525 = vpop.f32.mrb[0].mxu0
    %v526 = vadd.f32 %v105, %v525
    %v527 = vpop.f32.mrb[0].mxu0
    %v528 = vadd.f32 %v109, %v527
    %v529 = vpop.f32.mrb[0].mxu0
    %v530 = vadd.f32 %v105, %v529
    %v531 = vpop.f32.mrb[0].mxu0
    %v532 = vadd.f32 %v109, %v531
    %533 = vmatprep.mubr.bf16.mxu0 0
    %534 = vmatmul.mubr.bf16.gmra.mrb[0].mxu0 %v326
    %v535 = vpop.f32.mrb[0].mxu0
    %v536 = vadd.f32 %v105, %v535
    %v537 = vpop.f32.mrb[0].mxu0
    %v538 = vadd.f32 %v109, %v537
    %v539 = vpop.f32.mrb[0].mxu0
    %v540 = vadd.f32 %v105, %v539
    %v541 = vpop.f32.mrb[0].mxu0
    %v542 = vadd.f32 %v109, %v541
    %543 = vmatprep.mubr.bf16.mxu0 0
    %544 = vmatmul.mubr.bf16.gmra.mrb[0].mxu0 %v329
    %v545 = vpop.f32.mrb[0].mxu0
    %v546 = vadd.f32 %v105, %v545
    %v547 = vpop.f32.mrb[0].mxu0
    %v548 = vadd.f32 %v109, %v547
    %v549 = vpop.f32.mrb[0].mxu0
    %v550 = vadd.f32 %v105, %v549
    %v551 = vpop.f32.mrb[0].mxu0
    %v552 = vadd.f32 %v109, %v551
    %553 = vmatprep.mubr.bf16.mxu0 0
    %554 = vmatmul.mubr.bf16.gmra.mrb[0].mxu0 %v332
    %v555 = vpop.f32.mrb[0].mxu0
    %v556 = vadd.f32 %v105, %v555
    %v557 = vpop.f32.mrb[0].mxu0
    %v558 = vadd.f32 %v109, %v557
    %v559 = vpop.f32.mrb[0].mxu0
    %v560 = vadd.f32 %v105, %v559
    %v561 = vpop.f32.mrb[0].mxu0
    %v562 = vadd.f32 %v109, %v561
    %563 = vmatprep.mubr.bf16.mxu0 0
    %564 = vmatmul.mubr.bf16.gmra.mrb[0].mxu0 %v335
    %v565 = vpop.f32.mrb[0].mxu0
    %v566 = vadd.f32 %v105, %v565
    %v567 = vpop.f32.mrb[0].mxu0
    %v568 = vadd.f32 %v109, %v567
    %v569 = vpop.f32.mrb[0].mxu0
    %v570 = vadd.f32 %v105, %v569
    %v571 = vpop.f32.mrb[0].mxu0
    %v572 = vadd.f32 %v109, %v571
    %573 = vmatprep.mubr.bf16.mxu0 0
    %574 = vmatmul.mubr.bf16.gmra.mrb[0].mxu0 %v338
    %v575 = vpop.f32.mrb[0].mxu0
    %v576 = vadd.f32 %v105, %v575
    %v577 = vpop.f32.mrb[0].mxu0
    %v578 = vadd.f32 %v109, %v577
    %v579 = vpop.f32.mrb[0].mxu0
    %v580 = vadd.f32 %v105, %v579
    %v581 = vpop.f32.mrb[0].mxu0
    %v582 = vadd.f32 %v109, %v581
    %583 = vmatprep.mubr.bf16.mxu0 0
    %584 = vmatmul.mubr.bf16.gmra.mrb[0].mxu0 %v341
    %v585 = vpop.f32.mrb[0].mxu0
    %v586 = vadd.f32 %v105, %v585
    %v587 = vpop.f32.mrb[0].mxu0
    %v588 = vadd.f32 %v109, %v587
    %v589 = vpop.f32.mrb[0].mxu0
    %v590 = vadd.f32 %v105, %v589
    %v591 = vpop.f32.mrb[0].mxu0
    %v592 = vadd.f32 %v109, %v591
    %593 = vmatprep.mubr.bf16.mxu0 0
    %594 = vmatmul.mubr.bf16.gmra.mrb[0].mxu0 %v344
    %v595 = vpop.f32.mrb[0].mxu0
    %v596 = vadd.f32 %v105, %v595
    %v597 = vpop.f32.mrb[0].mxu0
    %v598 = vadd.f32 %v109, %v597
    %v599 = vpop.f32.mrb[0].mxu0
    %v600 = vadd.f32 %v105, %v599
    %v601 = vpop.f32.mrb[0].mxu0
    %v602 = vadd.f32 %v109, %v601
    %603 = vmatprep.mubr.bf16.mxu0 0
    %604 = vmatmul.mubr.bf16.gmra.mrb[0].mxu0 %v347
    %v605 = vpop.f32.mrb[0].mxu0
    %v606 = vadd.f32 %v105, %v605
    %v607 = vpop.f32.mrb[0].mxu0
    %v608 = vadd.f32 %v109, %v607
    %v609 = vpop.f32.mrb[0].mxu0
    %v610 = vadd.f32 %v105, %v609
    %v611 = vpop.f32.mrb[0].mxu0
    %v612 = vadd.f32 %v109, %v611
    %613 = vmatprep.mubr.bf16.mxu0 0
    %614 = vmatmul.mubr.bf16.gmra.mrb[0].mxu0 %v350
    %v615 = vpop.f32.mrb[0].mxu0
    %v616 = vadd.f32 %v105, %v615
    %v617 = vpop.f32.mrb[0].mxu0
    %v618 = vadd.f32 %v109, %v617
    %v619 = vpop.f32.mrb[0].mxu0
    %v620 = vadd.f32 %v105, %v619
    %v621 = vpop.f32.mrb[0].mxu0
    %v622 = vadd.f32 %v109, %v621
    %623 = vmatprep.mubr.bf16.mxu0 0
    %624 = vmatmul.mubr.bf16.gmra.mrb[0].mxu0 %v353
    %v625 = vpop.f32.mrb[0].mxu0
    %v626 = vadd.f32 %v105, %v625
    %v627 = vpop.f32.mrb[0].mxu0
    %v628 = vadd.f32 %v109, %v627
    %v629 = vpop.f32.mrb[0].mxu0
    %v630 = vadd.f32 %v105, %v629
    %v631 = vpop.f32.mrb[0].mxu0
    %v632 = vadd.f32 %v109, %v631
    %633 = vmatprep.mubr.bf16.mxu0 0
    %634 = vmatmul.mubr.bf16.gmra.mrb[0].mxu0 %v356
    %v635 = vpop.f32.mrb[0].mxu0
    %v636 = vadd.f32 %v105, %v635
    %v637 = vpop.f32.mrb[0].mxu0
    %v638 = vadd.f32 %v109, %v637
    %v639 = vpop.f32.mrb[0].mxu0
    %v640 = vadd.f32 %v105, %v639
    %v641 = vpop.f32.mrb[0].mxu0
    %v642 = vadd.f32 %v109, %v641
    %643 = vmatprep.mubr.bf16.mxu0 0
    %644 = vmatmul.mubr.bf16.gmra.mrb[0].mxu0 %v359
    %v645 = vpop.f32.mrb[0].mxu0
    %v646 = vadd.f32 %v105, %v645
    %v647 = vpop.f32.mrb[0].mxu0
    %v648 = vadd.f32 %v109, %v647
    %v649 = vpop.f32.mrb[0].mxu0
    %v650 = vadd.f32 %v105, %v649
    %v651 = vpop.f32.mrb[0].mxu0
    %v652 = vadd.f32 %v109, %v651
    %653 = vmatprep.mubr.bf16.mxu0 0
    %654 = vmatmul.mubr.bf16.gmra.mrb[0].mxu0 %v362
    %v655 = vpop.f32.mrb[0].mxu0
    %v656 = vadd.f32 %v105, %v655
    %v657 = vpop.f32.mrb[0].mxu0
    %v658 = vadd.f32 %v109, %v657
    %v659 = vpop.f32.mrb[0].mxu0
    %v660 = vadd.f32 %v105, %v659
    %v661 = vpop.f32.mrb[0].mxu0
    %v662 = vadd.f32 %v109, %v661
    %663 = vmatprep.mubr.bf16.mxu0 0
    %664 = vmatmul.mubr.bf16.gmra.mrb[0].mxu0 %v365
    %v665 = vpop.f32.mrb[0].mxu0
    %v666 = vadd.f32 %v105, %v665
    %v667 = vpop.f32.mrb[0].mxu0
    %v668 = vadd.f32 %v109, %v667
    %v669 = vpop.f32.mrb[0].mxu0
    %v670 = vadd.f32 %v105, %v669
    %v671 = vpop.f32.mrb[0].mxu0
    %v672 = vadd.f32 %v109, %v671
    %673 = vmatprep.mubr.bf16.mxu0 0
    %674 = vmatmul.mubr.bf16.gmra.mrb[0].mxu0 %v368
    %v675 = vpop.f32.mrb[0].mxu0
    %v676 = vadd.f32 %v105, %v675
    %v677 = vpop.f32.mrb[0].mxu0
    %v678 = vadd.f32 %v109, %v677
    %v679 = vpop.f32.mrb[0].mxu0
    %v680 = vadd.f32 %v105, %v679
    %v681 = vpop.f32.mrb[0].mxu0
    %v682 = vadd.f32 %v109, %v681
    %683 = vmatprep.mubr.bf16.mxu0 0
    %684 = vmatmul.mubr.bf16.gmra.mrb[0].mxu0 %v371
    %v685 = vpop.f32.mrb[0].mxu0
    %v686 = vadd.f32 %v105, %v685
    %v687 = vpop.f32.mrb[0].mxu0
    %v688 = vadd.f32 %v109, %v687
    %v689 = vpop.f32.mrb[0].mxu0
    %v690 = vadd.f32 %v105, %v689
    %v691 = vpop.f32.mrb[0].mxu0
    %v692 = vadd.f32 %v109, %v691
    %693 = vmatprep.mubr.bf16.mxu0 0
    %694 = vmatmul.mubr.bf16.gmra.mrb[0].mxu0 %v374
    %v695 = vpop.f32.mrb[0].mxu0
    %v696 = vadd.f32 %v105, %v695
    %v697 = vpop.f32.mrb[0].mxu0
    %v698 = vadd.f32 %v109, %v697
    %v699 = vpop.f32.mrb[0].mxu0
    %v700 = vadd.f32 %v105, %v699
    %v701 = vpop.f32.mrb[0].mxu0
    %v702 = vadd.f32 %v109, %v701
    %703 = vmatprep.mubr.bf16.mxu0 0
    %704 = vmatmul.mubr.bf16.gmra.mrb[0].mxu0 %v377
    %v705 = vpop.f32.mrb[0].mxu0
    %v706 = vadd.f32 %v105, %v705
    %v707 = vpop.f32.mrb[0].mxu0
    %v708 = vadd.f32 %v109, %v707
    %v709 = vpop.f32.mrb[0].mxu0
    %v710 = vadd.f32 %v105, %v709
    %v711 = vpop.f32.mrb[0].mxu0
    %v712 = vadd.f32 %v109, %v711
    %713 = vmatprep.mubr.bf16.mxu0 0
    %714 = vmatmul.mubr.bf16.gmra.mrb[0].mxu0 %v380
    %v715 = vpop.f32.mrb[0].mxu0
    %v716 = vadd.f32 %v105, %v715
    %v717 = vpop.f32.mrb[0].mxu0
    %v718 = vadd.f32 %v109, %v717
    %v719 = vpop.f32.mrb[0].mxu0
    %v720 = vadd.f32 %v105, %v719
    %v721 = vpop.f32.mrb[0].mxu0
    %v722 = vadd.f32 %v109, %v721
    %723 = vmatprep.mubr.bf16.mxu0 0
    %724 = vmatmul.mubr.bf16.gmra.mrb[0].mxu0 %v383
    %v725 = vpop.f32.mrb[0].mxu0
    %v726 = vadd.f32 %v105, %v725
    %v727 = vpop.f32.mrb[0].mxu0
    %v728 = vadd.f32 %v109, %v727
    %v729 = vpop.f32.mrb[0].mxu0
    %v730 = vadd.f32 %v105, %v729
    %v731 = vpop.f32.mrb[0].mxu0
    %v732 = vadd.f32 %v109, %v731
    %733 = vmatprep.mubr.bf16.mxu0 0
    %734 = vmatmul.mubr.bf16.gmra.mrb[0].mxu0 %v386
    %v735 = vpop.f32.mrb[0].mxu0
    %v736 = vadd.f32 %v105, %v735
    %v737 = vpop.f32.mrb[0].mxu0
    %v738 = vadd.f32 %v109, %v737
    %v739 = vpop.f32.mrb[0].mxu0
    %v740 = vadd.f32 %v105, %v739
    %v741 = vpop.f32.mrb[0].mxu0
    %v742 = vadd.f32 %v109, %v741
    %743 = vmatprep.mubr.bf16.mxu0 0
    %744 = vmatmul.mubr.bf16.gmra.mrb[0].mxu0 %v389
    %v745 = vpop.f32.mrb[0].mxu0
    %v746 = vadd.f32 %v105, %v745
    %v747 = vpop.f32.mrb[0].mxu0
    %v748 = vadd.f32 %v109, %v747
    %v749 = vpop.f32.mrb[0].mxu0
    %v750 = vadd.f32 %v105, %v749
    %v751 = vpop.f32.mrb[0].mxu0
    %v752 = vadd.f32 %v109, %v751
    %753 = vdwg.mxu0
    %754 = vmatprep.subr.bf16.mxu0 0
    %755 = vmatpush1.bf16.msra.mxu0 %v399
    %756 = vmatprep.subr.bf16.mxu0 0
    %757 = vmatpush1.bf16.msra.mxu0 0
    %758 = vmatprep.subr.bf16.mxu0 0
    %759 = vmatpush1.bf16.msra.mxu0 0
    %760 = vmatprep.subr.bf16.mxu0 0
    %761 = vmatpush1.bf16.msra.mxu0 0
    %762 = vmatprep.subr.bf16.mxu0 0
    %763 = vmatpush1.bf16.msra.mxu0 0
    %764 = vmatprep.subr.bf16.mxu0 0
    %765 = vmatpush1.bf16.msra.mxu0 0
    %766 = vmatprep.subr.bf16.mxu0 0
    %767 = vmatpush1.bf16.msra.mxu0 0
    %768 = vmatprep.subr.bf16.mxu0 0
    %769 = vmatpush1.bf16.msra.mxu0 0
    %770 = vmatprep.subr.bf16.mxu0 0
    %771 = vmatpush1.bf16.msra.mxu0 0
    %772 = vmatprep.subr.bf16.mxu0 0
    %773 = vmatpush1.bf16.msra.mxu0 0
    %774 = vmatprep.subr.bf16.mxu0 0
    %775 = vmatpush1.bf16.msra.mxu0 0
    %776 = vmatprep.subr.bf16.mxu0 0
    %777 = vmatpush1.bf16.msra.mxu0 0
    %778 = vmatprep.subr.bf16.mxu0 0
    %779 = vmatpush1.bf16.msra.mxu0 0
    %780 = vmatprep.subr.bf16.mxu0 0
    %781 = vmatpush1.bf16.msra.mxu0 0
    %782 = vmatprep.subr.bf16.mxu0 0
    %783 = vmatpush1.bf16.msra.mxu0 0
    %784 = vmatprep.subr.bf16.mxu0 0
    %785 = vmatpush1.bf16.msra.mxu0 0
    %786 = vmatprep.mubr.bf16.mxu0 0
    %787 = vmatmul.mubr.bf16.gmra.mrb[0].mxu0 %v296
    %v788 = vpop.f32.mrb[0].mxu0
    %v789 = vadd.f32 %v113, %v788
    %v790 = vpop.f32.mrb[0].mxu0
    %v791 = vpop.f32.mrb[0].mxu0
    %v792 = vadd.f32 %v113, %v791
    %v793 = vpop.f32.mrb[0].mxu0
    %794 = vmatprep.mubr.bf16.mxu0 0
    %795 = vmatmul.mubr.bf16.gmra.mrb[0].mxu0 %v299
    %v796 = vpop.f32.mrb[0].mxu0
    %v797 = vadd.f32 %v113, %v796
    %v798 = vpop.f32.mrb[0].mxu0
    %v799 = vpop.f32.mrb[0].mxu0
    %v800 = vadd.f32 %v113, %v799
    %v801 = vpop.f32.mrb[0].mxu0
    %802 = vmatprep.mubr.bf16.mxu0 0
    %803 = vmatmul.mubr.bf16.gmra.mrb[0].mxu0 %v302
    %v804 = vpop.f32.mrb[0].mxu0
    %v805 = vadd.f32 %v113, %v804
    %v806 = vpop.f32.mrb[0].mxu0
    %v807 = vpop.f32.mrb[0].mxu0
    %v808 = vadd.f32 %v113, %v807
    %v809 = vpop.f32.mrb[0].mxu0
    %810 = vmatprep.mubr.bf16.mxu0 0
    %811 = vmatmul.mubr.bf16.gmra.mrb[0].mxu0 %v305
    %v812 = vpop.f32.mrb[0].mxu0
    %v813 = vadd.f32 %v113, %v812
    %v814 = vpop.f32.mrb[0].mxu0
    %v815 = vpop.f32.mrb[0].mxu0
    %v816 = vadd.f32 %v113, %v815
    %v817 = vpop.f32.mrb[0].mxu0
    %818 = vmatprep.mubr.bf16.mxu0 0
    %819 = vmatmul.mubr.bf16.gmra.mrb[0].mxu0 %v308
    %v820 = vpop.f32.mrb[0].mxu0
    %v821 = vadd.f32 %v113, %v820
    %v822 = vpop.f32.mrb[0].mxu0
    %v823 = vpop.f32.mrb[0].mxu0
    %v824 = vadd.f32 %v113, %v823
    %v825 = vpop.f32.mrb[0].mxu0
    %826 = vmatprep.mubr.bf16.mxu0 0
    %827 = vmatmul.mubr.bf16.gmra.mrb[0].mxu0 %v311
    %v828 = vpop.f32.mrb[0].mxu0
    %v829 = vadd.f32 %v113, %v828
    %v830 = vpop.f32.mrb[0].mxu0
    %v831 = vpop.f32.mrb[0].mxu0
    %v832 = vadd.f32 %v113, %v831
    %v833 = vpop.f32.mrb[0].mxu0
    %834 = vmatprep.mubr.bf16.mxu0 0
    %835 = vmatmul.mubr.bf16.gmra.mrb[0].mxu0 %v314
    %v836 = vpop.f32.mrb[0].mxu0
    %v837 = vadd.f32 %v113, %v836
    %v838 = vpop.f32.mrb[0].mxu0
    %v839 = vpop.f32.mrb[0].mxu0
    %v840 = vadd.f32 %v113, %v839
    %v841 = vpop.f32.mrb[0].mxu0
    %842 = vmatprep.mubr.bf16.mxu0 0
    %843 = vmatmul.mubr.bf16.gmra.mrb[0].mxu0 %v317
    %v844 = vpop.f32.mrb[0].mxu0
    %v845 = vadd.f32 %v113, %v844
    %v846 = vpop.f32.mrb[0].mxu0
    %v847 = vpop.f32.mrb[0].mxu0
    %v848 = vadd.f32 %v113, %v847
    %v849 = vpop.f32.mrb[0].mxu0
    %850 = vmatprep.mubr.bf16.mxu0 0
    %851 = vmatmul.mubr.bf16.gmra.mrb[0].mxu0 %v320
    %v852 = vpop.f32.mrb[0].mxu0
    %v853 = vadd.f32 %v113, %v852
    %v854 = vpop.f32.mrb[0].mxu0
    %v855 = vpop.f32.mrb[0].mxu0
    %v856 = vadd.f32 %v113, %v855
    %v857 = vpop.f32.mrb[0].mxu0
    %858 = vmatprep.mubr.bf16.mxu0 0
    %859 = vmatmul.mubr.bf16.gmra.mrb[0].mxu0 %v323
    %v860 = vpop.f32.mrb[0].mxu0
    %v861 = vadd.f32 %v113, %v860
    %v862 = vpop.f32.mrb[0].mxu0
    %v863 = vpop.f32.mrb[0].mxu0
    %v864 = vadd.f32 %v113, %v863
    %v865 = vpop.f32.mrb[0].mxu0
    %866 = vmatprep.mubr.bf16.mxu0 0
    %867 = vmatmul.mubr.bf16.gmra.mrb[0].mxu0 %v326
    %v868 = vpop.f32.mrb[0].mxu0
    %v869 = vadd.f32 %v113, %v868
    %v870 = vpop.f32.mrb[0].mxu0
    %v871 = vpop.f32.mrb[0].mxu0
    %v872 = vadd.f32 %v113, %v871
    %v873 = vpop.f32.mrb[0].mxu0
    %874 = vmatprep.mubr.bf16.mxu0 0
    %875 = vmatmul.mubr.bf16.gmra.mrb[0].mxu0 %v329
    %v876 = vpop.f32.mrb[0].mxu0
    %v877 = vadd.f32 %v113, %v876
    %v878 = vpop.f32.mrb[0].mxu0
    %v879 = vpop.f32.mrb[0].mxu0
    %v880 = vadd.f32 %v113, %v879
    %v881 = vpop.f32.mrb[0].mxu0
    %882 = vmatprep.mubr.bf16.mxu0 0
    %883 = vmatmul.mubr.bf16.gmra.mrb[0].mxu0 %v332
    %v884 = vpop.f32.mrb[0].mxu0
    %v885 = vadd.f32 %v113, %v884
    %v886 = vpop.f32.mrb[0].mxu0
    %v887 = vpop.f32.mrb[0].mxu0
    %v888 = vadd.f32 %v113, %v887
    %v889 = vpop.f32.mrb[0].mxu0
    %890 = vmatprep.mubr.bf16.mxu0 0
    %891 = vmatmul.mubr.bf16.gmra.mrb[0].mxu0 %v335
    %v892 = vpop.f32.mrb[0].mxu0
    %v893 = vadd.f32 %v113, %v892
    %v894 = vpop.f32.mrb[0].mxu0
    %v895 = vpop.f32.mrb[0].mxu0
    %v896 = vadd.f32 %v113, %v895
    %v897 = vpop.f32.mrb[0].mxu0
    %898 = vmatprep.mubr.bf16.mxu0 0
    %899 = vmatmul.mubr.bf16.gmra.mrb[0].mxu0 %v338
    %v900 = vpop.f32.mrb[0].mxu0
    %v901 = vadd.f32 %v113, %v900
    %v902 = vpop.f32.mrb[0].mxu0
    %v903 = vpop.f32.mrb[0].mxu0
    %v904 = vadd.f32 %v113, %v903
    %v905 = vpop.f32.mrb[0].mxu0
    %906 = vmatprep.mubr.bf16.mxu0 0
    %907 = vmatmul.mubr.bf16.gmra.mrb[0].mxu0 %v341
    %v908 = vpop.f32.mrb[0].mxu0
    %v909 = vadd.f32 %v113, %v908
    %v910 = vpop.f32.mrb[0].mxu0
    %v911 = vpop.f32.mrb[0].mxu0
    %v912 = vadd.f32 %v113, %v911
    %v913 = vpop.f32.mrb[0].mxu0
    %914 = vmatprep.mubr.bf16.mxu0 0
    %915 = vmatmul.mubr.bf16.gmra.mrb[0].mxu0 %v344
    %v916 = vpop.f32.mrb[0].mxu0
    %v917 = vadd.f32 %v113, %v916
    %v918 = vpop.f32.mrb[0].mxu0
    %v919 = vpop.f32.mrb[0].mxu0
    %v920 = vadd.f32 %v113, %v919
    %v921 = vpop.f32.mrb[0].mxu0
    %922 = vmatprep.mubr.bf16.mxu0 0
    %923 = vmatmul.mubr.bf16.gmra.mrb[0].mxu0 %v347
    %v924 = vpop.f32.mrb[0].mxu0
    %v925 = vadd.f32 %v113, %v924
    %v926 = vpop.f32.mrb[0].mxu0
    %v927 = vpop.f32.mrb[0].mxu0
    %v928 = vadd.f32 %v113, %v927
    %v929 = vpop.f32.mrb[0].mxu0
    %930 = vmatprep.mubr.bf16.mxu0 0
    %931 = vmatmul.mubr.bf16.gmra.mrb[0].mxu0 %v350
    %v932 = vpop.f32.mrb[0].mxu0
    %v933 = vadd.f32 %v113, %v932
    %v934 = vpop.f32.mrb[0].mxu0
    %v935 = vpop.f32.mrb[0].mxu0
    %v936 = vadd.f32 %v113, %v935
    %v937 = vpop.f32.mrb[0].mxu0
    %938 = vmatprep.mubr.bf16.mxu0 0
    %939 = vmatmul.mubr.bf16.gmra.mrb[0].mxu0 %v353
    %v940 = vpop.f32.mrb[0].mxu0
    %v941 = vadd.f32 %v113, %v940
    %v942 = vpop.f32.mrb[0].mxu0
    %v943 = vpop.f32.mrb[0].mxu0
    %v944 = vadd.f32 %v113, %v943
    %v945 = vpop.f32.mrb[0].mxu0
    %946 = vmatprep.mubr.bf16.mxu0 0
    %947 = vmatmul.mubr.bf16.gmra.mrb[0].mxu0 %v356
    %v948 = vpop.f32.mrb[0].mxu0
    %v949 = vadd.f32 %v113, %v948
    %v950 = vpop.f32.mrb[0].mxu0
    %v951 = vpop.f32.mrb[0].mxu0
    %v952 = vadd.f32 %v113, %v951
    %v953 = vpop.f32.mrb[0].mxu0
    %954 = vmatprep.mubr.bf16.mxu0 0
    %955 = vmatmul.mubr.bf16.gmra.mrb[0].mxu0 %v359
    %v956 = vpop.f32.mrb[0].mxu0
    %v957 = vadd.f32 %v113, %v956
    %v958 = vpop.f32.mrb[0].mxu0
    %v959 = vpop.f32.mrb[0].mxu0
    %v960 = vadd.f32 %v113, %v959
    %v961 = vpop.f32.mrb[0].mxu0
    %962 = vmatprep.mubr.bf16.mxu0 0
    %963 = vmatmul.mubr.bf16.gmra.mrb[0].mxu0 %v362
    %v964 = vpop.f32.mrb[0].mxu0
    %v965 = vadd.f32 %v113, %v964
    %v966 = vpop.f32.mrb[0].mxu0
    %v967 = vpop.f32.mrb[0].mxu0
    %v968 = vadd.f32 %v113, %v967
    %v969 = vpop.f32.mrb[0].mxu0
    %970 = vmatprep.mubr.bf16.mxu0 0
    %971 = vmatmul.mubr.bf16.gmra.mrb[0].mxu0 %v365
    %v972 = vpop.f32.mrb[0].mxu0
    %v973 = vadd.f32 %v113, %v972
    %v974 = vpop.f32.mrb[0].mxu0
    %v975 = vpop.f32.mrb[0].mxu0
    %v976 = vadd.f32 %v113, %v975
    %v977 = vpop.f32.mrb[0].mxu0
    %978 = vmatprep.mubr.bf16.mxu0 0
    %979 = vmatmul.mubr.bf16.gmra.mrb[0].mxu0 %v368
    %v980 = vpop.f32.mrb[0].mxu0
    %v981 = vadd.f32 %v113, %v980
    %v982 = vpop.f32.mrb[0].mxu0
    %v983 = vpop.f32.mrb[0].mxu0
    %v984 = vadd.f32 %v113, %v983
    %v985 = vpop.f32.mrb[0].mxu0
    %986 = vmatprep.mubr.bf16.mxu0 0
    %987 = vmatmul.mubr.bf16.gmra.mrb[0].mxu0 %v371
    %v988 = vpop.f32.mrb[0].mxu0
    %v989 = vadd.f32 %v113, %v988
    %v990 = vpop.f32.mrb[0].mxu0
    %v991 = vpop.f32.mrb[0].mxu0
    %v992 = vadd.f32 %v113, %v991
    %v993 = vpop.f32.mrb[0].mxu0
    %994 = vmatprep.mubr.bf16.mxu0 0
    %995 = vmatmul.mubr.bf16.gmra.mrb[0].mxu0 %v374
    %v996 = vpop.f32.mrb[0].mxu0
    %v997 = vadd.f32 %v113, %v996
    %v998 = vpop.f32.mrb[0].mxu0
    %v999 = vpop.f32.mrb[0].mxu0
    %v1000 = vadd.f32 %v113, %v999
    %v1001 = vpop.f32.mrb[0].mxu0
    %1002 = vmatprep.mubr.bf16.mxu0 0
    %1003 = vmatmul.mubr.bf16.gmra.mrb[0].mxu0 %v377
    %v1004 = vpop.f32.mrb[0].mxu0
    %v1005 = vadd.f32 %v113, %v1004
    %v1006 = vpop.f32.mrb[0].mxu0
    %v1007 = vpop.f32.mrb[0].mxu0
    %v1008 = vadd.f32 %v113, %v1007
    %v1009 = vpop.f32.mrb[0].mxu0
    %1010 = vmatprep.mubr.bf16.mxu0 0
    %1011 = vmatmul.mubr.bf16.gmra.mrb[0].mxu0 %v380
    %v1012 = vpop.f32.mrb[0].mxu0
    %v1013 = vadd.f32 %v113, %v1012
    %v1014 = vpop.f32.mrb[0].mxu0
    %v1015 = vpop.f32.mrb[0].mxu0
    %v1016 = vadd.f32 %v113, %v1015
    %v1017 = vpop.f32.mrb[0].mxu0
    %1018 = vmatprep.mubr.bf16.mxu0 0
    %1019 = vmatmul.mubr.bf16.gmra.mrb[0].mxu0 %v383
    %v1020 = vpop.f32.mrb[0].mxu0
    %v1021 = vadd.f32 %v113, %v1020
    %v1022 = vpop.f32.mrb[0].mxu0
    %v1023 = vpop.f32.mrb[0].mxu0
    %v1024 = vadd.f32 %v113, %v1023
    %v1025 = vpop.f32.mrb[0].mxu0
    %1026 = vmatprep.mubr.bf16.mxu0 0
    %1027 = vmatmul.mubr.bf16.gmra.mrb[0].mxu0 %v386
    %v1028 = vpop.f32.mrb[0].mxu0
    %v1029 = vadd.f32 %v113, %v1028
    %v1030 = vpop.f32.mrb[0].mxu0
    %v1031 = vpop.f32.mrb[0].mxu0
    %v1032 = vadd.f32 %v113, %v1031
    %v1033 = vpop.f32.mrb[0].mxu0
    %1034 = vmatprep.mubr.bf16.mxu0 0
    %1035 = vmatmul.mubr.bf16.gmra.mrb[0].mxu0 %v389
    %v1036 = vpop.f32.mrb[0].mxu0
    %v1037 = vadd.f32 %v113, %v1036
    %v1038 = vpop.f32.mrb[0].mxu0
    %v1039 = vpop.f32.mrb[0].mxu0
    %v1040 = vadd.f32 %v113, %v1039
    %v1041 = vpop.f32.mrb[0].mxu0
    %1042 = vdwg.mxu0
    %v1043 = vmax.f32 %v436, 0.0
    %v1044 = vmax.f32 %v438, 0.0
    %v1045 = vmax.f32 %v789, 0.0
    %v1046 = vmax.f32 %v440, 0.0
    %v1047 = vmax.f32 %v442, 0.0
    %v1048 = vmax.f32 %v792, 0.0
    %v1049 = vmax.f32 %v446, 0.0
    %v1050 = vmax.f32 %v448, 0.0
    %v1051 = vmax.f32 %v797, 0.0
    %v1052 = vmax.f32 %v450, 0.0
    %v1053 = vmax.f32 %v452, 0.0
    %v1054 = vmax.f32 %v800, 0.0
    %v1055 = vmax.f32 %v456, 0.0
    %v1056 = vmax.f32 %v458, 0.0
    %v1057 = vmax.f32 %v805, 0.0
    %v1058 = vmax.f32 %v460, 0.0
    %v1059 = vmax.f32 %v462, 0.0
    %v1060 = vmax.f32 %v808, 0.0
    %v1061 = vmax.f32 %v466, 0.0
    %v1062 = vmax.f32 %v468, 0.0
    %v1063 = vmax.f32 %v813, 0.0
    %v1064 = vmax.f32 %v470, 0.0
    %v1065 = vmax.f32 %v472, 0.0
    %v1066 = vmax.f32 %v816, 0.0
    %v1067 = vmax.f32 %v476, 0.0
    %v1068 = vmax.f32 %v478, 0.0
    %v1069 = vmax.f32 %v821, 0.0
    %v1070 = vmax.f32 %v480, 0.0
    %v1071 = vmax.f32 %v482, 0.0
    %v1072 = vmax.f32 %v824, 0.0
    %v1073 = vmax.f32 %v486, 0.0
    %v1074 = vmax.f32 %v488, 0.0
    %v1075 = vmax.f32 %v829, 0.0
    %v1076 = vmax.f32 %v490, 0.0
    %v1077 = vmax.f32 %v492, 0.0
    %v1078 = vmax.f32 %v832, 0.0
    %v1079 = vmax.f32 %v496, 0.0
    %v1080 = vmax.f32 %v498, 0.0
    %v1081 = vmax.f32 %v837, 0.0
    %v1082 = vmax.f32 %v500, 0.0
    %v1083 = vmax.f32 %v502, 0.0
    %v1084 = vmax.f32 %v840, 0.0
    %v1085 = vmax.f32 %v506, 0.0
    %v1086 = vmax.f32 %v508, 0.0
    %v1087 = vmax.f32 %v845, 0.0
    %v1088 = vmax.f32 %v510, 0.0
    %v1089 = vmax.f32 %v512, 0.0
    %v1090 = vmax.f32 %v848, 0.0
    %v1091 = vmax.f32 %v516, 0.0
    %v1092 = vmax.f32 %v518, 0.0
    %v1093 = vmax.f32 %v853, 0.0
    %v1094 = vmax.f32 %v520, 0.0
    %v1095 = vmax.f32 %v522, 0.0
    %v1096 = vmax.f32 %v856, 0.0
    %v1097 = vmax.f32 %v526, 0.0
    %v1098 = vmax.f32 %v528, 0.0
    %v1099 = vmax.f32 %v861, 0.0
    %v1100 = vmax.f32 %v530, 0.0
    %v1101 = vmax.f32 %v532, 0.0
    %v1102 = vmax.f32 %v864, 0.0
    %v1103 = vmax.f32 %v536, 0.0
    %v1104 = vmax.f32 %v538, 0.0
    %v1105 = vmax.f32 %v869, 0.0
    %v1106 = vmax.f32 %v540, 0.0
    %v1107 = vmax.f32 %v542, 0.0
    %v1108 = vmax.f32 %v872, 0.0
    %v1109 = vmax.f32 %v546, 0.0
    %v1110 = vmax.f32 %v548, 0.0
    %v1111 = vmax.f32 %v877, 0.0
    %v1112 = vmax.f32 %v550, 0.0
    %v1113 = vmax.f32 %v552, 0.0
    %v1114 = vmax.f32 %v880, 0.0
    %v1115 = vmax.f32 %v556, 0.0
    %v1116 = vmax.f32 %v558, 0.0
    %v1117 = vmax.f32 %v885, 0.0
    %v1118 = vmax.f32 %v560, 0.0
    %v1119 = vmax.f32 %v562, 0.0
    %v1120 = vmax.f32 %v888, 0.0
    %v1121 = vmax.f32 %v566, 0.0
    %v1122 = vmax.f32 %v568, 0.0
    %v1123 = vmax.f32 %v893, 0.0
    %v1124 = vmax.f32 %v570, 0.0
    %v1125 = vmax.f32 %v572, 0.0
    %v1126 = vmax.f32 %v896, 0.0
    %v1127 = vmax.f32 %v576, 0.0
    %v1128 = vmax.f32 %v578, 0.0
    %v1129 = vmax.f32 %v901, 0.0
    %v1130 = vmax.f32 %v580, 0.0
    %v1131 = vmax.f32 %v582, 0.0
    %v1132 = vmax.f32 %v904, 0.0
    %v1133 = vmax.f32 %v586, 0.0
    %v1134 = vmax.f32 %v588, 0.0
    %v1135 = vmax.f32 %v909, 0.0
    %v1136 = vmax.f32 %v590, 0.0
    %v1137 = vmax.f32 %v592, 0.0
    %v1138 = vmax.f32 %v912, 0.0
    %v1139 = vmax.f32 %v596, 0.0
    %v1140 = vmax.f32 %v598, 0.0
    %v1141 = vmax.f32 %v917, 0.0
    %v1142 = vmax.f32 %v600, 0.0
    %v1143 = vmax.f32 %v602, 0.0
    %v1144 = vmax.f32 %v920, 0.0
    %v1145 = vmax.f32 %v606, 0.0
    %v1146 = vmax.f32 %v608, 0.0
    %v1147 = vmax.f32 %v925, 0.0
    %v1148 = vmax.f32 %v610, 0.0
    %v1149 = vmax.f32 %v612, 0.0
    %v1150 = vmax.f32 %v928, 0.0
    %v1151 = vmax.f32 %v616, 0.0
    %v1152 = vmax.f32 %v618, 0.0
    %v1153 = vmax.f32 %v933, 0.0
    %v1154 = vmax.f32 %v620, 0.0
    %v1155 = vmax.f32 %v622, 0.0
    %v1156 = vmax.f32 %v936, 0.0
    %v1157 = vmax.f32 %v626, 0.0
    %v1158 = vmax.f32 %v628, 0.0
    %v1159 = vmax.f32 %v941, 0.0
    %v1160 = vmax.f32 %v630, 0.0
    %v1161 = vmax.f32 %v632, 0.0
    %v1162 = vmax.f32 %v944, 0.0
    %v1163 = vmax.f32 %v636, 0.0
    %v1164 = vmax.f32 %v638, 0.0
    %v1165 = vmax.f32 %v949, 0.0
    %v1166 = vmax.f32 %v640, 0.0
    %v1167 = vmax.f32 %v642, 0.0
    %v1168 = vmax.f32 %v952, 0.0
    %v1169 = vmax.f32 %v646, 0.0
    %v1170 = vmax.f32 %v648, 0.0
    %v1171 = vmax.f32 %v957, 0.0
    %v1172 = vmax.f32 %v650, 0.0
    %v1173 = vmax.f32 %v652, 0.0
    %v1174 = vmax.f32 %v960, 0.0
    %v1175 = vmax.f32 %v656, 0.0
    %v1176 = vmax.f32 %v658, 0.0
    %v1177 = vmax.f32 %v965, 0.0
    %v1178 = vmax.f32 %v660, 0.0
    %v1179 = vmax.f32 %v662, 0.0
    %v1180 = vmax.f32 %v968, 0.0
    %v1181 = vmax.f32 %v666, 0.0
    %v1182 = vmax.f32 %v668, 0.0
    %v1183 = vmax.f32 %v973, 0.0
    %v1184 = vmax.f32 %v670, 0.0
    %v1185 = vmax.f32 %v672, 0.0
    %v1186 = vmax.f32 %v976, 0.0
    %v1187 = vmax.f32 %v676, 0.0
    %v1188 = vmax.f32 %v678, 0.0
    %v1189 = vmax.f32 %v981, 0.0
    %v1190 = vmax.f32 %v680, 0.0
    %v1191 = vmax.f32 %v682, 0.0
    %v1192 = vmax.f32 %v984, 0.0
    %v1193 = vmax.f32 %v686, 0.0
    %v1194 = vmax.f32 %v688, 0.0
    %v1195 = vmax.f32 %v989, 0.0
    %v1196 = vmax.f32 %v690, 0.0
    %v1197 = vmax.f32 %v692, 0.0
    %v1198 = vmax.f32 %v992, 0.0
    %v1199 = vmax.f32 %v696, 0.0
    %v1200 = vmax.f32 %v698, 0.0
    %v1201 = vmax.f32 %v997, 0.0
    %v1202 = vmax.f32 %v700, 0.0
    %v1203 = vmax.f32 %v702, 0.0
    %v1204 = vmax.f32 %v1000, 0.0
    %v1205 = vmax.f32 %v706, 0.0
    %v1206 = vmax.f32 %v708, 0.0
    %v1207 = vmax.f32 %v1005, 0.0
    %v1208 = vmax.f32 %v710, 0.0
    %v1209 = vmax.f32 %v712, 0.0
    %v1210 = vmax.f32 %v1008, 0.0
    %v1211 = vmax.f32 %v716, 0.0
    %v1212 = vmax.f32 %v718, 0.0
    %v1213 = vmax.f32 %v1013, 0.0
    %v1214 = vmax.f32 %v720, 0.0
    %v1215 = vmax.f32 %v722, 0.0
    %v1216 = vmax.f32 %v1016, 0.0
    %v1217 = vmax.f32 %v726, 0.0
    %v1218 = vmax.f32 %v728, 0.0
    %v1219 = vmax.f32 %v1021, 0.0
    %v1220 = vmax.f32 %v730, 0.0
    %v1221 = vmax.f32 %v732, 0.0
    %v1222 = vmax.f32 %v1024, 0.0
    %v1223 = vmax.f32 %v736, 0.0
    %v1224 = vmax.f32 %v738, 0.0
    %v1225 = vmax.f32 %v1029, 0.0
    %v1226 = vmax.f32 %v740, 0.0
    %v1227 = vmax.f32 %v742, 0.0
    %v1228 = vmax.f32 %v1032, 0.0
    %v1229 = vmax.f32 %v746, 0.0
    %v1230 = vmax.f32 %v748, 0.0
    %v1231 = vmax.f32 %v1037, 0.0
    %v1232 = vmax.f32 %v750, 0.0
    %v1233 = vmax.f32 %v752, 0.0
    %v1234 = vmax.f32 %v1040, 0.0
    %v1235 = vpack.c.bf16 %v1046, %v1043
    %v1236 = vpack.c.bf16 %v1052, %v1049
    %v1237 = vpack.c.bf16 %v1058, %v1055
    %v1238 = vpack.c.bf16 %v1064, %v1061
    %v1239 = vpack.c.bf16 %v1070, %v1067
    %v1240 = vpack.c.bf16 %v1076, %v1073
    %v1241 = vpack.c.bf16 %v1082, %v1079
    %v1242 = vpack.c.bf16 %v1088, %v1085
    %v1243 = vpack.c.bf16 %v1094, %v1091
    %v1244 = vpack.c.bf16 %v1100, %v1097
    %v1245 = vpack.c.bf16 %v1106, %v1103
    %v1246 = vpack.c.bf16 %v1112, %v1109
    %v1247 = vpack.c.bf16 %v1118, %v1115
    %v1248 = vpack.c.bf16 %v1124, %v1121
    %v1249 = vpack.c.bf16 %v1130, %v1127
    %v1250 = vpack.c.bf16 %v1136, %v1133
    %v1251 = vpack.c.bf16 %v1142, %v1139
    %v1252 = vpack.c.bf16 %v1148, %v1145
    %v1253 = vpack.c.bf16 %v1154, %v1151
    %v1254 = vpack.c.bf16 %v1160, %v1157
    %v1255 = vpack.c.bf16 %v1166, %v1163
    %v1256 = vpack.c.bf16 %v1172, %v1169
    %v1257 = vpack.c.bf16 %v1178, %v1175
    %v1258 = vpack.c.bf16 %v1184, %v1181
    %v1259 = vpack.c.bf16 %v1190, %v1187
    %v1260 = vpack.c.bf16 %v1196, %v1193
    %v1261 = vpack.c.bf16 %v1202, %v1199
    %v1262 = vpack.c.bf16 %v1208, %v1205
    %v1263 = vpack.c.bf16 %v1214, %v1211
    %v1264 = vpack.c.bf16 %v1220, %v1217
    %v1265 = vpack.c.bf16 %v1226, %v1223
    %v1266 = vpack.c.bf16 %v1232, %v1229
    %v1267 = vpack.c.bf16 %v1047, %v1044
    %v1268 = vpack.c.bf16 %v1053, %v1050
    %v1269 = vpack.c.bf16 %v1059, %v1056
    %v1270 = vpack.c.bf16 %v1065, %v1062
    %v1271 = vpack.c.bf16 %v1071, %v1068
    %v1272 = vpack.c.bf16 %v1077, %v1074
    %v1273 = vpack.c.bf16 %v1083, %v1080
    %v1274 = vpack.c.bf16 %v1089, %v1086
    %v1275 = vpack.c.bf16 %v1095, %v1092
    %v1276 = vpack.c.bf16 %v1101, %v1098
    %v1277 = vpack.c.bf16 %v1107, %v1104
    %v1278 = vpack.c.bf16 %v1113, %v1110
    %v1279 = vpack.c.bf16 %v1119, %v1116
    %v1280 = vpack.c.bf16 %v1125, %v1122
    %v1281 = vpack.c.bf16 %v1131, %v1128
    %v1282 = vpack.c.bf16 %v1137, %v1134
    %v1283 = vpack.c.bf16 %v1143, %v1140
    %v1284 = vpack.c.bf16 %v1149, %v1146
    %v1285 = vpack.c.bf16 %v1155, %v1152
    %v1286 = vpack.c.bf16 %v1161, %v1158
    %v1287 = vpack.c.bf16 %v1167, %v1164
    %v1288 = vpack.c.bf16 %v1173, %v1170
    %v1289 = vpack.c.bf16 %v1179, %v1176
    %v1290 = vpack.c.bf16 %v1185, %v1182
    %v1291 = vpack.c.bf16 %v1191, %v1188
    %v1292 = vpack.c.bf16 %v1197, %v1194
    %v1293 = vpack.c.bf16 %v1203, %v1200
    %v1294 = vpack.c.bf16 %v1209, %v1206
    %v1295 = vpack.c.bf16 %v1215, %v1212
    %v1296 = vpack.c.bf16 %v1221, %v1218
    %v1297 = vpack.c.bf16 %v1227, %v1224
    %v1298 = vpack.c.bf16 %v1233, %v1230
    %v1299 = vld [vmem:[%s3] sm:$0xf]
    %v1300 = vld [vmem:[%s3 + $0x4] sm:$0xf]
    %v1301 = vld [vmem:[%s3 + $0x8] sm:$0xf]
    %v1302 = vld [vmem:[%s3 + $0xc] sm:$0xf]
    %v1303 = vld [vmem:[%s3 + $0x10] sm:$0xf]
    %v1304 = vld [vmem:[%s3 + $0x14] sm:$0xf]
    %v1305 = vld [vmem:[%s3 + $0x18] sm:$0xf]
    %v1306 = vld [vmem:[%s3 + $0x1c] sm:$0xf]
    %v1307 = vld [vmem:[%s3 + $0x20] sm:$0xf]
    %v1308 = vld [vmem:[%s3 + $0x24] sm:$0xf]
    %v1309 = vld [vmem:[%s3 + $0x28] sm:$0xf]
    %v1310 = vld [vmem:[%s3 + $0x2c] sm:$0xf]
    %v1311 = vld [vmem:[%s3 + $0x30] sm:$0xf]
    %v1312 = vld [vmem:[%s3 + $0x34] sm:$0xf]
    %v1313 = vld [vmem:[%s3 + $0x38] sm:$0xf]
    %v1314 = vld [vmem:[%s3 + $0x3c] sm:$0xf]
    %v1315 = vld [vmem:[%s3 + $0x40] sm:$0xf]
    %v1316 = vld [vmem:[%s3 + $0x44] sm:$0xf]
    %v1317 = vld [vmem:[%s3 + $0x48] sm:$0xf]
    %v1318 = vld [vmem:[%s3 + $0x4c] sm:$0xf]
    %v1319 = vld [vmem:[%s3 + $0x50] sm:$0xf]
    %v1320 = vld [vmem:[%s3 + $0x54] sm:$0xf]
    %v1321 = vld [vmem:[%s3 + $0x58] sm:$0xf]
    %v1322 = vld [vmem:[%s3 + $0x5c] sm:$0xf]
    %v1323 = vld [vmem:[%s3 + $0x60] sm:$0xf]
    %v1324 = vld [vmem:[%s3 + $0x64] sm:$0xf]
    %v1325 = vld [vmem:[%s3 + $0x68] sm:$0xf]
    %v1326 = vld [vmem:[%s3 + $0x6c] sm:$0xf]
    %v1327 = vld [vmem:[%s3 + $0x70] sm:$0xf]
    %v1328 = vld [vmem:[%s3 + $0x74] sm:$0xf]
    %v1329 = vld [vmem:[%s3 + $0x78] sm:$0xf]
    %v1330 = vld [vmem:[%s3 + $0x7c] sm:$0xf]
    %v1331 = vld [vmem:[%s3 + $0x80] sm:$0xf]
    %v1332 = vld [vmem:[%s3 + $0x84] sm:$0xf]
    %v1333 = vld [vmem:[%s3 + $0x88] sm:$0xf]
    %v1334 = vld [vmem:[%s3 + $0x8c] sm:$0xf]
    %v1335 = vld [vmem:[%s3 + $0x90] sm:$0xf]
    %v1336 = vld [vmem:[%s3 + $0x94] sm:$0xf]
    %v1337 = vld [vmem:[%s3 + $0x98] sm:$0xf]
    %v1338 = vld [vmem:[%s3 + $0x9c] sm:$0xf]
    %v1339 = vld [vmem:[%s3 + $0xa0] sm:$0xf]
    %v1340 = vld [vmem:[%s3 + $0xa4] sm:$0xf]
    %v1341 = vld [vmem:[%s3 + $0xa8] sm:$0xf]
    %v1342 = vld [vmem:[%s3 + $0xac] sm:$0xf]
    %v1343 = vld [vmem:[%s3 + $0xb0] sm:$0xf]
    %v1344 = vld [vmem:[%s3 + $0xb4] sm:$0xf]
    %v1345 = vld [vmem:[%s3 + $0xb8] sm:$0xf]
    %v1346 = vld [vmem:[%s3 + $0xbc] sm:$0xf]
    %v1347 = vld [vmem:[%s3 + $0xc0] sm:$0xf]
    %v1348 = vld [vmem:[%s3 + $0xc4] sm:$0xf]
    %v1349 = vld [vmem:[%s3 + $0xc8] sm:$0xf]
    %v1350 = vld [vmem:[%s3 + $0xcc] sm:$0xf]
    %v1351 = vld [vmem:[%s3 + $0xd0] sm:$0xf]
    %v1352 = vld [vmem:[%s3 + $0xd4] sm:$0xf]
    %v1353 = vld [vmem:[%s3 + $0xd8] sm:$0xf]
    %v1354 = vld [vmem:[%s3 + $0xdc] sm:$0xf]
    %v1355 = vld [vmem:[%s3 + $0xe0] sm:$0xf]
    %v1356 = vld [vmem:[%s3 + $0xe4] sm:$0xf]
    %v1357 = vld [vmem:[%s3 + $0xe8] sm:$0xf]
    %v1358 = vld [vmem:[%s3 + $0xec] sm:$0xf]
    %v1359 = vld [vmem:[%s3 + $0xf0] sm:$0xf]
    %v1360 = vld [vmem:[%s3 + $0xf4] sm:$0xf]
    %v1361 = vld [vmem:[%s3 + $0xf8] sm:$0xf]
    %v1362 = vld [vmem:[%s3 + $0xfc] sm:$0xf]
    %v1363 = vld [vmem:[%s3 + $0x100] sm:$0xf]
    %v1364 = vld [vmem:[%s3 + $0x104] sm:$0xf]
    %v1365 = vld [vmem:[%s3 + $0x108] sm:$0xf]
    %v1366 = vld [vmem:[%s3 + $0x10c] sm:$0xf]
    %v1367 = vld [vmem:[%s3 + $0x110] sm:$0xf]
    %v1368 = vld [vmem:[%s3 + $0x114] sm:$0xf]
    %v1369 = vld [vmem:[%s3 + $0x118] sm:$0xf]
    %v1370 = vld [vmem:[%s3 + $0x11c] sm:$0xf]
    %v1371 = vld [vmem:[%s3 + $0x120] sm:$0xf]
    %v1372 = vld [vmem:[%s3 + $0x124] sm:$0xf]
    %v1373 = vld [vmem:[%s3 + $0x128] sm:$0xf]
    %v1374 = vld [vmem:[%s3 + $0x12c] sm:$0xf]
    %v1375 = vld [vmem:[%s3 + $0x130] sm:$0xf]
    %v1376 = vld [vmem:[%s3 + $0x134] sm:$0xf]
    %v1377 = vld [vmem:[%s3 + $0x138] sm:$0xf]
    %v1378 = vld [vmem:[%s3 + $0x13c] sm:$0xf]
    %v1379 = vld [vmem:[%s3 + $0x140] sm:$0xf]
    %v1380 = vld [vmem:[%s3 + $0x144] sm:$0xf]
    %v1381 = vld [vmem:[%s3 + $0x148] sm:$0xf]
    %v1382 = vld [vmem:[%s3 + $0x14c] sm:$0xf]
    %v1383 = vld [vmem:[%s3 + $0x150] sm:$0xf]
    %v1384 = vld [vmem:[%s3 + $0x154] sm:$0xf]
    %v1385 = vld [vmem:[%s3 + $0x158] sm:$0xf]
    %v1386 = vld [vmem:[%s3 + $0x15c] sm:$0xf]
    %v1387 = vld [vmem:[%s3 + $0x160] sm:$0xf]
    %v1388 = vld [vmem:[%s3 + $0x164] sm:$0xf]
    %v1389 = vld [vmem:[%s3 + $0x168] sm:$0xf]
    %v1390 = vld [vmem:[%s3 + $0x16c] sm:$0xf]
    %v1391 = vld [vmem:[%s3 + $0x170] sm:$0xf]
    %v1392 = vld [vmem:[%s3 + $0x174] sm:$0xf]
    %v1393 = vld [vmem:[%s3 + $0x178] sm:$0xf]
    %v1394 = vld [vmem:[%s3 + $0x17c] sm:$0xf]
    %v1395 = vld [vmem:[%s3 + $0x180] sm:$0xf]
    %v1396 = vld [vmem:[%s3 + $0x184] sm:$0xf]
    %v1397 = vld [vmem:[%s3 + $0x188] sm:$0xf]
    %v1398 = vld [vmem:[%s3 + $0x18c] sm:$0xf]
    %v1399 = vld [vmem:[%s3 + $0x190] sm:$0xf]
    %v1400 = vld [vmem:[%s3 + $0x194] sm:$0xf]
    %v1401 = vld [vmem:[%s3 + $0x198] sm:$0xf]
    %v1402 = vld [vmem:[%s3 + $0x19c] sm:$0xf]
    %v1403 = vld [vmem:[%s3 + $0x1a0] sm:$0xf]
    %v1404 = vld [vmem:[%s3 + $0x1a4] sm:$0xf]
    %v1405 = vld [vmem:[%s3 + $0x1a8] sm:$0xf]
    %v1406 = vld [vmem:[%s3 + $0x1ac] sm:$0xf]
    %v1407 = vld [vmem:[%s3 + $0x1b0] sm:$0xf]
    %v1408 = vld [vmem:[%s3 + $0x1b4] sm:$0xf]
    %v1409 = vld [vmem:[%s3 + $0x1b8] sm:$0xf]
    %v1410 = vld [vmem:[%s3 + $0x1bc] sm:$0xf]
    %v1411 = vld [vmem:[%s3 + $0x1c0] sm:$0xf]
    %v1412 = vld [vmem:[%s3 + $0x1c4] sm:$0xf]
    %v1413 = vld [vmem:[%s3 + $0x1c8] sm:$0xf]
    %v1414 = vld [vmem:[%s3 + $0x1cc] sm:$0xf]
    %v1415 = vld [vmem:[%s3 + $0x1d0] sm:$0xf]
    %v1416 = vld [vmem:[%s3 + $0x1d4] sm:$0xf]
    %v1417 = vld [vmem:[%s3 + $0x1d8] sm:$0xf]
    %v1418 = vld [vmem:[%s3 + $0x1dc] sm:$0xf]
    %v1419 = vld [vmem:[%s3 + $0x1e0] sm:$0xf]
    %v1420 = vld [vmem:[%s3 + $0x1e4] sm:$0xf]
    %v1421 = vld [vmem:[%s3 + $0x1e8] sm:$0xf]
    %v1422 = vld [vmem:[%s3 + $0x1ec] sm:$0xf]
    %v1423 = vld [vmem:[%s3 + $0x1f0] sm:$0xf]
    %v1424 = vld [vmem:[%s3 + $0x1f4] sm:$0xf]
    %v1425 = vld [vmem:[%s3 + $0x1f8] sm:$0xf]
    %v1426 = vld [vmem:[%s3 + $0x1fc] sm:$0xf]
    %v1427 = vld [vmem:[%s3 + $0x200] sm:$0xf]
    %v1428 = vld [vmem:[%s3 + $0x204] sm:$0xf]
    %v1429 = vld [vmem:[%s3 + $0x208] sm:$0xf]
    %v1430 = vld [vmem:[%s3 + $0x20c] sm:$0xf]
    %v1431 = vld [vmem:[%s3 + $0x210] sm:$0xf]
    %v1432 = vld [vmem:[%s3 + $0x214] sm:$0xf]
    %v1433 = vld [vmem:[%s3 + $0x218] sm:$0xf]
    %v1434 = vld [vmem:[%s3 + $0x21c] sm:$0xf]
    %v1435 = vld [vmem:[%s3 + $0x220] sm:$0xf]
    %v1436 = vld [vmem:[%s3 + $0x224] sm:$0xf]
    %v1437 = vld [vmem:[%s3 + $0x228] sm:$0xf]
    %v1438 = vld [vmem:[%s3 + $0x22c] sm:$0xf]
    %v1439 = vld [vmem:[%s3 + $0x230] sm:$0xf]
    %v1440 = vld [vmem:[%s3 + $0x234] sm:$0xf]
    %v1441 = vld [vmem:[%s3 + $0x238] sm:$0xf]
    %v1442 = vld [vmem:[%s3 + $0x23c] sm:$0xf]
    %v1443 = vld [vmem:[%s4] sm:$0x1]
    %v1445 = vshrl.u32 0, 16
    %v1447 = vrot.slane %v1445, 7
    %v1448 = vshll.u32 0, 16
    %v1450 = vor.u32 %v1447, %v1448
    %v1452 = vshrl.u32 %v1235, 16
    %v1454 = vrot.slane %v1452, 7
    %v1455 = vshll.u32 %v1235, 16
    %v1457 = vor.u32 %v1454, %v1455
    %v1459 = vshrl.u32 %v1236, 16
    %v1461 = vrot.slane %v1459, 7
    %v1462 = vshll.u32 %v1236, 16
    %v1464 = vor.u32 %v1461, %v1462
    %v1466 = vshrl.u32 %v1237, 16
    %v1468 = vrot.slane %v1466, 7
    %v1469 = vshll.u32 %v1237, 16
    %v1471 = vor.u32 %v1468, %v1469
    %v1473 = vshrl.u32 %v1238, 16
    %v1475 = vrot.slane %v1473, 7
    %v1476 = vshll.u32 %v1238, 16
    %v1478 = vor.u32 %v1475, %v1476
    %v1480 = vshrl.u32 %v1239, 16
    %v1482 = vrot.slane %v1480, 7
    %v1483 = vshll.u32 %v1239, 16
    %v1485 = vor.u32 %v1482, %v1483
    %v1487 = vshrl.u32 %v1240, 16
    %v1489 = vrot.slane %v1487, 7
    %v1490 = vshll.u32 %v1240, 16
    %v1492 = vor.u32 %v1489, %v1490
    %v1494 = vshrl.u32 %v1241, 16
    %v1496 = vrot.slane %v1494, 7
    %v1497 = vshll.u32 %v1241, 16
    %v1499 = vor.u32 %v1496, %v1497
    %v1501 = vshrl.u32 %v1242, 16
    %v1503 = vrot.slane %v1501, 7
    %v1504 = vshll.u32 %v1242, 16
    %v1506 = vor.u32 %v1503, %v1504
    %v1508 = vshrl.u32 %v1243, 16
    %v1510 = vrot.slane %v1508, 7
    %v1511 = vshll.u32 %v1243, 16
    %v1513 = vor.u32 %v1510, %v1511
    %v1515 = vshrl.u32 %v1244, 16
    %v1517 = vrot.slane %v1515, 7
    %v1518 = vshll.u32 %v1244, 16
    %v1520 = vor.u32 %v1517, %v1518
    %v1522 = vshrl.u32 %v1245, 16
    %v1524 = vrot.slane %v1522, 7
    %v1525 = vshll.u32 %v1245, 16
    %v1527 = vor.u32 %v1524, %v1525
    %v1529 = vshrl.u32 %v1246, 16
    %v1531 = vrot.slane %v1529, 7
    %v1532 = vshll.u32 %v1246, 16
    %v1534 = vor.u32 %v1531, %v1532
    %v1536 = vshrl.u32 %v1247, 16
    %v1538 = vrot.slane %v1536, 7
    %v1539 = vshll.u32 %v1247, 16
    %v1541 = vor.u32 %v1538, %v1539
    %v1543 = vshrl.u32 %v1248, 16
    %v1545 = vrot.slane %v1543, 7
    %v1546 = vshll.u32 %v1248, 16
    %v1548 = vor.u32 %v1545, %v1546
    %v1550 = vshrl.u32 %v1249, 16
    %v1552 = vrot.slane %v1550, 7
    %v1553 = vshll.u32 %v1249, 16
    %v1555 = vor.u32 %v1552, %v1553
    %v1557 = vshrl.u32 %v1250, 16
    %v1559 = vrot.slane %v1557, 7
    %v1560 = vshll.u32 %v1250, 16
    %v1562 = vor.u32 %v1559, %v1560
    %v1564 = vshrl.u32 %v1251, 16
    %v1566 = vrot.slane %v1564, 7
    %v1567 = vshll.u32 %v1251, 16
    %v1569 = vor.u32 %v1566, %v1567
    %v1571 = vshrl.u32 %v1252, 16
    %v1573 = vrot.slane %v1571, 7
    %v1574 = vshll.u32 %v1252, 16
    %v1576 = vor.u32 %v1573, %v1574
    %v1578 = vshrl.u32 %v1253, 16
    %v1580 = vrot.slane %v1578, 7
    %v1581 = vshll.u32 %v1253, 16
    %v1583 = vor.u32 %v1580, %v1581
    %v1585 = vshrl.u32 %v1254, 16
    %v1587 = vrot.slane %v1585, 7
    %v1588 = vshll.u32 %v1254, 16
    %v1590 = vor.u32 %v1587, %v1588
    %v1592 = vshrl.u32 %v1255, 16
    %v1594 = vrot.slane %v1592, 7
    %v1595 = vshll.u32 %v1255, 16
    %v1597 = vor.u32 %v1594, %v1595
    %v1599 = vshrl.u32 %v1256, 16
    %v1601 = vrot.slane %v1599, 7
    %v1602 = vshll.u32 %v1256, 16
    %v1604 = vor.u32 %v1601, %v1602
    %v1606 = vshrl.u32 %v1257, 16
    %v1608 = vrot.slane %v1606, 7
    %v1609 = vshll.u32 %v1257, 16
    %v1611 = vor.u32 %v1608, %v1609
    %v1613 = vshrl.u32 %v1258, 16
    %v1615 = vrot.slane %v1613, 7
    %v1616 = vshll.u32 %v1258, 16
    %v1618 = vor.u32 %v1615, %v1616
    %v1620 = vshrl.u32 %v1259, 16
    %v1622 = vrot.slane %v1620, 7
    %v1623 = vshll.u32 %v1259, 16
    %v1625 = vor.u32 %v1622, %v1623
    %v1627 = vshrl.u32 %v1260, 16
    %v1629 = vrot.slane %v1627, 7
    %v1630 = vshll.u32 %v1260, 16
    %v1632 = vor.u32 %v1629, %v1630
    %v1634 = vshrl.u32 %v1261, 16
    %v1636 = vrot.slane %v1634, 7
    %v1637 = vshll.u32 %v1261, 16
    %v1639 = vor.u32 %v1636, %v1637
    %v1641 = vshrl.u32 %v1262, 16
    %v1643 = vrot.slane %v1641, 7
    %v1644 = vshll.u32 %v1262, 16
    %v1646 = vor.u32 %v1643, %v1644
    %v1648 = vshrl.u32 %v1263, 16
    %v1650 = vrot.slane %v1648, 7
    %v1651 = vshll.u32 %v1263, 16
    %v1653 = vor.u32 %v1650, %v1651
    %v1655 = vshrl.u32 %v1264, 16
    %v1657 = vrot.slane %v1655, 7
    %v1658 = vshll.u32 %v1264, 16
    %v1660 = vor.u32 %v1657, %v1658
    %v1662 = vshrl.u32 %v1265, 16
    %v1664 = vrot.slane %v1662, 7
    %v1665 = vshll.u32 %v1265, 16
    %v1667 = vor.u32 %v1664, %v1665
    %v1669 = vshrl.u32 %v1266, 16
    %v1671 = vrot.slane %v1669, 7
    %v1672 = vshll.u32 %v1266, 16
    %v1674 = vor.u32 %v1671, %v1672
    %vm1741 = vcmask 1040384
    %vm1742 = vsmask.f32 256
    %vm1743 = vmand %vm1741, %vm1742
    %v1744 = vsel %vm1743, 0, %v1450
    %v1745 = vsel %vm1743, 0, %v1457
    %v1746 = vsel %vm1743, 0, %v1464
    %v1747 = vsel %vm1743, 0, %v1471
    %v1748 = vsel %vm1743, 0, %v1478
    %v1749 = vsel %vm1743, 0, %v1485
    %v1750 = vsel %vm1743, 0, %v1492
    %v1751 = vsel %vm1743, 0, %v1499
    %v1752 = vsel %vm1743, 0, %v1506
    %v1753 = vsel %vm1743, 0, %v1513
    %v1754 = vsel %vm1743, 0, %v1520
    %v1755 = vsel %vm1743, 0, %v1527
    %v1756 = vsel %vm1743, 0, %v1534
    %v1757 = vsel %vm1743, 0, %v1541
    %v1758 = vsel %vm1743, 0, %v1548
    %v1759 = vsel %vm1743, 0, %v1555
    %v1760 = vsel %vm1743, 0, %v1562
    %v1761 = vsel %vm1743, 0, %v1569
    %v1762 = vsel %vm1743, 0, %v1576
    %v1763 = vsel %vm1743, 0, %v1583
    %v1764 = vsel %vm1743, 0, %v1590
    %v1765 = vsel %vm1743, 0, %v1597
    %v1766 = vsel %vm1743, 0, %v1604
    %v1767 = vsel %vm1743, 0, %v1611
    %v1768 = vsel %vm1743, 0, %v1618
    %v1769 = vsel %vm1743, 0, %v1625
    %v1770 = vsel %vm1743, 0, %v1632
    %v1771 = vsel %vm1743, 0, %v1639
    %v1772 = vsel %vm1743, 0, %v1646
    %v1773 = vsel %vm1743, 0, %v1653
    %v1774 = vsel %vm1743, 0, %v1660
    %v1775 = vsel %vm1743, 0, %v1667
    %v1776 = vsel %vm1743, 0, %v1674
    %v1777 = vsel %vm1743, %v1447, 0
    %v1778 = vsel %vm1743, %v1454, 0
    %v1779 = vsel %vm1743, %v1461, 0
    %v1780 = vsel %vm1743, %v1468, 0
    %v1781 = vsel %vm1743, %v1475, 0
    %v1782 = vsel %vm1743, %v1482, 0
    %v1783 = vsel %vm1743, %v1489, 0
    %v1784 = vsel %vm1743, %v1496, 0
    %v1785 = vsel %vm1743, %v1503, 0
    %v1786 = vsel %vm1743, %v1510, 0
    %v1787 = vsel %vm1743, %v1517, 0
    %v1788 = vsel %vm1743, %v1524, 0
    %v1789 = vsel %vm1743, %v1531, 0
    %v1790 = vsel %vm1743, %v1538, 0
    %v1791 = vsel %vm1743, %v1545, 0
    %v1792 = vsel %vm1743, %v1552, 0
    %v1793 = vsel %vm1743, %v1559, 0
    %v1794 = vsel %vm1743, %v1566, 0
    %v1795 = vsel %vm1743, %v1573, 0
    %v1796 = vsel %vm1743, %v1580, 0
    %v1797 = vsel %vm1743, %v1587, 0
    %v1798 = vsel %vm1743, %v1594, 0
    %v1799 = vsel %vm1743, %v1601, 0
    %v1800 = vsel %vm1743, %v1608, 0
    %v1801 = vsel %vm1743, %v1615, 0
    %v1802 = vsel %vm1743, %v1622, 0
    %v1803 = vsel %vm1743, %v1629, 0
    %v1804 = vsel %vm1743, %v1636, 0
    %v1805 = vsel %vm1743, %v1643, 0
    %v1806 = vsel %vm1743, %v1650, 0
    %v1807 = vsel %vm1743, %v1657, 0
    %v1808 = vsel %vm1743, %v1664, 0
    %v1809 = vsel %vm1743, %v1671, 0
    %vm1810 = vsmask.f32 7424
    %v1812 = vshrl.u32 %v1744, 16
    %v1814 = vshll.u32 %v1744, 16
    %v1816 = vrot.slane %v1814, 1
    %v1817 = vor.u32 %v1812, %v1816
    %v1819 = vshll.u32 %v1777, 16
    %v1821 = vrot.slane %v1819, 1
    %v1822 = vsel %vm1810, %v1817, %v1821
    %v1824 = vshrl.u32 %v1745, 16
    %v1826 = vshll.u32 %v1745, 16
    %v1828 = vrot.slane %v1826, 1
    %v1829 = vor.u32 %v1824, %v1828
    %v1831 = vshll.u32 %v1778, 16
    %v1833 = vrot.slane %v1831, 1
    %v1834 = vsel %vm1810, %v1829, %v1833
    %v1836 = vshrl.u32 %v1746, 16
    %v1838 = vshll.u32 %v1746, 16
    %v1840 = vrot.slane %v1838, 1
    %v1841 = vor.u32 %v1836, %v1840
    %v1843 = vshll.u32 %v1779, 16
    %v1845 = vrot.slane %v1843, 1
    %v1846 = vsel %vm1810, %v1841, %v1845
    %v1848 = vshrl.u32 %v1747, 16
    %v1850 = vshll.u32 %v1747, 16
    %v1852 = vrot.slane %v1850, 1
    %v1853 = vor.u32 %v1848, %v1852
    %v1855 = vshll.u32 %v1780, 16
    %v1857 = vrot.slane %v1855, 1
    %v1858 = vsel %vm1810, %v1853, %v1857
    %v1860 = vshrl.u32 %v1748, 16
    %v1862 = vshll.u32 %v1748, 16
    %v1864 = vrot.slane %v1862, 1
    %v1865 = vor.u32 %v1860, %v1864
    %v1867 = vshll.u32 %v1781, 16
    %v1869 = vrot.slane %v1867, 1
    %v1870 = vsel %vm1810, %v1865, %v1869
    %v1872 = vshrl.u32 %v1749, 16
    %v1874 = vshll.u32 %v1749, 16
    %v1876 = vrot.slane %v1874, 1
    %v1877 = vor.u32 %v1872, %v1876
    %v1879 = vshll.u32 %v1782, 16
    %v1881 = vrot.slane %v1879, 1
    %v1882 = vsel %vm1810, %v1877, %v1881
    %v1884 = vshrl.u32 %v1750, 16
    %v1886 = vshll.u32 %v1750, 16
    %v1888 = vrot.slane %v1886, 1
    %v1889 = vor.u32 %v1884, %v1888
    %v1891 = vshll.u32 %v1783, 16
    %v1893 = vrot.slane %v1891, 1
    %v1894 = vsel %vm1810, %v1889, %v1893
    %v1896 = vshrl.u32 %v1751, 16
    %v1898 = vshll.u32 %v1751, 16
    %v1900 = vrot.slane %v1898, 1
    %v1901 = vor.u32 %v1896, %v1900
    %v1903 = vshll.u32 %v1784, 16
    %v1905 = vrot.slane %v1903, 1
    %v1906 = vsel %vm1810, %v1901, %v1905
    %v1908 = vshrl.u32 %v1752, 16
    %v1910 = vshll.u32 %v1752, 16
    %v1912 = vrot.slane %v1910, 1
    %v1913 = vor.u32 %v1908, %v1912
    %v1915 = vshll.u32 %v1785, 16
    %v1917 = vrot.slane %v1915, 1
    %v1918 = vsel %vm1810, %v1913, %v1917
    %v1920 = vshrl.u32 %v1753, 16
    %v1922 = vshll.u32 %v1753, 16
    %v1924 = vrot.slane %v1922, 1
    %v1925 = vor.u32 %v1920, %v1924
    %v1927 = vshll.u32 %v1786, 16
    %v1929 = vrot.slane %v1927, 1
    %v1930 = vsel %vm1810, %v1925, %v1929
    %v1932 = vshrl.u32 %v1754, 16
    %v1934 = vshll.u32 %v1754, 16
    %v1936 = vrot.slane %v1934, 1
    %v1937 = vor.u32 %v1932, %v1936
    %v1939 = vshll.u32 %v1787, 16
    %v1941 = vrot.slane %v1939, 1
    %v1942 = vsel %vm1810, %v1937, %v1941
    %v1944 = vshrl.u32 %v1755, 16
    %v1946 = vshll.u32 %v1755, 16
    %v1948 = vrot.slane %v1946, 1
    %v1949 = vor.u32 %v1944, %v1948
    %v1951 = vshll.u32 %v1788, 16
    %v1953 = vrot.slane %v1951, 1
    %v1954 = vsel %vm1810, %v1949, %v1953
    %v1956 = vshrl.u32 %v1756, 16
    %v1958 = vshll.u32 %v1756, 16
    %v1960 = vrot.slane %v1958, 1
    %v1961 = vor.u32 %v1956, %v1960
    %v1963 = vshll.u32 %v1789, 16
    %v1965 = vrot.slane %v1963, 1
    %v1966 = vsel %vm1810, %v1961, %v1965
    %v1968 = vshrl.u32 %v1757, 16
    %v1970 = vshll.u32 %v1757, 16
    %v1972 = vrot.slane %v1970, 1
    %v1973 = vor.u32 %v1968, %v1972
    %v1975 = vshll.u32 %v1790, 16
    %v1977 = vrot.slane %v1975, 1
    %v1978 = vsel %vm1810, %v1973, %v1977
    %v1980 = vshrl.u32 %v1758, 16
    %v1982 = vshll.u32 %v1758, 16
    %v1984 = vrot.slane %v1982, 1
    %v1985 = vor.u32 %v1980, %v1984
    %v1987 = vshll.u32 %v1791, 16
    %v1989 = vrot.slane %v1987, 1
    %v1990 = vsel %vm1810, %v1985, %v1989
    %v1992 = vshrl.u32 %v1759, 16
    %v1994 = vshll.u32 %v1759, 16
    %v1996 = vrot.slane %v1994, 1
    %v1997 = vor.u32 %v1992, %v1996
    %v1999 = vshll.u32 %v1792, 16
    %v2001 = vrot.slane %v1999, 1
    %v2002 = vsel %vm1810, %v1997, %v2001
    %v2004 = vshrl.u32 %v1761, 16
    %v2006 = vshll.u32 %v1761, 16
    %v2008 = vrot.slane %v2006, 1
    %v2009 = vor.u32 %v2004, %v2008
    %v2011 = vshll.u32 %v1794, 16
    %v2013 = vrot.slane %v2011, 1
    %v2014 = vsel %vm1810, %v2009, %v2013
    %v2016 = vshrl.u32 %v1762, 16
    %v2018 = vshll.u32 %v1762, 16
    %v2020 = vrot.slane %v2018, 1
    %v2021 = vor.u32 %v2016, %v2020
    %v2023 = vshll.u32 %v1795, 16
    %v2025 = vrot.slane %v2023, 1
    %v2026 = vsel %vm1810, %v2021, %v2025
    %v2028 = vshrl.u32 %v1763, 16
    %v2030 = vshll.u32 %v1763, 16
    %v2032 = vrot.slane %v2030, 1
    %v2033 = vor.u32 %v2028, %v2032
    %v2035 = vshll.u32 %v1796, 16
    %v2037 = vrot.slane %v2035, 1
    %v2038 = vsel %vm1810, %v2033, %v2037
    %v2040 = vshrl.u32 %v1764, 16
    %v2042 = vshll.u32 %v1764, 16
    %v2044 = vrot.slane %v2042, 1
    %v2045 = vor.u32 %v2040, %v2044
    %v2047 = vshll.u32 %v1797, 16
    %v2049 = vrot.slane %v2047, 1
    %v2050 = vsel %vm1810, %v2045, %v2049
    %v2052 = vshrl.u32 %v1765, 16
    %v2054 = vshll.u32 %v1765, 16
    %v2056 = vrot.slane %v2054, 1
    %v2057 = vor.u32 %v2052, %v2056
    %v2059 = vshll.u32 %v1798, 16
    %v2061 = vrot.slane %v2059, 1
    %v2062 = vsel %vm1810, %v2057, %v2061
    %v2064 = vshrl.u32 %v1766, 16
    %v2066 = vshll.u32 %v1766, 16
    %v2068 = vrot.slane %v2066, 1
    %v2069 = vor.u32 %v2064, %v2068
    %v2071 = vshll.u32 %v1799, 16
    %v2073 = vrot.slane %v2071, 1
    %v2074 = vsel %vm1810, %v2069, %v2073
    %v2076 = vshrl.u32 %v1767, 16
    %v2078 = vshll.u32 %v1767, 16
    %v2080 = vrot.slane %v2078, 1
    %v2081 = vor.u32 %v2076, %v2080
    %v2083 = vshll.u32 %v1800, 16
    %v2085 = vrot.slane %v2083, 1
    %v2086 = vsel %vm1810, %v2081, %v2085
    %v2088 = vshrl.u32 %v1768, 16
    %v2090 = vshll.u32 %v1768, 16
    %v2092 = vrot.slane %v2090, 1
    %v2093 = vor.u32 %v2088, %v2092
    %v2095 = vshll.u32 %v1801, 16
    %v2097 = vrot.slane %v2095, 1
    %v2098 = vsel %vm1810, %v2093, %v2097
    %v2100 = vshrl.u32 %v1769, 16
    %v2102 = vshll.u32 %v1769, 16
    %v2104 = vrot.slane %v2102, 1
    %v2105 = vor.u32 %v2100, %v2104
    %v2107 = vshll.u32 %v1802, 16
    %v2109 = vrot.slane %v2107, 1
    %v2110 = vsel %vm1810, %v2105, %v2109
    %v2112 = vshrl.u32 %v1770, 16
    %v2114 = vshll.u32 %v1770, 16
    %v2116 = vrot.slane %v2114, 1
    %v2117 = vor.u32 %v2112, %v2116
    %v2119 = vshll.u32 %v1803, 16
    %v2121 = vrot.slane %v2119, 1
    %v2122 = vsel %vm1810, %v2117, %v2121
    %v2124 = vshrl.u32 %v1771, 16
    %v2126 = vshll.u32 %v1771, 16
    %v2128 = vrot.slane %v2126, 1
    %v2129 = vor.u32 %v2124, %v2128
    %v2131 = vshll.u32 %v1804, 16
    %v2133 = vrot.slane %v2131, 1
    %v2134 = vsel %vm1810, %v2129, %v2133
    %v2136 = vshrl.u32 %v1772, 16
    %v2138 = vshll.u32 %v1772, 16
    %v2140 = vrot.slane %v2138, 1
    %v2141 = vor.u32 %v2136, %v2140
    %v2143 = vshll.u32 %v1805, 16
    %v2145 = vrot.slane %v2143, 1
    %v2146 = vsel %vm1810, %v2141, %v2145
    %v2148 = vshrl.u32 %v1773, 16
    %v2150 = vshll.u32 %v1773, 16
    %v2152 = vrot.slane %v2150, 1
    %v2153 = vor.u32 %v2148, %v2152
    %v2155 = vshll.u32 %v1806, 16
    %v2157 = vrot.slane %v2155, 1
    %v2158 = vsel %vm1810, %v2153, %v2157
    %v2160 = vshrl.u32 %v1774, 16
    %v2162 = vshll.u32 %v1774, 16
    %v2164 = vrot.slane %v2162, 1
    %v2165 = vor.u32 %v2160, %v2164
    %v2167 = vshll.u32 %v1807, 16
    %v2169 = vrot.slane %v2167, 1
    %v2170 = vsel %vm1810, %v2165, %v2169
    %v2172 = vshrl.u32 %v1775, 16
    %v2174 = vshll.u32 %v1775, 16
    %v2176 = vrot.slane %v2174, 1
    %v2177 = vor.u32 %v2172, %v2176
    %v2179 = vshll.u32 %v1808, 16
    %v2181 = vrot.slane %v2179, 1
    %v2182 = vsel %vm1810, %v2177, %v2181
    %vm2276 = vcmask 1046528
    %v2277 = vrot.slane %v1744, 1
    %v2278 = vrot.slane %v1777, 1
    %v2279 = vsel %vm2276, %v2277, %v2278
    %v2280 = vrot.slane %v1745, 1
    %v2281 = vrot.slane %v1778, 1
    %v2282 = vsel %vm2276, %v2280, %v2281
    %v2283 = vrot.slane %v1746, 1
    %v2284 = vrot.slane %v1779, 1
    %v2285 = vsel %vm2276, %v2283, %v2284
    %v2286 = vrot.slane %v1747, 1
    %v2287 = vrot.slane %v1780, 1
    %v2288 = vsel %vm2276, %v2286, %v2287
    %v2289 = vrot.slane %v1748, 1
    %v2290 = vrot.slane %v1781, 1
    %v2291 = vsel %vm2276, %v2289, %v2290
    %v2292 = vrot.slane %v1749, 1
    %v2293 = vrot.slane %v1782, 1
    %v2294 = vsel %vm2276, %v2292, %v2293
    %v2295 = vrot.slane %v1750, 1
    %v2296 = vrot.slane %v1783, 1
    %v2297 = vsel %vm2276, %v2295, %v2296
    %v2298 = vrot.slane %v1751, 1
    %v2299 = vrot.slane %v1784, 1
    %v2300 = vsel %vm2276, %v2298, %v2299
    %v2301 = vrot.slane %v1752, 1
    %v2302 = vrot.slane %v1785, 1
    %v2303 = vsel %vm2276, %v2301, %v2302
    %v2304 = vrot.slane %v1753, 1
    %v2305 = vrot.slane %v1786, 1
    %v2306 = vsel %vm2276, %v2304, %v2305
    %v2307 = vrot.slane %v1754, 1
    %v2308 = vrot.slane %v1787, 1
    %v2309 = vsel %vm2276, %v2307, %v2308
    %v2310 = vrot.slane %v1755, 1
    %v2311 = vrot.slane %v1788, 1
    %v2312 = vsel %vm2276, %v2310, %v2311
    %v2313 = vrot.slane %v1756, 1
    %v2314 = vrot.slane %v1789, 1
    %v2315 = vsel %vm2276, %v2313, %v2314
    %v2316 = vrot.slane %v1757, 1
    %v2317 = vrot.slane %v1790, 1
    %v2318 = vsel %vm2276, %v2316, %v2317
    %v2319 = vrot.slane %v1758, 1
    %v2320 = vrot.slane %v1791, 1
    %v2321 = vsel %vm2276, %v2319, %v2320
    %v2322 = vrot.slane %v1759, 1
    %v2323 = vrot.slane %v1792, 1
    %v2324 = vsel %vm2276, %v2322, %v2323
    %v2325 = vrot.slane %v1761, 1
    %v2326 = vrot.slane %v1794, 1
    %v2327 = vsel %vm2276, %v2325, %v2326
    %v2328 = vrot.slane %v1762, 1
    %v2329 = vrot.slane %v1795, 1
    %v2330 = vsel %vm2276, %v2328, %v2329
    %v2331 = vrot.slane %v1763, 1
    %v2332 = vrot.slane %v1796, 1
    %v2333 = vsel %vm2276, %v2331, %v2332
    %v2334 = vrot.slane %v1764, 1
    %v2335 = vrot.slane %v1797, 1
    %v2336 = vsel %vm2276, %v2334, %v2335
    %v2337 = vrot.slane %v1765, 1
    %v2338 = vrot.slane %v1798, 1
    %v2339 = vsel %vm2276, %v2337, %v2338
    %v2340 = vrot.slane %v1766, 1
    %v2341 = vrot.slane %v1799, 1
    %v2342 = vsel %vm2276, %v2340, %v2341
    %v2343 = vrot.slane %v1767, 1
    %v2344 = vrot.slane %v1800, 1
    %v2345 = vsel %vm2276, %v2343, %v2344
    %v2346 = vrot.slane %v1768, 1
    %v2347 = vrot.slane %v1801, 1
    %v2348 = vsel %vm2276, %v2346, %v2347
    %v2349 = vrot.slane %v1769, 1
    %v2350 = vrot.slane %v1802, 1
    %v2351 = vsel %vm2276, %v2349, %v2350
    %v2352 = vrot.slane %v1770, 1
    %v2353 = vrot.slane %v1803, 1
    %v2354 = vsel %vm2276, %v2352, %v2353
    %v2355 = vrot.slane %v1771, 1
    %v2356 = vrot.slane %v1804, 1
    %v2357 = vsel %vm2276, %v2355, %v2356
    %v2358 = vrot.slane %v1772, 1
    %v2359 = vrot.slane %v1805, 1
    %v2360 = vsel %vm2276, %v2358, %v2359
    %v2361 = vrot.slane %v1773, 1
    %v2362 = vrot.slane %v1806, 1
    %v2363 = vsel %vm2276, %v2361, %v2362
    %v2364 = vrot.slane %v1774, 1
    %v2365 = vrot.slane %v1807, 1
    %v2366 = vsel %vm2276, %v2364, %v2365
    %v2367 = vrot.slane %v1775, 1
    %v2368 = vrot.slane %v1808, 1
    %v2369 = vsel %vm2276, %v2367, %v2368
    %v2402 = vshrl.u32 %v1760, 16
    %v2404 = vshll.u32 %v1760, 16
    %v2406 = vrot.slane %v2404, 1
    %v2407 = vor.u32 %v2402, %v2406
    %v2409 = vshll.u32 %v1793, 16
    %v2411 = vrot.slane %v2409, 1
    %v2412 = vsel %vm1810, %v2407, %v2411
    %v2414 = vshrl.u32 %v1776, 16
    %v2416 = vshll.u32 %v1776, 16
    %v2418 = vrot.slane %v2416, 1
    %v2419 = vor.u32 %v2414, %v2418
    %v2421 = vshll.u32 %v1809, 16
    %v2423 = vrot.slane %v2421, 1
    %v2424 = vsel %vm1810, %v2419, %v2423
    %v2431 = vrot.slane %v1760, 1
    %v2432 = vrot.slane %v1793, 1
    %v2433 = vsel %vm2276, %v2431, %v2432
    %v2434 = vrot.slane %v1776, 1
    %v2435 = vrot.slane %v1809, 1
    %v2436 = vsel %vm2276, %v2434, %v2435
    %v2440 = vlaneseq
    %v2441 = vshrl.u32 %v2440, 7
    %v2442 = vsub.s32 0, %v2441
    %v2443 = vrot.slane %v1443, %v2442
    %v2589 = vunpack.c.l.b16 %v1299
    %v2590 = vunpack.c.l.b16 %v1300
    %v2591 = vunpack.c.l.b16 %v1301
    %v2592 = vunpack.c.l.b16 %v1302
    %v2593 = vunpack.c.l.b16 %v1303
    %v2594 = vunpack.c.l.b16 %v1304
    %v2595 = vunpack.c.l.b16 %v1305
    %v2596 = vunpack.c.l.b16 %v1306
    %v2597 = vunpack.c.l.b16 %v1307
    %v2598 = vunpack.c.l.b16 %v1308
    %v2599 = vunpack.c.l.b16 %v1309
    %v2600 = vunpack.c.l.b16 %v1310
    %v2601 = vunpack.c.l.b16 %v1311
    %v2602 = vunpack.c.l.b16 %v1312
    %v2603 = vunpack.c.l.b16 %v1313
    %v2604 = vunpack.c.l.b16 %v1314
    %v2605 = vunpack.c.l.b16 %v1315
    %v2606 = vunpack.c.l.b16 %v1316
    %v2607 = vunpack.c.l.b16 %v1317
    %v2608 = vunpack.c.l.b16 %v1318
    %v2609 = vunpack.c.l.b16 %v1319
    %v2610 = vunpack.c.l.b16 %v1320
    %v2611 = vunpack.c.l.b16 %v1321
    %v2612 = vunpack.c.l.b16 %v1322
    %v2613 = vunpack.c.l.b16 %v1323
    %v2614 = vunpack.c.l.b16 %v1324
    %v2615 = vunpack.c.l.b16 %v1325
    %v2616 = vunpack.c.l.b16 %v1326
    %v2617 = vunpack.c.l.b16 %v1327
    %v2618 = vunpack.c.l.b16 %v1328
    %v2619 = vunpack.c.l.b16 %v1329
    %v2620 = vunpack.c.l.b16 %v1330
    %v2621 = vunpack.c.l.b16 %v1331
    %v2622 = vunpack.c.l.b16 %v1332
    %v2623 = vunpack.c.l.b16 %v1333
    %v2624 = vunpack.c.l.b16 %v1334
    %v2625 = vunpack.c.l.b16 %v1335
    %v2626 = vunpack.c.l.b16 %v1336
    %v2627 = vunpack.c.l.b16 %v1337
    %v2628 = vunpack.c.l.b16 %v1338
    %v2629 = vunpack.c.l.b16 %v1339
    %v2630 = vunpack.c.l.b16 %v1340
    %v2631 = vunpack.c.l.b16 %v1341
    %v2632 = vunpack.c.l.b16 %v1342
    %v2633 = vunpack.c.l.b16 %v1343
    %v2634 = vunpack.c.l.b16 %v1344
    %v2635 = vunpack.c.l.b16 %v1345
    %v2636 = vunpack.c.l.b16 %v1346
    %v2637 = vunpack.c.l.b16 %v1347
    %v2638 = vunpack.c.l.b16 %v1348
    %v2639 = vunpack.c.l.b16 %v1349
    %v2640 = vunpack.c.l.b16 %v1350
    %v2641 = vunpack.c.l.b16 %v1351
    %v2642 = vunpack.c.l.b16 %v1352
    %v2643 = vunpack.c.l.b16 %v1353
    %v2644 = vunpack.c.l.b16 %v1354
    %v2645 = vunpack.c.l.b16 %v1355
    %v2646 = vunpack.c.l.b16 %v1356
    %v2647 = vunpack.c.l.b16 %v1357
    %v2648 = vunpack.c.l.b16 %v1358
    %v2649 = vunpack.c.l.b16 %v1359
    %v2650 = vunpack.c.l.b16 %v1360
    %v2651 = vunpack.c.l.b16 %v1361
    %v2652 = vunpack.c.l.b16 %v1362
    %v2653 = vunpack.c.l.b16 %v1363
    %v2654 = vunpack.c.l.b16 %v1364
    %v2655 = vunpack.c.l.b16 %v1365
    %v2656 = vunpack.c.l.b16 %v1366
    %v2657 = vunpack.c.l.b16 %v1367
    %v2658 = vunpack.c.l.b16 %v1368
    %v2659 = vunpack.c.l.b16 %v1369
    %v2660 = vunpack.c.l.b16 %v1370
    %v2661 = vunpack.c.l.b16 %v1371
    %v2662 = vunpack.c.l.b16 %v1372
    %v2663 = vunpack.c.l.b16 %v1373
    %v2664 = vunpack.c.l.b16 %v1374
    %v2665 = vunpack.c.l.b16 %v1375
    %v2666 = vunpack.c.l.b16 %v1376
    %v2667 = vunpack.c.l.b16 %v1377
    %v2668 = vunpack.c.l.b16 %v1378
    %v2669 = vunpack.c.l.b16 %v1379
    %v2670 = vunpack.c.l.b16 %v1380
    %v2671 = vunpack.c.l.b16 %v1381
    %v2672 = vunpack.c.l.b16 %v1382
    %v2673 = vunpack.c.l.b16 %v1383
    %v2674 = vunpack.c.l.b16 %v1384
    %v2675 = vunpack.c.l.b16 %v1385
    %v2676 = vunpack.c.l.b16 %v1386
    %v2677 = vunpack.c.l.b16 %v1387
    %v2678 = vunpack.c.l.b16 %v1388
    %v2679 = vunpack.c.l.b16 %v1389
    %v2680 = vunpack.c.l.b16 %v1390
    %v2681 = vunpack.c.l.b16 %v1391
    %v2682 = vunpack.c.l.b16 %v1392
    %v2683 = vunpack.c.l.b16 %v1393
    %v2684 = vunpack.c.l.b16 %v1394
    %v2685 = vunpack.c.l.b16 %v1395
    %v2686 = vunpack.c.l.b16 %v1396
    %v2687 = vunpack.c.l.b16 %v1397
    %v2688 = vunpack.c.l.b16 %v1398
    %v2689 = vunpack.c.l.b16 %v1399
    %v2690 = vunpack.c.l.b16 %v1400
    %v2691 = vunpack.c.l.b16 %v1401
    %v2692 = vunpack.c.l.b16 %v1402
    %v2693 = vunpack.c.l.b16 %v1403
    %v2694 = vunpack.c.l.b16 %v1404
    %v2695 = vunpack.c.l.b16 %v1405
    %v2696 = vunpack.c.l.b16 %v1406
    %v2697 = vunpack.c.l.b16 %v1407
    %v2698 = vunpack.c.l.b16 %v1408
    %v2699 = vunpack.c.l.b16 %v1409
    %v2700 = vunpack.c.l.b16 %v1410
    %v2701 = vunpack.c.l.b16 %v1411
    %v2702 = vunpack.c.l.b16 %v1412
    %v2703 = vunpack.c.l.b16 %v1413
    %v2704 = vunpack.c.l.b16 %v1414
    %v2705 = vunpack.c.l.b16 %v1415
    %v2706 = vunpack.c.l.b16 %v1416
    %v2707 = vunpack.c.l.b16 %v1417
    %v2708 = vunpack.c.l.b16 %v1418
    %v2709 = vunpack.c.l.b16 %v1419
    %v2710 = vunpack.c.l.b16 %v1420
    %v2711 = vunpack.c.l.b16 %v1421
    %v2712 = vunpack.c.l.b16 %v1422
    %v2713 = vunpack.c.l.b16 %v1423
    %v2714 = vunpack.c.l.b16 %v1424
    %v2715 = vunpack.c.l.b16 %v1425
    %v2716 = vunpack.c.l.b16 %v1426
    %v2717 = vunpack.c.l.b16 %v1427
    %v2718 = vunpack.c.l.b16 %v1428
    %v2719 = vunpack.c.l.b16 %v1429
    %v2720 = vunpack.c.l.b16 %v1430
    %v2721 = vunpack.c.l.b16 %v1431
    %v2722 = vunpack.c.l.b16 %v1432
    %v2723 = vunpack.c.l.b16 %v1433
    %v2724 = vunpack.c.l.b16 %v1434
    %v2725 = vunpack.c.l.b16 %v1435
    %v2726 = vunpack.c.l.b16 %v1436
    %v2727 = vunpack.c.l.b16 %v1437
    %v2728 = vunpack.c.l.b16 %v1438
    %v2729 = vunpack.c.l.b16 %v1439
    %v2730 = vunpack.c.l.b16 %v1440
    %v2731 = vunpack.c.l.b16 %v1441
    %v2732 = vunpack.c.l.b16 %v1442
    %v2733 = vpack.c.b16 %v2590, %v2589
    %v2734 = vpack.c.b16 %v2592, %v2591
    %v2735 = vpack.c.b16 %v2594, %v2593
    %v2736 = vpack.c.b16 %v2596, %v2595
    %v2737 = vpack.c.b16 %v2598, %v2597
    %v2738 = vpack.c.b16 %v2600, %v2599
    %v2739 = vpack.c.b16 %v2602, %v2601
    %v2740 = vpack.c.b16 %v2604, %v2603
    %v2741 = vpack.c.b16 %v2606, %v2605
    %v2742 = vpack.c.b16 %v2608, %v2607
    %v2743 = vpack.c.b16 %v2610, %v2609
    %v2744 = vpack.c.b16 %v2612, %v2611
    %v2745 = vpack.c.b16 %v2614, %v2613
    %v2746 = vpack.c.b16 %v2616, %v2615
    %v2747 = vpack.c.b16 %v2618, %v2617
    %v2748 = vpack.c.b16 %v2620, %v2619
    %v2749 = vpack.c.b16 %v2622, %v2621
    %v2750 = vpack.c.b16 %v2624, %v2623
    %v2751 = vpack.c.b16 %v2626, %v2625
    %v2752 = vpack.c.b16 %v2628, %v2627
    %v2753 = vpack.c.b16 %v2630, %v2629
    %v2754 = vpack.c.b16 %v2632, %v2631
    %v2755 = vpack.c.b16 %v2634, %v2633
    %v2756 = vpack.c.b16 %v2636, %v2635
    %v2757 = vpack.c.b16 %v2638, %v2637
    %v2758 = vpack.c.b16 %v2640, %v2639
    %v2759 = vpack.c.b16 %v2642, %v2641
    %v2760 = vpack.c.b16 %v2644, %v2643
    %v2761 = vpack.c.b16 %v2646, %v2645
    %v2762 = vpack.c.b16 %v2648, %v2647
    %v2763 = vpack.c.b16 %v2650, %v2649
    %v2764 = vpack.c.b16 %v2652, %v2651
    %v2765 = vpack.c.b16 %v2654, %v2653
    %v2766 = vpack.c.b16 %v2656, %v2655
    %v2767 = vpack.c.b16 %v2658, %v2657
    %v2768 = vpack.c.b16 %v2660, %v2659
    %v2769 = vpack.c.b16 %v2662, %v2661
    %v2770 = vpack.c.b16 %v2664, %v2663
    %v2771 = vpack.c.b16 %v2666, %v2665
    %v2772 = vpack.c.b16 %v2668, %v2667
    %v2773 = vpack.c.b16 %v2670, %v2669
    %v2774 = vpack.c.b16 %v2672, %v2671
    %v2775 = vpack.c.b16 %v2674, %v2673
    %v2776 = vpack.c.b16 %v2676, %v2675
    %v2777 = vpack.c.b16 %v2678, %v2677
    %v2778 = vpack.c.b16 %v2680, %v2679
    %v2779 = vpack.c.b16 %v2682, %v2681
    %v2780 = vpack.c.b16 %v2684, %v2683
    %v2781 = vpack.c.b16 %v2686, %v2685
    %v2782 = vpack.c.b16 %v2688, %v2687
    %v2783 = vpack.c.b16 %v2690, %v2689
    %v2784 = vpack.c.b16 %v2692, %v2691
    %v2785 = vpack.c.b16 %v2694, %v2693
    %v2786 = vpack.c.b16 %v2696, %v2695
    %v2787 = vpack.c.b16 %v2698, %v2697
    %v2788 = vpack.c.b16 %v2700, %v2699
    %v2789 = vpack.c.b16 %v2702, %v2701
    %v2790 = vpack.c.b16 %v2704, %v2703
    %v2791 = vpack.c.b16 %v2706, %v2705
    %v2792 = vpack.c.b16 %v2708, %v2707
    %v2793 = vpack.c.b16 %v2710, %v2709
    %v2794 = vpack.c.b16 %v2712, %v2711
    %v2795 = vpack.c.b16 %v2714, %v2713
    %v2796 = vpack.c.b16 %v2716, %v2715
    %v2797 = vpack.c.b16 %v2718, %v2717
    %v2798 = vpack.c.b16 %v2720, %v2719
    %v2799 = vpack.c.b16 %v2722, %v2721
    %v2800 = vpack.c.b16 %v2724, %v2723
    %v2801 = vpack.c.b16 %v2726, %v2725
    %v2802 = vpack.c.b16 %v2728, %v2727
    %v2803 = vpack.c.b16 %v2730, %v2729
    %v2804 = vpack.c.b16 %v2732, %v2731
    %2877 = vmatprep.subr.bf16.mxu0 0
    %2878 = vmatpush1.bf16.msra.mxu0 %v2733
    %2879 = vmatprep.subr.bf16.mxu0 0
    %2880 = vmatpush1.bf16.msra.mxu0 %v2734
    %2881 = vmatprep.subr.bf16.mxu0 0
    %2882 = vmatpush1.bf16.msra.mxu0 %v2735
    %2883 = vmatprep.subr.bf16.mxu0 0
    %2884 = vmatpush1.bf16.msra.mxu0 %v2736
    %2885 = vmatprep.subr.bf16.mxu0 0
    %2886 = vmatpush1.bf16.msra.mxu0 %v2737
    %2887 = vmatprep.subr.bf16.mxu0 0
    %2888 = vmatpush1.bf16.msra.mxu0 %v2738
    %2889 = vmatprep.subr.bf16.mxu0 0
    %2890 = vmatpush1.bf16.msra.mxu0 %v2739
    %2891 = vmatprep.subr.bf16.mxu0 0
    %2892 = vmatpush1.bf16.msra.mxu0 %v2740
    %2893 = vmatprep.subr.bf16.mxu0 0
    %2894 = vmatpush1.bf16.msra.mxu0 %v2741
    %2895 = vmatprep.subr.bf16.mxu0 0
    %2896 = vmatpush1.bf16.msra.mxu0 %v2742
    %2897 = vmatprep.subr.bf16.mxu0 0
    %2898 = vmatpush1.bf16.msra.mxu0 %v2743
    %2899 = vmatprep.subr.bf16.mxu0 0
    %2900 = vmatpush1.bf16.msra.mxu0 %v2744
    %2901 = vmatprep.subr.bf16.mxu0 0
    %2902 = vmatpush1.bf16.msra.mxu0 %v2745
    %2903 = vmatprep.subr.bf16.mxu0 0
    %2904 = vmatpush1.bf16.msra.mxu0 %v2746
    %2905 = vmatprep.subr.bf16.mxu0 0
    %2906 = vmatpush1.bf16.msra.mxu0 %v2747
    %2907 = vmatprep.subr.bf16.mxu0 0
    %2908 = vmatpush1.bf16.msra.mxu0 %v2748
    %2909 = vmatprep.mubr.bf16.mxu0 %v1822
    %2910 = vmatmul.mubr.bf16.gmra.mrb[0].mxu0 %v1744
    %v2911 = vpop.f32.mrb[0].mxu0
    %v2912 = vadd.f32 %v2443, %v2911
    %v2913 = vpop.f32.mrb[0].mxu0
    %v2914 = vpop.f32.mrb[0].mxu0
    %v2915 = vadd.f32 %v2443, %v2914
    %v2916 = vpop.f32.mrb[0].mxu0
    %2917 = vmatprep.mubr.bf16.mxu0 %v1834
    %2918 = vmatmul.mubr.bf16.gmra.mrb[0].mxu0 %v1745
    %v2919 = vpop.f32.mrb[0].mxu0
    %v2920 = vadd.f32 %v2443, %v2919
    %v2921 = vpop.f32.mrb[0].mxu0
    %v2922 = vpop.f32.mrb[0].mxu0
    %v2923 = vadd.f32 %v2443, %v2922
    %v2924 = vpop.f32.mrb[0].mxu0
    %2925 = vmatprep.mubr.bf16.mxu0 %v1846
    %2926 = vmatmul.mubr.bf16.gmra.mrb[0].mxu0 %v1746
    %v2927 = vpop.f32.mrb[0].mxu0
    %v2928 = vadd.f32 %v2443, %v2927
    %v2929 = vpop.f32.mrb[0].mxu0
    %v2930 = vpop.f32.mrb[0].mxu0
    %v2931 = vadd.f32 %v2443, %v2930
    %v2932 = vpop.f32.mrb[0].mxu0
    %2933 = vmatprep.mubr.bf16.mxu0 %v1858
    %2934 = vmatmul.mubr.bf16.gmra.mrb[0].mxu0 %v1747
    %v2935 = vpop.f32.mrb[0].mxu0
    %v2936 = vadd.f32 %v2443, %v2935
    %v2937 = vpop.f32.mrb[0].mxu0
    %v2938 = vpop.f32.mrb[0].mxu0
    %v2939 = vadd.f32 %v2443, %v2938
    %v2940 = vpop.f32.mrb[0].mxu0
    %2941 = vmatprep.mubr.bf16.mxu0 %v1870
    %2942 = vmatmul.mubr.bf16.gmra.mrb[0].mxu0 %v1748
    %v2943 = vpop.f32.mrb[0].mxu0
    %v2944 = vadd.f32 %v2443, %v2943
    %v2945 = vpop.f32.mrb[0].mxu0
    %v2946 = vpop.f32.mrb[0].mxu0
    %v2947 = vadd.f32 %v2443, %v2946
    %v2948 = vpop.f32.mrb[0].mxu0
    %2949 = vmatprep.mubr.bf16.mxu0 %v1882
    %2950 = vmatmul.mubr.bf16.gmra.mrb[0].mxu0 %v1749
    %v2951 = vpop.f32.mrb[0].mxu0
    %v2952 = vadd.f32 %v2443, %v2951
    %v2953 = vpop.f32.mrb[0].mxu0
    %v2954 = vpop.f32.mrb[0].mxu0
    %v2955 = vadd.f32 %v2443, %v2954
    %v2956 = vpop.f32.mrb[0].mxu0
    %2957 = vmatprep.mubr.bf16.mxu0 %v1894
    %2958 = vmatmul.mubr.bf16.gmra.mrb[0].mxu0 %v1750
    %v2959 = vpop.f32.mrb[0].mxu0
    %v2960 = vadd.f32 %v2443, %v2959
    %v2961 = vpop.f32.mrb[0].mxu0
    %v2962 = vpop.f32.mrb[0].mxu0
    %v2963 = vadd.f32 %v2443, %v2962
    %v2964 = vpop.f32.mrb[0].mxu0
    %2965 = vmatprep.mubr.bf16.mxu0 %v1906
    %2966 = vmatmul.mubr.bf16.gmra.mrb[0].mxu0 %v1751
    %v2967 = vpop.f32.mrb[0].mxu0
    %v2968 = vadd.f32 %v2443, %v2967
    %v2969 = vpop.f32.mrb[0].mxu0
    %v2970 = vpop.f32.mrb[0].mxu0
    %v2971 = vadd.f32 %v2443, %v2970
    %v2972 = vpop.f32.mrb[0].mxu0
    %2973 = vmatprep.mubr.bf16.mxu0 %v1918
    %2974 = vmatmul.mubr.bf16.gmra.mrb[0].mxu0 %v1752
    %v2975 = vpop.f32.mrb[0].mxu0
    %v2976 = vadd.f32 %v2443, %v2975
    %v2977 = vpop.f32.mrb[0].mxu0
    %v2978 = vpop.f32.mrb[0].mxu0
    %v2979 = vadd.f32 %v2443, %v2978
    %v2980 = vpop.f32.mrb[0].mxu0
    %2981 = vmatprep.mubr.bf16.mxu0 %v1930
    %2982 = vmatmul.mubr.bf16.gmra.mrb[0].mxu0 %v1753
    %v2983 = vpop.f32.mrb[0].mxu0
    %v2984 = vadd.f32 %v2443, %v2983
    %v2985 = vpop.f32.mrb[0].mxu0
    %v2986 = vpop.f32.mrb[0].mxu0
    %v2987 = vadd.f32 %v2443, %v2986
    %v2988 = vpop.f32.mrb[0].mxu0
    %2989 = vmatprep.mubr.bf16.mxu0 %v1942
    %2990 = vmatmul.mubr.bf16.gmra.mrb[0].mxu0 %v1754
    %v2991 = vpop.f32.mrb[0].mxu0
    %v2992 = vadd.f32 %v2443, %v2991
    %v2993 = vpop.f32.mrb[0].mxu0
    %v2994 = vpop.f32.mrb[0].mxu0
    %v2995 = vadd.f32 %v2443, %v2994
    %v2996 = vpop.f32.mrb[0].mxu0
    %2997 = vmatprep.mubr.bf16.mxu0 %v1954
    %2998 = vmatmul.mubr.bf16.gmra.mrb[0].mxu0 %v1755
    %v2999 = vpop.f32.mrb[0].mxu0
    %v3000 = vadd.f32 %v2443, %v2999
    %v3001 = vpop.f32.mrb[0].mxu0
    %v3002 = vpop.f32.mrb[0].mxu0
    %v3003 = vadd.f32 %v2443, %v3002
    %v3004 = vpop.f32.mrb[0].mxu0
    %3005 = vmatprep.mubr.bf16.mxu0 %v1966
    %3006 = vmatmul.mubr.bf16.gmra.mrb[0].mxu0 %v1756
    %v3007 = vpop.f32.mrb[0].mxu0
    %v3008 = vadd.f32 %v2443, %v3007
    %v3009 = vpop.f32.mrb[0].mxu0
    %v3010 = vpop.f32.mrb[0].mxu0
    %v3011 = vadd.f32 %v2443, %v3010
    %v3012 = vpop.f32.mrb[0].mxu0
    %3013 = vmatprep.mubr.bf16.mxu0 %v1978
    %3014 = vmatmul.mubr.bf16.gmra.mrb[0].mxu0 %v1757
    %v3015 = vpop.f32.mrb[0].mxu0
    %v3016 = vadd.f32 %v2443, %v3015
    %v3017 = vpop.f32.mrb[0].mxu0
    %v3018 = vpop.f32.mrb[0].mxu0
    %v3019 = vadd.f32 %v2443, %v3018
    %v3020 = vpop.f32.mrb[0].mxu0
    %3021 = vmatprep.mubr.bf16.mxu0 %v1990
    %3022 = vmatmul.mubr.bf16.gmra.mrb[0].mxu0 %v1758
    %v3023 = vpop.f32.mrb[0].mxu0
    %v3024 = vadd.f32 %v2443, %v3023
    %v3025 = vpop.f32.mrb[0].mxu0
    %v3026 = vpop.f32.mrb[0].mxu0
    %v3027 = vadd.f32 %v2443, %v3026
    %v3028 = vpop.f32.mrb[0].mxu0
    %3029 = vmatprep.mubr.bf16.mxu0 %v2002
    %3030 = vmatmul.mubr.bf16.gmra.mrb[0].mxu0 %v1759
    %v3031 = vpop.f32.mrb[0].mxu0
    %v3032 = vadd.f32 %v2443, %v3031
    %v3033 = vpop.f32.mrb[0].mxu0
    %v3034 = vpop.f32.mrb[0].mxu0
    %v3035 = vadd.f32 %v2443, %v3034
    %v3036 = vpop.f32.mrb[0].mxu0
    %3037 = vmatprep.mubr.bf16.mxu0 %v1822
    %3038 = vmatmul.mubr.bf16.gmra.mrb[0].mxu0 %v1744
    %v3039 = vpop.f32.mrb[0].mxu0
    %v3040 = vadd.f32 %v2443, %v3039
    %v3041 = vpop.f32.mrb[0].mxu0
    %v3042 = vpop.f32.mrb[0].mxu0
    %v3043 = vadd.f32 %v2443, %v3042
    %v3044 = vpop.f32.mrb[0].mxu0
    %3045 = vmatprep.mubr.bf16.mxu0 %v2014
    %3046 = vmatmul.mubr.bf16.gmra.mrb[0].mxu0 %v1761
    %v3047 = vpop.f32.mrb[0].mxu0
    %v3048 = vadd.f32 %v2443, %v3047
    %v3049 = vpop.f32.mrb[0].mxu0
    %v3050 = vpop.f32.mrb[0].mxu0
    %v3051 = vadd.f32 %v2443, %v3050
    %v3052 = vpop.f32.mrb[0].mxu0
    %3053 = vmatprep.mubr.bf16.mxu0 %v2026
    %3054 = vmatmul.mubr.bf16.gmra.mrb[0].mxu0 %v1762
    %v3055 = vpop.f32.mrb[0].mxu0
    %v3056 = vadd.f32 %v2443, %v3055
    %v3057 = vpop.f32.mrb[0].mxu0
    %v3058 = vpop.f32.mrb[0].mxu0
    %v3059 = vadd.f32 %v2443, %v3058
    %v3060 = vpop.f32.mrb[0].mxu0
    %3061 = vmatprep.mubr.bf16.mxu0 %v2038
    %3062 = vmatmul.mubr.bf16.gmra.mrb[0].mxu0 %v1763
    %v3063 = vpop.f32.mrb[0].mxu0
    %v3064 = vadd.f32 %v2443, %v3063
    %v3065 = vpop.f32.mrb[0].mxu0
    %v3066 = vpop.f32.mrb[0].mxu0
    %v3067 = vadd.f32 %v2443, %v3066
    %v3068 = vpop.f32.mrb[0].mxu0
    %3069 = vmatprep.mubr.bf16.mxu0 %v2050
    %3070 = vmatmul.mubr.bf16.gmra.mrb[0].mxu0 %v1764
    %v3071 = vpop.f32.mrb[0].mxu0
    %v3072 = vadd.f32 %v2443, %v3071
    %v3073 = vpop.f32.mrb[0].mxu0
    %v3074 = vpop.f32.mrb[0].mxu0
    %v3075 = vadd.f32 %v2443, %v3074
    %v3076 = vpop.f32.mrb[0].mxu0
    %3077 = vmatprep.mubr.bf16.mxu0 %v2062
    %3078 = vmatmul.mubr.bf16.gmra.mrb[0].mxu0 %v1765
    %v3079 = vpop.f32.mrb[0].mxu0
    %v3080 = vadd.f32 %v2443, %v3079
    %v3081 = vpop.f32.mrb[0].mxu0
    %v3082 = vpop.f32.mrb[0].mxu0
    %v3083 = vadd.f32 %v2443, %v3082
    %v3084 = vpop.f32.mrb[0].mxu0
    %3085 = vmatprep.mubr.bf16.mxu0 %v2074
    %3086 = vmatmul.mubr.bf16.gmra.mrb[0].mxu0 %v1766
    %v3087 = vpop.f32.mrb[0].mxu0
    %v3088 = vadd.f32 %v2443, %v3087
    %v3089 = vpop.f32.mrb[0].mxu0
    %v3090 = vpop.f32.mrb[0].mxu0
    %v3091 = vadd.f32 %v2443, %v3090
    %v3092 = vpop.f32.mrb[0].mxu0
    %3093 = vmatprep.mubr.bf16.mxu0 %v2086
    %3094 = vmatmul.mubr.bf16.gmra.mrb[0].mxu0 %v1767
    %v3095 = vpop.f32.mrb[0].mxu0
    %v3096 = vadd.f32 %v2443, %v3095
    %v3097 = vpop.f32.mrb[0].mxu0
    %v3098 = vpop.f32.mrb[0].mxu0
    %v3099 = vadd.f32 %v2443, %v3098
    %v3100 = vpop.f32.mrb[0].mxu0
    %3101 = vmatprep.mubr.bf16.mxu0 %v2098
    %3102 = vmatmul.mubr.bf16.gmra.mrb[0].mxu0 %v1768
    %v3103 = vpop.f32.mrb[0].mxu0
    %v3104 = vadd.f32 %v2443, %v3103
    %v3105 = vpop.f32.mrb[0].mxu0
    %v3106 = vpop.f32.mrb[0].mxu0
    %v3107 = vadd.f32 %v2443, %v3106
    %v3108 = vpop.f32.mrb[0].mxu0
    %3109 = vmatprep.mubr.bf16.mxu0 %v2110
    %3110 = vmatmul.mubr.bf16.gmra.mrb[0].mxu0 %v1769
    %v3111 = vpop.f32.mrb[0].mxu0
    %v3112 = vadd.f32 %v2443, %v3111
    %v3113 = vpop.f32.mrb[0].mxu0
    %v3114 = vpop.f32.mrb[0].mxu0
    %v3115 = vadd.f32 %v2443, %v3114
    %v3116 = vpop.f32.mrb[0].mxu0
    %3117 = vmatprep.mubr.bf16.mxu0 %v2122
    %3118 = vmatmul.mubr.bf16.gmra.mrb[0].mxu0 %v1770
    %v3119 = vpop.f32.mrb[0].mxu0
    %v3120 = vadd.f32 %v2443, %v3119
    %v3121 = vpop.f32.mrb[0].mxu0
    %v3122 = vpop.f32.mrb[0].mxu0
    %v3123 = vadd.f32 %v2443, %v3122
    %v3124 = vpop.f32.mrb[0].mxu0
    %3125 = vmatprep.mubr.bf16.mxu0 %v2134
    %3126 = vmatmul.mubr.bf16.gmra.mrb[0].mxu0 %v1771
    %v3127 = vpop.f32.mrb[0].mxu0
    %v3128 = vadd.f32 %v2443, %v3127
    %v3129 = vpop.f32.mrb[0].mxu0
    %v3130 = vpop.f32.mrb[0].mxu0
    %v3131 = vadd.f32 %v2443, %v3130
    %v3132 = vpop.f32.mrb[0].mxu0
    %3133 = vmatprep.mubr.bf16.mxu0 %v2146
    %3134 = vmatmul.mubr.bf16.gmra.mrb[0].mxu0 %v1772
    %v3135 = vpop.f32.mrb[0].mxu0
    %v3136 = vadd.f32 %v2443, %v3135
    %v3137 = vpop.f32.mrb[0].mxu0
    %v3138 = vpop.f32.mrb[0].mxu0
    %v3139 = vadd.f32 %v2443, %v3138
    %v3140 = vpop.f32.mrb[0].mxu0
    %3141 = vmatprep.mubr.bf16.mxu0 %v2158
    %3142 = vmatmul.mubr.bf16.gmra.mrb[0].mxu0 %v1773
    %v3143 = vpop.f32.mrb[0].mxu0
    %v3144 = vadd.f32 %v2443, %v3143
    %v3145 = vpop.f32.mrb[0].mxu0
    %v3146 = vpop.f32.mrb[0].mxu0
    %v3147 = vadd.f32 %v2443, %v3146
    %v3148 = vpop.f32.mrb[0].mxu0
    %3149 = vmatprep.mubr.bf16.mxu0 %v2170
    %3150 = vmatmul.mubr.bf16.gmra.mrb[0].mxu0 %v1774
    %v3151 = vpop.f32.mrb[0].mxu0
    %v3152 = vadd.f32 %v2443, %v3151
    %v3153 = vpop.f32.mrb[0].mxu0
    %v3154 = vpop.f32.mrb[0].mxu0
    %v3155 = vadd.f32 %v2443, %v3154
    %v3156 = vpop.f32.mrb[0].mxu0
    %3157 = vmatprep.mubr.bf16.mxu0 %v2182
    %3158 = vmatmul.mubr.bf16.gmra.mrb[0].mxu0 %v1775
    %v3159 = vpop.f32.mrb[0].mxu0
    %v3160 = vadd.f32 %v2443, %v3159
    %v3161 = vpop.f32.mrb[0].mxu0
    %v3162 = vpop.f32.mrb[0].mxu0
    %v3163 = vadd.f32 %v2443, %v3162
    %v3164 = vpop.f32.mrb[0].mxu0
    %3165 = vdwg.mxu0
    %3166 = vmatprep.subr.bf16.mxu0 0
    %3167 = vmatpush1.bf16.msra.mxu0 %v2749
    %3168 = vmatprep.subr.bf16.mxu0 0
    %3169 = vmatpush1.bf16.msra.mxu0 %v2750
    %3170 = vmatprep.subr.bf16.mxu0 0
    %3171 = vmatpush1.bf16.msra.mxu0 %v2751
    %3172 = vmatprep.subr.bf16.mxu0 0
    %3173 = vmatpush1.bf16.msra.mxu0 %v2752
    %3174 = vmatprep.subr.bf16.mxu0 0
    %3175 = vmatpush1.bf16.msra.mxu0 %v2753
    %3176 = vmatprep.subr.bf16.mxu0 0
    %3177 = vmatpush1.bf16.msra.mxu0 %v2754
    %3178 = vmatprep.subr.bf16.mxu0 0
    %3179 = vmatpush1.bf16.msra.mxu0 %v2755
    %3180 = vmatprep.subr.bf16.mxu0 0
    %3181 = vmatpush1.bf16.msra.mxu0 %v2756
    %3182 = vmatprep.subr.bf16.mxu0 0
    %3183 = vmatpush1.bf16.msra.mxu0 %v2757
    %3184 = vmatprep.subr.bf16.mxu0 0
    %3185 = vmatpush1.bf16.msra.mxu0 %v2758
    %3186 = vmatprep.subr.bf16.mxu0 0
    %3187 = vmatpush1.bf16.msra.mxu0 %v2759
    %3188 = vmatprep.subr.bf16.mxu0 0
    %3189 = vmatpush1.bf16.msra.mxu0 %v2760
    %3190 = vmatprep.subr.bf16.mxu0 0
    %3191 = vmatpush1.bf16.msra.mxu0 %v2761
    %3192 = vmatprep.subr.bf16.mxu0 0
    %3193 = vmatpush1.bf16.msra.mxu0 %v2762
    %3194 = vmatprep.subr.bf16.mxu0 0
    %3195 = vmatpush1.bf16.msra.mxu0 %v2763
    %3196 = vmatprep.subr.bf16.mxu0 0
    %3197 = vmatpush1.bf16.msra.mxu0 %v2764
    %3198 = vmatprep.mubr.bf16.mxu0 %v1745
    %3199 = vmatmul.mubr.bf16.gmra.mrb[0].mxu0 %v2279
    %v3200 = vpop.f32.mrb[0].mxu0
    %v3201 = vadd.f32 %v2912, %v3200
    %v3202 = vpop.f32.mrb[0].mxu0
    %v3203 = vpop.f32.mrb[0].mxu0
    %v3204 = vadd.f32 %v2915, %v3203
    %v3205 = vpop.f32.mrb[0].mxu0
    %3206 = vmatprep.mubr.bf16.mxu0 %v1746
    %3207 = vmatmul.mubr.bf16.gmra.mrb[0].mxu0 %v2282
    %v3208 = vpop.f32.mrb[0].mxu0
    %v3209 = vadd.f32 %v2920, %v3208
    %v3210 = vpop.f32.mrb[0].mxu0
    %v3211 = vpop.f32.mrb[0].mxu0
    %v3212 = vadd.f32 %v2923, %v3211
    %v3213 = vpop.f32.mrb[0].mxu0
    %3214 = vmatprep.mubr.bf16.mxu0 %v1747
    %3215 = vmatmul.mubr.bf16.gmra.mrb[0].mxu0 %v2285
    %v3216 = vpop.f32.mrb[0].mxu0
    %v3217 = vadd.f32 %v2928, %v3216
    %v3218 = vpop.f32.mrb[0].mxu0
    %v3219 = vpop.f32.mrb[0].mxu0
    %v3220 = vadd.f32 %v2931, %v3219
    %v3221 = vpop.f32.mrb[0].mxu0
    %3222 = vmatprep.mubr.bf16.mxu0 %v1748
    %3223 = vmatmul.mubr.bf16.gmra.mrb[0].mxu0 %v2288
    %v3224 = vpop.f32.mrb[0].mxu0
    %v3225 = vadd.f32 %v2936, %v3224
    %v3226 = vpop.f32.mrb[0].mxu0
    %v3227 = vpop.f32.mrb[0].mxu0
    %v3228 = vadd.f32 %v2939, %v3227
    %v3229 = vpop.f32.mrb[0].mxu0
    %3230 = vmatprep.mubr.bf16.mxu0 %v1749
    %3231 = vmatmul.mubr.bf16.gmra.mrb[0].mxu0 %v2291
    %v3232 = vpop.f32.mrb[0].mxu0
    %v3233 = vadd.f32 %v2944, %v3232
    %v3234 = vpop.f32.mrb[0].mxu0
    %v3235 = vpop.f32.mrb[0].mxu0
    %v3236 = vadd.f32 %v2947, %v3235
    %v3237 = vpop.f32.mrb[0].mxu0
    %3238 = vmatprep.mubr.bf16.mxu0 %v1750
    %3239 = vmatmul.mubr.bf16.gmra.mrb[0].mxu0 %v2294
    %v3240 = vpop.f32.mrb[0].mxu0
    %v3241 = vadd.f32 %v2952, %v3240
    %v3242 = vpop.f32.mrb[0].mxu0
    %v3243 = vpop.f32.mrb[0].mxu0
    %v3244 = vadd.f32 %v2955, %v3243
    %v3245 = vpop.f32.mrb[0].mxu0
    %3246 = vmatprep.mubr.bf16.mxu0 %v1751
    %3247 = vmatmul.mubr.bf16.gmra.mrb[0].mxu0 %v2297
    %v3248 = vpop.f32.mrb[0].mxu0
    %v3249 = vadd.f32 %v2960, %v3248
    %v3250 = vpop.f32.mrb[0].mxu0
    %v3251 = vpop.f32.mrb[0].mxu0
    %v3252 = vadd.f32 %v2963, %v3251
    %v3253 = vpop.f32.mrb[0].mxu0
    %3254 = vmatprep.mubr.bf16.mxu0 %v1752
    %3255 = vmatmul.mubr.bf16.gmra.mrb[0].mxu0 %v2300
    %v3256 = vpop.f32.mrb[0].mxu0
    %v3257 = vadd.f32 %v2968, %v3256
    %v3258 = vpop.f32.mrb[0].mxu0
    %v3259 = vpop.f32.mrb[0].mxu0
    %v3260 = vadd.f32 %v2971, %v3259
    %v3261 = vpop.f32.mrb[0].mxu0
    %3262 = vmatprep.mubr.bf16.mxu0 %v1753
    %3263 = vmatmul.mubr.bf16.gmra.mrb[0].mxu0 %v2303
    %v3264 = vpop.f32.mrb[0].mxu0
    %v3265 = vadd.f32 %v2976, %v3264
    %v3266 = vpop.f32.mrb[0].mxu0
    %v3267 = vpop.f32.mrb[0].mxu0
    %v3268 = vadd.f32 %v2979, %v3267
    %v3269 = vpop.f32.mrb[0].mxu0
    %3270 = vmatprep.mubr.bf16.mxu0 %v1754
    %3271 = vmatmul.mubr.bf16.gmra.mrb[0].mxu0 %v2306
    %v3272 = vpop.f32.mrb[0].mxu0
    %v3273 = vadd.f32 %v2984, %v3272
    %v3274 = vpop.f32.mrb[0].mxu0
    %v3275 = vpop.f32.mrb[0].mxu0
    %v3276 = vadd.f32 %v2987, %v3275
    %v3277 = vpop.f32.mrb[0].mxu0
    %3278 = vmatprep.mubr.bf16.mxu0 %v1755
    %3279 = vmatmul.mubr.bf16.gmra.mrb[0].mxu0 %v2309
    %v3280 = vpop.f32.mrb[0].mxu0
    %v3281 = vadd.f32 %v2992, %v3280
    %v3282 = vpop.f32.mrb[0].mxu0
    %v3283 = vpop.f32.mrb[0].mxu0
    %v3284 = vadd.f32 %v2995, %v3283
    %v3285 = vpop.f32.mrb[0].mxu0
    %3286 = vmatprep.mubr.bf16.mxu0 %v1756
    %3287 = vmatmul.mubr.bf16.gmra.mrb[0].mxu0 %v2312
    %v3288 = vpop.f32.mrb[0].mxu0
    %v3289 = vadd.f32 %v3000, %v3288
    %v3290 = vpop.f32.mrb[0].mxu0
    %v3291 = vpop.f32.mrb[0].mxu0
    %v3292 = vadd.f32 %v3003, %v3291
    %v3293 = vpop.f32.mrb[0].mxu0
    %3294 = vmatprep.mubr.bf16.mxu0 %v1757
    %3295 = vmatmul.mubr.bf16.gmra.mrb[0].mxu0 %v2315
    %v3296 = vpop.f32.mrb[0].mxu0
    %v3297 = vadd.f32 %v3008, %v3296
    %v3298 = vpop.f32.mrb[0].mxu0
    %v3299 = vpop.f32.mrb[0].mxu0
    %v3300 = vadd.f32 %v3011, %v3299
    %v3301 = vpop.f32.mrb[0].mxu0
    %3302 = vmatprep.mubr.bf16.mxu0 %v1758
    %3303 = vmatmul.mubr.bf16.gmra.mrb[0].mxu0 %v2318
    %v3304 = vpop.f32.mrb[0].mxu0
    %v3305 = vadd.f32 %v3016, %v3304
    %v3306 = vpop.f32.mrb[0].mxu0
    %v3307 = vpop.f32.mrb[0].mxu0
    %v3308 = vadd.f32 %v3019, %v3307
    %v3309 = vpop.f32.mrb[0].mxu0
    %3310 = vmatprep.mubr.bf16.mxu0 %v1759
    %3311 = vmatmul.mubr.bf16.gmra.mrb[0].mxu0 %v2321
    %v3312 = vpop.f32.mrb[0].mxu0
    %v3313 = vadd.f32 %v3024, %v3312
    %v3314 = vpop.f32.mrb[0].mxu0
    %v3315 = vpop.f32.mrb[0].mxu0
    %v3316 = vadd.f32 %v3027, %v3315
    %v3317 = vpop.f32.mrb[0].mxu0
    %3318 = vmatprep.mubr.bf16.mxu0 %v1760
    %3319 = vmatmul.mubr.bf16.gmra.mrb[0].mxu0 %v2324
    %v3320 = vpop.f32.mrb[0].mxu0
    %v3321 = vadd.f32 %v3032, %v3320
    %v3322 = vpop.f32.mrb[0].mxu0
    %v3323 = vpop.f32.mrb[0].mxu0
    %v3324 = vadd.f32 %v3035, %v3323
    %v3325 = vpop.f32.mrb[0].mxu0
    %3326 = vmatprep.mubr.bf16.mxu0 %v1761
    %3327 = vmatmul.mubr.bf16.gmra.mrb[0].mxu0 %v2279
    %v3328 = vpop.f32.mrb[0].mxu0
    %v3329 = vadd.f32 %v3040, %v3328
    %v3330 = vpop.f32.mrb[0].mxu0
    %v3331 = vpop.f32.mrb[0].mxu0
    %v3332 = vadd.f32 %v3043, %v3331
    %v3333 = vpop.f32.mrb[0].mxu0
    %3334 = vmatprep.mubr.bf16.mxu0 %v1762
    %3335 = vmatmul.mubr.bf16.gmra.mrb[0].mxu0 %v2327
    %v3336 = vpop.f32.mrb[0].mxu0
    %v3337 = vadd.f32 %v3048, %v3336
    %v3338 = vpop.f32.mrb[0].mxu0
    %v3339 = vpop.f32.mrb[0].mxu0
    %v3340 = vadd.f32 %v3051, %v3339
    %v3341 = vpop.f32.mrb[0].mxu0
    %3342 = vmatprep.mubr.bf16.mxu0 %v1763
    %3343 = vmatmul.mubr.bf16.gmra.mrb[0].mxu0 %v2330
    %v3344 = vpop.f32.mrb[0].mxu0
    %v3345 = vadd.f32 %v3056, %v3344
    %v3346 = vpop.f32.mrb[0].mxu0
    %v3347 = vpop.f32.mrb[0].mxu0
    %v3348 = vadd.f32 %v3059, %v3347
    %v3349 = vpop.f32.mrb[0].mxu0
    %3350 = vmatprep.mubr.bf16.mxu0 %v1764
    %3351 = vmatmul.mubr.bf16.gmra.mrb[0].mxu0 %v2333
    %v3352 = vpop.f32.mrb[0].mxu0
    %v3353 = vadd.f32 %v3064, %v3352
    %v3354 = vpop.f32.mrb[0].mxu0
    %v3355 = vpop.f32.mrb[0].mxu0
    %v3356 = vadd.f32 %v3067, %v3355
    %v3357 = vpop.f32.mrb[0].mxu0
    %3358 = vmatprep.mubr.bf16.mxu0 %v1765
    %3359 = vmatmul.mubr.bf16.gmra.mrb[0].mxu0 %v2336
    %v3360 = vpop.f32.mrb[0].mxu0
    %v3361 = vadd.f32 %v3072, %v3360
    %v3362 = vpop.f32.mrb[0].mxu0
    %v3363 = vpop.f32.mrb[0].mxu0
    %v3364 = vadd.f32 %v3075, %v3363
    %v3365 = vpop.f32.mrb[0].mxu0
    %3366 = vmatprep.mubr.bf16.mxu0 %v1766
    %3367 = vmatmul.mubr.bf16.gmra.mrb[0].mxu0 %v2339
    %v3368 = vpop.f32.mrb[0].mxu0
    %v3369 = vadd.f32 %v3080, %v3368
    %v3370 = vpop.f32.mrb[0].mxu0
    %v3371 = vpop.f32.mrb[0].mxu0
    %v3372 = vadd.f32 %v3083, %v3371
    %v3373 = vpop.f32.mrb[0].mxu0
    %3374 = vmatprep.mubr.bf16.mxu0 %v1767
    %3375 = vmatmul.mubr.bf16.gmra.mrb[0].mxu0 %v2342
    %v3376 = vpop.f32.mrb[0].mxu0
    %v3377 = vadd.f32 %v3088, %v3376
    %v3378 = vpop.f32.mrb[0].mxu0
    %v3379 = vpop.f32.mrb[0].mxu0
    %v3380 = vadd.f32 %v3091, %v3379
    %v3381 = vpop.f32.mrb[0].mxu0
    %3382 = vmatprep.mubr.bf16.mxu0 %v1768
    %3383 = vmatmul.mubr.bf16.gmra.mrb[0].mxu0 %v2345
    %v3384 = vpop.f32.mrb[0].mxu0
    %v3385 = vadd.f32 %v3096, %v3384
    %v3386 = vpop.f32.mrb[0].mxu0
    %v3387 = vpop.f32.mrb[0].mxu0
    %v3388 = vadd.f32 %v3099, %v3387
    %v3389 = vpop.f32.mrb[0].mxu0
    %3390 = vmatprep.mubr.bf16.mxu0 %v1769
    %3391 = vmatmul.mubr.bf16.gmra.mrb[0].mxu0 %v2348
    %v3392 = vpop.f32.mrb[0].mxu0
    %v3393 = vadd.f32 %v3104, %v3392
    %v3394 = vpop.f32.mrb[0].mxu0
    %v3395 = vpop.f32.mrb[0].mxu0
    %v3396 = vadd.f32 %v3107, %v3395
    %v3397 = vpop.f32.mrb[0].mxu0
    %3398 = vmatprep.mubr.bf16.mxu0 %v1770
    %3399 = vmatmul.mubr.bf16.gmra.mrb[0].mxu0 %v2351
    %v3400 = vpop.f32.mrb[0].mxu0
    %v3401 = vadd.f32 %v3112, %v3400
    %v3402 = vpop.f32.mrb[0].mxu0
    %v3403 = vpop.f32.mrb[0].mxu0
    %v3404 = vadd.f32 %v3115, %v3403
    %v3405 = vpop.f32.mrb[0].mxu0
    %3406 = vmatprep.mubr.bf16.mxu0 %v1771
    %3407 = vmatmul.mubr.bf16.gmra.mrb[0].mxu0 %v2354
    %v3408 = vpop.f32.mrb[0].mxu0
    %v3409 = vadd.f32 %v3120, %v3408
    %v3410 = vpop.f32.mrb[0].mxu0
    %v3411 = vpop.f32.mrb[0].mxu0
    %v3412 = vadd.f32 %v3123, %v3411
    %v3413 = vpop.f32.mrb[0].mxu0
    %3414 = vmatprep.mubr.bf16.mxu0 %v1772
    %3415 = vmatmul.mubr.bf16.gmra.mrb[0].mxu0 %v2357
    %v3416 = vpop.f32.mrb[0].mxu0
    %v3417 = vadd.f32 %v3128, %v3416
    %v3418 = vpop.f32.mrb[0].mxu0
    %v3419 = vpop.f32.mrb[0].mxu0
    %v3420 = vadd.f32 %v3131, %v3419
    %v3421 = vpop.f32.mrb[0].mxu0
    %3422 = vmatprep.mubr.bf16.mxu0 %v1773
    %3423 = vmatmul.mubr.bf16.gmra.mrb[0].mxu0 %v2360
    %v3424 = vpop.f32.mrb[0].mxu0
    %v3425 = vadd.f32 %v3136, %v3424
    %v3426 = vpop.f32.mrb[0].mxu0
    %v3427 = vpop.f32.mrb[0].mxu0
    %v3428 = vadd.f32 %v3139, %v3427
    %v3429 = vpop.f32.mrb[0].mxu0
    %3430 = vmatprep.mubr.bf16.mxu0 %v1774
    %3431 = vmatmul.mubr.bf16.gmra.mrb[0].mxu0 %v2363
    %v3432 = vpop.f32.mrb[0].mxu0
    %v3433 = vadd.f32 %v3144, %v3432
    %v3434 = vpop.f32.mrb[0].mxu0
    %v3435 = vpop.f32.mrb[0].mxu0
    %v3436 = vadd.f32 %v3147, %v3435
    %v3437 = vpop.f32.mrb[0].mxu0
    %3438 = vmatprep.mubr.bf16.mxu0 %v1775
    %3439 = vmatmul.mubr.bf16.gmra.mrb[0].mxu0 %v2366
    %v3440 = vpop.f32.mrb[0].mxu0
    %v3441 = vadd.f32 %v3152, %v3440
    %v3442 = vpop.f32.mrb[0].mxu0
    %v3443 = vpop.f32.mrb[0].mxu0
    %v3444 = vadd.f32 %v3155, %v3443
    %v3445 = vpop.f32.mrb[0].mxu0
    %3446 = vmatprep.mubr.bf16.mxu0 %v1776
    %3447 = vmatmul.mubr.bf16.gmra.mrb[0].mxu0 %v2369
    %v3448 = vpop.f32.mrb[0].mxu0
    %v3449 = vadd.f32 %v3160, %v3448
    %v3450 = vpop.f32.mrb[0].mxu0
    %v3451 = vpop.f32.mrb[0].mxu0
    %v3452 = vadd.f32 %v3163, %v3451
    %v3453 = vpop.f32.mrb[0].mxu0
    %3454 = vdwg.mxu0
    %3455 = vmatprep.subr.bf16.mxu0 0
    %3456 = vmatpush1.bf16.msra.mxu0 %v2765
    %3457 = vmatprep.subr.bf16.mxu0 0
    %3458 = vmatpush1.bf16.msra.mxu0 %v2766
    %3459 = vmatprep.subr.bf16.mxu0 0
    %3460 = vmatpush1.bf16.msra.mxu0 %v2767
    %3461 = vmatprep.subr.bf16.mxu0 0
    %3462 = vmatpush1.bf16.msra.mxu0 %v2768
    %3463 = vmatprep.subr.bf16.mxu0 0
    %3464 = vmatpush1.bf16.msra.mxu0 %v2769
    %3465 = vmatprep.subr.bf16.mxu0 0
    %3466 = vmatpush1.bf16.msra.mxu0 %v2770
    %3467 = vmatprep.subr.bf16.mxu0 0
    %3468 = vmatpush1.bf16.msra.mxu0 %v2771
    %3469 = vmatprep.subr.bf16.mxu0 0
    %3470 = vmatpush1.bf16.msra.mxu0 %v2772
    %3471 = vmatprep.subr.bf16.mxu0 0
    %3472 = vmatpush1.bf16.msra.mxu0 %v2773
    %3473 = vmatprep.subr.bf16.mxu0 0
    %3474 = vmatpush1.bf16.msra.mxu0 %v2774
    %3475 = vmatprep.subr.bf16.mxu0 0
    %3476 = vmatpush1.bf16.msra.mxu0 %v2775
    %3477 = vmatprep.subr.bf16.mxu0 0
    %3478 = vmatpush1.bf16.msra.mxu0 %v2776
    %3479 = vmatprep.subr.bf16.mxu0 0
    %3480 = vmatpush1.bf16.msra.mxu0 %v2777
    %3481 = vmatprep.subr.bf16.mxu0 0
    %3482 = vmatpush1.bf16.msra.mxu0 %v2778
    %3483 = vmatprep.subr.bf16.mxu0 0
    %3484 = vmatpush1.bf16.msra.mxu0 %v2779
    %3485 = vmatprep.subr.bf16.mxu0 0
    %3486 = vmatpush1.bf16.msra.mxu0 %v2780
    %3487 = vmatprep.mubr.bf16.mxu0 %v2282
    %3488 = vmatmul.mubr.bf16.gmra.mrb[0].mxu0 %v1834
    %v3489 = vpop.f32.mrb[0].mxu0
    %v3490 = vadd.f32 %v3201, %v3489
    %v3491 = vpop.f32.mrb[0].mxu0
    %v3492 = vpop.f32.mrb[0].mxu0
    %v3493 = vadd.f32 %v3204, %v3492
    %v3494 = vpop.f32.mrb[0].mxu0
    %3495 = vmatprep.mubr.bf16.mxu0 %v2285
    %3496 = vmatmul.mubr.bf16.gmra.mrb[0].mxu0 %v1846
    %v3497 = vpop.f32.mrb[0].mxu0
    %v3498 = vadd.f32 %v3209, %v3497
    %v3499 = vpop.f32.mrb[0].mxu0
    %v3500 = vpop.f32.mrb[0].mxu0
    %v3501 = vadd.f32 %v3212, %v3500
    %v3502 = vpop.f32.mrb[0].mxu0
    %3503 = vmatprep.mubr.bf16.mxu0 %v2288
    %3504 = vmatmul.mubr.bf16.gmra.mrb[0].mxu0 %v1858
    %v3505 = vpop.f32.mrb[0].mxu0
    %v3506 = vadd.f32 %v3217, %v3505
    %v3507 = vpop.f32.mrb[0].mxu0
    %v3508 = vpop.f32.mrb[0].mxu0
    %v3509 = vadd.f32 %v3220, %v3508
    %v3510 = vpop.f32.mrb[0].mxu0
    %3511 = vmatprep.mubr.bf16.mxu0 %v2291
    %3512 = vmatmul.mubr.bf16.gmra.mrb[0].mxu0 %v1870
    %v3513 = vpop.f32.mrb[0].mxu0
    %v3514 = vadd.f32 %v3225, %v3513
    %v3515 = vpop.f32.mrb[0].mxu0
    %v3516 = vpop.f32.mrb[0].mxu0
    %v3517 = vadd.f32 %v3228, %v3516
    %v3518 = vpop.f32.mrb[0].mxu0
    %3519 = vmatprep.mubr.bf16.mxu0 %v2294
    %3520 = vmatmul.mubr.bf16.gmra.mrb[0].mxu0 %v1882
    %v3521 = vpop.f32.mrb[0].mxu0
    %v3522 = vadd.f32 %v3233, %v3521
    %v3523 = vpop.f32.mrb[0].mxu0
    %v3524 = vpop.f32.mrb[0].mxu0
    %v3525 = vadd.f32 %v3236, %v3524
    %v3526 = vpop.f32.mrb[0].mxu0
    %3527 = vmatprep.mubr.bf16.mxu0 %v2297
    %3528 = vmatmul.mubr.bf16.gmra.mrb[0].mxu0 %v1894
    %v3529 = vpop.f32.mrb[0].mxu0
    %v3530 = vadd.f32 %v3241, %v3529
    %v3531 = vpop.f32.mrb[0].mxu0
    %v3532 = vpop.f32.mrb[0].mxu0
    %v3533 = vadd.f32 %v3244, %v3532
    %v3534 = vpop.f32.mrb[0].mxu0
    %3535 = vmatprep.mubr.bf16.mxu0 %v2300
    %3536 = vmatmul.mubr.bf16.gmra.mrb[0].mxu0 %v1906
    %v3537 = vpop.f32.mrb[0].mxu0
    %v3538 = vadd.f32 %v3249, %v3537
    %v3539 = vpop.f32.mrb[0].mxu0
    %v3540 = vpop.f32.mrb[0].mxu0
    %v3541 = vadd.f32 %v3252, %v3540
    %v3542 = vpop.f32.mrb[0].mxu0
    %3543 = vmatprep.mubr.bf16.mxu0 %v2303
    %3544 = vmatmul.mubr.bf16.gmra.mrb[0].mxu0 %v1918
    %v3545 = vpop.f32.mrb[0].mxu0
    %v3546 = vadd.f32 %v3257, %v3545
    %v3547 = vpop.f32.mrb[0].mxu0
    %v3548 = vpop.f32.mrb[0].mxu0
    %v3549 = vadd.f32 %v3260, %v3548
    %v3550 = vpop.f32.mrb[0].mxu0
    %3551 = vmatprep.mubr.bf16.mxu0 %v2306
    %3552 = vmatmul.mubr.bf16.gmra.mrb[0].mxu0 %v1930
    %v3553 = vpop.f32.mrb[0].mxu0
    %v3554 = vadd.f32 %v3265, %v3553
    %v3555 = vpop.f32.mrb[0].mxu0
    %v3556 = vpop.f32.mrb[0].mxu0
    %v3557 = vadd.f32 %v3268, %v3556
    %v3558 = vpop.f32.mrb[0].mxu0
    %3559 = vmatprep.mubr.bf16.mxu0 %v2309
    %3560 = vmatmul.mubr.bf16.gmra.mrb[0].mxu0 %v1942
    %v3561 = vpop.f32.mrb[0].mxu0
    %v3562 = vadd.f32 %v3273, %v3561
    %v3563 = vpop.f32.mrb[0].mxu0
    %v3564 = vpop.f32.mrb[0].mxu0
    %v3565 = vadd.f32 %v3276, %v3564
    %v3566 = vpop.f32.mrb[0].mxu0
    %3567 = vmatprep.mubr.bf16.mxu0 %v2312
    %3568 = vmatmul.mubr.bf16.gmra.mrb[0].mxu0 %v1954
    %v3569 = vpop.f32.mrb[0].mxu0
    %v3570 = vadd.f32 %v3281, %v3569
    %v3571 = vpop.f32.mrb[0].mxu0
    %v3572 = vpop.f32.mrb[0].mxu0
    %v3573 = vadd.f32 %v3284, %v3572
    %v3574 = vpop.f32.mrb[0].mxu0
    %3575 = vmatprep.mubr.bf16.mxu0 %v2315
    %3576 = vmatmul.mubr.bf16.gmra.mrb[0].mxu0 %v1966
    %v3577 = vpop.f32.mrb[0].mxu0
    %v3578 = vadd.f32 %v3289, %v3577
    %v3579 = vpop.f32.mrb[0].mxu0
    %v3580 = vpop.f32.mrb[0].mxu0
    %v3581 = vadd.f32 %v3292, %v3580
    %v3582 = vpop.f32.mrb[0].mxu0
    %3583 = vmatprep.mubr.bf16.mxu0 %v2318
    %3584 = vmatmul.mubr.bf16.gmra.mrb[0].mxu0 %v1978
    %v3585 = vpop.f32.mrb[0].mxu0
    %v3586 = vadd.f32 %v3297, %v3585
    %v3587 = vpop.f32.mrb[0].mxu0
    %v3588 = vpop.f32.mrb[0].mxu0
    %v3589 = vadd.f32 %v3300, %v3588
    %v3590 = vpop.f32.mrb[0].mxu0
    %3591 = vmatprep.mubr.bf16.mxu0 %v2321
    %3592 = vmatmul.mubr.bf16.gmra.mrb[0].mxu0 %v1990
    %v3593 = vpop.f32.mrb[0].mxu0
    %v3594 = vadd.f32 %v3305, %v3593
    %v3595 = vpop.f32.mrb[0].mxu0
    %v3596 = vpop.f32.mrb[0].mxu0
    %v3597 = vadd.f32 %v3308, %v3596
    %v3598 = vpop.f32.mrb[0].mxu0
    %3599 = vmatprep.mubr.bf16.mxu0 %v2324
    %3600 = vmatmul.mubr.bf16.gmra.mrb[0].mxu0 %v2002
    %v3601 = vpop.f32.mrb[0].mxu0
    %v3602 = vadd.f32 %v3313, %v3601
    %v3603 = vpop.f32.mrb[0].mxu0
    %v3604 = vpop.f32.mrb[0].mxu0
    %v3605 = vadd.f32 %v3316, %v3604
    %v3606 = vpop.f32.mrb[0].mxu0
    %3607 = vmatprep.mubr.bf16.mxu0 %v2433
    %3608 = vmatmul.mubr.bf16.gmra.mrb[0].mxu0 %v2412
    %v3609 = vpop.f32.mrb[0].mxu0
    %v3610 = vadd.f32 %v3321, %v3609
    %v3611 = vpop.f32.mrb[0].mxu0
    %v3612 = vpop.f32.mrb[0].mxu0
    %v3613 = vadd.f32 %v3324, %v3612
    %v3614 = vpop.f32.mrb[0].mxu0
    %3615 = vmatprep.mubr.bf16.mxu0 %v2327
    %3616 = vmatmul.mubr.bf16.gmra.mrb[0].mxu0 %v2014
    %v3617 = vpop.f32.mrb[0].mxu0
    %v3618 = vadd.f32 %v3329, %v3617
    %v3619 = vpop.f32.mrb[0].mxu0
    %v3620 = vpop.f32.mrb[0].mxu0
    %v3621 = vadd.f32 %v3332, %v3620
    %v3622 = vpop.f32.mrb[0].mxu0
    %3623 = vmatprep.mubr.bf16.mxu0 %v2330
    %3624 = vmatmul.mubr.bf16.gmra.mrb[0].mxu0 %v2026
    %v3625 = vpop.f32.mrb[0].mxu0
    %v3626 = vadd.f32 %v3337, %v3625
    %v3627 = vpop.f32.mrb[0].mxu0
    %v3628 = vpop.f32.mrb[0].mxu0
    %v3629 = vadd.f32 %v3340, %v3628
    %v3630 = vpop.f32.mrb[0].mxu0
    %3631 = vmatprep.mubr.bf16.mxu0 %v2333
    %3632 = vmatmul.mubr.bf16.gmra.mrb[0].mxu0 %v2038
    %v3633 = vpop.f32.mrb[0].mxu0
    %v3634 = vadd.f32 %v3345, %v3633
    %v3635 = vpop.f32.mrb[0].mxu0
    %v3636 = vpop.f32.mrb[0].mxu0
    %v3637 = vadd.f32 %v3348, %v3636
    %v3638 = vpop.f32.mrb[0].mxu0
    %3639 = vmatprep.mubr.bf16.mxu0 %v2336
    %3640 = vmatmul.mubr.bf16.gmra.mrb[0].mxu0 %v2050
    %v3641 = vpop.f32.mrb[0].mxu0
    %v3642 = vadd.f32 %v3353, %v3641
    %v3643 = vpop.f32.mrb[0].mxu0
    %v3644 = vpop.f32.mrb[0].mxu0
    %v3645 = vadd.f32 %v3356, %v3644
    %v3646 = vpop.f32.mrb[0].mxu0
    %3647 = vmatprep.mubr.bf16.mxu0 %v2339
    %3648 = vmatmul.mubr.bf16.gmra.mrb[0].mxu0 %v2062
    %v3649 = vpop.f32.mrb[0].mxu0
    %v3650 = vadd.f32 %v3361, %v3649
    %v3651 = vpop.f32.mrb[0].mxu0
    %v3652 = vpop.f32.mrb[0].mxu0
    %v3653 = vadd.f32 %v3364, %v3652
    %v3654 = vpop.f32.mrb[0].mxu0
    %3655 = vmatprep.mubr.bf16.mxu0 %v2342
    %3656 = vmatmul.mubr.bf16.gmra.mrb[0].mxu0 %v2074
    %v3657 = vpop.f32.mrb[0].mxu0
    %v3658 = vadd.f32 %v3369, %v3657
    %v3659 = vpop.f32.mrb[0].mxu0
    %v3660 = vpop.f32.mrb[0].mxu0
    %v3661 = vadd.f32 %v3372, %v3660
    %v3662 = vpop.f32.mrb[0].mxu0
    %3663 = vmatprep.mubr.bf16.mxu0 %v2345
    %3664 = vmatmul.mubr.bf16.gmra.mrb[0].mxu0 %v2086
    %v3665 = vpop.f32.mrb[0].mxu0
    %v3666 = vadd.f32 %v3377, %v3665
    %v3667 = vpop.f32.mrb[0].mxu0
    %v3668 = vpop.f32.mrb[0].mxu0
    %v3669 = vadd.f32 %v3380, %v3668
    %v3670 = vpop.f32.mrb[0].mxu0
    %3671 = vmatprep.mubr.bf16.mxu0 %v2348
    %3672 = vmatmul.mubr.bf16.gmra.mrb[0].mxu0 %v2098
    %v3673 = vpop.f32.mrb[0].mxu0
    %v3674 = vadd.f32 %v3385, %v3673
    %v3675 = vpop.f32.mrb[0].mxu0
    %v3676 = vpop.f32.mrb[0].mxu0
    %v3677 = vadd.f32 %v3388, %v3676
    %v3678 = vpop.f32.mrb[0].mxu0
    %3679 = vmatprep.mubr.bf16.mxu0 %v2351
    %3680 = vmatmul.mubr.bf16.gmra.mrb[0].mxu0 %v2110
    %v3681 = vpop.f32.mrb[0].mxu0
    %v3682 = vadd.f32 %v3393, %v3681
    %v3683 = vpop.f32.mrb[0].mxu0
    %v3684 = vpop.f32.mrb[0].mxu0
    %v3685 = vadd.f32 %v3396, %v3684
    %v3686 = vpop.f32.mrb[0].mxu0
    %3687 = vmatprep.mubr.bf16.mxu0 %v2354
    %3688 = vmatmul.mubr.bf16.gmra.mrb[0].mxu0 %v2122
    %v3689 = vpop.f32.mrb[0].mxu0
    %v3690 = vadd.f32 %v3401, %v3689
    %v3691 = vpop.f32.mrb[0].mxu0
    %v3692 = vpop.f32.mrb[0].mxu0
    %v3693 = vadd.f32 %v3404, %v3692
    %v3694 = vpop.f32.mrb[0].mxu0
    %3695 = vmatprep.mubr.bf16.mxu0 %v2357
    %3696 = vmatmul.mubr.bf16.gmra.mrb[0].mxu0 %v2134
    %v3697 = vpop.f32.mrb[0].mxu0
    %v3698 = vadd.f32 %v3409, %v3697
    %v3699 = vpop.f32.mrb[0].mxu0
    %v3700 = vpop.f32.mrb[0].mxu0
    %v3701 = vadd.f32 %v3412, %v3700
    %v3702 = vpop.f32.mrb[0].mxu0
    %3703 = vmatprep.mubr.bf16.mxu0 %v2360
    %3704 = vmatmul.mubr.bf16.gmra.mrb[0].mxu0 %v2146
    %v3705 = vpop.f32.mrb[0].mxu0
    %v3706 = vadd.f32 %v3417, %v3705
    %v3707 = vpop.f32.mrb[0].mxu0
    %v3708 = vpop.f32.mrb[0].mxu0
    %v3709 = vadd.f32 %v3420, %v3708
    %v3710 = vpop.f32.mrb[0].mxu0
    %3711 = vmatprep.mubr.bf16.mxu0 %v2363
    %3712 = vmatmul.mubr.bf16.gmra.mrb[0].mxu0 %v2158
    %v3713 = vpop.f32.mrb[0].mxu0
    %v3714 = vadd.f32 %v3425, %v3713
    %v3715 = vpop.f32.mrb[0].mxu0
    %v3716 = vpop.f32.mrb[0].mxu0
    %v3717 = vadd.f32 %v3428, %v3716
    %v3718 = vpop.f32.mrb[0].mxu0
    %3719 = vmatprep.mubr.bf16.mxu0 %v2366
    %3720 = vmatmul.mubr.bf16.gmra.mrb[0].mxu0 %v2170
    %v3721 = vpop.f32.mrb[0].mxu0
    %v3722 = vadd.f32 %v3433, %v3721
    %v3723 = vpop.f32.mrb[0].mxu0
    %v3724 = vpop.f32.mrb[0].mxu0
    %v3725 = vadd.f32 %v3436, %v3724
    %v3726 = vpop.f32.mrb[0].mxu0
    %3727 = vmatprep.mubr.bf16.mxu0 %v2369
    %3728 = vmatmul.mubr.bf16.gmra.mrb[0].mxu0 %v2182
    %v3729 = vpop.f32.mrb[0].mxu0
    %v3730 = vadd.f32 %v3441, %v3729
    %v3731 = vpop.f32.mrb[0].mxu0
    %v3732 = vpop.f32.mrb[0].mxu0
    %v3733 = vadd.f32 %v3444, %v3732
    %v3734 = vpop.f32.mrb[0].mxu0
    %3735 = vmatprep.mubr.bf16.mxu0 %v2436
    %3736 = vmatmul.mubr.bf16.gmra.mrb[0].mxu0 %v2424
    %v3737 = vpop.f32.mrb[0].mxu0
    %v3738 = vadd.f32 %v3449, %v3737
    %v3739 = vpop.f32.mrb[0].mxu0
    %v3740 = vpop.f32.mrb[0].mxu0
    %v3741 = vadd.f32 %v3452, %v3740
    %v3742 = vpop.f32.mrb[0].mxu0
    %3743 = vdwg.mxu0
    %3744 = vmatprep.subr.bf16.mxu0 0
    %3745 = vmatpush1.bf16.msra.mxu0 %v2781
    %3746 = vmatprep.subr.bf16.mxu0 0
    %3747 = vmatpush1.bf16.msra.mxu0 %v2782
    %3748 = vmatprep.subr.bf16.mxu0 0
    %3749 = vmatpush1.bf16.msra.mxu0 %v2783
    %3750 = vmatprep.subr.bf16.mxu0 0
    %3751 = vmatpush1.bf16.msra.mxu0 %v2784
    %3752 = vmatprep.subr.bf16.mxu0 0
    %3753 = vmatpush1.bf16.msra.mxu0 %v2785
    %3754 = vmatprep.subr.bf16.mxu0 0
    %3755 = vmatpush1.bf16.msra.mxu0 %v2786
    %3756 = vmatprep.subr.bf16.mxu0 0
    %3757 = vmatpush1.bf16.msra.mxu0 %v2787
    %3758 = vmatprep.subr.bf16.mxu0 0
    %3759 = vmatpush1.bf16.msra.mxu0 %v2788
    %3760 = vmatprep.subr.bf16.mxu0 0
    %3761 = vmatpush1.bf16.msra.mxu0 %v2789
    %3762 = vmatprep.subr.bf16.mxu0 0
    %3763 = vmatpush1.bf16.msra.mxu0 %v2790
    %3764 = vmatprep.subr.bf16.mxu0 0
    %3765 = vmatpush1.bf16.msra.mxu0 %v2791
    %3766 = vmatprep.subr.bf16.mxu0 0
    %3767 = vmatpush1.bf16.msra.mxu0 %v2792
    %3768 = vmatprep.subr.bf16.mxu0 0
    %3769 = vmatpush1.bf16.msra.mxu0 %v2793
    %3770 = vmatprep.subr.bf16.mxu0 0
    %3771 = vmatpush1.bf16.msra.mxu0 %v2794
    %3772 = vmatprep.subr.bf16.mxu0 0
    %3773 = vmatpush1.bf16.msra.mxu0 %v2795
    %3774 = vmatprep.subr.bf16.mxu0 0
    %3775 = vmatpush1.bf16.msra.mxu0 %v2796
    %3776 = vmatprep.mubr.bf16.mxu0 %v1846
    %3777 = vmatmul.mubr.bf16.gmra.mrb[0].mxu0 %v1746
    %v3778 = vpop.f32.mrb[0].mxu0
    %v3779 = vadd.f32 %v3490, %v3778
    %v3780 = vpop.f32.mrb[0].mxu0
    %v3781 = vpop.f32.mrb[0].mxu0
    %v3782 = vadd.f32 %v3493, %v3781
    %v3783 = vpop.f32.mrb[0].mxu0
    %3784 = vmatprep.mubr.bf16.mxu0 %v1858
    %3785 = vmatmul.mubr.bf16.gmra.mrb[0].mxu0 %v1747
    %v3786 = vpop.f32.mrb[0].mxu0
    %v3787 = vadd.f32 %v3498, %v3786
    %v3788 = vpop.f32.mrb[0].mxu0
    %v3789 = vpop.f32.mrb[0].mxu0
    %v3790 = vadd.f32 %v3501, %v3789
    %v3791 = vpop.f32.mrb[0].mxu0
    %3792 = vmatprep.mubr.bf16.mxu0 %v1870
    %3793 = vmatmul.mubr.bf16.gmra.mrb[0].mxu0 %v1748
    %v3794 = vpop.f32.mrb[0].mxu0
    %v3795 = vadd.f32 %v3506, %v3794
    %v3796 = vpop.f32.mrb[0].mxu0
    %v3797 = vpop.f32.mrb[0].mxu0
    %v3798 = vadd.f32 %v3509, %v3797
    %v3799 = vpop.f32.mrb[0].mxu0
    %3800 = vmatprep.mubr.bf16.mxu0 %v1882
    %3801 = vmatmul.mubr.bf16.gmra.mrb[0].mxu0 %v1749
    %v3802 = vpop.f32.mrb[0].mxu0
    %v3803 = vadd.f32 %v3514, %v3802
    %v3804 = vpop.f32.mrb[0].mxu0
    %v3805 = vpop.f32.mrb[0].mxu0
    %v3806 = vadd.f32 %v3517, %v3805
    %v3807 = vpop.f32.mrb[0].mxu0
    %3808 = vmatprep.mubr.bf16.mxu0 %v1894
    %3809 = vmatmul.mubr.bf16.gmra.mrb[0].mxu0 %v1750
    %v3810 = vpop.f32.mrb[0].mxu0
    %v3811 = vadd.f32 %v3522, %v3810
    %v3812 = vpop.f32.mrb[0].mxu0
    %v3813 = vpop.f32.mrb[0].mxu0
    %v3814 = vadd.f32 %v3525, %v3813
    %v3815 = vpop.f32.mrb[0].mxu0
    %3816 = vmatprep.mubr.bf16.mxu0 %v1906
    %3817 = vmatmul.mubr.bf16.gmra.mrb[0].mxu0 %v1751
    %v3818 = vpop.f32.mrb[0].mxu0
    %v3819 = vadd.f32 %v3530, %v3818
    %v3820 = vpop.f32.mrb[0].mxu0
    %v3821 = vpop.f32.mrb[0].mxu0
    %v3822 = vadd.f32 %v3533, %v3821
    %v3823 = vpop.f32.mrb[0].mxu0
    %3824 = vmatprep.mubr.bf16.mxu0 %v1918
    %3825 = vmatmul.mubr.bf16.gmra.mrb[0].mxu0 %v1752
    %v3826 = vpop.f32.mrb[0].mxu0
    %v3827 = vadd.f32 %v3538, %v3826
    %v3828 = vpop.f32.mrb[0].mxu0
    %v3829 = vpop.f32.mrb[0].mxu0
    %v3830 = vadd.f32 %v3541, %v3829
    %v3831 = vpop.f32.mrb[0].mxu0
    %3832 = vmatprep.mubr.bf16.mxu0 %v1930
    %3833 = vmatmul.mubr.bf16.gmra.mrb[0].mxu0 %v1753
    %v3834 = vpop.f32.mrb[0].mxu0
    %v3835 = vadd.f32 %v3546, %v3834
    %v3836 = vpop.f32.mrb[0].mxu0
    %v3837 = vpop.f32.mrb[0].mxu0
    %v3838 = vadd.f32 %v3549, %v3837
    %v3839 = vpop.f32.mrb[0].mxu0
    %3840 = vmatprep.mubr.bf16.mxu0 %v1942
    %3841 = vmatmul.mubr.bf16.gmra.mrb[0].mxu0 %v1754
    %v3842 = vpop.f32.mrb[0].mxu0
    %v3843 = vadd.f32 %v3554, %v3842
    %v3844 = vpop.f32.mrb[0].mxu0
    %v3845 = vpop.f32.mrb[0].mxu0
    %v3846 = vadd.f32 %v3557, %v3845
    %v3847 = vpop.f32.mrb[0].mxu0
    %3848 = vmatprep.mubr.bf16.mxu0 %v1954
    %3849 = vmatmul.mubr.bf16.gmra.mrb[0].mxu0 %v1755
    %v3850 = vpop.f32.mrb[0].mxu0
    %v3851 = vadd.f32 %v3562, %v3850
    %v3852 = vpop.f32.mrb[0].mxu0
    %v3853 = vpop.f32.mrb[0].mxu0
    %v3854 = vadd.f32 %v3565, %v3853
    %v3855 = vpop.f32.mrb[0].mxu0
    %3856 = vmatprep.mubr.bf16.mxu0 %v1966
    %3857 = vmatmul.mubr.bf16.gmra.mrb[0].mxu0 %v1756
    %v3858 = vpop.f32.mrb[0].mxu0
    %v3859 = vadd.f32 %v3570, %v3858
    %v3860 = vpop.f32.mrb[0].mxu0
    %v3861 = vpop.f32.mrb[0].mxu0
    %v3862 = vadd.f32 %v3573, %v3861
    %v3863 = vpop.f32.mrb[0].mxu0
    %3864 = vmatprep.mubr.bf16.mxu0 %v1978
    %3865 = vmatmul.mubr.bf16.gmra.mrb[0].mxu0 %v1757
    %v3866 = vpop.f32.mrb[0].mxu0
    %v3867 = vadd.f32 %v3578, %v3866
    %v3868 = vpop.f32.mrb[0].mxu0
    %v3869 = vpop.f32.mrb[0].mxu0
    %v3870 = vadd.f32 %v3581, %v3869
    %v3871 = vpop.f32.mrb[0].mxu0
    %3872 = vmatprep.mubr.bf16.mxu0 %v1990
    %3873 = vmatmul.mubr.bf16.gmra.mrb[0].mxu0 %v1758
    %v3874 = vpop.f32.mrb[0].mxu0
    %v3875 = vadd.f32 %v3586, %v3874
    %v3876 = vpop.f32.mrb[0].mxu0
    %v3877 = vpop.f32.mrb[0].mxu0
    %v3878 = vadd.f32 %v3589, %v3877
    %v3879 = vpop.f32.mrb[0].mxu0
    %3880 = vmatprep.mubr.bf16.mxu0 %v2002
    %3881 = vmatmul.mubr.bf16.gmra.mrb[0].mxu0 %v1759
    %v3882 = vpop.f32.mrb[0].mxu0
    %v3883 = vadd.f32 %v3594, %v3882
    %v3884 = vpop.f32.mrb[0].mxu0
    %v3885 = vpop.f32.mrb[0].mxu0
    %v3886 = vadd.f32 %v3597, %v3885
    %v3887 = vpop.f32.mrb[0].mxu0
    %3888 = vmatprep.mubr.bf16.mxu0 %v2412
    %3889 = vmatmul.mubr.bf16.gmra.mrb[0].mxu0 %v1760
    %v3890 = vpop.f32.mrb[0].mxu0
    %v3891 = vadd.f32 %v3602, %v3890
    %v3892 = vpop.f32.mrb[0].mxu0
    %v3893 = vpop.f32.mrb[0].mxu0
    %v3894 = vadd.f32 %v3605, %v3893
    %v3895 = vpop.f32.mrb[0].mxu0
    %3896 = vmatprep.mubr.bf16.mxu0 %v1822
    %3897 = vmatmul.mubr.bf16.gmra.mrb[0].mxu0 %v1744
    %v3898 = vpop.f32.mrb[0].mxu0
    %v3899 = vadd.f32 %v3610, %v3898
    %v3900 = vpop.f32.mrb[0].mxu0
    %v3901 = vpop.f32.mrb[0].mxu0
    %v3902 = vadd.f32 %v3613, %v3901
    %v3903 = vpop.f32.mrb[0].mxu0
    %3904 = vmatprep.mubr.bf16.mxu0 %v2026
    %3905 = vmatmul.mubr.bf16.gmra.mrb[0].mxu0 %v1762
    %v3906 = vpop.f32.mrb[0].mxu0
    %v3907 = vadd.f32 %v3618, %v3906
    %v3908 = vpop.f32.mrb[0].mxu0
    %v3909 = vpop.f32.mrb[0].mxu0
    %v3910 = vadd.f32 %v3621, %v3909
    %v3911 = vpop.f32.mrb[0].mxu0
    %3912 = vmatprep.mubr.bf16.mxu0 %v2038
    %3913 = vmatmul.mubr.bf16.gmra.mrb[0].mxu0 %v1763
    %v3914 = vpop.f32.mrb[0].mxu0
    %v3915 = vadd.f32 %v3626, %v3914
    %v3916 = vpop.f32.mrb[0].mxu0
    %v3917 = vpop.f32.mrb[0].mxu0
    %v3918 = vadd.f32 %v3629, %v3917
    %v3919 = vpop.f32.mrb[0].mxu0
    %3920 = vmatprep.mubr.bf16.mxu0 %v2050
    %3921 = vmatmul.mubr.bf16.gmra.mrb[0].mxu0 %v1764
    %v3922 = vpop.f32.mrb[0].mxu0
    %v3923 = vadd.f32 %v3634, %v3922
    %v3924 = vpop.f32.mrb[0].mxu0
    %v3925 = vpop.f32.mrb[0].mxu0
    %v3926 = vadd.f32 %v3637, %v3925
    %v3927 = vpop.f32.mrb[0].mxu0
    %3928 = vmatprep.mubr.bf16.mxu0 %v2062
    %3929 = vmatmul.mubr.bf16.gmra.mrb[0].mxu0 %v1765
    %v3930 = vpop.f32.mrb[0].mxu0
    %v3931 = vadd.f32 %v3642, %v3930
    %v3932 = vpop.f32.mrb[0].mxu0
    %v3933 = vpop.f32.mrb[0].mxu0
    %v3934 = vadd.f32 %v3645, %v3933
    %v3935 = vpop.f32.mrb[0].mxu0
    %3936 = vmatprep.mubr.bf16.mxu0 %v2074
    %3937 = vmatmul.mubr.bf16.gmra.mrb[0].mxu0 %v1766
    %v3938 = vpop.f32.mrb[0].mxu0
    %v3939 = vadd.f32 %v3650, %v3938
    %v3940 = vpop.f32.mrb[0].mxu0
    %v3941 = vpop.f32.mrb[0].mxu0
    %v3942 = vadd.f32 %v3653, %v3941
    %v3943 = vpop.f32.mrb[0].mxu0
    %3944 = vmatprep.mubr.bf16.mxu0 %v2086
    %3945 = vmatmul.mubr.bf16.gmra.mrb[0].mxu0 %v1767
    %v3946 = vpop.f32.mrb[0].mxu0
    %v3947 = vadd.f32 %v3658, %v3946
    %v3948 = vpop.f32.mrb[0].mxu0
    %v3949 = vpop.f32.mrb[0].mxu0
    %v3950 = vadd.f32 %v3661, %v3949
    %v3951 = vpop.f32.mrb[0].mxu0
    %3952 = vmatprep.mubr.bf16.mxu0 %v2098
    %3953 = vmatmul.mubr.bf16.gmra.mrb[0].mxu0 %v1768
    %v3954 = vpop.f32.mrb[0].mxu0
    %v3955 = vadd.f32 %v3666, %v3954
    %v3956 = vpop.f32.mrb[0].mxu0
    %v3957 = vpop.f32.mrb[0].mxu0
    %v3958 = vadd.f32 %v3669, %v3957
    %v3959 = vpop.f32.mrb[0].mxu0
    %3960 = vmatprep.mubr.bf16.mxu0 %v2110
    %3961 = vmatmul.mubr.bf16.gmra.mrb[0].mxu0 %v1769
    %v3962 = vpop.f32.mrb[0].mxu0
    %v3963 = vadd.f32 %v3674, %v3962
    %v3964 = vpop.f32.mrb[0].mxu0
    %v3965 = vpop.f32.mrb[0].mxu0
    %v3966 = vadd.f32 %v3677, %v3965
    %v3967 = vpop.f32.mrb[0].mxu0
    %3968 = vmatprep.mubr.bf16.mxu0 %v2122
    %3969 = vmatmul.mubr.bf16.gmra.mrb[0].mxu0 %v1770
    %v3970 = vpop.f32.mrb[0].mxu0
    %v3971 = vadd.f32 %v3682, %v3970
    %v3972 = vpop.f32.mrb[0].mxu0
    %v3973 = vpop.f32.mrb[0].mxu0
    %v3974 = vadd.f32 %v3685, %v3973
    %v3975 = vpop.f32.mrb[0].mxu0
    %3976 = vmatprep.mubr.bf16.mxu0 %v2134
    %3977 = vmatmul.mubr.bf16.gmra.mrb[0].mxu0 %v1771
    %v3978 = vpop.f32.mrb[0].mxu0
    %v3979 = vadd.f32 %v3690, %v3978
    %v3980 = vpop.f32.mrb[0].mxu0
    %v3981 = vpop.f32.mrb[0].mxu0
    %v3982 = vadd.f32 %v3693, %v3981
    %v3983 = vpop.f32.mrb[0].mxu0
    %3984 = vmatprep.mubr.bf16.mxu0 %v2146
    %3985 = vmatmul.mubr.bf16.gmra.mrb[0].mxu0 %v1772
    %v3986 = vpop.f32.mrb[0].mxu0
    %v3987 = vadd.f32 %v3698, %v3986
    %v3988 = vpop.f32.mrb[0].mxu0
    %v3989 = vpop.f32.mrb[0].mxu0
    %v3990 = vadd.f32 %v3701, %v3989
    %v3991 = vpop.f32.mrb[0].mxu0
    %3992 = vmatprep.mubr.bf16.mxu0 %v2158
    %3993 = vmatmul.mubr.bf16.gmra.mrb[0].mxu0 %v1773
    %v3994 = vpop.f32.mrb[0].mxu0
    %v3995 = vadd.f32 %v3706, %v3994
    %v3996 = vpop.f32.mrb[0].mxu0
    %v3997 = vpop.f32.mrb[0].mxu0
    %v3998 = vadd.f32 %v3709, %v3997
    %v3999 = vpop.f32.mrb[0].mxu0
    %4000 = vmatprep.mubr.bf16.mxu0 %v2170
    %4001 = vmatmul.mubr.bf16.gmra.mrb[0].mxu0 %v1774
    %v4002 = vpop.f32.mrb[0].mxu0
    %v4003 = vadd.f32 %v3714, %v4002
    %v4004 = vpop.f32.mrb[0].mxu0
    %v4005 = vpop.f32.mrb[0].mxu0
    %v4006 = vadd.f32 %v3717, %v4005
    %v4007 = vpop.f32.mrb[0].mxu0
    %4008 = vmatprep.mubr.bf16.mxu0 %v2182
    %4009 = vmatmul.mubr.bf16.gmra.mrb[0].mxu0 %v1775
    %v4010 = vpop.f32.mrb[0].mxu0
    %v4011 = vadd.f32 %v3722, %v4010
    %v4012 = vpop.f32.mrb[0].mxu0
    %v4013 = vpop.f32.mrb[0].mxu0
    %v4014 = vadd.f32 %v3725, %v4013
    %v4015 = vpop.f32.mrb[0].mxu0
    %4016 = vmatprep.mubr.bf16.mxu0 %v2424
    %4017 = vmatmul.mubr.bf16.gmra.mrb[0].mxu0 %v1776
    %v4018 = vpop.f32.mrb[0].mxu0
    %v4019 = vadd.f32 %v3730, %v4018
    %v4020 = vpop.f32.mrb[0].mxu0
    %v4021 = vpop.f32.mrb[0].mxu0
    %v4022 = vadd.f32 %v3733, %v4021
    %v4023 = vpop.f32.mrb[0].mxu0
    %4024 = vmatprep.mubr.bf16.mxu0 %v1822
    %4025 = vmatmul.mubr.bf16.gmra.mrb[0].mxu0 %v1744
    %v4026 = vpop.f32.mrb[0].mxu0
    %v4027 = vadd.f32 %v3738, %v4026
    %v4028 = vpop.f32.mrb[0].mxu0
    %v4029 = vpop.f32.mrb[0].mxu0
    %v4030 = vadd.f32 %v3741, %v4029
    %v4031 = vpop.f32.mrb[0].mxu0
    %4032 = vdwg.mxu0
    %4033 = vmatprep.subr.bf16.mxu0 0
    %4034 = vmatpush1.bf16.msra.mxu0 %v2797
    %4035 = vmatprep.subr.bf16.mxu0 0
    %4036 = vmatpush1.bf16.msra.mxu0 %v2798
    %4037 = vmatprep.subr.bf16.mxu0 0
    %4038 = vmatpush1.bf16.msra.mxu0 %v2799
    %4039 = vmatprep.subr.bf16.mxu0 0
    %4040 = vmatpush1.bf16.msra.mxu0 %v2800
    %4041 = vmatprep.subr.bf16.mxu0 0
    %4042 = vmatpush1.bf16.msra.mxu0 %v2801
    %4043 = vmatprep.subr.bf16.mxu0 0
    %4044 = vmatpush1.bf16.msra.mxu0 %v2802
    %4045 = vmatprep.subr.bf16.mxu0 0
    %4046 = vmatpush1.bf16.msra.mxu0 %v2803
    %4047 = vmatprep.subr.bf16.mxu0 0
    %4048 = vmatpush1.bf16.msra.mxu0 %v2804
    %4049 = vmatprep.subr.bf16.mxu0 0
    %4050 = vmatpush1.bf16.msra.mxu0 0
    %4051 = vmatprep.subr.bf16.mxu0 0
    %4052 = vmatpush1.bf16.msra.mxu0 0
    %4053 = vmatprep.subr.bf16.mxu0 0
    %4054 = vmatpush1.bf16.msra.mxu0 0
    %4055 = vmatprep.subr.bf16.mxu0 0
    %4056 = vmatpush1.bf16.msra.mxu0 0
    %4057 = vmatprep.subr.bf16.mxu0 0
    %4058 = vmatpush1.bf16.msra.mxu0 0
    %4059 = vmatprep.subr.bf16.mxu0 0
    %4060 = vmatpush1.bf16.msra.mxu0 0
    %4061 = vmatprep.subr.bf16.mxu0 0
    %4062 = vmatpush1.bf16.msra.mxu0 0
    %4063 = vmatprep.subr.bf16.mxu0 0
    %4064 = vmatpush1.bf16.msra.mxu0 0
    %4065 = vmatprep.mubr.bf16.mxu0 0
    %4066 = vmatmul.mubr.bf16.gmra.mrb[0].mxu0 %v2285
    %v4067 = vpop.f32.mrb[0].mxu0
    %v4068 = vadd.f32 %v3779, %v4067
    %v4069 = vpop.f32.mrb[0].mxu0
    %v4070 = vpop.f32.mrb[0].mxu0
    %v4071 = vadd.f32 %v3782, %v4070
    %v4072 = vpop.f32.mrb[0].mxu0
    %4073 = vmatprep.mubr.bf16.mxu0 0
    %4074 = vmatmul.mubr.bf16.gmra.mrb[0].mxu0 %v2288
    %v4075 = vpop.f32.mrb[0].mxu0
    %v4076 = vadd.f32 %v3787, %v4075
    %v4077 = vpop.f32.mrb[0].mxu0
    %v4078 = vpop.f32.mrb[0].mxu0
    %v4079 = vadd.f32 %v3790, %v4078
    %v4080 = vpop.f32.mrb[0].mxu0
    %4081 = vmatprep.mubr.bf16.mxu0 0
    %4082 = vmatmul.mubr.bf16.gmra.mrb[0].mxu0 %v2291
    %v4083 = vpop.f32.mrb[0].mxu0
    %v4084 = vadd.f32 %v3795, %v4083
    %v4085 = vpop.f32.mrb[0].mxu0
    %v4086 = vpop.f32.mrb[0].mxu0
    %v4087 = vadd.f32 %v3798, %v4086
    %v4088 = vpop.f32.mrb[0].mxu0
    %4089 = vmatprep.mubr.bf16.mxu0 0
    %4090 = vmatmul.mubr.bf16.gmra.mrb[0].mxu0 %v2294
    %v4091 = vpop.f32.mrb[0].mxu0
    %v4092 = vadd.f32 %v3803, %v4091
    %v4093 = vpop.f32.mrb[0].mxu0
    %v4094 = vpop.f32.mrb[0].mxu0
    %v4095 = vadd.f32 %v3806, %v4094
    %v4096 = vpop.f32.mrb[0].mxu0
    %4097 = vmatprep.mubr.bf16.mxu0 0
    %4098 = vmatmul.mubr.bf16.gmra.mrb[0].mxu0 %v2297
    %v4099 = vpop.f32.mrb[0].mxu0
    %v4100 = vadd.f32 %v3811, %v4099
    %v4101 = vpop.f32.mrb[0].mxu0
    %v4102 = vpop.f32.mrb[0].mxu0
    %v4103 = vadd.f32 %v3814, %v4102
    %v4104 = vpop.f32.mrb[0].mxu0
    %4105 = vmatprep.mubr.bf16.mxu0 0
    %4106 = vmatmul.mubr.bf16.gmra.mrb[0].mxu0 %v2300
    %v4107 = vpop.f32.mrb[0].mxu0
    %v4108 = vadd.f32 %v3819, %v4107
    %v4109 = vpop.f32.mrb[0].mxu0
    %v4110 = vpop.f32.mrb[0].mxu0
    %v4111 = vadd.f32 %v3822, %v4110
    %v4112 = vpop.f32.mrb[0].mxu0
    %4113 = vmatprep.mubr.bf16.mxu0 0
    %4114 = vmatmul.mubr.bf16.gmra.mrb[0].mxu0 %v2303
    %v4115 = vpop.f32.mrb[0].mxu0
    %v4116 = vadd.f32 %v3827, %v4115
    %v4117 = vpop.f32.mrb[0].mxu0
    %v4118 = vpop.f32.mrb[0].mxu0
    %v4119 = vadd.f32 %v3830, %v4118
    %v4120 = vpop.f32.mrb[0].mxu0
    %4121 = vmatprep.mubr.bf16.mxu0 0
    %4122 = vmatmul.mubr.bf16.gmra.mrb[0].mxu0 %v2306
    %v4123 = vpop.f32.mrb[0].mxu0
    %v4124 = vadd.f32 %v3835, %v4123
    %v4125 = vpop.f32.mrb[0].mxu0
    %v4126 = vpop.f32.mrb[0].mxu0
    %v4127 = vadd.f32 %v3838, %v4126
    %v4128 = vpop.f32.mrb[0].mxu0
    %4129 = vmatprep.mubr.bf16.mxu0 0
    %4130 = vmatmul.mubr.bf16.gmra.mrb[0].mxu0 %v2309
    %v4131 = vpop.f32.mrb[0].mxu0
    %v4132 = vadd.f32 %v3843, %v4131
    %v4133 = vpop.f32.mrb[0].mxu0
    %v4134 = vpop.f32.mrb[0].mxu0
    %v4135 = vadd.f32 %v3846, %v4134
    %v4136 = vpop.f32.mrb[0].mxu0
    %4137 = vmatprep.mubr.bf16.mxu0 0
    %4138 = vmatmul.mubr.bf16.gmra.mrb[0].mxu0 %v2312
    %v4139 = vpop.f32.mrb[0].mxu0
    %v4140 = vadd.f32 %v3851, %v4139
    %v4141 = vpop.f32.mrb[0].mxu0
    %v4142 = vpop.f32.mrb[0].mxu0
    %v4143 = vadd.f32 %v3854, %v4142
    %v4144 = vpop.f32.mrb[0].mxu0
    %4145 = vmatprep.mubr.bf16.mxu0 0
    %4146 = vmatmul.mubr.bf16.gmra.mrb[0].mxu0 %v2315
    %v4147 = vpop.f32.mrb[0].mxu0
    %v4148 = vadd.f32 %v3859, %v4147
    %v4149 = vpop.f32.mrb[0].mxu0
    %v4150 = vpop.f32.mrb[0].mxu0
    %v4151 = vadd.f32 %v3862, %v4150
    %v4152 = vpop.f32.mrb[0].mxu0
    %4153 = vmatprep.mubr.bf16.mxu0 0
    %4154 = vmatmul.mubr.bf16.gmra.mrb[0].mxu0 %v2318
    %v4155 = vpop.f32.mrb[0].mxu0
    %v4156 = vadd.f32 %v3867, %v4155
    %v4157 = vpop.f32.mrb[0].mxu0
    %v4158 = vpop.f32.mrb[0].mxu0
    %v4159 = vadd.f32 %v3870, %v4158
    %v4160 = vpop.f32.mrb[0].mxu0
    %4161 = vmatprep.mubr.bf16.mxu0 0
    %4162 = vmatmul.mubr.bf16.gmra.mrb[0].mxu0 %v2321
    %v4163 = vpop.f32.mrb[0].mxu0
    %v4164 = vadd.f32 %v3875, %v4163
    %v4165 = vpop.f32.mrb[0].mxu0
    %v4166 = vpop.f32.mrb[0].mxu0
    %v4167 = vadd.f32 %v3878, %v4166
    %v4168 = vpop.f32.mrb[0].mxu0
    %4169 = vmatprep.mubr.bf16.mxu0 0
    %4170 = vmatmul.mubr.bf16.gmra.mrb[0].mxu0 %v2324
    %v4171 = vpop.f32.mrb[0].mxu0
    %v4172 = vadd.f32 %v3883, %v4171
    %v4173 = vpop.f32.mrb[0].mxu0
    %v4174 = vpop.f32.mrb[0].mxu0
    %v4175 = vadd.f32 %v3886, %v4174
    %v4176 = vpop.f32.mrb[0].mxu0
    %4177 = vmatprep.mubr.bf16.mxu0 0
    %4178 = vmatmul.mubr.bf16.gmra.mrb[0].mxu0 %v2433
    %v4179 = vpop.f32.mrb[0].mxu0
    %v4180 = vadd.f32 %v3891, %v4179
    %v4181 = vpop.f32.mrb[0].mxu0
    %v4182 = vpop.f32.mrb[0].mxu0
    %v4183 = vadd.f32 %v3894, %v4182
    %v4184 = vpop.f32.mrb[0].mxu0
    %4185 = vmatprep.mubr.bf16.mxu0 0
    %4186 = vmatmul.mubr.bf16.gmra.mrb[0].mxu0 %v2279
    %v4187 = vpop.f32.mrb[0].mxu0
    %v4188 = vadd.f32 %v3899, %v4187
    %v4189 = vpop.f32.mrb[0].mxu0
    %v4190 = vpop.f32.mrb[0].mxu0
    %v4191 = vadd.f32 %v3902, %v4190
    %v4192 = vpop.f32.mrb[0].mxu0
    %4193 = vmatprep.mubr.bf16.mxu0 0
    %4194 = vmatmul.mubr.bf16.gmra.mrb[0].mxu0 %v2330
    %v4195 = vpop.f32.mrb[0].mxu0
    %v4196 = vadd.f32 %v3907, %v4195
    %v4197 = vpop.f32.mrb[0].mxu0
    %v4198 = vpop.f32.mrb[0].mxu0
    %v4199 = vadd.f32 %v3910, %v4198
    %v4200 = vpop.f32.mrb[0].mxu0
    %4201 = vmatprep.mubr.bf16.mxu0 0
    %4202 = vmatmul.mubr.bf16.gmra.mrb[0].mxu0 %v2333
    %v4203 = vpop.f32.mrb[0].mxu0
    %v4204 = vadd.f32 %v3915, %v4203
    %v4205 = vpop.f32.mrb[0].mxu0
    %v4206 = vpop.f32.mrb[0].mxu0
    %v4207 = vadd.f32 %v3918, %v4206
    %v4208 = vpop.f32.mrb[0].mxu0
    %4209 = vmatprep.mubr.bf16.mxu0 0
    %4210 = vmatmul.mubr.bf16.gmra.mrb[0].mxu0 %v2336
    %v4211 = vpop.f32.mrb[0].mxu0
    %v4212 = vadd.f32 %v3923, %v4211
    %v4213 = vpop.f32.mrb[0].mxu0
    %v4214 = vpop.f32.mrb[0].mxu0
    %v4215 = vadd.f32 %v3926, %v4214
    %v4216 = vpop.f32.mrb[0].mxu0
    %4217 = vmatprep.mubr.bf16.mxu0 0
    %4218 = vmatmul.mubr.bf16.gmra.mrb[0].mxu0 %v2339
    %v4219 = vpop.f32.mrb[0].mxu0
    %v4220 = vadd.f32 %v3931, %v4219
    %v4221 = vpop.f32.mrb[0].mxu0
    %v4222 = vpop.f32.mrb[0].mxu0
    %v4223 = vadd.f32 %v3934, %v4222
    %v4224 = vpop.f32.mrb[0].mxu0
    %4225 = vmatprep.mubr.bf16.mxu0 0
    %4226 = vmatmul.mubr.bf16.gmra.mrb[0].mxu0 %v2342
    %v4227 = vpop.f32.mrb[0].mxu0
    %v4228 = vadd.f32 %v3939, %v4227
    %v4229 = vpop.f32.mrb[0].mxu0
    %v4230 = vpop.f32.mrb[0].mxu0
    %v4231 = vadd.f32 %v3942, %v4230
    %v4232 = vpop.f32.mrb[0].mxu0
    %4233 = vmatprep.mubr.bf16.mxu0 0
    %4234 = vmatmul.mubr.bf16.gmra.mrb[0].mxu0 %v2345
    %v4235 = vpop.f32.mrb[0].mxu0
    %v4236 = vadd.f32 %v3947, %v4235
    %v4237 = vpop.f32.mrb[0].mxu0
    %v4238 = vpop.f32.mrb[0].mxu0
    %v4239 = vadd.f32 %v3950, %v4238
    %v4240 = vpop.f32.mrb[0].mxu0
    %4241 = vmatprep.mubr.bf16.mxu0 0
    %4242 = vmatmul.mubr.bf16.gmra.mrb[0].mxu0 %v2348
    %v4243 = vpop.f32.mrb[0].mxu0
    %v4244 = vadd.f32 %v3955, %v4243
    %v4245 = vpop.f32.mrb[0].mxu0
    %v4246 = vpop.f32.mrb[0].mxu0
    %v4247 = vadd.f32 %v3958, %v4246
    %v4248 = vpop.f32.mrb[0].mxu0
    %4249 = vmatprep.mubr.bf16.mxu0 0
    %4250 = vmatmul.mubr.bf16.gmra.mrb[0].mxu0 %v2351
    %v4251 = vpop.f32.mrb[0].mxu0
    %v4252 = vadd.f32 %v3963, %v4251
    %v4253 = vpop.f32.mrb[0].mxu0
    %v4254 = vpop.f32.mrb[0].mxu0
    %v4255 = vadd.f32 %v3966, %v4254
    %v4256 = vpop.f32.mrb[0].mxu0
    %4257 = vmatprep.mubr.bf16.mxu0 0
    %4258 = vmatmul.mubr.bf16.gmra.mrb[0].mxu0 %v2354
    %v4259 = vpop.f32.mrb[0].mxu0
    %v4260 = vadd.f32 %v3971, %v4259
    %v4261 = vpop.f32.mrb[0].mxu0
    %v4262 = vpop.f32.mrb[0].mxu0
    %v4263 = vadd.f32 %v3974, %v4262
    %v4264 = vpop.f32.mrb[0].mxu0
    %4265 = vmatprep.mubr.bf16.mxu0 0
    %4266 = vmatmul.mubr.bf16.gmra.mrb[0].mxu0 %v2357
    %v4267 = vpop.f32.mrb[0].mxu0
    %v4268 = vadd.f32 %v3979, %v4267
    %v4269 = vpop.f32.mrb[0].mxu0
    %v4270 = vpop.f32.mrb[0].mxu0
    %v4271 = vadd.f32 %v3982, %v4270
    %v4272 = vpop.f32.mrb[0].mxu0
    %4273 = vmatprep.mubr.bf16.mxu0 0
    %4274 = vmatmul.mubr.bf16.gmra.mrb[0].mxu0 %v2360
    %v4275 = vpop.f32.mrb[0].mxu0
    %v4276 = vadd.f32 %v3987, %v4275
    %v4277 = vpop.f32.mrb[0].mxu0
    %v4278 = vpop.f32.mrb[0].mxu0
    %v4279 = vadd.f32 %v3990, %v4278
    %v4280 = vpop.f32.mrb[0].mxu0
    %4281 = vmatprep.mubr.bf16.mxu0 0
    %4282 = vmatmul.mubr.bf16.gmra.mrb[0].mxu0 %v2363
    %v4283 = vpop.f32.mrb[0].mxu0
    %v4284 = vadd.f32 %v3995, %v4283
    %v4285 = vpop.f32.mrb[0].mxu0
    %v4286 = vpop.f32.mrb[0].mxu0
    %v4287 = vadd.f32 %v3998, %v4286
    %v4288 = vpop.f32.mrb[0].mxu0
    %4289 = vmatprep.mubr.bf16.mxu0 0
    %4290 = vmatmul.mubr.bf16.gmra.mrb[0].mxu0 %v2366
    %v4291 = vpop.f32.mrb[0].mxu0
    %v4292 = vadd.f32 %v4003, %v4291
    %v4293 = vpop.f32.mrb[0].mxu0
    %v4294 = vpop.f32.mrb[0].mxu0
    %v4295 = vadd.f32 %v4006, %v4294
    %v4296 = vpop.f32.mrb[0].mxu0
    %4297 = vmatprep.mubr.bf16.mxu0 0
    %4298 = vmatmul.mubr.bf16.gmra.mrb[0].mxu0 %v2369
    %v4299 = vpop.f32.mrb[0].mxu0
    %v4300 = vadd.f32 %v4011, %v4299
    %v4301 = vpop.f32.mrb[0].mxu0
    %v4302 = vpop.f32.mrb[0].mxu0
    %v4303 = vadd.f32 %v4014, %v4302
    %v4304 = vpop.f32.mrb[0].mxu0
    %4305 = vmatprep.mubr.bf16.mxu0 0
    %4306 = vmatmul.mubr.bf16.gmra.mrb[0].mxu0 %v2436
    %v4307 = vpop.f32.mrb[0].mxu0
    %v4308 = vadd.f32 %v4019, %v4307
    %v4309 = vpop.f32.mrb[0].mxu0
    %v4310 = vpop.f32.mrb[0].mxu0
    %v4311 = vadd.f32 %v4022, %v4310
    %v4312 = vpop.f32.mrb[0].mxu0
    %4313 = vmatprep.mubr.bf16.mxu0 0
    %4314 = vmatmul.mubr.bf16.gmra.mrb[0].mxu0 %v2279
    %v4315 = vpop.f32.mrb[0].mxu0
    %v4316 = vadd.f32 %v4027, %v4315
    %v4317 = vpop.f32.mrb[0].mxu0
    %v4318 = vpop.f32.mrb[0].mxu0
    %v4319 = vadd.f32 %v4030, %v4318
    %v4320 = vpop.f32.mrb[0].mxu0
    %4321 = vdwg.mxu0
    %v4322 = vmax.f32 %v4068, 0.0
    %v4323 = vmax.f32 %v4071, 0.0
    %v4324 = vmax.f32 %v4076, 0.0
    %v4325 = vmax.f32 %v4079, 0.0
    %v4326 = vmax.f32 %v4084, 0.0
    %v4327 = vmax.f32 %v4087, 0.0
    %v4328 = vmax.f32 %v4092, 0.0
    %v4329 = vmax.f32 %v4095, 0.0
    %v4330 = vmax.f32 %v4100, 0.0
    %v4331 = vmax.f32 %v4103, 0.0
    %v4332 = vmax.f32 %v4108, 0.0
    %v4333 = vmax.f32 %v4111, 0.0
    %v4334 = vmax.f32 %v4116, 0.0
    %v4335 = vmax.f32 %v4119, 0.0
    %v4336 = vmax.f32 %v4124, 0.0
    %v4337 = vmax.f32 %v4127, 0.0
    %v4338 = vmax.f32 %v4132, 0.0
    %v4339 = vmax.f32 %v4135, 0.0
    %v4340 = vmax.f32 %v4140, 0.0
    %v4341 = vmax.f32 %v4143, 0.0
    %v4342 = vmax.f32 %v4148, 0.0
    %v4343 = vmax.f32 %v4151, 0.0
    %v4344 = vmax.f32 %v4156, 0.0
    %v4345 = vmax.f32 %v4159, 0.0
    %v4346 = vmax.f32 %v4164, 0.0
    %v4347 = vmax.f32 %v4167, 0.0
    %v4348 = vmax.f32 %v4172, 0.0
    %v4349 = vmax.f32 %v4175, 0.0
    %v4350 = vmax.f32 %v4180, 0.0
    %v4351 = vmax.f32 %v4183, 0.0
    %v4352 = vmax.f32 %v4188, 0.0
    %v4353 = vmax.f32 %v4191, 0.0
    %v4354 = vmax.f32 %v4196, 0.0
    %v4355 = vmax.f32 %v4199, 0.0
    %v4356 = vmax.f32 %v4204, 0.0
    %v4357 = vmax.f32 %v4207, 0.0
    %v4358 = vmax.f32 %v4212, 0.0
    %v4359 = vmax.f32 %v4215, 0.0
    %v4360 = vmax.f32 %v4220, 0.0
    %v4361 = vmax.f32 %v4223, 0.0
    %v4362 = vmax.f32 %v4228, 0.0
    %v4363 = vmax.f32 %v4231, 0.0
    %v4364 = vmax.f32 %v4236, 0.0
    %v4365 = vmax.f32 %v4239, 0.0
    %v4366 = vmax.f32 %v4244, 0.0
    %v4367 = vmax.f32 %v4247, 0.0
    %v4368 = vmax.f32 %v4252, 0.0
    %v4369 = vmax.f32 %v4255, 0.0
    %v4370 = vmax.f32 %v4260, 0.0
    %v4371 = vmax.f32 %v4263, 0.0
    %v4372 = vmax.f32 %v4268, 0.0
    %v4373 = vmax.f32 %v4271, 0.0
    %v4374 = vmax.f32 %v4276, 0.0
    %v4375 = vmax.f32 %v4279, 0.0
    %v4376 = vmax.f32 %v4284, 0.0
    %v4377 = vmax.f32 %v4287, 0.0
    %v4378 = vmax.f32 %v4292, 0.0
    %v4379 = vmax.f32 %v4295, 0.0
    %v4380 = vmax.f32 %v4300, 0.0
    %v4381 = vmax.f32 %v4303, 0.0
    %v4382 = vmax.f32 %v4308, 0.0
    %v4383 = vmax.f32 %v4311, 0.0
    %v4384 = vmax.f32 %v4316, 0.0
    %v4385 = vmax.f32 %v4319, 0.0
    %v4386 = vld [vmem:[%s5] sm:$0xf]
    %v4387 = vld [vmem:[%s5 + $0x4] sm:$0xf]
    %v4388 = vld [vmem:[%s5 + $0x8] sm:$0xf]
    %v4389 = vld [vmem:[%s5 + $0xc] sm:$0xf]
    %v4390 = vld [vmem:[%s5 + $0x10] sm:$0xf]
    %v4391 = vld [vmem:[%s5 + $0x14] sm:$0xf]
    %v4392 = vld [vmem:[%s5 + $0x18] sm:$0xf]
    %v4393 = vld [vmem:[%s5 + $0x1c] sm:$0xf]
    %v4394 = vld [vmem:[%s5 + $0x20] sm:$0xf]
    %v4395 = vld [vmem:[%s5 + $0x24] sm:$0xf]
    %v4396 = vld [vmem:[%s5 + $0x28] sm:$0xf]
    %v4397 = vld [vmem:[%s5 + $0x2c] sm:$0xf]
    %v4398 = vld [vmem:[%s5 + $0x30] sm:$0xf]
    %v4399 = vld [vmem:[%s5 + $0x34] sm:$0xf]
    %v4400 = vld [vmem:[%s5 + $0x38] sm:$0xf]
    %v4401 = vld [vmem:[%s5 + $0x3c] sm:$0xf]
    %v4402 = vld [vmem:[%s5 + $0x40] sm:$0xf]
    %v4403 = vld [vmem:[%s5 + $0x44] sm:$0xf]
    %v4404 = vld [vmem:[%s5 + $0x48] sm:$0xf]
    %v4405 = vld [vmem:[%s5 + $0x4c] sm:$0xf]
    %v4406 = vld [vmem:[%s5 + $0x50] sm:$0xf]
    %v4407 = vld [vmem:[%s5 + $0x54] sm:$0xf]
    %v4408 = vld [vmem:[%s5 + $0x58] sm:$0xf]
    %v4409 = vld [vmem:[%s5 + $0x5c] sm:$0xf]
    %v4410 = vld [vmem:[%s5 + $0x60] sm:$0xf]
    %v4411 = vld [vmem:[%s5 + $0x64] sm:$0xf]
    %v4412 = vld [vmem:[%s5 + $0x68] sm:$0xf]
    %v4413 = vld [vmem:[%s5 + $0x6c] sm:$0xf]
    %v4414 = vld [vmem:[%s5 + $0x70] sm:$0xf]
    %v4415 = vld [vmem:[%s5 + $0x74] sm:$0xf]
    %v4416 = vld [vmem:[%s5 + $0x78] sm:$0xf]
    %v4417 = vld [vmem:[%s5 + $0x7c] sm:$0xf]
    %v4418 = vld [vmem:[%s5 + $0x80] sm:$0xf]
    %v4419 = vld [vmem:[%s5 + $0x84] sm:$0xf]
    %v4420 = vld [vmem:[%s5 + $0x88] sm:$0xf]
    %v4421 = vld [vmem:[%s5 + $0x8c] sm:$0xf]
    %v4422 = vld [vmem:[%s5 + $0x90] sm:$0xf]
    %v4423 = vld [vmem:[%s5 + $0x94] sm:$0xf]
    %v4424 = vld [vmem:[%s5 + $0x98] sm:$0xf]
    %v4425 = vld [vmem:[%s5 + $0x9c] sm:$0xf]
    %v4426 = vld [vmem:[%s5 + $0xa0] sm:$0xf]
    %v4427 = vld [vmem:[%s5 + $0xa4] sm:$0xf]
    %v4428 = vld [vmem:[%s5 + $0xa8] sm:$0xf]
    %v4429 = vld [vmem:[%s5 + $0xac] sm:$0xf]
    %v4430 = vld [vmem:[%s5 + $0xb0] sm:$0xf]
    %v4431 = vld [vmem:[%s5 + $0xb4] sm:$0xf]
    %v4432 = vld [vmem:[%s5 + $0xb8] sm:$0xf]
    %v4433 = vld [vmem:[%s5 + $0xbc] sm:$0xf]
    %v4434 = vld [vmem:[%s5 + $0xc0] sm:$0xf]
    %v4435 = vld [vmem:[%s5 + $0xc4] sm:$0xf]
    %v4436 = vld [vmem:[%s5 + $0xc8] sm:$0xf]
    %v4437 = vld [vmem:[%s5 + $0xcc] sm:$0xf]
    %v4438 = vld [vmem:[%s5 + $0xd0] sm:$0xf]
    %v4439 = vld [vmem:[%s5 + $0xd4] sm:$0xf]
    %v4440 = vld [vmem:[%s5 + $0xd8] sm:$0xf]
    %v4441 = vld [vmem:[%s5 + $0xdc] sm:$0xf]
    %v4442 = vld [vmem:[%s5 + $0xe0] sm:$0xf]
    %v4443 = vld [vmem:[%s5 + $0xe4] sm:$0xf]
    %v4444 = vld [vmem:[%s5 + $0xe8] sm:$0xf]
    %v4445 = vld [vmem:[%s5 + $0xec] sm:$0xf]
    %v4446 = vld [vmem:[%s5 + $0xf0] sm:$0xf]
    %v4447 = vld [vmem:[%s5 + $0xf4] sm:$0xf]
    %v4448 = vld [vmem:[%s5 + $0xf8] sm:$0xf]
    %v4449 = vld [vmem:[%s5 + $0xfc] sm:$0xf]
    %v4450 = vld [vmem:[%s5 + $0x100] sm:$0xf]
    %v4451 = vld [vmem:[%s5 + $0x104] sm:$0xf]
    %v4452 = vld [vmem:[%s5 + $0x108] sm:$0xf]
    %v4453 = vld [vmem:[%s5 + $0x10c] sm:$0xf]
    %v4454 = vld [vmem:[%s5 + $0x110] sm:$0xf]
    %v4455 = vld [vmem:[%s5 + $0x114] sm:$0xf]
    %v4456 = vld [vmem:[%s5 + $0x118] sm:$0xf]
    %v4457 = vld [vmem:[%s5 + $0x11c] sm:$0xf]
    %v4458 = vld [vmem:[%s5 + $0x120] sm:$0xf]
    %v4459 = vld [vmem:[%s5 + $0x124] sm:$0xf]
    %v4460 = vld [vmem:[%s5 + $0x128] sm:$0xf]
    %v4461 = vld [vmem:[%s5 + $0x12c] sm:$0xf]
    %v4462 = vld [vmem:[%s5 + $0x130] sm:$0xf]
    %v4463 = vld [vmem:[%s5 + $0x134] sm:$0xf]
    %v4464 = vld [vmem:[%s5 + $0x138] sm:$0xf]
    %v4465 = vld [vmem:[%s5 + $0x13c] sm:$0xf]
    %v4466 = vld [vmem:[%s5 + $0x140] sm:$0xf]
    %v4467 = vld [vmem:[%s5 + $0x144] sm:$0xf]
    %v4468 = vld [vmem:[%s5 + $0x148] sm:$0xf]
    %v4469 = vld [vmem:[%s5 + $0x14c] sm:$0xf]
    %v4470 = vld [vmem:[%s5 + $0x150] sm:$0xf]
    %v4471 = vld [vmem:[%s5 + $0x154] sm:$0xf]
    %v4472 = vld [vmem:[%s5 + $0x158] sm:$0xf]
    %v4473 = vld [vmem:[%s5 + $0x15c] sm:$0xf]
    %v4474 = vld [vmem:[%s5 + $0x160] sm:$0xf]
    %v4475 = vld [vmem:[%s5 + $0x164] sm:$0xf]
    %v4476 = vld [vmem:[%s5 + $0x168] sm:$0xf]
    %v4477 = vld [vmem:[%s5 + $0x16c] sm:$0xf]
    %v4478 = vld [vmem:[%s5 + $0x170] sm:$0xf]
    %v4479 = vld [vmem:[%s5 + $0x174] sm:$0xf]
    %v4480 = vld [vmem:[%s5 + $0x178] sm:$0xf]
    %v4481 = vld [vmem:[%s5 + $0x17c] sm:$0xf]
    %v4482 = vld [vmem:[%s5 + $0x180] sm:$0xf]
    %v4483 = vld [vmem:[%s5 + $0x184] sm:$0xf]
    %v4484 = vld [vmem:[%s5 + $0x188] sm:$0xf]
    %v4485 = vld [vmem:[%s5 + $0x18c] sm:$0xf]
    %v4486 = vld [vmem:[%s5 + $0x190] sm:$0xf]
    %v4487 = vld [vmem:[%s5 + $0x194] sm:$0xf]
    %v4488 = vld [vmem:[%s5 + $0x198] sm:$0xf]
    %v4489 = vld [vmem:[%s5 + $0x19c] sm:$0xf]
    %v4490 = vld [vmem:[%s5 + $0x1a0] sm:$0xf]
    %v4491 = vld [vmem:[%s5 + $0x1a4] sm:$0xf]
    %v4492 = vld [vmem:[%s5 + $0x1a8] sm:$0xf]
    %v4493 = vld [vmem:[%s5 + $0x1ac] sm:$0xf]
    %v4494 = vld [vmem:[%s5 + $0x1b0] sm:$0xf]
    %v4495 = vld [vmem:[%s5 + $0x1b4] sm:$0xf]
    %v4496 = vld [vmem:[%s5 + $0x1b8] sm:$0xf]
    %v4497 = vld [vmem:[%s5 + $0x1bc] sm:$0xf]
    %v4498 = vld [vmem:[%s5 + $0x1c0] sm:$0xf]
    %v4499 = vld [vmem:[%s5 + $0x1c4] sm:$0xf]
    %v4500 = vld [vmem:[%s5 + $0x1c8] sm:$0xf]
    %v4501 = vld [vmem:[%s5 + $0x1cc] sm:$0xf]
    %v4502 = vld [vmem:[%s5 + $0x1d0] sm:$0xf]
    %v4503 = vld [vmem:[%s5 + $0x1d4] sm:$0xf]
    %v4504 = vld [vmem:[%s5 + $0x1d8] sm:$0xf]
    %v4505 = vld [vmem:[%s5 + $0x1dc] sm:$0xf]
    %v4506 = vld [vmem:[%s5 + $0x1e0] sm:$0xf]
    %v4507 = vld [vmem:[%s5 + $0x1e4] sm:$0xf]
    %v4508 = vld [vmem:[%s5 + $0x1e8] sm:$0xf]
    %v4509 = vld [vmem:[%s5 + $0x1ec] sm:$0xf]
    %v4510 = vld [vmem:[%s5 + $0x1f0] sm:$0xf]
    %v4511 = vld [vmem:[%s5 + $0x1f4] sm:$0xf]
    %v4512 = vld [vmem:[%s5 + $0x1f8] sm:$0xf]
    %v4513 = vld [vmem:[%s5 + $0x1fc] sm:$0xf]
    %v4514 = vld [vmem:[%s5 + $0x200] sm:$0xf]
    %v4515 = vld [vmem:[%s5 + $0x204] sm:$0xf]
    %v4516 = vld [vmem:[%s5 + $0x208] sm:$0xf]
    %v4517 = vld [vmem:[%s5 + $0x20c] sm:$0xf]
    %v4518 = vld [vmem:[%s5 + $0x210] sm:$0xf]
    %v4519 = vld [vmem:[%s5 + $0x214] sm:$0xf]
    %v4520 = vld [vmem:[%s5 + $0x218] sm:$0xf]
    %v4521 = vld [vmem:[%s5 + $0x21c] sm:$0xf]
    %v4522 = vld [vmem:[%s5 + $0x220] sm:$0xf]
    %v4523 = vld [vmem:[%s5 + $0x224] sm:$0xf]
    %v4524 = vld [vmem:[%s5 + $0x228] sm:$0xf]
    %v4525 = vld [vmem:[%s5 + $0x22c] sm:$0xf]
    %v4526 = vld [vmem:[%s5 + $0x230] sm:$0xf]
    %v4527 = vld [vmem:[%s5 + $0x234] sm:$0xf]
    %v4528 = vld [vmem:[%s5 + $0x238] sm:$0xf]
    %v4529 = vld [vmem:[%s5 + $0x23c] sm:$0xf]
    %v4530 = vld [vmem:[%s6] sm:$0x1]
    %v4532 = vshrl.u32 %v1267, 16
    %v4534 = vrot.slane %v4532, 7
    %v4535 = vshll.u32 %v1267, 16
    %v4537 = vor.u32 %v4534, %v4535
    %v4539 = vshrl.u32 %v1268, 16
    %v4541 = vrot.slane %v4539, 7
    %v4542 = vshll.u32 %v1268, 16
    %v4544 = vor.u32 %v4541, %v4542
    %v4546 = vshrl.u32 %v1269, 16
    %v4548 = vrot.slane %v4546, 7
    %v4549 = vshll.u32 %v1269, 16
    %v4551 = vor.u32 %v4548, %v4549
    %v4553 = vshrl.u32 %v1270, 16
    %v4555 = vrot.slane %v4553, 7
    %v4556 = vshll.u32 %v1270, 16
    %v4558 = vor.u32 %v4555, %v4556
    %v4560 = vshrl.u32 %v1271, 16
    %v4562 = vrot.slane %v4560, 7
    %v4563 = vshll.u32 %v1271, 16
    %v4565 = vor.u32 %v4562, %v4563
    %v4567 = vshrl.u32 %v1272, 16
    %v4569 = vrot.slane %v4567, 7
    %v4570 = vshll.u32 %v1272, 16
    %v4572 = vor.u32 %v4569, %v4570
    %v4574 = vshrl.u32 %v1273, 16
    %v4576 = vrot.slane %v4574, 7
    %v4577 = vshll.u32 %v1273, 16
    %v4579 = vor.u32 %v4576, %v4577
    %v4581 = vshrl.u32 %v1274, 16
    %v4583 = vrot.slane %v4581, 7
    %v4584 = vshll.u32 %v1274, 16
    %v4586 = vor.u32 %v4583, %v4584
    %v4588 = vshrl.u32 %v1275, 16
    %v4590 = vrot.slane %v4588, 7
    %v4591 = vshll.u32 %v1275, 16
    %v4593 = vor.u32 %v4590, %v4591
    %v4595 = vshrl.u32 %v1276, 16
    %v4597 = vrot.slane %v4595, 7
    %v4598 = vshll.u32 %v1276, 16
    %v4600 = vor.u32 %v4597, %v4598
    %v4602 = vshrl.u32 %v1277, 16
    %v4604 = vrot.slane %v4602, 7
    %v4605 = vshll.u32 %v1277, 16
    %v4607 = vor.u32 %v4604, %v4605
    %v4609 = vshrl.u32 %v1278, 16
    %v4611 = vrot.slane %v4609, 7
    %v4612 = vshll.u32 %v1278, 16
    %v4614 = vor.u32 %v4611, %v4612
    %v4616 = vshrl.u32 %v1279, 16
    %v4618 = vrot.slane %v4616, 7
    %v4619 = vshll.u32 %v1279, 16
    %v4621 = vor.u32 %v4618, %v4619
    %v4623 = vshrl.u32 %v1280, 16
    %v4625 = vrot.slane %v4623, 7
    %v4626 = vshll.u32 %v1280, 16
    %v4628 = vor.u32 %v4625, %v4626
    %v4630 = vshrl.u32 %v1281, 16
    %v4632 = vrot.slane %v4630, 7
    %v4633 = vshll.u32 %v1281, 16
    %v4635 = vor.u32 %v4632, %v4633
    %v4637 = vshrl.u32 %v1282, 16
    %v4639 = vrot.slane %v4637, 7
    %v4640 = vshll.u32 %v1282, 16
    %v4642 = vor.u32 %v4639, %v4640
    %v4644 = vshrl.u32 %v1283, 16
    %v4646 = vrot.slane %v4644, 7
    %v4647 = vshll.u32 %v1283, 16
    %v4649 = vor.u32 %v4646, %v4647
    %v4651 = vshrl.u32 %v1284, 16
    %v4653 = vrot.slane %v4651, 7
    %v4654 = vshll.u32 %v1284, 16
    %v4656 = vor.u32 %v4653, %v4654
    %v4658 = vshrl.u32 %v1285, 16
    %v4660 = vrot.slane %v4658, 7
    %v4661 = vshll.u32 %v1285, 16
    %v4663 = vor.u32 %v4660, %v4661
    %v4665 = vshrl.u32 %v1286, 16
    %v4667 = vrot.slane %v4665, 7
    %v4668 = vshll.u32 %v1286, 16
    %v4670 = vor.u32 %v4667, %v4668
    %v4672 = vshrl.u32 %v1287, 16
    %v4674 = vrot.slane %v4672, 7
    %v4675 = vshll.u32 %v1287, 16
    %v4677 = vor.u32 %v4674, %v4675
    %v4679 = vshrl.u32 %v1288, 16
    %v4681 = vrot.slane %v4679, 7
    %v4682 = vshll.u32 %v1288, 16
    %v4684 = vor.u32 %v4681, %v4682
    %v4686 = vshrl.u32 %v1289, 16
    %v4688 = vrot.slane %v4686, 7
    %v4689 = vshll.u32 %v1289, 16
    %v4691 = vor.u32 %v4688, %v4689
    %v4693 = vshrl.u32 %v1290, 16
    %v4695 = vrot.slane %v4693, 7
    %v4696 = vshll.u32 %v1290, 16
    %v4698 = vor.u32 %v4695, %v4696
    %v4700 = vshrl.u32 %v1291, 16
    %v4702 = vrot.slane %v4700, 7
    %v4703 = vshll.u32 %v1291, 16
    %v4705 = vor.u32 %v4702, %v4703
    %v4707 = vshrl.u32 %v1292, 16
    %v4709 = vrot.slane %v4707, 7
    %v4710 = vshll.u32 %v1292, 16
    %v4712 = vor.u32 %v4709, %v4710
    %v4714 = vshrl.u32 %v1293, 16
    %v4716 = vrot.slane %v4714, 7
    %v4717 = vshll.u32 %v1293, 16
    %v4719 = vor.u32 %v4716, %v4717
    %v4721 = vshrl.u32 %v1294, 16
    %v4723 = vrot.slane %v4721, 7
    %v4724 = vshll.u32 %v1294, 16
    %v4726 = vor.u32 %v4723, %v4724
    %v4728 = vshrl.u32 %v1295, 16
    %v4730 = vrot.slane %v4728, 7
    %v4731 = vshll.u32 %v1295, 16
    %v4733 = vor.u32 %v4730, %v4731
    %v4735 = vshrl.u32 %v1296, 16
    %v4737 = vrot.slane %v4735, 7
    %v4738 = vshll.u32 %v1296, 16
    %v4740 = vor.u32 %v4737, %v4738
    %v4742 = vshrl.u32 %v1297, 16
    %v4744 = vrot.slane %v4742, 7
    %v4745 = vshll.u32 %v1297, 16
    %v4747 = vor.u32 %v4744, %v4745
    %v4749 = vshrl.u32 %v1298, 16
    %v4751 = vrot.slane %v4749, 7
    %v4752 = vshll.u32 %v1298, 16
    %v4754 = vor.u32 %v4751, %v4752
    %v4819 = vsel %vm1743, 0, %v4537
    %v4820 = vsel %vm1743, 0, %v4544
    %v4821 = vsel %vm1743, 0, %v4551
    %v4822 = vsel %vm1743, 0, %v4558
    %v4823 = vsel %vm1743, 0, %v4565
    %v4824 = vsel %vm1743, 0, %v4572
    %v4825 = vsel %vm1743, 0, %v4579
    %v4826 = vsel %vm1743, 0, %v4586
    %v4827 = vsel %vm1743, 0, %v4593
    %v4828 = vsel %vm1743, 0, %v4600
    %v4829 = vsel %vm1743, 0, %v4607
    %v4830 = vsel %vm1743, 0, %v4614
    %v4831 = vsel %vm1743, 0, %v4621
    %v4832 = vsel %vm1743, 0, %v4628
    %v4833 = vsel %vm1743, 0, %v4635
    %v4834 = vsel %vm1743, 0, %v4642
    %v4835 = vsel %vm1743, 0, %v4649
    %v4836 = vsel %vm1743, 0, %v4656
    %v4837 = vsel %vm1743, 0, %v4663
    %v4838 = vsel %vm1743, 0, %v4670
    %v4839 = vsel %vm1743, 0, %v4677
    %v4840 = vsel %vm1743, 0, %v4684
    %v4841 = vsel %vm1743, 0, %v4691
    %v4842 = vsel %vm1743, 0, %v4698
    %v4843 = vsel %vm1743, 0, %v4705
    %v4844 = vsel %vm1743, 0, %v4712
    %v4845 = vsel %vm1743, 0, %v4719
    %v4846 = vsel %vm1743, 0, %v4726
    %v4847 = vsel %vm1743, 0, %v4733
    %v4848 = vsel %vm1743, 0, %v4740
    %v4849 = vsel %vm1743, 0, %v4747
    %v4850 = vsel %vm1743, 0, %v4754
    %v4851 = vsel %vm1743, %v4534, 0
    %v4852 = vsel %vm1743, %v4541, 0
    %v4853 = vsel %vm1743, %v4548, 0
    %v4854 = vsel %vm1743, %v4555, 0
    %v4855 = vsel %vm1743, %v4562, 0
    %v4856 = vsel %vm1743, %v4569, 0
    %v4857 = vsel %vm1743, %v4576, 0
    %v4858 = vsel %vm1743, %v4583, 0
    %v4859 = vsel %vm1743, %v4590, 0
    %v4860 = vsel %vm1743, %v4597, 0
    %v4861 = vsel %vm1743, %v4604, 0
    %v4862 = vsel %vm1743, %v4611, 0
    %v4863 = vsel %vm1743, %v4618, 0
    %v4864 = vsel %vm1743, %v4625, 0
    %v4865 = vsel %vm1743, %v4632, 0
    %v4866 = vsel %vm1743, %v4639, 0
    %v4867 = vsel %vm1743, %v4646, 0
    %v4868 = vsel %vm1743, %v4653, 0
    %v4869 = vsel %vm1743, %v4660, 0
    %v4870 = vsel %vm1743, %v4667, 0
    %v4871 = vsel %vm1743, %v4674, 0
    %v4872 = vsel %vm1743, %v4681, 0
    %v4873 = vsel %vm1743, %v4688, 0
    %v4874 = vsel %vm1743, %v4695, 0
    %v4875 = vsel %vm1743, %v4702, 0
    %v4876 = vsel %vm1743, %v4709, 0
    %v4877 = vsel %vm1743, %v4716, 0
    %v4878 = vsel %vm1743, %v4723, 0
    %v4879 = vsel %vm1743, %v4730, 0
    %v4880 = vsel %vm1743, %v4737, 0
    %v4881 = vsel %vm1743, %v4744, 0
    %v4882 = vsel %vm1743, %v4751, 0
    %v4884 = vshrl.u32 %v4819, 16
    %v4886 = vshll.u32 %v4819, 16
    %v4888 = vrot.slane %v4886, 1
    %v4889 = vor.u32 %v4884, %v4888
    %v4891 = vshll.u32 %v4851, 16
    %v4893 = vrot.slane %v4891, 1
    %v4894 = vsel %vm1810, %v4889, %v4893
    %v4896 = vshrl.u32 %v4820, 16
    %v4898 = vshll.u32 %v4820, 16
    %v4900 = vrot.slane %v4898, 1
    %v4901 = vor.u32 %v4896, %v4900
    %v4903 = vshll.u32 %v4852, 16
    %v4905 = vrot.slane %v4903, 1
    %v4906 = vsel %vm1810, %v4901, %v4905
    %v4908 = vshrl.u32 %v4821, 16
    %v4910 = vshll.u32 %v4821, 16
    %v4912 = vrot.slane %v4910, 1
    %v4913 = vor.u32 %v4908, %v4912
    %v4915 = vshll.u32 %v4853, 16
    %v4917 = vrot.slane %v4915, 1
    %v4918 = vsel %vm1810, %v4913, %v4917
    %v4920 = vshrl.u32 %v4822, 16
    %v4922 = vshll.u32 %v4822, 16
    %v4924 = vrot.slane %v4922, 1
    %v4925 = vor.u32 %v4920, %v4924
    %v4927 = vshll.u32 %v4854, 16
    %v4929 = vrot.slane %v4927, 1
    %v4930 = vsel %vm1810, %v4925, %v4929
    %v4932 = vshrl.u32 %v4823, 16
    %v4934 = vshll.u32 %v4823, 16
    %v4936 = vrot.slane %v4934, 1
    %v4937 = vor.u32 %v4932, %v4936
    %v4939 = vshll.u32 %v4855, 16
    %v4941 = vrot.slane %v4939, 1
    %v4942 = vsel %vm1810, %v4937, %v4941
    %v4944 = vshrl.u32 %v4824, 16
    %v4946 = vshll.u32 %v4824, 16
    %v4948 = vrot.slane %v4946, 1
    %v4949 = vor.u32 %v4944, %v4948
    %v4951 = vshll.u32 %v4856, 16
    %v4953 = vrot.slane %v4951, 1
    %v4954 = vsel %vm1810, %v4949, %v4953
    %v4956 = vshrl.u32 %v4825, 16
    %v4958 = vshll.u32 %v4825, 16
    %v4960 = vrot.slane %v4958, 1
    %v4961 = vor.u32 %v4956, %v4960
    %v4963 = vshll.u32 %v4857, 16
    %v4965 = vrot.slane %v4963, 1
    %v4966 = vsel %vm1810, %v4961, %v4965
    %v4968 = vshrl.u32 %v4826, 16
    %v4970 = vshll.u32 %v4826, 16
    %v4972 = vrot.slane %v4970, 1
    %v4973 = vor.u32 %v4968, %v4972
    %v4975 = vshll.u32 %v4858, 16
    %v4977 = vrot.slane %v4975, 1
    %v4978 = vsel %vm1810, %v4973, %v4977
    %v4980 = vshrl.u32 %v4827, 16
    %v4982 = vshll.u32 %v4827, 16
    %v4984 = vrot.slane %v4982, 1
    %v4985 = vor.u32 %v4980, %v4984
    %v4987 = vshll.u32 %v4859, 16
    %v4989 = vrot.slane %v4987, 1
    %v4990 = vsel %vm1810, %v4985, %v4989
    %v4992 = vshrl.u32 %v4828, 16
    %v4994 = vshll.u32 %v4828, 16
    %v4996 = vrot.slane %v4994, 1
    %v4997 = vor.u32 %v4992, %v4996
    %v4999 = vshll.u32 %v4860, 16
    %v5001 = vrot.slane %v4999, 1
    %v5002 = vsel %vm1810, %v4997, %v5001
    %v5004 = vshrl.u32 %v4829, 16
    %v5006 = vshll.u32 %v4829, 16
    %v5008 = vrot.slane %v5006, 1
    %v5009 = vor.u32 %v5004, %v5008
    %v5011 = vshll.u32 %v4861, 16
    %v5013 = vrot.slane %v5011, 1
    %v5014 = vsel %vm1810, %v5009, %v5013
    %v5016 = vshrl.u32 %v4830, 16
    %v5018 = vshll.u32 %v4830, 16
    %v5020 = vrot.slane %v5018, 1
    %v5021 = vor.u32 %v5016, %v5020
    %v5023 = vshll.u32 %v4862, 16
    %v5025 = vrot.slane %v5023, 1
    %v5026 = vsel %vm1810, %v5021, %v5025
    %v5028 = vshrl.u32 %v4831, 16
    %v5030 = vshll.u32 %v4831, 16
    %v5032 = vrot.slane %v5030, 1
    %v5033 = vor.u32 %v5028, %v5032
    %v5035 = vshll.u32 %v4863, 16
    %v5037 = vrot.slane %v5035, 1
    %v5038 = vsel %vm1810, %v5033, %v5037
    %v5040 = vshrl.u32 %v4832, 16
    %v5042 = vshll.u32 %v4832, 16
    %v5044 = vrot.slane %v5042, 1
    %v5045 = vor.u32 %v5040, %v5044
    %v5047 = vshll.u32 %v4864, 16
    %v5049 = vrot.slane %v5047, 1
    %v5050 = vsel %vm1810, %v5045, %v5049
    %v5052 = vshrl.u32 %v4833, 16
    %v5054 = vshll.u32 %v4833, 16
    %v5056 = vrot.slane %v5054, 1
    %v5057 = vor.u32 %v5052, %v5056
    %v5059 = vshll.u32 %v4865, 16
    %v5061 = vrot.slane %v5059, 1
    %v5062 = vsel %vm1810, %v5057, %v5061
    %v5064 = vshrl.u32 %v4835, 16
    %v5066 = vshll.u32 %v4835, 16
    %v5068 = vrot.slane %v5066, 1
    %v5069 = vor.u32 %v5064, %v5068
    %v5071 = vshll.u32 %v4867, 16
    %v5073 = vrot.slane %v5071, 1
    %v5074 = vsel %vm1810, %v5069, %v5073
    %v5076 = vshrl.u32 %v4836, 16
    %v5078 = vshll.u32 %v4836, 16
    %v5080 = vrot.slane %v5078, 1
    %v5081 = vor.u32 %v5076, %v5080
    %v5083 = vshll.u32 %v4868, 16
    %v5085 = vrot.slane %v5083, 1
    %v5086 = vsel %vm1810, %v5081, %v5085
    %v5088 = vshrl.u32 %v4837, 16
    %v5090 = vshll.u32 %v4837, 16
    %v5092 = vrot.slane %v5090, 1
    %v5093 = vor.u32 %v5088, %v5092
    %v5095 = vshll.u32 %v4869, 16
    %v5097 = vrot.slane %v5095, 1
    %v5098 = vsel %vm1810, %v5093, %v5097
    %v5100 = vshrl.u32 %v4838, 16
    %v5102 = vshll.u32 %v4838, 16
    %v5104 = vrot.slane %v5102, 1
    %v5105 = vor.u32 %v5100, %v5104
    %v5107 = vshll.u32 %v4870, 16
    %v5109 = vrot.slane %v5107, 1
    %v5110 = vsel %vm1810, %v5105, %v5109
    %v5112 = vshrl.u32 %v4839, 16
    %v5114 = vshll.u32 %v4839, 16
    %v5116 = vrot.slane %v5114, 1
    %v5117 = vor.u32 %v5112, %v5116
    %v5119 = vshll.u32 %v4871, 16
    %v5121 = vrot.slane %v5119, 1
    %v5122 = vsel %vm1810, %v5117, %v5121
    %v5124 = vshrl.u32 %v4840, 16
    %v5126 = vshll.u32 %v4840, 16
    %v5128 = vrot.slane %v5126, 1
    %v5129 = vor.u32 %v5124, %v5128
    %v5131 = vshll.u32 %v4872, 16
    %v5133 = vrot.slane %v5131, 1
    %v5134 = vsel %vm1810, %v5129, %v5133
    %v5136 = vshrl.u32 %v4841, 16
    %v5138 = vshll.u32 %v4841, 16
    %v5140 = vrot.slane %v5138, 1
    %v5141 = vor.u32 %v5136, %v5140
    %v5143 = vshll.u32 %v4873, 16
    %v5145 = vrot.slane %v5143, 1
    %v5146 = vsel %vm1810, %v5141, %v5145
    %v5148 = vshrl.u32 %v4842, 16
    %v5150 = vshll.u32 %v4842, 16
    %v5152 = vrot.slane %v5150, 1
    %v5153 = vor.u32 %v5148, %v5152
    %v5155 = vshll.u32 %v4874, 16
    %v5157 = vrot.slane %v5155, 1
    %v5158 = vsel %vm1810, %v5153, %v5157
    %v5160 = vshrl.u32 %v4843, 16
    %v5162 = vshll.u32 %v4843, 16
    %v5164 = vrot.slane %v5162, 1
    %v5165 = vor.u32 %v5160, %v5164
    %v5167 = vshll.u32 %v4875, 16
    %v5169 = vrot.slane %v5167, 1
    %v5170 = vsel %vm1810, %v5165, %v5169
    %v5172 = vshrl.u32 %v4844, 16
    %v5174 = vshll.u32 %v4844, 16
    %v5176 = vrot.slane %v5174, 1
    %v5177 = vor.u32 %v5172, %v5176
    %v5179 = vshll.u32 %v4876, 16
    %v5181 = vrot.slane %v5179, 1
    %v5182 = vsel %vm1810, %v5177, %v5181
    %v5184 = vshrl.u32 %v4845, 16
    %v5186 = vshll.u32 %v4845, 16
    %v5188 = vrot.slane %v5186, 1
    %v5189 = vor.u32 %v5184, %v5188
    %v5191 = vshll.u32 %v4877, 16
    %v5193 = vrot.slane %v5191, 1
    %v5194 = vsel %vm1810, %v5189, %v5193
    %v5196 = vshrl.u32 %v4846, 16
    %v5198 = vshll.u32 %v4846, 16
    %v5200 = vrot.slane %v5198, 1
    %v5201 = vor.u32 %v5196, %v5200
    %v5203 = vshll.u32 %v4878, 16
    %v5205 = vrot.slane %v5203, 1
    %v5206 = vsel %vm1810, %v5201, %v5205
    %v5208 = vshrl.u32 %v4847, 16
    %v5210 = vshll.u32 %v4847, 16
    %v5212 = vrot.slane %v5210, 1
    %v5213 = vor.u32 %v5208, %v5212
    %v5215 = vshll.u32 %v4879, 16
    %v5217 = vrot.slane %v5215, 1
    %v5218 = vsel %vm1810, %v5213, %v5217
    %v5220 = vshrl.u32 %v4848, 16
    %v5222 = vshll.u32 %v4848, 16
    %v5224 = vrot.slane %v5222, 1
    %v5225 = vor.u32 %v5220, %v5224
    %v5227 = vshll.u32 %v4880, 16
    %v5229 = vrot.slane %v5227, 1
    %v5230 = vsel %vm1810, %v5225, %v5229
    %v5232 = vshrl.u32 %v4849, 16
    %v5234 = vshll.u32 %v4849, 16
    %v5236 = vrot.slane %v5234, 1
    %v5237 = vor.u32 %v5232, %v5236
    %v5239 = vshll.u32 %v4881, 16
    %v5241 = vrot.slane %v5239, 1
    %v5242 = vsel %vm1810, %v5237, %v5241
    %v5333 = vrot.slane %v4819, 1
    %v5334 = vrot.slane %v4851, 1
    %v5335 = vsel %vm2276, %v5333, %v5334
    %v5336 = vrot.slane %v4820, 1
    %v5337 = vrot.slane %v4852, 1
    %v5338 = vsel %vm2276, %v5336, %v5337
    %v5339 = vrot.slane %v4821, 1
    %v5340 = vrot.slane %v4853, 1
    %v5341 = vsel %vm2276, %v5339, %v5340
    %v5342 = vrot.slane %v4822, 1
    %v5343 = vrot.slane %v4854, 1
    %v5344 = vsel %vm2276, %v5342, %v5343
    %v5345 = vrot.slane %v4823, 1
    %v5346 = vrot.slane %v4855, 1
    %v5347 = vsel %vm2276, %v5345, %v5346
    %v5348 = vrot.slane %v4824, 1
    %v5349 = vrot.slane %v4856, 1
    %v5350 = vsel %vm2276, %v5348, %v5349
    %v5351 = vrot.slane %v4825, 1
    %v5352 = vrot.slane %v4857, 1
    %v5353 = vsel %vm2276, %v5351, %v5352
    %v5354 = vrot.slane %v4826, 1
    %v5355 = vrot.slane %v4858, 1
    %v5356 = vsel %vm2276, %v5354, %v5355
    %v5357 = vrot.slane %v4827, 1
    %v5358 = vrot.slane %v4859, 1
    %v5359 = vsel %vm2276, %v5357, %v5358
    %v5360 = vrot.slane %v4828, 1
    %v5361 = vrot.slane %v4860, 1
    %v5362 = vsel %vm2276, %v5360, %v5361
    %v5363 = vrot.slane %v4829, 1
    %v5364 = vrot.slane %v4861, 1
    %v5365 = vsel %vm2276, %v5363, %v5364
    %v5366 = vrot.slane %v4830, 1
    %v5367 = vrot.slane %v4862, 1
    %v5368 = vsel %vm2276, %v5366, %v5367
    %v5369 = vrot.slane %v4831, 1
    %v5370 = vrot.slane %v4863, 1
    %v5371 = vsel %vm2276, %v5369, %v5370
    %v5372 = vrot.slane %v4832, 1
    %v5373 = vrot.slane %v4864, 1
    %v5374 = vsel %vm2276, %v5372, %v5373
    %v5375 = vrot.slane %v4833, 1
    %v5376 = vrot.slane %v4865, 1
    %v5377 = vsel %vm2276, %v5375, %v5376
    %v5378 = vrot.slane %v4835, 1
    %v5379 = vrot.slane %v4867, 1
    %v5380 = vsel %vm2276, %v5378, %v5379
    %v5381 = vrot.slane %v4836, 1
    %v5382 = vrot.slane %v4868, 1
    %v5383 = vsel %vm2276, %v5381, %v5382
    %v5384 = vrot.slane %v4837, 1
    %v5385 = vrot.slane %v4869, 1
    %v5386 = vsel %vm2276, %v5384, %v5385
    %v5387 = vrot.slane %v4838, 1
    %v5388 = vrot.slane %v4870, 1
    %v5389 = vsel %vm2276, %v5387, %v5388
    %v5390 = vrot.slane %v4839, 1
    %v5391 = vrot.slane %v4871, 1
    %v5392 = vsel %vm2276, %v5390, %v5391
    %v5393 = vrot.slane %v4840, 1
    %v5394 = vrot.slane %v4872, 1
    %v5395 = vsel %vm2276, %v5393, %v5394
    %v5396 = vrot.slane %v4841, 1
    %v5397 = vrot.slane %v4873, 1
    %v5398 = vsel %vm2276, %v5396, %v5397
    %v5399 = vrot.slane %v4842, 1
    %v5400 = vrot.slane %v4874, 1
    %v5401 = vsel %vm2276, %v5399, %v5400
    %v5402 = vrot.slane %v4843, 1
    %v5403 = vrot.slane %v4875, 1
    %v5404 = vsel %vm2276, %v5402, %v5403
    %v5405 = vrot.slane %v4844, 1
    %v5406 = vrot.slane %v4876, 1
    %v5407 = vsel %vm2276, %v5405, %v5406
    %v5408 = vrot.slane %v4845, 1
    %v5409 = vrot.slane %v4877, 1
    %v5410 = vsel %vm2276, %v5408, %v5409
    %v5411 = vrot.slane %v4846, 1
    %v5412 = vrot.slane %v4878, 1
    %v5413 = vsel %vm2276, %v5411, %v5412
    %v5414 = vrot.slane %v4847, 1
    %v5415 = vrot.slane %v4879, 1
    %v5416 = vsel %vm2276, %v5414, %v5415
    %v5417 = vrot.slane %v4848, 1
    %v5418 = vrot.slane %v4880, 1
    %v5419 = vsel %vm2276, %v5417, %v5418
    %v5420 = vrot.slane %v4849, 1
    %v5421 = vrot.slane %v4881, 1
    %v5422 = vsel %vm2276, %v5420, %v5421
    %v5454 = vshrl.u32 %v4834, 16
    %v5456 = vshll.u32 %v4834, 16
    %v5458 = vrot.slane %v5456, 1
    %v5459 = vor.u32 %v5454, %v5458
    %v5461 = vshll.u32 %v4866, 16
    %v5463 = vrot.slane %v5461, 1
    %v5464 = vsel %vm1810, %v5459, %v5463
    %v5466 = vshrl.u32 %v4850, 16
    %v5468 = vshll.u32 %v4850, 16
    %v5470 = vrot.slane %v5468, 1
    %v5471 = vor.u32 %v5466, %v5470
    %v5473 = vshll.u32 %v4882, 16
    %v5475 = vrot.slane %v5473, 1
    %v5476 = vsel %vm1810, %v5471, %v5475
    %v5483 = vrot.slane %v4834, 1
    %v5484 = vrot.slane %v4866, 1
    %v5485 = vsel %vm2276, %v5483, %v5484
    %v5486 = vrot.slane %v4850, 1
    %v5487 = vrot.slane %v4882, 1
    %v5488 = vsel %vm2276, %v5486, %v5487
    %v5492 = vlaneseq
    %v5493 = vshrl.u32 %v5492, 7
    %v5494 = vsub.s32 0, %v5493
    %v5495 = vrot.slane %v4530, %v5494
    %v5641 = vunpack.c.l.b16 %v4386
    %v5642 = vunpack.c.l.b16 %v4387
    %v5643 = vunpack.c.l.b16 %v4388
    %v5644 = vunpack.c.l.b16 %v4389
    %v5645 = vunpack.c.l.b16 %v4390
    %v5646 = vunpack.c.l.b16 %v4391
    %v5647 = vunpack.c.l.b16 %v4392
    %v5648 = vunpack.c.l.b16 %v4393
    %v5649 = vunpack.c.l.b16 %v4394
    %v5650 = vunpack.c.l.b16 %v4395
    %v5651 = vunpack.c.l.b16 %v4396
    %v5652 = vunpack.c.l.b16 %v4397
    %v5653 = vunpack.c.l.b16 %v4398
    %v5654 = vunpack.c.l.b16 %v4399
    %v5655 = vunpack.c.l.b16 %v4400
    %v5656 = vunpack.c.l.b16 %v4401
    %v5657 = vunpack.c.l.b16 %v4402
    %v5658 = vunpack.c.l.b16 %v4403
    %v5659 = vunpack.c.l.b16 %v4404
    %v5660 = vunpack.c.l.b16 %v4405
    %v5661 = vunpack.c.l.b16 %v4406
    %v5662 = vunpack.c.l.b16 %v4407
    %v5663 = vunpack.c.l.b16 %v4408
    %v5664 = vunpack.c.l.b16 %v4409
    %v5665 = vunpack.c.l.b16 %v4410
    %v5666 = vunpack.c.l.b16 %v4411
    %v5667 = vunpack.c.l.b16 %v4412
    %v5668 = vunpack.c.l.b16 %v4413
    %v5669 = vunpack.c.l.b16 %v4414
    %v5670 = vunpack.c.l.b16 %v4415
    %v5671 = vunpack.c.l.b16 %v4416
    %v5672 = vunpack.c.l.b16 %v4417
    %v5673 = vunpack.c.l.b16 %v4418
    %v5674 = vunpack.c.l.b16 %v4419
    %v5675 = vunpack.c.l.b16 %v4420
    %v5676 = vunpack.c.l.b16 %v4421
    %v5677 = vunpack.c.l.b16 %v4422
    %v5678 = vunpack.c.l.b16 %v4423
    %v5679 = vunpack.c.l.b16 %v4424
    %v5680 = vunpack.c.l.b16 %v4425
    %v5681 = vunpack.c.l.b16 %v4426
    %v5682 = vunpack.c.l.b16 %v4427
    %v5683 = vunpack.c.l.b16 %v4428
    %v5684 = vunpack.c.l.b16 %v4429
    %v5685 = vunpack.c.l.b16 %v4430
    %v5686 = vunpack.c.l.b16 %v4431
    %v5687 = vunpack.c.l.b16 %v4432
    %v5688 = vunpack.c.l.b16 %v4433
    %v5689 = vunpack.c.l.b16 %v4434
    %v5690 = vunpack.c.l.b16 %v4435
    %v5691 = vunpack.c.l.b16 %v4436
    %v5692 = vunpack.c.l.b16 %v4437
    %v5693 = vunpack.c.l.b16 %v4438
    %v5694 = vunpack.c.l.b16 %v4439
    %v5695 = vunpack.c.l.b16 %v4440
    %v5696 = vunpack.c.l.b16 %v4441
    %v5697 = vunpack.c.l.b16 %v4442
    %v5698 = vunpack.c.l.b16 %v4443
    %v5699 = vunpack.c.l.b16 %v4444
    %v5700 = vunpack.c.l.b16 %v4445
    %v5701 = vunpack.c.l.b16 %v4446
    %v5702 = vunpack.c.l.b16 %v4447
    %v5703 = vunpack.c.l.b16 %v4448
    %v5704 = vunpack.c.l.b16 %v4449
    %v5705 = vunpack.c.l.b16 %v4450
    %v5706 = vunpack.c.l.b16 %v4451
    %v5707 = vunpack.c.l.b16 %v4452
    %v5708 = vunpack.c.l.b16 %v4453
    %v5709 = vunpack.c.l.b16 %v4454
    %v5710 = vunpack.c.l.b16 %v4455
    %v5711 = vunpack.c.l.b16 %v4456
    %v5712 = vunpack.c.l.b16 %v4457
    %v5713 = vunpack.c.l.b16 %v4458
    %v5714 = vunpack.c.l.b16 %v4459
    %v5715 = vunpack.c.l.b16 %v4460
    %v5716 = vunpack.c.l.b16 %v4461
    %v5717 = vunpack.c.l.b16 %v4462
    %v5718 = vunpack.c.l.b16 %v4463
    %v5719 = vunpack.c.l.b16 %v4464
    %v5720 = vunpack.c.l.b16 %v4465
    %v5721 = vunpack.c.l.b16 %v4466
    %v5722 = vunpack.c.l.b16 %v4467
    %v5723 = vunpack.c.l.b16 %v4468
    %v5724 = vunpack.c.l.b16 %v4469
    %v5725 = vunpack.c.l.b16 %v4470
    %v5726 = vunpack.c.l.b16 %v4471
    %v5727 = vunpack.c.l.b16 %v4472
    %v5728 = vunpack.c.l.b16 %v4473
    %v5729 = vunpack.c.l.b16 %v4474
    %v5730 = vunpack.c.l.b16 %v4475
    %v5731 = vunpack.c.l.b16 %v4476
    %v5732 = vunpack.c.l.b16 %v4477
    %v5733 = vunpack.c.l.b16 %v4478
    %v5734 = vunpack.c.l.b16 %v4479
    %v5735 = vunpack.c.l.b16 %v4480
    %v5736 = vunpack.c.l.b16 %v4481
    %v5737 = vunpack.c.l.b16 %v4482
    %v5738 = vunpack.c.l.b16 %v4483
    %v5739 = vunpack.c.l.b16 %v4484
    %v5740 = vunpack.c.l.b16 %v4485
    %v5741 = vunpack.c.l.b16 %v4486
    %v5742 = vunpack.c.l.b16 %v4487
    %v5743 = vunpack.c.l.b16 %v4488
    %v5744 = vunpack.c.l.b16 %v4489
    %v5745 = vunpack.c.l.b16 %v4490
    %v5746 = vunpack.c.l.b16 %v4491
    %v5747 = vunpack.c.l.b16 %v4492
    %v5748 = vunpack.c.l.b16 %v4493
    %v5749 = vunpack.c.l.b16 %v4494
    %v5750 = vunpack.c.l.b16 %v4495
    %v5751 = vunpack.c.l.b16 %v4496
    %v5752 = vunpack.c.l.b16 %v4497
    %v5753 = vunpack.c.l.b16 %v4498
    %v5754 = vunpack.c.l.b16 %v4499
    %v5755 = vunpack.c.l.b16 %v4500
    %v5756 = vunpack.c.l.b16 %v4501
    %v5757 = vunpack.c.l.b16 %v4502
    %v5758 = vunpack.c.l.b16 %v4503
    %v5759 = vunpack.c.l.b16 %v4504
    %v5760 = vunpack.c.l.b16 %v4505
    %v5761 = vunpack.c.l.b16 %v4506
    %v5762 = vunpack.c.l.b16 %v4507
    %v5763 = vunpack.c.l.b16 %v4508
    %v5764 = vunpack.c.l.b16 %v4509
    %v5765 = vunpack.c.l.b16 %v4510
    %v5766 = vunpack.c.l.b16 %v4511
    %v5767 = vunpack.c.l.b16 %v4512
    %v5768 = vunpack.c.l.b16 %v4513
    %v5769 = vunpack.c.l.b16 %v4514
    %v5770 = vunpack.c.l.b16 %v4515
    %v5771 = vunpack.c.l.b16 %v4516
    %v5772 = vunpack.c.l.b16 %v4517
    %v5773 = vunpack.c.l.b16 %v4518
    %v5774 = vunpack.c.l.b16 %v4519
    %v5775 = vunpack.c.l.b16 %v4520
    %v5776 = vunpack.c.l.b16 %v4521
    %v5777 = vunpack.c.l.b16 %v4522
    %v5778 = vunpack.c.l.b16 %v4523
    %v5779 = vunpack.c.l.b16 %v4524
    %v5780 = vunpack.c.l.b16 %v4525
    %v5781 = vunpack.c.l.b16 %v4526
    %v5782 = vunpack.c.l.b16 %v4527
    %v5783 = vunpack.c.l.b16 %v4528
    %v5784 = vunpack.c.l.b16 %v4529
    %v5785 = vpack.c.b16 %v5642, %v5641
    %v5786 = vpack.c.b16 %v5644, %v5643
    %v5787 = vpack.c.b16 %v5646, %v5645
    %v5788 = vpack.c.b16 %v5648, %v5647
    %v5789 = vpack.c.b16 %v5650, %v5649
    %v5790 = vpack.c.b16 %v5652, %v5651
    %v5791 = vpack.c.b16 %v5654, %v5653
    %v5792 = vpack.c.b16 %v5656, %v5655
    %v5793 = vpack.c.b16 %v5658, %v5657
    %v5794 = vpack.c.b16 %v5660, %v5659
    %v5795 = vpack.c.b16 %v5662, %v5661
    %v5796 = vpack.c.b16 %v5664, %v5663
    %v5797 = vpack.c.b16 %v5666, %v5665
    %v5798 = vpack.c.b16 %v5668, %v5667
    %v5799 = vpack.c.b16 %v5670, %v5669
    %v5800 = vpack.c.b16 %v5672, %v5671
    %v5801 = vpack.c.b16 %v5674, %v5673
    %v5802 = vpack.c.b16 %v5676, %v5675
    %v5803 = vpack.c.b16 %v5678, %v5677
    %v5804 = vpack.c.b16 %v5680, %v5679
    %v5805 = vpack.c.b16 %v5682, %v5681
    %v5806 = vpack.c.b16 %v5684, %v5683
    %v5807 = vpack.c.b16 %v5686, %v5685
    %v5808 = vpack.c.b16 %v5688, %v5687
    %v5809 = vpack.c.b16 %v5690, %v5689
    %v5810 = vpack.c.b16 %v5692, %v5691
    %v5811 = vpack.c.b16 %v5694, %v5693
    %v5812 = vpack.c.b16 %v5696, %v5695
    %v5813 = vpack.c.b16 %v5698, %v5697
    %v5814 = vpack.c.b16 %v5700, %v5699
    %v5815 = vpack.c.b16 %v5702, %v5701
    %v5816 = vpack.c.b16 %v5704, %v5703
    %v5817 = vpack.c.b16 %v5706, %v5705
    %v5818 = vpack.c.b16 %v5708, %v5707
    %v5819 = vpack.c.b16 %v5710, %v5709
    %v5820 = vpack.c.b16 %v5712, %v5711
    %v5821 = vpack.c.b16 %v5714, %v5713
    %v5822 = vpack.c.b16 %v5716, %v5715
    %v5823 = vpack.c.b16 %v5718, %v5717
    %v5824 = vpack.c.b16 %v5720, %v5719
    %v5825 = vpack.c.b16 %v5722, %v5721
    %v5826 = vpack.c.b16 %v5724, %v5723
    %v5827 = vpack.c.b16 %v5726, %v5725
    %v5828 = vpack.c.b16 %v5728, %v5727
    %v5829 = vpack.c.b16 %v5730, %v5729
    %v5830 = vpack.c.b16 %v5732, %v5731
    %v5831 = vpack.c.b16 %v5734, %v5733
    %v5832 = vpack.c.b16 %v5736, %v5735
    %v5833 = vpack.c.b16 %v5738, %v5737
    %v5834 = vpack.c.b16 %v5740, %v5739
    %v5835 = vpack.c.b16 %v5742, %v5741
    %v5836 = vpack.c.b16 %v5744, %v5743
    %v5837 = vpack.c.b16 %v5746, %v5745
    %v5838 = vpack.c.b16 %v5748, %v5747
    %v5839 = vpack.c.b16 %v5750, %v5749
    %v5840 = vpack.c.b16 %v5752, %v5751
    %v5841 = vpack.c.b16 %v5754, %v5753
    %v5842 = vpack.c.b16 %v5756, %v5755
    %v5843 = vpack.c.b16 %v5758, %v5757
    %v5844 = vpack.c.b16 %v5760, %v5759
    %v5845 = vpack.c.b16 %v5762, %v5761
    %v5846 = vpack.c.b16 %v5764, %v5763
    %v5847 = vpack.c.b16 %v5766, %v5765
    %v5848 = vpack.c.b16 %v5768, %v5767
    %v5849 = vpack.c.b16 %v5770, %v5769
    %v5850 = vpack.c.b16 %v5772, %v5771
    %v5851 = vpack.c.b16 %v5774, %v5773
    %v5852 = vpack.c.b16 %v5776, %v5775
    %v5853 = vpack.c.b16 %v5778, %v5777
    %v5854 = vpack.c.b16 %v5780, %v5779
    %v5855 = vpack.c.b16 %v5782, %v5781
    %v5856 = vpack.c.b16 %v5784, %v5783
    %5929 = vmatprep.subr.bf16.mxu0 0
    %5930 = vmatpush1.bf16.msra.mxu0 %v5785
    %5931 = vmatprep.subr.bf16.mxu0 0
    %5932 = vmatpush1.bf16.msra.mxu0 %v5786
    %5933 = vmatprep.subr.bf16.mxu0 0
    %5934 = vmatpush1.bf16.msra.mxu0 %v5787
    %5935 = vmatprep.subr.bf16.mxu0 0
    %5936 = vmatpush1.bf16.msra.mxu0 %v5788
    %5937 = vmatprep.subr.bf16.mxu0 0
    %5938 = vmatpush1.bf16.msra.mxu0 %v5789
    %5939 = vmatprep.subr.bf16.mxu0 0
    %5940 = vmatpush1.bf16.msra.mxu0 %v5790
    %5941 = vmatprep.subr.bf16.mxu0 0
    %5942 = vmatpush1.bf16.msra.mxu0 %v5791
    %5943 = vmatprep.subr.bf16.mxu0 0
    %5944 = vmatpush1.bf16.msra.mxu0 %v5792
    %5945 = vmatprep.subr.bf16.mxu0 0
    %5946 = vmatpush1.bf16.msra.mxu0 %v5793
    %5947 = vmatprep.subr.bf16.mxu0 0
    %5948 = vmatpush1.bf16.msra.mxu0 %v5794
    %5949 = vmatprep.subr.bf16.mxu0 0
    %5950 = vmatpush1.bf16.msra.mxu0 %v5795
    %5951 = vmatprep.subr.bf16.mxu0 0
    %5952 = vmatpush1.bf16.msra.mxu0 %v5796
    %5953 = vmatprep.subr.bf16.mxu0 0
    %5954 = vmatpush1.bf16.msra.mxu0 %v5797
    %5955 = vmatprep.subr.bf16.mxu0 0
    %5956 = vmatpush1.bf16.msra.mxu0 %v5798
    %5957 = vmatprep.subr.bf16.mxu0 0
    %5958 = vmatpush1.bf16.msra.mxu0 %v5799
    %5959 = vmatprep.subr.bf16.mxu0 0
    %5960 = vmatpush1.bf16.msra.mxu0 %v5800
    %5961 = vmatprep.mubr.bf16.mxu0 %v1822
    %5962 = vmatmul.mubr.bf16.gmra.mrb[0].mxu0 %v1744
    %v5963 = vpop.f32.mrb[0].mxu0
    %v5964 = vadd.f32 %v5495, %v5963
    %v5965 = vpop.f32.mrb[0].mxu0
    %v5966 = vpop.f32.mrb[0].mxu0
    %v5967 = vadd.f32 %v5495, %v5966
    %v5968 = vpop.f32.mrb[0].mxu0
    %5969 = vmatprep.mubr.bf16.mxu0 %v4894
    %5970 = vmatmul.mubr.bf16.gmra.mrb[0].mxu0 %v4819
    %v5971 = vpop.f32.mrb[0].mxu0
    %v5972 = vadd.f32 %v5495, %v5971
    %v5973 = vpop.f32.mrb[0].mxu0
    %v5974 = vpop.f32.mrb[0].mxu0
    %v5975 = vadd.f32 %v5495, %v5974
    %v5976 = vpop.f32.mrb[0].mxu0
    %5977 = vmatprep.mubr.bf16.mxu0 %v4906
    %5978 = vmatmul.mubr.bf16.gmra.mrb[0].mxu0 %v4820
    %v5979 = vpop.f32.mrb[0].mxu0
    %v5980 = vadd.f32 %v5495, %v5979
    %v5981 = vpop.f32.mrb[0].mxu0
    %v5982 = vpop.f32.mrb[0].mxu0
    %v5983 = vadd.f32 %v5495, %v5982
    %v5984 = vpop.f32.mrb[0].mxu0
    %5985 = vmatprep.mubr.bf16.mxu0 %v4918
    %5986 = vmatmul.mubr.bf16.gmra.mrb[0].mxu0 %v4821
    %v5987 = vpop.f32.mrb[0].mxu0
    %v5988 = vadd.f32 %v5495, %v5987
    %v5989 = vpop.f32.mrb[0].mxu0
    %v5990 = vpop.f32.mrb[0].mxu0
    %v5991 = vadd.f32 %v5495, %v5990
    %v5992 = vpop.f32.mrb[0].mxu0
    %5993 = vmatprep.mubr.bf16.mxu0 %v4930
    %5994 = vmatmul.mubr.bf16.gmra.mrb[0].mxu0 %v4822
    %v5995 = vpop.f32.mrb[0].mxu0
    %v5996 = vadd.f32 %v5495, %v5995
    %v5997 = vpop.f32.mrb[0].mxu0
    %v5998 = vpop.f32.mrb[0].mxu0
    %v5999 = vadd.f32 %v5495, %v5998
    %v6000 = vpop.f32.mrb[0].mxu0
    %6001 = vmatprep.mubr.bf16.mxu0 %v4942
    %6002 = vmatmul.mubr.bf16.gmra.mrb[0].mxu0 %v4823
    %v6003 = vpop.f32.mrb[0].mxu0
    %v6004 = vadd.f32 %v5495, %v6003
    %v6005 = vpop.f32.mrb[0].mxu0
    %v6006 = vpop.f32.mrb[0].mxu0
    %v6007 = vadd.f32 %v5495, %v6006
    %v6008 = vpop.f32.mrb[0].mxu0
    %6009 = vmatprep.mubr.bf16.mxu0 %v4954
    %6010 = vmatmul.mubr.bf16.gmra.mrb[0].mxu0 %v4824
    %v6011 = vpop.f32.mrb[0].mxu0
    %v6012 = vadd.f32 %v5495, %v6011
    %v6013 = vpop.f32.mrb[0].mxu0
    %v6014 = vpop.f32.mrb[0].mxu0
    %v6015 = vadd.f32 %v5495, %v6014
    %v6016 = vpop.f32.mrb[0].mxu0
    %6017 = vmatprep.mubr.bf16.mxu0 %v4966
    %6018 = vmatmul.mubr.bf16.gmra.mrb[0].mxu0 %v4825
    %v6019 = vpop.f32.mrb[0].mxu0
    %v6020 = vadd.f32 %v5495, %v6019
    %v6021 = vpop.f32.mrb[0].mxu0
    %v6022 = vpop.f32.mrb[0].mxu0
    %v6023 = vadd.f32 %v5495, %v6022
    %v6024 = vpop.f32.mrb[0].mxu0
    %6025 = vmatprep.mubr.bf16.mxu0 %v4978
    %6026 = vmatmul.mubr.bf16.gmra.mrb[0].mxu0 %v4826
    %v6027 = vpop.f32.mrb[0].mxu0
    %v6028 = vadd.f32 %v5495, %v6027
    %v6029 = vpop.f32.mrb[0].mxu0
    %v6030 = vpop.f32.mrb[0].mxu0
    %v6031 = vadd.f32 %v5495, %v6030
    %v6032 = vpop.f32.mrb[0].mxu0
    %6033 = vmatprep.mubr.bf16.mxu0 %v4990
    %6034 = vmatmul.mubr.bf16.gmra.mrb[0].mxu0 %v4827
    %v6035 = vpop.f32.mrb[0].mxu0
    %v6036 = vadd.f32 %v5495, %v6035
    %v6037 = vpop.f32.mrb[0].mxu0
    %v6038 = vpop.f32.mrb[0].mxu0
    %v6039 = vadd.f32 %v5495, %v6038
    %v6040 = vpop.f32.mrb[0].mxu0
    %6041 = vmatprep.mubr.bf16.mxu0 %v5002
    %6042 = vmatmul.mubr.bf16.gmra.mrb[0].mxu0 %v4828
    %v6043 = vpop.f32.mrb[0].mxu0
    %v6044 = vadd.f32 %v5495, %v6043
    %v6045 = vpop.f32.mrb[0].mxu0
    %v6046 = vpop.f32.mrb[0].mxu0
    %v6047 = vadd.f32 %v5495, %v6046
    %v6048 = vpop.f32.mrb[0].mxu0
    %6049 = vmatprep.mubr.bf16.mxu0 %v5014
    %6050 = vmatmul.mubr.bf16.gmra.mrb[0].mxu0 %v4829
    %v6051 = vpop.f32.mrb[0].mxu0
    %v6052 = vadd.f32 %v5495, %v6051
    %v6053 = vpop.f32.mrb[0].mxu0
    %v6054 = vpop.f32.mrb[0].mxu0
    %v6055 = vadd.f32 %v5495, %v6054
    %v6056 = vpop.f32.mrb[0].mxu0
    %6057 = vmatprep.mubr.bf16.mxu0 %v5026
    %6058 = vmatmul.mubr.bf16.gmra.mrb[0].mxu0 %v4830
    %v6059 = vpop.f32.mrb[0].mxu0
    %v6060 = vadd.f32 %v5495, %v6059
    %v6061 = vpop.f32.mrb[0].mxu0
    %v6062 = vpop.f32.mrb[0].mxu0
    %v6063 = vadd.f32 %v5495, %v6062
    %v6064 = vpop.f32.mrb[0].mxu0
    %6065 = vmatprep.mubr.bf16.mxu0 %v5038
    %6066 = vmatmul.mubr.bf16.gmra.mrb[0].mxu0 %v4831
    %v6067 = vpop.f32.mrb[0].mxu0
    %v6068 = vadd.f32 %v5495, %v6067
    %v6069 = vpop.f32.mrb[0].mxu0
    %v6070 = vpop.f32.mrb[0].mxu0
    %v6071 = vadd.f32 %v5495, %v6070
    %v6072 = vpop.f32.mrb[0].mxu0
    %6073 = vmatprep.mubr.bf16.mxu0 %v5050
    %6074 = vmatmul.mubr.bf16.gmra.mrb[0].mxu0 %v4832
    %v6075 = vpop.f32.mrb[0].mxu0
    %v6076 = vadd.f32 %v5495, %v6075
    %v6077 = vpop.f32.mrb[0].mxu0
    %v6078 = vpop.f32.mrb[0].mxu0
    %v6079 = vadd.f32 %v5495, %v6078
    %v6080 = vpop.f32.mrb[0].mxu0
    %6081 = vmatprep.mubr.bf16.mxu0 %v5062
    %6082 = vmatmul.mubr.bf16.gmra.mrb[0].mxu0 %v4833
    %v6083 = vpop.f32.mrb[0].mxu0
    %v6084 = vadd.f32 %v5495, %v6083
    %v6085 = vpop.f32.mrb[0].mxu0
    %v6086 = vpop.f32.mrb[0].mxu0
    %v6087 = vadd.f32 %v5495, %v6086
    %v6088 = vpop.f32.mrb[0].mxu0
    %6089 = vmatprep.mubr.bf16.mxu0 %v1822
    %6090 = vmatmul.mubr.bf16.gmra.mrb[0].mxu0 %v1744
    %v6091 = vpop.f32.mrb[0].mxu0
    %v6092 = vadd.f32 %v5495, %v6091
    %v6093 = vpop.f32.mrb[0].mxu0
    %v6094 = vpop.f32.mrb[0].mxu0
    %v6095 = vadd.f32 %v5495, %v6094
    %v6096 = vpop.f32.mrb[0].mxu0
    %6097 = vmatprep.mubr.bf16.mxu0 %v5074
    %6098 = vmatmul.mubr.bf16.gmra.mrb[0].mxu0 %v4835
    %v6099 = vpop.f32.mrb[0].mxu0
    %v6100 = vadd.f32 %v5495, %v6099
    %v6101 = vpop.f32.mrb[0].mxu0
    %v6102 = vpop.f32.mrb[0].mxu0
    %v6103 = vadd.f32 %v5495, %v6102
    %v6104 = vpop.f32.mrb[0].mxu0
    %6105 = vmatprep.mubr.bf16.mxu0 %v5086
    %6106 = vmatmul.mubr.bf16.gmra.mrb[0].mxu0 %v4836
    %v6107 = vpop.f32.mrb[0].mxu0
    %v6108 = vadd.f32 %v5495, %v6107
    %v6109 = vpop.f32.mrb[0].mxu0
    %v6110 = vpop.f32.mrb[0].mxu0
    %v6111 = vadd.f32 %v5495, %v6110
    %v6112 = vpop.f32.mrb[0].mxu0
    %6113 = vmatprep.mubr.bf16.mxu0 %v5098
    %6114 = vmatmul.mubr.bf16.gmra.mrb[0].mxu0 %v4837
    %v6115 = vpop.f32.mrb[0].mxu0
    %v6116 = vadd.f32 %v5495, %v6115
    %v6117 = vpop.f32.mrb[0].mxu0
    %v6118 = vpop.f32.mrb[0].mxu0
    %v6119 = vadd.f32 %v5495, %v6118
    %v6120 = vpop.f32.mrb[0].mxu0
    %6121 = vmatprep.mubr.bf16.mxu0 %v5110
    %6122 = vmatmul.mubr.bf16.gmra.mrb[0].mxu0 %v4838
    %v6123 = vpop.f32.mrb[0].mxu0
    %v6124 = vadd.f32 %v5495, %v6123
    %v6125 = vpop.f32.mrb[0].mxu0
    %v6126 = vpop.f32.mrb[0].mxu0
    %v6127 = vadd.f32 %v5495, %v6126
    %v6128 = vpop.f32.mrb[0].mxu0
    %6129 = vmatprep.mubr.bf16.mxu0 %v5122
    %6130 = vmatmul.mubr.bf16.gmra.mrb[0].mxu0 %v4839
    %v6131 = vpop.f32.mrb[0].mxu0
    %v6132 = vadd.f32 %v5495, %v6131
    %v6133 = vpop.f32.mrb[0].mxu0
    %v6134 = vpop.f32.mrb[0].mxu0
    %v6135 = vadd.f32 %v5495, %v6134
    %v6136 = vpop.f32.mrb[0].mxu0
    %6137 = vmatprep.mubr.bf16.mxu0 %v5134
    %6138 = vmatmul.mubr.bf16.gmra.mrb[0].mxu0 %v4840
    %v6139 = vpop.f32.mrb[0].mxu0
    %v6140 = vadd.f32 %v5495, %v6139
    %v6141 = vpop.f32.mrb[0].mxu0
    %v6142 = vpop.f32.mrb[0].mxu0
    %v6143 = vadd.f32 %v5495, %v6142
    %v6144 = vpop.f32.mrb[0].mxu0
    %6145 = vmatprep.mubr.bf16.mxu0 %v5146
    %6146 = vmatmul.mubr.bf16.gmra.mrb[0].mxu0 %v4841
    %v6147 = vpop.f32.mrb[0].mxu0
    %v6148 = vadd.f32 %v5495, %v6147
    %v6149 = vpop.f32.mrb[0].mxu0
    %v6150 = vpop.f32.mrb[0].mxu0
    %v6151 = vadd.f32 %v5495, %v6150
    %v6152 = vpop.f32.mrb[0].mxu0
    %6153 = vmatprep.mubr.bf16.mxu0 %v5158
    %6154 = vmatmul.mubr.bf16.gmra.mrb[0].mxu0 %v4842
    %v6155 = vpop.f32.mrb[0].mxu0
    %v6156 = vadd.f32 %v5495, %v6155
    %v6157 = vpop.f32.mrb[0].mxu0
    %v6158 = vpop.f32.mrb[0].mxu0
    %v6159 = vadd.f32 %v5495, %v6158
    %v6160 = vpop.f32.mrb[0].mxu0
    %6161 = vmatprep.mubr.bf16.mxu0 %v5170
    %6162 = vmatmul.mubr.bf16.gmra.mrb[0].mxu0 %v4843
    %v6163 = vpop.f32.mrb[0].mxu0
    %v6164 = vadd.f32 %v5495, %v6163
    %v6165 = vpop.f32.mrb[0].mxu0
    %v6166 = vpop.f32.mrb[0].mxu0
    %v6167 = vadd.f32 %v5495, %v6166
    %v6168 = vpop.f32.mrb[0].mxu0
    %6169 = vmatprep.mubr.bf16.mxu0 %v5182
    %6170 = vmatmul.mubr.bf16.gmra.mrb[0].mxu0 %v4844
    %v6171 = vpop.f32.mrb[0].mxu0
    %v6172 = vadd.f32 %v5495, %v6171
    %v6173 = vpop.f32.mrb[0].mxu0
    %v6174 = vpop.f32.mrb[0].mxu0
    %v6175 = vadd.f32 %v5495, %v6174
    %v6176 = vpop.f32.mrb[0].mxu0
    %6177 = vmatprep.mubr.bf16.mxu0 %v5194
    %6178 = vmatmul.mubr.bf16.gmra.mrb[0].mxu0 %v4845
    %v6179 = vpop.f32.mrb[0].mxu0
    %v6180 = vadd.f32 %v5495, %v6179
    %v6181 = vpop.f32.mrb[0].mxu0
    %v6182 = vpop.f32.mrb[0].mxu0
    %v6183 = vadd.f32 %v5495, %v6182
    %v6184 = vpop.f32.mrb[0].mxu0
    %6185 = vmatprep.mubr.bf16.mxu0 %v5206
    %6186 = vmatmul.mubr.bf16.gmra.mrb[0].mxu0 %v4846
    %v6187 = vpop.f32.mrb[0].mxu0
    %v6188 = vadd.f32 %v5495, %v6187
    %v6189 = vpop.f32.mrb[0].mxu0
    %v6190 = vpop.f32.mrb[0].mxu0
    %v6191 = vadd.f32 %v5495, %v6190
    %v6192 = vpop.f32.mrb[0].mxu0
    %6193 = vmatprep.mubr.bf16.mxu0 %v5218
    %6194 = vmatmul.mubr.bf16.gmra.mrb[0].mxu0 %v4847
    %v6195 = vpop.f32.mrb[0].mxu0
    %v6196 = vadd.f32 %v5495, %v6195
    %v6197 = vpop.f32.mrb[0].mxu0
    %v6198 = vpop.f32.mrb[0].mxu0
    %v6199 = vadd.f32 %v5495, %v6198
    %v6200 = vpop.f32.mrb[0].mxu0
    %6201 = vmatprep.mubr.bf16.mxu0 %v5230
    %6202 = vmatmul.mubr.bf16.gmra.mrb[0].mxu0 %v4848
    %v6203 = vpop.f32.mrb[0].mxu0
    %v6204 = vadd.f32 %v5495, %v6203
    %v6205 = vpop.f32.mrb[0].mxu0
    %v6206 = vpop.f32.mrb[0].mxu0
    %v6207 = vadd.f32 %v5495, %v6206
    %v6208 = vpop.f32.mrb[0].mxu0
    %6209 = vmatprep.mubr.bf16.mxu0 %v5242
    %6210 = vmatmul.mubr.bf16.gmra.mrb[0].mxu0 %v4849
    %v6211 = vpop.f32.mrb[0].mxu0
    %v6212 = vadd.f32 %v5495, %v6211
    %v6213 = vpop.f32.mrb[0].mxu0
    %v6214 = vpop.f32.mrb[0].mxu0
    %v6215 = vadd.f32 %v5495, %v6214
    %v6216 = vpop.f32.mrb[0].mxu0
    %6217 = vdwg.mxu0
    %6218 = vmatprep.subr.bf16.mxu0 0
    %6219 = vmatpush1.bf16.msra.mxu0 %v5801
    %6220 = vmatprep.subr.bf16.mxu0 0
    %6221 = vmatpush1.bf16.msra.mxu0 %v5802
    %6222 = vmatprep.subr.bf16.mxu0 0
    %6223 = vmatpush1.bf16.msra.mxu0 %v5803
    %6224 = vmatprep.subr.bf16.mxu0 0
    %6225 = vmatpush1.bf16.msra.mxu0 %v5804
    %6226 = vmatprep.subr.bf16.mxu0 0
    %6227 = vmatpush1.bf16.msra.mxu0 %v5805
    %6228 = vmatprep.subr.bf16.mxu0 0
    %6229 = vmatpush1.bf16.msra.mxu0 %v5806
    %6230 = vmatprep.subr.bf16.mxu0 0
    %6231 = vmatpush1.bf16.msra.mxu0 %v5807
    %6232 = vmatprep.subr.bf16.mxu0 0
    %6233 = vmatpush1.bf16.msra.mxu0 %v5808
    %6234 = vmatprep.subr.bf16.mxu0 0
    %6235 = vmatpush1.bf16.msra.mxu0 %v5809
    %6236 = vmatprep.subr.bf16.mxu0 0
    %6237 = vmatpush1.bf16.msra.mxu0 %v5810
    %6238 = vmatprep.subr.bf16.mxu0 0
    %6239 = vmatpush1.bf16.msra.mxu0 %v5811
    %6240 = vmatprep.subr.bf16.mxu0 0
    %6241 = vmatpush1.bf16.msra.mxu0 %v5812
    %6242 = vmatprep.subr.bf16.mxu0 0
    %6243 = vmatpush1.bf16.msra.mxu0 %v5813
    %6244 = vmatprep.subr.bf16.mxu0 0
    %6245 = vmatpush1.bf16.msra.mxu0 %v5814
    %6246 = vmatprep.subr.bf16.mxu0 0
    %6247 = vmatpush1.bf16.msra.mxu0 %v5815
    %6248 = vmatprep.subr.bf16.mxu0 0
    %6249 = vmatpush1.bf16.msra.mxu0 %v5816
    %6250 = vmatprep.mubr.bf16.mxu0 %v4819
    %6251 = vmatmul.mubr.bf16.gmra.mrb[0].mxu0 %v2279
    %v6252 = vpop.f32.mrb[0].mxu0
    %v6253 = vadd.f32 %v5964, %v6252
    %v6254 = vpop.f32.mrb[0].mxu0
    %v6255 = vpop.f32.mrb[0].mxu0
    %v6256 = vadd.f32 %v5967, %v6255
    %v6257 = vpop.f32.mrb[0].mxu0
    %6258 = vmatprep.mubr.bf16.mxu0 %v4820
    %6259 = vmatmul.mubr.bf16.gmra.mrb[0].mxu0 %v5335
    %v6260 = vpop.f32.mrb[0].mxu0
    %v6261 = vadd.f32 %v5972, %v6260
    %v6262 = vpop.f32.mrb[0].mxu0
    %v6263 = vpop.f32.mrb[0].mxu0
    %v6264 = vadd.f32 %v5975, %v6263
    %v6265 = vpop.f32.mrb[0].mxu0
    %6266 = vmatprep.mubr.bf16.mxu0 %v4821
    %6267 = vmatmul.mubr.bf16.gmra.mrb[0].mxu0 %v5338
    %v6268 = vpop.f32.mrb[0].mxu0
    %v6269 = vadd.f32 %v5980, %v6268
    %v6270 = vpop.f32.mrb[0].mxu0
    %v6271 = vpop.f32.mrb[0].mxu0
    %v6272 = vadd.f32 %v5983, %v6271
    %v6273 = vpop.f32.mrb[0].mxu0
    %6274 = vmatprep.mubr.bf16.mxu0 %v4822
    %6275 = vmatmul.mubr.bf16.gmra.mrb[0].mxu0 %v5341
    %v6276 = vpop.f32.mrb[0].mxu0
    %v6277 = vadd.f32 %v5988, %v6276
    %v6278 = vpop.f32.mrb[0].mxu0
    %v6279 = vpop.f32.mrb[0].mxu0
    %v6280 = vadd.f32 %v5991, %v6279
    %v6281 = vpop.f32.mrb[0].mxu0
    %6282 = vmatprep.mubr.bf16.mxu0 %v4823
    %6283 = vmatmul.mubr.bf16.gmra.mrb[0].mxu0 %v5344
    %v6284 = vpop.f32.mrb[0].mxu0
    %v6285 = vadd.f32 %v5996, %v6284
    %v6286 = vpop.f32.mrb[0].mxu0
    %v6287 = vpop.f32.mrb[0].mxu0
    %v6288 = vadd.f32 %v5999, %v6287
    %v6289 = vpop.f32.mrb[0].mxu0
    %6290 = vmatprep.mubr.bf16.mxu0 %v4824
    %6291 = vmatmul.mubr.bf16.gmra.mrb[0].mxu0 %v5347
    %v6292 = vpop.f32.mrb[0].mxu0
    %v6293 = vadd.f32 %v6004, %v6292
    %v6294 = vpop.f32.mrb[0].mxu0
    %v6295 = vpop.f32.mrb[0].mxu0
    %v6296 = vadd.f32 %v6007, %v6295
    %v6297 = vpop.f32.mrb[0].mxu0
    %6298 = vmatprep.mubr.bf16.mxu0 %v4825
    %6299 = vmatmul.mubr.bf16.gmra.mrb[0].mxu0 %v5350
    %v6300 = vpop.f32.mrb[0].mxu0
    %v6301 = vadd.f32 %v6012, %v6300
    %v6302 = vpop.f32.mrb[0].mxu0
    %v6303 = vpop.f32.mrb[0].mxu0
    %v6304 = vadd.f32 %v6015, %v6303
    %v6305 = vpop.f32.mrb[0].mxu0
    %6306 = vmatprep.mubr.bf16.mxu0 %v4826
    %6307 = vmatmul.mubr.bf16.gmra.mrb[0].mxu0 %v5353
    %v6308 = vpop.f32.mrb[0].mxu0
    %v6309 = vadd.f32 %v6020, %v6308
    %v6310 = vpop.f32.mrb[0].mxu0
    %v6311 = vpop.f32.mrb[0].mxu0
    %v6312 = vadd.f32 %v6023, %v6311
    %v6313 = vpop.f32.mrb[0].mxu0
    %6314 = vmatprep.mubr.bf16.mxu0 %v4827
    %6315 = vmatmul.mubr.bf16.gmra.mrb[0].mxu0 %v5356
    %v6316 = vpop.f32.mrb[0].mxu0
    %v6317 = vadd.f32 %v6028, %v6316
    %v6318 = vpop.f32.mrb[0].mxu0
    %v6319 = vpop.f32.mrb[0].mxu0
    %v6320 = vadd.f32 %v6031, %v6319
    %v6321 = vpop.f32.mrb[0].mxu0
    %6322 = vmatprep.mubr.bf16.mxu0 %v4828
    %6323 = vmatmul.mubr.bf16.gmra.mrb[0].mxu0 %v5359
    %v6324 = vpop.f32.mrb[0].mxu0
    %v6325 = vadd.f32 %v6036, %v6324
    %v6326 = vpop.f32.mrb[0].mxu0
    %v6327 = vpop.f32.mrb[0].mxu0
    %v6328 = vadd.f32 %v6039, %v6327
    %v6329 = vpop.f32.mrb[0].mxu0
    %6330 = vmatprep.mubr.bf16.mxu0 %v4829
    %6331 = vmatmul.mubr.bf16.gmra.mrb[0].mxu0 %v5362
    %v6332 = vpop.f32.mrb[0].mxu0
    %v6333 = vadd.f32 %v6044, %v6332
    %v6334 = vpop.f32.mrb[0].mxu0
    %v6335 = vpop.f32.mrb[0].mxu0
    %v6336 = vadd.f32 %v6047, %v6335
    %v6337 = vpop.f32.mrb[0].mxu0
    %6338 = vmatprep.mubr.bf16.mxu0 %v4830
    %6339 = vmatmul.mubr.bf16.gmra.mrb[0].mxu0 %v5365
    %v6340 = vpop.f32.mrb[0].mxu0
    %v6341 = vadd.f32 %v6052, %v6340
    %v6342 = vpop.f32.mrb[0].mxu0
    %v6343 = vpop.f32.mrb[0].mxu0
    %v6344 = vadd.f32 %v6055, %v6343
    %v6345 = vpop.f32.mrb[0].mxu0
    %6346 = vmatprep.mubr.bf16.mxu0 %v4831
    %6347 = vmatmul.mubr.bf16.gmra.mrb[0].mxu0 %v5368
    %v6348 = vpop.f32.mrb[0].mxu0
    %v6349 = vadd.f32 %v6060, %v6348
    %v6350 = vpop.f32.mrb[0].mxu0
    %v6351 = vpop.f32.mrb[0].mxu0
    %v6352 = vadd.f32 %v6063, %v6351
    %v6353 = vpop.f32.mrb[0].mxu0
    %6354 = vmatprep.mubr.bf16.mxu0 %v4832
    %6355 = vmatmul.mubr.bf16.gmra.mrb[0].mxu0 %v5371
    %v6356 = vpop.f32.mrb[0].mxu0
    %v6357 = vadd.f32 %v6068, %v6356
    %v6358 = vpop.f32.mrb[0].mxu0
    %v6359 = vpop.f32.mrb[0].mxu0
    %v6360 = vadd.f32 %v6071, %v6359
    %v6361 = vpop.f32.mrb[0].mxu0
    %6362 = vmatprep.mubr.bf16.mxu0 %v4833
    %6363 = vmatmul.mubr.bf16.gmra.mrb[0].mxu0 %v5374
    %v6364 = vpop.f32.mrb[0].mxu0
    %v6365 = vadd.f32 %v6076, %v6364
    %v6366 = vpop.f32.mrb[0].mxu0
    %v6367 = vpop.f32.mrb[0].mxu0
    %v6368 = vadd.f32 %v6079, %v6367
    %v6369 = vpop.f32.mrb[0].mxu0
    %6370 = vmatprep.mubr.bf16.mxu0 %v4834
    %6371 = vmatmul.mubr.bf16.gmra.mrb[0].mxu0 %v5377
    %v6372 = vpop.f32.mrb[0].mxu0
    %v6373 = vadd.f32 %v6084, %v6372
    %v6374 = vpop.f32.mrb[0].mxu0
    %v6375 = vpop.f32.mrb[0].mxu0
    %v6376 = vadd.f32 %v6087, %v6375
    %v6377 = vpop.f32.mrb[0].mxu0
    %6378 = vmatprep.mubr.bf16.mxu0 %v4835
    %6379 = vmatmul.mubr.bf16.gmra.mrb[0].mxu0 %v2279
    %v6380 = vpop.f32.mrb[0].mxu0
    %v6381 = vadd.f32 %v6092, %v6380
    %v6382 = vpop.f32.mrb[0].mxu0
    %v6383 = vpop.f32.mrb[0].mxu0
    %v6384 = vadd.f32 %v6095, %v6383
    %v6385 = vpop.f32.mrb[0].mxu0
    %6386 = vmatprep.mubr.bf16.mxu0 %v4836
    %6387 = vmatmul.mubr.bf16.gmra.mrb[0].mxu0 %v5380
    %v6388 = vpop.f32.mrb[0].mxu0
    %v6389 = vadd.f32 %v6100, %v6388
    %v6390 = vpop.f32.mrb[0].mxu0
    %v6391 = vpop.f32.mrb[0].mxu0
    %v6392 = vadd.f32 %v6103, %v6391
    %v6393 = vpop.f32.mrb[0].mxu0
    %6394 = vmatprep.mubr.bf16.mxu0 %v4837
    %6395 = vmatmul.mubr.bf16.gmra.mrb[0].mxu0 %v5383
    %v6396 = vpop.f32.mrb[0].mxu0
    %v6397 = vadd.f32 %v6108, %v6396
    %v6398 = vpop.f32.mrb[0].mxu0
    %v6399 = vpop.f32.mrb[0].mxu0
    %v6400 = vadd.f32 %v6111, %v6399
    %v6401 = vpop.f32.mrb[0].mxu0
    %6402 = vmatprep.mubr.bf16.mxu0 %v4838
    %6403 = vmatmul.mubr.bf16.gmra.mrb[0].mxu0 %v5386
    %v6404 = vpop.f32.mrb[0].mxu0
    %v6405 = vadd.f32 %v6116, %v6404
    %v6406 = vpop.f32.mrb[0].mxu0
    %v6407 = vpop.f32.mrb[0].mxu0
    %v6408 = vadd.f32 %v6119, %v6407
    %v6409 = vpop.f32.mrb[0].mxu0
    %6410 = vmatprep.mubr.bf16.mxu0 %v4839
    %6411 = vmatmul.mubr.bf16.gmra.mrb[0].mxu0 %v5389
    %v6412 = vpop.f32.mrb[0].mxu0
    %v6413 = vadd.f32 %v6124, %v6412
    %v6414 = vpop.f32.mrb[0].mxu0
    %v6415 = vpop.f32.mrb[0].mxu0
    %v6416 = vadd.f32 %v6127, %v6415
    %v6417 = vpop.f32.mrb[0].mxu0
    %6418 = vmatprep.mubr.bf16.mxu0 %v4840
    %6419 = vmatmul.mubr.bf16.gmra.mrb[0].mxu0 %v5392
    %v6420 = vpop.f32.mrb[0].mxu0
    %v6421 = vadd.f32 %v6132, %v6420
    %v6422 = vpop.f32.mrb[0].mxu0
    %v6423 = vpop.f32.mrb[0].mxu0
    %v6424 = vadd.f32 %v6135, %v6423
    %v6425 = vpop.f32.mrb[0].mxu0
    %6426 = vmatprep.mubr.bf16.mxu0 %v4841
    %6427 = vmatmul.mubr.bf16.gmra.mrb[0].mxu0 %v5395
    %v6428 = vpop.f32.mrb[0].mxu0
    %v6429 = vadd.f32 %v6140, %v6428
    %v6430 = vpop.f32.mrb[0].mxu0
    %v6431 = vpop.f32.mrb[0].mxu0
    %v6432 = vadd.f32 %v6143, %v6431
    %v6433 = vpop.f32.mrb[0].mxu0
    %6434 = vmatprep.mubr.bf16.mxu0 %v4842
    %6435 = vmatmul.mubr.bf16.gmra.mrb[0].mxu0 %v5398
    %v6436 = vpop.f32.mrb[0].mxu0
    %v6437 = vadd.f32 %v6148, %v6436
    %v6438 = vpop.f32.mrb[0].mxu0
    %v6439 = vpop.f32.mrb[0].mxu0
    %v6440 = vadd.f32 %v6151, %v6439
    %v6441 = vpop.f32.mrb[0].mxu0
    %6442 = vmatprep.mubr.bf16.mxu0 %v4843
    %6443 = vmatmul.mubr.bf16.gmra.mrb[0].mxu0 %v5401
    %v6444 = vpop.f32.mrb[0].mxu0
    %v6445 = vadd.f32 %v6156, %v6444
    %v6446 = vpop.f32.mrb[0].mxu0
    %v6447 = vpop.f32.mrb[0].mxu0
    %v6448 = vadd.f32 %v6159, %v6447
    %v6449 = vpop.f32.mrb[0].mxu0
    %6450 = vmatprep.mubr.bf16.mxu0 %v4844
    %6451 = vmatmul.mubr.bf16.gmra.mrb[0].mxu0 %v5404
    %v6452 = vpop.f32.mrb[0].mxu0
    %v6453 = vadd.f32 %v6164, %v6452
    %v6454 = vpop.f32.mrb[0].mxu0
    %v6455 = vpop.f32.mrb[0].mxu0
    %v6456 = vadd.f32 %v6167, %v6455
    %v6457 = vpop.f32.mrb[0].mxu0
    %6458 = vmatprep.mubr.bf16.mxu0 %v4845
    %6459 = vmatmul.mubr.bf16.gmra.mrb[0].mxu0 %v5407
    %v6460 = vpop.f32.mrb[0].mxu0
    %v6461 = vadd.f32 %v6172, %v6460
    %v6462 = vpop.f32.mrb[0].mxu0
    %v6463 = vpop.f32.mrb[0].mxu0
    %v6464 = vadd.f32 %v6175, %v6463
    %v6465 = vpop.f32.mrb[0].mxu0
    %6466 = vmatprep.mubr.bf16.mxu0 %v4846
    %6467 = vmatmul.mubr.bf16.gmra.mrb[0].mxu0 %v5410
    %v6468 = vpop.f32.mrb[0].mxu0
    %v6469 = vadd.f32 %v6180, %v6468
    %v6470 = vpop.f32.mrb[0].mxu0
    %v6471 = vpop.f32.mrb[0].mxu0
    %v6472 = vadd.f32 %v6183, %v6471
    %v6473 = vpop.f32.mrb[0].mxu0
    %6474 = vmatprep.mubr.bf16.mxu0 %v4847
    %6475 = vmatmul.mubr.bf16.gmra.mrb[0].mxu0 %v5413
    %v6476 = vpop.f32.mrb[0].mxu0
    %v6477 = vadd.f32 %v6188, %v6476
    %v6478 = vpop.f32.mrb[0].mxu0
    %v6479 = vpop.f32.mrb[0].mxu0
    %v6480 = vadd.f32 %v6191, %v6479
    %v6481 = vpop.f32.mrb[0].mxu0
    %6482 = vmatprep.mubr.bf16.mxu0 %v4848
    %6483 = vmatmul.mubr.bf16.gmra.mrb[0].mxu0 %v5416
    %v6484 = vpop.f32.mrb[0].mxu0
    %v6485 = vadd.f32 %v6196, %v6484
    %v6486 = vpop.f32.mrb[0].mxu0
    %v6487 = vpop.f32.mrb[0].mxu0
    %v6488 = vadd.f32 %v6199, %v6487
    %v6489 = vpop.f32.mrb[0].mxu0
    %6490 = vmatprep.mubr.bf16.mxu0 %v4849
    %6491 = vmatmul.mubr.bf16.gmra.mrb[0].mxu0 %v5419
    %v6492 = vpop.f32.mrb[0].mxu0
    %v6493 = vadd.f32 %v6204, %v6492
    %v6494 = vpop.f32.mrb[0].mxu0
    %v6495 = vpop.f32.mrb[0].mxu0
    %v6496 = vadd.f32 %v6207, %v6495
    %v6497 = vpop.f32.mrb[0].mxu0
    %6498 = vmatprep.mubr.bf16.mxu0 %v4850
    %6499 = vmatmul.mubr.bf16.gmra.mrb[0].mxu0 %v5422
    %v6500 = vpop.f32.mrb[0].mxu0
    %v6501 = vadd.f32 %v6212, %v6500
    %v6502 = vpop.f32.mrb[0].mxu0
    %v6503 = vpop.f32.mrb[0].mxu0
    %v6504 = vadd.f32 %v6215, %v6503
    %v6505 = vpop.f32.mrb[0].mxu0
    %6506 = vdwg.mxu0
    %6507 = vmatprep.subr.bf16.mxu0 0
    %6508 = vmatpush1.bf16.msra.mxu0 %v5817
    %6509 = vmatprep.subr.bf16.mxu0 0
    %6510 = vmatpush1.bf16.msra.mxu0 %v5818
    %6511 = vmatprep.subr.bf16.mxu0 0
    %6512 = vmatpush1.bf16.msra.mxu0 %v5819
    %6513 = vmatprep.subr.bf16.mxu0 0
    %6514 = vmatpush1.bf16.msra.mxu0 %v5820
    %6515 = vmatprep.subr.bf16.mxu0 0
    %6516 = vmatpush1.bf16.msra.mxu0 %v5821
    %6517 = vmatprep.subr.bf16.mxu0 0
    %6518 = vmatpush1.bf16.msra.mxu0 %v5822
    %6519 = vmatprep.subr.bf16.mxu0 0
    %6520 = vmatpush1.bf16.msra.mxu0 %v5823
    %6521 = vmatprep.subr.bf16.mxu0 0
    %6522 = vmatpush1.bf16.msra.mxu0 %v5824
    %6523 = vmatprep.subr.bf16.mxu0 0
    %6524 = vmatpush1.bf16.msra.mxu0 %v5825
    %6525 = vmatprep.subr.bf16.mxu0 0
    %6526 = vmatpush1.bf16.msra.mxu0 %v5826
    %6527 = vmatprep.subr.bf16.mxu0 0
    %6528 = vmatpush1.bf16.msra.mxu0 %v5827
    %6529 = vmatprep.subr.bf16.mxu0 0
    %6530 = vmatpush1.bf16.msra.mxu0 %v5828
    %6531 = vmatprep.subr.bf16.mxu0 0
    %6532 = vmatpush1.bf16.msra.mxu0 %v5829
    %6533 = vmatprep.subr.bf16.mxu0 0
    %6534 = vmatpush1.bf16.msra.mxu0 %v5830
    %6535 = vmatprep.subr.bf16.mxu0 0
    %6536 = vmatpush1.bf16.msra.mxu0 %v5831
    %6537 = vmatprep.subr.bf16.mxu0 0
    %6538 = vmatpush1.bf16.msra.mxu0 %v5832
    %6539 = vmatprep.mubr.bf16.mxu0 %v5335
    %6540 = vmatmul.mubr.bf16.gmra.mrb[0].mxu0 %v4894
    %v6541 = vpop.f32.mrb[0].mxu0
    %v6542 = vadd.f32 %v6253, %v6541
    %v6543 = vpop.f32.mrb[0].mxu0
    %v6544 = vpop.f32.mrb[0].mxu0
    %v6545 = vadd.f32 %v6256, %v6544
    %v6546 = vpop.f32.mrb[0].mxu0
    %6547 = vmatprep.mubr.bf16.mxu0 %v5338
    %6548 = vmatmul.mubr.bf16.gmra.mrb[0].mxu0 %v4906
    %v6549 = vpop.f32.mrb[0].mxu0
    %v6550 = vadd.f32 %v6261, %v6549
    %v6551 = vpop.f32.mrb[0].mxu0
    %v6552 = vpop.f32.mrb[0].mxu0
    %v6553 = vadd.f32 %v6264, %v6552
    %v6554 = vpop.f32.mrb[0].mxu0
    %6555 = vmatprep.mubr.bf16.mxu0 %v5341
    %6556 = vmatmul.mubr.bf16.gmra.mrb[0].mxu0 %v4918
    %v6557 = vpop.f32.mrb[0].mxu0
    %v6558 = vadd.f32 %v6269, %v6557
    %v6559 = vpop.f32.mrb[0].mxu0
    %v6560 = vpop.f32.mrb[0].mxu0
    %v6561 = vadd.f32 %v6272, %v6560
    %v6562 = vpop.f32.mrb[0].mxu0
    %6563 = vmatprep.mubr.bf16.mxu0 %v5344
    %6564 = vmatmul.mubr.bf16.gmra.mrb[0].mxu0 %v4930
    %v6565 = vpop.f32.mrb[0].mxu0
    %v6566 = vadd.f32 %v6277, %v6565
    %v6567 = vpop.f32.mrb[0].mxu0
    %v6568 = vpop.f32.mrb[0].mxu0
    %v6569 = vadd.f32 %v6280, %v6568
    %v6570 = vpop.f32.mrb[0].mxu0
    %6571 = vmatprep.mubr.bf16.mxu0 %v5347
    %6572 = vmatmul.mubr.bf16.gmra.mrb[0].mxu0 %v4942
    %v6573 = vpop.f32.mrb[0].mxu0
    %v6574 = vadd.f32 %v6285, %v6573
    %v6575 = vpop.f32.mrb[0].mxu0
    %v6576 = vpop.f32.mrb[0].mxu0
    %v6577 = vadd.f32 %v6288, %v6576
    %v6578 = vpop.f32.mrb[0].mxu0
    %6579 = vmatprep.mubr.bf16.mxu0 %v5350
    %6580 = vmatmul.mubr.bf16.gmra.mrb[0].mxu0 %v4954
    %v6581 = vpop.f32.mrb[0].mxu0
    %v6582 = vadd.f32 %v6293, %v6581
    %v6583 = vpop.f32.mrb[0].mxu0
    %v6584 = vpop.f32.mrb[0].mxu0
    %v6585 = vadd.f32 %v6296, %v6584
    %v6586 = vpop.f32.mrb[0].mxu0
    %6587 = vmatprep.mubr.bf16.mxu0 %v5353
    %6588 = vmatmul.mubr.bf16.gmra.mrb[0].mxu0 %v4966
    %v6589 = vpop.f32.mrb[0].mxu0
    %v6590 = vadd.f32 %v6301, %v6589
    %v6591 = vpop.f32.mrb[0].mxu0
    %v6592 = vpop.f32.mrb[0].mxu0
    %v6593 = vadd.f32 %v6304, %v6592
    %v6594 = vpop.f32.mrb[0].mxu0
    %6595 = vmatprep.mubr.bf16.mxu0 %v5356
    %6596 = vmatmul.mubr.bf16.gmra.mrb[0].mxu0 %v4978
    %v6597 = vpop.f32.mrb[0].mxu0
    %v6598 = vadd.f32 %v6309, %v6597
    %v6599 = vpop.f32.mrb[0].mxu0
    %v6600 = vpop.f32.mrb[0].mxu0
    %v6601 = vadd.f32 %v6312, %v6600
    %v6602 = vpop.f32.mrb[0].mxu0
    %6603 = vmatprep.mubr.bf16.mxu0 %v5359
    %6604 = vmatmul.mubr.bf16.gmra.mrb[0].mxu0 %v4990
    %v6605 = vpop.f32.mrb[0].mxu0
    %v6606 = vadd.f32 %v6317, %v6605
    %v6607 = vpop.f32.mrb[0].mxu0
    %v6608 = vpop.f32.mrb[0].mxu0
    %v6609 = vadd.f32 %v6320, %v6608
    %v6610 = vpop.f32.mrb[0].mxu0
    %6611 = vmatprep.mubr.bf16.mxu0 %v5362
    %6612 = vmatmul.mubr.bf16.gmra.mrb[0].mxu0 %v5002
    %v6613 = vpop.f32.mrb[0].mxu0
    %v6614 = vadd.f32 %v6325, %v6613
    %v6615 = vpop.f32.mrb[0].mxu0
    %v6616 = vpop.f32.mrb[0].mxu0
    %v6617 = vadd.f32 %v6328, %v6616
    %v6618 = vpop.f32.mrb[0].mxu0
    %6619 = vmatprep.mubr.bf16.mxu0 %v5365
    %6620 = vmatmul.mubr.bf16.gmra.mrb[0].mxu0 %v5014
    %v6621 = vpop.f32.mrb[0].mxu0
    %v6622 = vadd.f32 %v6333, %v6621
    %v6623 = vpop.f32.mrb[0].mxu0
    %v6624 = vpop.f32.mrb[0].mxu0
    %v6625 = vadd.f32 %v6336, %v6624
    %v6626 = vpop.f32.mrb[0].mxu0
    %6627 = vmatprep.mubr.bf16.mxu0 %v5368
    %6628 = vmatmul.mubr.bf16.gmra.mrb[0].mxu0 %v5026
    %v6629 = vpop.f32.mrb[0].mxu0
    %v6630 = vadd.f32 %v6341, %v6629
    %v6631 = vpop.f32.mrb[0].mxu0
    %v6632 = vpop.f32.mrb[0].mxu0
    %v6633 = vadd.f32 %v6344, %v6632
    %v6634 = vpop.f32.mrb[0].mxu0
    %6635 = vmatprep.mubr.bf16.mxu0 %v5371
    %6636 = vmatmul.mubr.bf16.gmra.mrb[0].mxu0 %v5038
    %v6637 = vpop.f32.mrb[0].mxu0
    %v6638 = vadd.f32 %v6349, %v6637
    %v6639 = vpop.f32.mrb[0].mxu0
    %v6640 = vpop.f32.mrb[0].mxu0
    %v6641 = vadd.f32 %v6352, %v6640
    %v6642 = vpop.f32.mrb[0].mxu0
    %6643 = vmatprep.mubr.bf16.mxu0 %v5374
    %6644 = vmatmul.mubr.bf16.gmra.mrb[0].mxu0 %v5050
    %v6645 = vpop.f32.mrb[0].mxu0
    %v6646 = vadd.f32 %v6357, %v6645
    %v6647 = vpop.f32.mrb[0].mxu0
    %v6648 = vpop.f32.mrb[0].mxu0
    %v6649 = vadd.f32 %v6360, %v6648
    %v6650 = vpop.f32.mrb[0].mxu0
    %6651 = vmatprep.mubr.bf16.mxu0 %v5377
    %6652 = vmatmul.mubr.bf16.gmra.mrb[0].mxu0 %v5062
    %v6653 = vpop.f32.mrb[0].mxu0
    %v6654 = vadd.f32 %v6365, %v6653
    %v6655 = vpop.f32.mrb[0].mxu0
    %v6656 = vpop.f32.mrb[0].mxu0
    %v6657 = vadd.f32 %v6368, %v6656
    %v6658 = vpop.f32.mrb[0].mxu0
    %6659 = vmatprep.mubr.bf16.mxu0 %v5485
    %6660 = vmatmul.mubr.bf16.gmra.mrb[0].mxu0 %v5464
    %v6661 = vpop.f32.mrb[0].mxu0
    %v6662 = vadd.f32 %v6373, %v6661
    %v6663 = vpop.f32.mrb[0].mxu0
    %v6664 = vpop.f32.mrb[0].mxu0
    %v6665 = vadd.f32 %v6376, %v6664
    %v6666 = vpop.f32.mrb[0].mxu0
    %6667 = vmatprep.mubr.bf16.mxu0 %v5380
    %6668 = vmatmul.mubr.bf16.gmra.mrb[0].mxu0 %v5074
    %v6669 = vpop.f32.mrb[0].mxu0
    %v6670 = vadd.f32 %v6381, %v6669
    %v6671 = vpop.f32.mrb[0].mxu0
    %v6672 = vpop.f32.mrb[0].mxu0
    %v6673 = vadd.f32 %v6384, %v6672
    %v6674 = vpop.f32.mrb[0].mxu0
    %6675 = vmatprep.mubr.bf16.mxu0 %v5383
    %6676 = vmatmul.mubr.bf16.gmra.mrb[0].mxu0 %v5086
    %v6677 = vpop.f32.mrb[0].mxu0
    %v6678 = vadd.f32 %v6389, %v6677
    %v6679 = vpop.f32.mrb[0].mxu0
    %v6680 = vpop.f32.mrb[0].mxu0
    %v6681 = vadd.f32 %v6392, %v6680
    %v6682 = vpop.f32.mrb[0].mxu0
    %6683 = vmatprep.mubr.bf16.mxu0 %v5386
    %6684 = vmatmul.mubr.bf16.gmra.mrb[0].mxu0 %v5098
    %v6685 = vpop.f32.mrb[0].mxu0
    %v6686 = vadd.f32 %v6397, %v6685
    %v6687 = vpop.f32.mrb[0].mxu0
    %v6688 = vpop.f32.mrb[0].mxu0
    %v6689 = vadd.f32 %v6400, %v6688
    %v6690 = vpop.f32.mrb[0].mxu0
    %6691 = vmatprep.mubr.bf16.mxu0 %v5389
    %6692 = vmatmul.mubr.bf16.gmra.mrb[0].mxu0 %v5110
    %v6693 = vpop.f32.mrb[0].mxu0
    %v6694 = vadd.f32 %v6405, %v6693
    %v6695 = vpop.f32.mrb[0].mxu0
    %v6696 = vpop.f32.mrb[0].mxu0
    %v6697 = vadd.f32 %v6408, %v6696
    %v6698 = vpop.f32.mrb[0].mxu0
    %6699 = vmatprep.mubr.bf16.mxu0 %v5392
    %6700 = vmatmul.mubr.bf16.gmra.mrb[0].mxu0 %v5122
    %v6701 = vpop.f32.mrb[0].mxu0
    %v6702 = vadd.f32 %v6413, %v6701
    %v6703 = vpop.f32.mrb[0].mxu0
    %v6704 = vpop.f32.mrb[0].mxu0
    %v6705 = vadd.f32 %v6416, %v6704
    %v6706 = vpop.f32.mrb[0].mxu0
    %6707 = vmatprep.mubr.bf16.mxu0 %v5395
    %6708 = vmatmul.mubr.bf16.gmra.mrb[0].mxu0 %v5134
    %v6709 = vpop.f32.mrb[0].mxu0
    %v6710 = vadd.f32 %v6421, %v6709
    %v6711 = vpop.f32.mrb[0].mxu0
    %v6712 = vpop.f32.mrb[0].mxu0
    %v6713 = vadd.f32 %v6424, %v6712
    %v6714 = vpop.f32.mrb[0].mxu0
    %6715 = vmatprep.mubr.bf16.mxu0 %v5398
    %6716 = vmatmul.mubr.bf16.gmra.mrb[0].mxu0 %v5146
    %v6717 = vpop.f32.mrb[0].mxu0
    %v6718 = vadd.f32 %v6429, %v6717
    %v6719 = vpop.f32.mrb[0].mxu0
    %v6720 = vpop.f32.mrb[0].mxu0
    %v6721 = vadd.f32 %v6432, %v6720
    %v6722 = vpop.f32.mrb[0].mxu0
    %6723 = vmatprep.mubr.bf16.mxu0 %v5401
    %6724 = vmatmul.mubr.bf16.gmra.mrb[0].mxu0 %v5158
    %v6725 = vpop.f32.mrb[0].mxu0
    %v6726 = vadd.f32 %v6437, %v6725
    %v6727 = vpop.f32.mrb[0].mxu0
    %v6728 = vpop.f32.mrb[0].mxu0
    %v6729 = vadd.f32 %v6440, %v6728
    %v6730 = vpop.f32.mrb[0].mxu0
    %6731 = vmatprep.mubr.bf16.mxu0 %v5404
    %6732 = vmatmul.mubr.bf16.gmra.mrb[0].mxu0 %v5170
    %v6733 = vpop.f32.mrb[0].mxu0
    %v6734 = vadd.f32 %v6445, %v6733
    %v6735 = vpop.f32.mrb[0].mxu0
    %v6736 = vpop.f32.mrb[0].mxu0
    %v6737 = vadd.f32 %v6448, %v6736
    %v6738 = vpop.f32.mrb[0].mxu0
    %6739 = vmatprep.mubr.bf16.mxu0 %v5407
    %6740 = vmatmul.mubr.bf16.gmra.mrb[0].mxu0 %v5182
    %v6741 = vpop.f32.mrb[0].mxu0
    %v6742 = vadd.f32 %v6453, %v6741
    %v6743 = vpop.f32.mrb[0].mxu0
    %v6744 = vpop.f32.mrb[0].mxu0
    %v6745 = vadd.f32 %v6456, %v6744
    %v6746 = vpop.f32.mrb[0].mxu0
    %6747 = vmatprep.mubr.bf16.mxu0 %v5410
    %6748 = vmatmul.mubr.bf16.gmra.mrb[0].mxu0 %v5194
    %v6749 = vpop.f32.mrb[0].mxu0
    %v6750 = vadd.f32 %v6461, %v6749
    %v6751 = vpop.f32.mrb[0].mxu0
    %v6752 = vpop.f32.mrb[0].mxu0
    %v6753 = vadd.f32 %v6464, %v6752
    %v6754 = vpop.f32.mrb[0].mxu0
    %6755 = vmatprep.mubr.bf16.mxu0 %v5413
    %6756 = vmatmul.mubr.bf16.gmra.mrb[0].mxu0 %v5206
    %v6757 = vpop.f32.mrb[0].mxu0
    %v6758 = vadd.f32 %v6469, %v6757
    %v6759 = vpop.f32.mrb[0].mxu0
    %v6760 = vpop.f32.mrb[0].mxu0
    %v6761 = vadd.f32 %v6472, %v6760
    %v6762 = vpop.f32.mrb[0].mxu0
    %6763 = vmatprep.mubr.bf16.mxu0 %v5416
    %6764 = vmatmul.mubr.bf16.gmra.mrb[0].mxu0 %v5218
    %v6765 = vpop.f32.mrb[0].mxu0
    %v6766 = vadd.f32 %v6477, %v6765
    %v6767 = vpop.f32.mrb[0].mxu0
    %v6768 = vpop.f32.mrb[0].mxu0
    %v6769 = vadd.f32 %v6480, %v6768
    %v6770 = vpop.f32.mrb[0].mxu0
    %6771 = vmatprep.mubr.bf16.mxu0 %v5419
    %6772 = vmatmul.mubr.bf16.gmra.mrb[0].mxu0 %v5230
    %v6773 = vpop.f32.mrb[0].mxu0
    %v6774 = vadd.f32 %v6485, %v6773
    %v6775 = vpop.f32.mrb[0].mxu0
    %v6776 = vpop.f32.mrb[0].mxu0
    %v6777 = vadd.f32 %v6488, %v6776
    %v6778 = vpop.f32.mrb[0].mxu0
    %6779 = vmatprep.mubr.bf16.mxu0 %v5422
    %6780 = vmatmul.mubr.bf16.gmra.mrb[0].mxu0 %v5242
    %v6781 = vpop.f32.mrb[0].mxu0
    %v6782 = vadd.f32 %v6493, %v6781
    %v6783 = vpop.f32.mrb[0].mxu0
    %v6784 = vpop.f32.mrb[0].mxu0
    %v6785 = vadd.f32 %v6496, %v6784
    %v6786 = vpop.f32.mrb[0].mxu0
    %6787 = vmatprep.mubr.bf16.mxu0 %v5488
    %6788 = vmatmul.mubr.bf16.gmra.mrb[0].mxu0 %v5476
    %v6789 = vpop.f32.mrb[0].mxu0
    %v6790 = vadd.f32 %v6501, %v6789
    %v6791 = vpop.f32.mrb[0].mxu0
    %v6792 = vpop.f32.mrb[0].mxu0
    %v6793 = vadd.f32 %v6504, %v6792
    %v6794 = vpop.f32.mrb[0].mxu0
    %6795 = vdwg.mxu0
    %6796 = vmatprep.subr.bf16.mxu0 0
    %6797 = vmatpush1.bf16.msra.mxu0 %v5833
    %6798 = vmatprep.subr.bf16.mxu0 0
    %6799 = vmatpush1.bf16.msra.mxu0 %v5834
    %6800 = vmatprep.subr.bf16.mxu0 0
    %6801 = vmatpush1.bf16.msra.mxu0 %v5835
    %6802 = vmatprep.subr.bf16.mxu0 0
    %6803 = vmatpush1.bf16.msra.mxu0 %v5836
    %6804 = vmatprep.subr.bf16.mxu0 0
    %6805 = vmatpush1.bf16.msra.mxu0 %v5837
    %6806 = vmatprep.subr.bf16.mxu0 0
    %6807 = vmatpush1.bf16.msra.mxu0 %v5838
    %6808 = vmatprep.subr.bf16.mxu0 0
    %6809 = vmatpush1.bf16.msra.mxu0 %v5839
    %6810 = vmatprep.subr.bf16.mxu0 0
    %6811 = vmatpush1.bf16.msra.mxu0 %v5840
    %6812 = vmatprep.subr.bf16.mxu0 0
    %6813 = vmatpush1.bf16.msra.mxu0 %v5841
    %6814 = vmatprep.subr.bf16.mxu0 0
    %6815 = vmatpush1.bf16.msra.mxu0 %v5842
    %6816 = vmatprep.subr.bf16.mxu0 0
    %6817 = vmatpush1.bf16.msra.mxu0 %v5843
    %6818 = vmatprep.subr.bf16.mxu0 0
    %6819 = vmatpush1.bf16.msra.mxu0 %v5844
    %6820 = vmatprep.subr.bf16.mxu0 0
    %6821 = vmatpush1.bf16.msra.mxu0 %v5845
    %6822 = vmatprep.subr.bf16.mxu0 0
    %6823 = vmatpush1.bf16.msra.mxu0 %v5846
    %6824 = vmatprep.subr.bf16.mxu0 0
    %6825 = vmatpush1.bf16.msra.mxu0 %v5847
    %6826 = vmatprep.subr.bf16.mxu0 0
    %6827 = vmatpush1.bf16.msra.mxu0 %v5848
    %6828 = vmatprep.mubr.bf16.mxu0 %v4906
    %6829 = vmatmul.mubr.bf16.gmra.mrb[0].mxu0 %v4820
    %v6830 = vpop.f32.mrb[0].mxu0
    %v6831 = vadd.f32 %v6542, %v6830
    %v6832 = vpop.f32.mrb[0].mxu0
    %v6833 = vpop.f32.mrb[0].mxu0
    %v6834 = vadd.f32 %v6545, %v6833
    %v6835 = vpop.f32.mrb[0].mxu0
    %6836 = vmatprep.mubr.bf16.mxu0 %v4918
    %6837 = vmatmul.mubr.bf16.gmra.mrb[0].mxu0 %v4821
    %v6838 = vpop.f32.mrb[0].mxu0
    %v6839 = vadd.f32 %v6550, %v6838
    %v6840 = vpop.f32.mrb[0].mxu0
    %v6841 = vpop.f32.mrb[0].mxu0
    %v6842 = vadd.f32 %v6553, %v6841
    %v6843 = vpop.f32.mrb[0].mxu0
    %6844 = vmatprep.mubr.bf16.mxu0 %v4930
    %6845 = vmatmul.mubr.bf16.gmra.mrb[0].mxu0 %v4822
    %v6846 = vpop.f32.mrb[0].mxu0
    %v6847 = vadd.f32 %v6558, %v6846
    %v6848 = vpop.f32.mrb[0].mxu0
    %v6849 = vpop.f32.mrb[0].mxu0
    %v6850 = vadd.f32 %v6561, %v6849
    %v6851 = vpop.f32.mrb[0].mxu0
    %6852 = vmatprep.mubr.bf16.mxu0 %v4942
    %6853 = vmatmul.mubr.bf16.gmra.mrb[0].mxu0 %v4823
    %v6854 = vpop.f32.mrb[0].mxu0
    %v6855 = vadd.f32 %v6566, %v6854
    %v6856 = vpop.f32.mrb[0].mxu0
    %v6857 = vpop.f32.mrb[0].mxu0
    %v6858 = vadd.f32 %v6569, %v6857
    %v6859 = vpop.f32.mrb[0].mxu0
    %6860 = vmatprep.mubr.bf16.mxu0 %v4954
    %6861 = vmatmul.mubr.bf16.gmra.mrb[0].mxu0 %v4824
    %v6862 = vpop.f32.mrb[0].mxu0
    %v6863 = vadd.f32 %v6574, %v6862
    %v6864 = vpop.f32.mrb[0].mxu0
    %v6865 = vpop.f32.mrb[0].mxu0
    %v6866 = vadd.f32 %v6577, %v6865
    %v6867 = vpop.f32.mrb[0].mxu0
    %6868 = vmatprep.mubr.bf16.mxu0 %v4966
    %6869 = vmatmul.mubr.bf16.gmra.mrb[0].mxu0 %v4825
    %v6870 = vpop.f32.mrb[0].mxu0
    %v6871 = vadd.f32 %v6582, %v6870
    %v6872 = vpop.f32.mrb[0].mxu0
    %v6873 = vpop.f32.mrb[0].mxu0
    %v6874 = vadd.f32 %v6585, %v6873
    %v6875 = vpop.f32.mrb[0].mxu0
    %6876 = vmatprep.mubr.bf16.mxu0 %v4978
    %6877 = vmatmul.mubr.bf16.gmra.mrb[0].mxu0 %v4826
    %v6878 = vpop.f32.mrb[0].mxu0
    %v6879 = vadd.f32 %v6590, %v6878
    %v6880 = vpop.f32.mrb[0].mxu0
    %v6881 = vpop.f32.mrb[0].mxu0
    %v6882 = vadd.f32 %v6593, %v6881
    %v6883 = vpop.f32.mrb[0].mxu0
    %6884 = vmatprep.mubr.bf16.mxu0 %v4990
    %6885 = vmatmul.mubr.bf16.gmra.mrb[0].mxu0 %v4827
    %v6886 = vpop.f32.mrb[0].mxu0
    %v6887 = vadd.f32 %v6598, %v6886
    %v6888 = vpop.f32.mrb[0].mxu0
    %v6889 = vpop.f32.mrb[0].mxu0
    %v6890 = vadd.f32 %v6601, %v6889
    %v6891 = vpop.f32.mrb[0].mxu0
    %6892 = vmatprep.mubr.bf16.mxu0 %v5002
    %6893 = vmatmul.mubr.bf16.gmra.mrb[0].mxu0 %v4828
    %v6894 = vpop.f32.mrb[0].mxu0
    %v6895 = vadd.f32 %v6606, %v6894
    %v6896 = vpop.f32.mrb[0].mxu0
    %v6897 = vpop.f32.mrb[0].mxu0
    %v6898 = vadd.f32 %v6609, %v6897
    %v6899 = vpop.f32.mrb[0].mxu0
    %6900 = vmatprep.mubr.bf16.mxu0 %v5014
    %6901 = vmatmul.mubr.bf16.gmra.mrb[0].mxu0 %v4829
    %v6902 = vpop.f32.mrb[0].mxu0
    %v6903 = vadd.f32 %v6614, %v6902
    %v6904 = vpop.f32.mrb[0].mxu0
    %v6905 = vpop.f32.mrb[0].mxu0
    %v6906 = vadd.f32 %v6617, %v6905
    %v6907 = vpop.f32.mrb[0].mxu0
    %6908 = vmatprep.mubr.bf16.mxu0 %v5026
    %6909 = vmatmul.mubr.bf16.gmra.mrb[0].mxu0 %v4830
    %v6910 = vpop.f32.mrb[0].mxu0
    %v6911 = vadd.f32 %v6622, %v6910
    %v6912 = vpop.f32.mrb[0].mxu0
    %v6913 = vpop.f32.mrb[0].mxu0
    %v6914 = vadd.f32 %v6625, %v6913
    %v6915 = vpop.f32.mrb[0].mxu0
    %6916 = vmatprep.mubr.bf16.mxu0 %v5038
    %6917 = vmatmul.mubr.bf16.gmra.mrb[0].mxu0 %v4831
    %v6918 = vpop.f32.mrb[0].mxu0
    %v6919 = vadd.f32 %v6630, %v6918
    %v6920 = vpop.f32.mrb[0].mxu0
    %v6921 = vpop.f32.mrb[0].mxu0
    %v6922 = vadd.f32 %v6633, %v6921
    %v6923 = vpop.f32.mrb[0].mxu0
    %6924 = vmatprep.mubr.bf16.mxu0 %v5050
    %6925 = vmatmul.mubr.bf16.gmra.mrb[0].mxu0 %v4832
    %v6926 = vpop.f32.mrb[0].mxu0
    %v6927 = vadd.f32 %v6638, %v6926
    %v6928 = vpop.f32.mrb[0].mxu0
    %v6929 = vpop.f32.mrb[0].mxu0
    %v6930 = vadd.f32 %v6641, %v6929
    %v6931 = vpop.f32.mrb[0].mxu0
    %6932 = vmatprep.mubr.bf16.mxu0 %v5062
    %6933 = vmatmul.mubr.bf16.gmra.mrb[0].mxu0 %v4833
    %v6934 = vpop.f32.mrb[0].mxu0
    %v6935 = vadd.f32 %v6646, %v6934
    %v6936 = vpop.f32.mrb[0].mxu0
    %v6937 = vpop.f32.mrb[0].mxu0
    %v6938 = vadd.f32 %v6649, %v6937
    %v6939 = vpop.f32.mrb[0].mxu0
    %6940 = vmatprep.mubr.bf16.mxu0 %v5464
    %6941 = vmatmul.mubr.bf16.gmra.mrb[0].mxu0 %v4834
    %v6942 = vpop.f32.mrb[0].mxu0
    %v6943 = vadd.f32 %v6654, %v6942
    %v6944 = vpop.f32.mrb[0].mxu0
    %v6945 = vpop.f32.mrb[0].mxu0
    %v6946 = vadd.f32 %v6657, %v6945
    %v6947 = vpop.f32.mrb[0].mxu0
    %6948 = vmatprep.mubr.bf16.mxu0 %v1822
    %6949 = vmatmul.mubr.bf16.gmra.mrb[0].mxu0 %v1744
    %v6950 = vpop.f32.mrb[0].mxu0
    %v6951 = vadd.f32 %v6662, %v6950
    %v6952 = vpop.f32.mrb[0].mxu0
    %v6953 = vpop.f32.mrb[0].mxu0
    %v6954 = vadd.f32 %v6665, %v6953
    %v6955 = vpop.f32.mrb[0].mxu0
    %6956 = vmatprep.mubr.bf16.mxu0 %v5086
    %6957 = vmatmul.mubr.bf16.gmra.mrb[0].mxu0 %v4836
    %v6958 = vpop.f32.mrb[0].mxu0
    %v6959 = vadd.f32 %v6670, %v6958
    %v6960 = vpop.f32.mrb[0].mxu0
    %v6961 = vpop.f32.mrb[0].mxu0
    %v6962 = vadd.f32 %v6673, %v6961
    %v6963 = vpop.f32.mrb[0].mxu0
    %6964 = vmatprep.mubr.bf16.mxu0 %v5098
    %6965 = vmatmul.mubr.bf16.gmra.mrb[0].mxu0 %v4837
    %v6966 = vpop.f32.mrb[0].mxu0
    %v6967 = vadd.f32 %v6678, %v6966
    %v6968 = vpop.f32.mrb[0].mxu0
    %v6969 = vpop.f32.mrb[0].mxu0
    %v6970 = vadd.f32 %v6681, %v6969
    %v6971 = vpop.f32.mrb[0].mxu0
    %6972 = vmatprep.mubr.bf16.mxu0 %v5110
    %6973 = vmatmul.mubr.bf16.gmra.mrb[0].mxu0 %v4838
    %v6974 = vpop.f32.mrb[0].mxu0
    %v6975 = vadd.f32 %v6686, %v6974
    %v6976 = vpop.f32.mrb[0].mxu0
    %v6977 = vpop.f32.mrb[0].mxu0
    %v6978 = vadd.f32 %v6689, %v6977
    %v6979 = vpop.f32.mrb[0].mxu0
    %6980 = vmatprep.mubr.bf16.mxu0 %v5122
    %6981 = vmatmul.mubr.bf16.gmra.mrb[0].mxu0 %v4839
    %v6982 = vpop.f32.mrb[0].mxu0
    %v6983 = vadd.f32 %v6694, %v6982
    %v6984 = vpop.f32.mrb[0].mxu0
    %v6985 = vpop.f32.mrb[0].mxu0
    %v6986 = vadd.f32 %v6697, %v6985
    %v6987 = vpop.f32.mrb[0].mxu0
    %6988 = vmatprep.mubr.bf16.mxu0 %v5134
    %6989 = vmatmul.mubr.bf16.gmra.mrb[0].mxu0 %v4840
    %v6990 = vpop.f32.mrb[0].mxu0
    %v6991 = vadd.f32 %v6702, %v6990
    %v6992 = vpop.f32.mrb[0].mxu0
    %v6993 = vpop.f32.mrb[0].mxu0
    %v6994 = vadd.f32 %v6705, %v6993
    %v6995 = vpop.f32.mrb[0].mxu0
    %6996 = vmatprep.mubr.bf16.mxu0 %v5146
    %6997 = vmatmul.mubr.bf16.gmra.mrb[0].mxu0 %v4841
    %v6998 = vpop.f32.mrb[0].mxu0
    %v6999 = vadd.f32 %v6710, %v6998
    %v7000 = vpop.f32.mrb[0].mxu0
    %v7001 = vpop.f32.mrb[0].mxu0
    %v7002 = vadd.f32 %v6713, %v7001
    %v7003 = vpop.f32.mrb[0].mxu0
    %7004 = vmatprep.mubr.bf16.mxu0 %v5158
    %7005 = vmatmul.mubr.bf16.gmra.mrb[0].mxu0 %v4842
    %v7006 = vpop.f32.mrb[0].mxu0
    %v7007 = vadd.f32 %v6718, %v7006
    %v7008 = vpop.f32.mrb[0].mxu0
    %v7009 = vpop.f32.mrb[0].mxu0
    %v7010 = vadd.f32 %v6721, %v7009
    %v7011 = vpop.f32.mrb[0].mxu0
    %7012 = vmatprep.mubr.bf16.mxu0 %v5170
    %7013 = vmatmul.mubr.bf16.gmra.mrb[0].mxu0 %v4843
    %v7014 = vpop.f32.mrb[0].mxu0
    %v7015 = vadd.f32 %v6726, %v7014
    %v7016 = vpop.f32.mrb[0].mxu0
    %v7017 = vpop.f32.mrb[0].mxu0
    %v7018 = vadd.f32 %v6729, %v7017
    %v7019 = vpop.f32.mrb[0].mxu0
    %7020 = vmatprep.mubr.bf16.mxu0 %v5182
    %7021 = vmatmul.mubr.bf16.gmra.mrb[0].mxu0 %v4844
    %v7022 = vpop.f32.mrb[0].mxu0
    %v7023 = vadd.f32 %v6734, %v7022
    %v7024 = vpop.f32.mrb[0].mxu0
    %v7025 = vpop.f32.mrb[0].mxu0
    %v7026 = vadd.f32 %v6737, %v7025
    %v7027 = vpop.f32.mrb[0].mxu0
    %7028 = vmatprep.mubr.bf16.mxu0 %v5194
    %7029 = vmatmul.mubr.bf16.gmra.mrb[0].mxu0 %v4845
    %v7030 = vpop.f32.mrb[0].mxu0
    %v7031 = vadd.f32 %v6742, %v7030
    %v7032 = vpop.f32.mrb[0].mxu0
    %v7033 = vpop.f32.mrb[0].mxu0
    %v7034 = vadd.f32 %v6745, %v7033
    %v7035 = vpop.f32.mrb[0].mxu0
    %7036 = vmatprep.mubr.bf16.mxu0 %v5206
    %7037 = vmatmul.mubr.bf16.gmra.mrb[0].mxu0 %v4846
    %v7038 = vpop.f32.mrb[0].mxu0
    %v7039 = vadd.f32 %v6750, %v7038
    %v7040 = vpop.f32.mrb[0].mxu0
    %v7041 = vpop.f32.mrb[0].mxu0
    %v7042 = vadd.f32 %v6753, %v7041
    %v7043 = vpop.f32.mrb[0].mxu0
    %7044 = vmatprep.mubr.bf16.mxu0 %v5218
    %7045 = vmatmul.mubr.bf16.gmra.mrb[0].mxu0 %v4847
    %v7046 = vpop.f32.mrb[0].mxu0
    %v7047 = vadd.f32 %v6758, %v7046
    %v7048 = vpop.f32.mrb[0].mxu0
    %v7049 = vpop.f32.mrb[0].mxu0
    %v7050 = vadd.f32 %v6761, %v7049
    %v7051 = vpop.f32.mrb[0].mxu0
    %7052 = vmatprep.mubr.bf16.mxu0 %v5230
    %7053 = vmatmul.mubr.bf16.gmra.mrb[0].mxu0 %v4848
    %v7054 = vpop.f32.mrb[0].mxu0
    %v7055 = vadd.f32 %v6766, %v7054
    %v7056 = vpop.f32.mrb[0].mxu0
    %v7057 = vpop.f32.mrb[0].mxu0
    %v7058 = vadd.f32 %v6769, %v7057
    %v7059 = vpop.f32.mrb[0].mxu0
    %7060 = vmatprep.mubr.bf16.mxu0 %v5242
    %7061 = vmatmul.mubr.bf16.gmra.mrb[0].mxu0 %v4849
    %v7062 = vpop.f32.mrb[0].mxu0
    %v7063 = vadd.f32 %v6774, %v7062
    %v7064 = vpop.f32.mrb[0].mxu0
    %v7065 = vpop.f32.mrb[0].mxu0
    %v7066 = vadd.f32 %v6777, %v7065
    %v7067 = vpop.f32.mrb[0].mxu0
    %7068 = vmatprep.mubr.bf16.mxu0 %v5476
    %7069 = vmatmul.mubr.bf16.gmra.mrb[0].mxu0 %v4850
    %v7070 = vpop.f32.mrb[0].mxu0
    %v7071 = vadd.f32 %v6782, %v7070
    %v7072 = vpop.f32.mrb[0].mxu0
    %v7073 = vpop.f32.mrb[0].mxu0
    %v7074 = vadd.f32 %v6785, %v7073
    %v7075 = vpop.f32.mrb[0].mxu0
    %7076 = vmatprep.mubr.bf16.mxu0 %v1822
    %7077 = vmatmul.mubr.bf16.gmra.mrb[0].mxu0 %v1744
    %v7078 = vpop.f32.mrb[0].mxu0
    %v7079 = vadd.f32 %v6790, %v7078
    %v7080 = vpop.f32.mrb[0].mxu0
    %v7081 = vpop.f32.mrb[0].mxu0
    %v7082 = vadd.f32 %v6793, %v7081
    %v7083 = vpop.f32.mrb[0].mxu0
    %7084 = vdwg.mxu0
    %7085 = vmatprep.subr.bf16.mxu0 0
    %7086 = vmatpush1.bf16.msra.mxu0 %v5849
    %7087 = vmatprep.subr.bf16.mxu0 0
    %7088 = vmatpush1.bf16.msra.mxu0 %v5850
    %7089 = vmatprep.subr.bf16.mxu0 0
    %7090 = vmatpush1.bf16.msra.mxu0 %v5851
    %7091 = vmatprep.subr.bf16.mxu0 0
    %7092 = vmatpush1.bf16.msra.mxu0 %v5852
    %7093 = vmatprep.subr.bf16.mxu0 0
    %7094 = vmatpush1.bf16.msra.mxu0 %v5853
    %7095 = vmatprep.subr.bf16.mxu0 0
    %7096 = vmatpush1.bf16.msra.mxu0 %v5854
    %7097 = vmatprep.subr.bf16.mxu0 0
    %7098 = vmatpush1.bf16.msra.mxu0 %v5855
    %7099 = vmatprep.subr.bf16.mxu0 0
    %7100 = vmatpush1.bf16.msra.mxu0 %v5856
    %7101 = vmatprep.subr.bf16.mxu0 0
    %7102 = vmatpush1.bf16.msra.mxu0 0
    %7103 = vmatprep.subr.bf16.mxu0 0
    %7104 = vmatpush1.bf16.msra.mxu0 0
    %7105 = vmatprep.subr.bf16.mxu0 0
    %7106 = vmatpush1.bf16.msra.mxu0 0
    %7107 = vmatprep.subr.bf16.mxu0 0
    %7108 = vmatpush1.bf16.msra.mxu0 0
    %7109 = vmatprep.subr.bf16.mxu0 0
    %7110 = vmatpush1.bf16.msra.mxu0 0
    %7111 = vmatprep.subr.bf16.mxu0 0
    %7112 = vmatpush1.bf16.msra.mxu0 0
    %7113 = vmatprep.subr.bf16.mxu0 0
    %7114 = vmatpush1.bf16.msra.mxu0 0
    %7115 = vmatprep.subr.bf16.mxu0 0
    %7116 = vmatpush1.bf16.msra.mxu0 0
    %7117 = vmatprep.mubr.bf16.mxu0 0
    %7118 = vmatmul.mubr.bf16.gmra.mrb[0].mxu0 %v5338
    %v7119 = vpop.f32.mrb[0].mxu0
    %v7120 = vadd.f32 %v6831, %v7119
    %v7121 = vpop.f32.mrb[0].mxu0
    %v7122 = vpop.f32.mrb[0].mxu0
    %v7123 = vadd.f32 %v6834, %v7122
    %v7124 = vpop.f32.mrb[0].mxu0
    %7125 = vmatprep.mubr.bf16.mxu0 0
    %7126 = vmatmul.mubr.bf16.gmra.mrb[0].mxu0 %v5341
    %v7127 = vpop.f32.mrb[0].mxu0
    %v7128 = vadd.f32 %v6839, %v7127
    %v7129 = vpop.f32.mrb[0].mxu0
    %v7130 = vpop.f32.mrb[0].mxu0
    %v7131 = vadd.f32 %v6842, %v7130
    %v7132 = vpop.f32.mrb[0].mxu0
    %7133 = vmatprep.mubr.bf16.mxu0 0
    %7134 = vmatmul.mubr.bf16.gmra.mrb[0].mxu0 %v5344
    %v7135 = vpop.f32.mrb[0].mxu0
    %v7136 = vadd.f32 %v6847, %v7135
    %v7137 = vpop.f32.mrb[0].mxu0
    %v7138 = vpop.f32.mrb[0].mxu0
    %v7139 = vadd.f32 %v6850, %v7138
    %v7140 = vpop.f32.mrb[0].mxu0
    %7141 = vmatprep.mubr.bf16.mxu0 0
    %7142 = vmatmul.mubr.bf16.gmra.mrb[0].mxu0 %v5347
    %v7143 = vpop.f32.mrb[0].mxu0
    %v7144 = vadd.f32 %v6855, %v7143
    %v7145 = vpop.f32.mrb[0].mxu0
    %v7146 = vpop.f32.mrb[0].mxu0
    %v7147 = vadd.f32 %v6858, %v7146
    %v7148 = vpop.f32.mrb[0].mxu0
    %7149 = vmatprep.mubr.bf16.mxu0 0
    %7150 = vmatmul.mubr.bf16.gmra.mrb[0].mxu0 %v5350
    %v7151 = vpop.f32.mrb[0].mxu0
    %v7152 = vadd.f32 %v6863, %v7151
    %v7153 = vpop.f32.mrb[0].mxu0
    %v7154 = vpop.f32.mrb[0].mxu0
    %v7155 = vadd.f32 %v6866, %v7154
    %v7156 = vpop.f32.mrb[0].mxu0
    %7157 = vmatprep.mubr.bf16.mxu0 0
    %7158 = vmatmul.mubr.bf16.gmra.mrb[0].mxu0 %v5353
    %v7159 = vpop.f32.mrb[0].mxu0
    %v7160 = vadd.f32 %v6871, %v7159
    %v7161 = vpop.f32.mrb[0].mxu0
    %v7162 = vpop.f32.mrb[0].mxu0
    %v7163 = vadd.f32 %v6874, %v7162
    %v7164 = vpop.f32.mrb[0].mxu0
    %7165 = vmatprep.mubr.bf16.mxu0 0
    %7166 = vmatmul.mubr.bf16.gmra.mrb[0].mxu0 %v5356
    %v7167 = vpop.f32.mrb[0].mxu0
    %v7168 = vadd.f32 %v6879, %v7167
    %v7169 = vpop.f32.mrb[0].mxu0
    %v7170 = vpop.f32.mrb[0].mxu0
    %v7171 = vadd.f32 %v6882, %v7170
    %v7172 = vpop.f32.mrb[0].mxu0
    %7173 = vmatprep.mubr.bf16.mxu0 0
    %7174 = vmatmul.mubr.bf16.gmra.mrb[0].mxu0 %v5359
    %v7175 = vpop.f32.mrb[0].mxu0
    %v7176 = vadd.f32 %v6887, %v7175
    %v7177 = vpop.f32.mrb[0].mxu0
    %v7178 = vpop.f32.mrb[0].mxu0
    %v7179 = vadd.f32 %v6890, %v7178
    %v7180 = vpop.f32.mrb[0].mxu0
    %7181 = vmatprep.mubr.bf16.mxu0 0
    %7182 = vmatmul.mubr.bf16.gmra.mrb[0].mxu0 %v5362
    %v7183 = vpop.f32.mrb[0].mxu0
    %v7184 = vadd.f32 %v6895, %v7183
    %v7185 = vpop.f32.mrb[0].mxu0
    %v7186 = vpop.f32.mrb[0].mxu0
    %v7187 = vadd.f32 %v6898, %v7186
    %v7188 = vpop.f32.mrb[0].mxu0
    %7189 = vmatprep.mubr.bf16.mxu0 0
    %7190 = vmatmul.mubr.bf16.gmra.mrb[0].mxu0 %v5365
    %v7191 = vpop.f32.mrb[0].mxu0
    %v7192 = vadd.f32 %v6903, %v7191
    %v7193 = vpop.f32.mrb[0].mxu0
    %v7194 = vpop.f32.mrb[0].mxu0
    %v7195 = vadd.f32 %v6906, %v7194
    %v7196 = vpop.f32.mrb[0].mxu0
    %7197 = vmatprep.mubr.bf16.mxu0 0
    %7198 = vmatmul.mubr.bf16.gmra.mrb[0].mxu0 %v5368
    %v7199 = vpop.f32.mrb[0].mxu0
    %v7200 = vadd.f32 %v6911, %v7199
    %v7201 = vpop.f32.mrb[0].mxu0
    %v7202 = vpop.f32.mrb[0].mxu0
    %v7203 = vadd.f32 %v6914, %v7202
    %v7204 = vpop.f32.mrb[0].mxu0
    %7205 = vmatprep.mubr.bf16.mxu0 0
    %7206 = vmatmul.mubr.bf16.gmra.mrb[0].mxu0 %v5371
    %v7207 = vpop.f32.mrb[0].mxu0
    %v7208 = vadd.f32 %v6919, %v7207
    %v7209 = vpop.f32.mrb[0].mxu0
    %v7210 = vpop.f32.mrb[0].mxu0
    %v7211 = vadd.f32 %v6922, %v7210
    %v7212 = vpop.f32.mrb[0].mxu0
    %7213 = vmatprep.mubr.bf16.mxu0 0
    %7214 = vmatmul.mubr.bf16.gmra.mrb[0].mxu0 %v5374
    %v7215 = vpop.f32.mrb[0].mxu0
    %v7216 = vadd.f32 %v6927, %v7215
    %v7217 = vpop.f32.mrb[0].mxu0
    %v7218 = vpop.f32.mrb[0].mxu0
    %v7219 = vadd.f32 %v6930, %v7218
    %v7220 = vpop.f32.mrb[0].mxu0
    %7221 = vmatprep.mubr.bf16.mxu0 0
    %7222 = vmatmul.mubr.bf16.gmra.mrb[0].mxu0 %v5377
    %v7223 = vpop.f32.mrb[0].mxu0
    %v7224 = vadd.f32 %v6935, %v7223
    %v7225 = vpop.f32.mrb[0].mxu0
    %v7226 = vpop.f32.mrb[0].mxu0
    %v7227 = vadd.f32 %v6938, %v7226
    %v7228 = vpop.f32.mrb[0].mxu0
    %7229 = vmatprep.mubr.bf16.mxu0 0
    %7230 = vmatmul.mubr.bf16.gmra.mrb[0].mxu0 %v5485
    %v7231 = vpop.f32.mrb[0].mxu0
    %v7232 = vadd.f32 %v6943, %v7231
    %v7233 = vpop.f32.mrb[0].mxu0
    %v7234 = vpop.f32.mrb[0].mxu0
    %v7235 = vadd.f32 %v6946, %v7234
    %v7236 = vpop.f32.mrb[0].mxu0
    %7237 = vmatprep.mubr.bf16.mxu0 0
    %7238 = vmatmul.mubr.bf16.gmra.mrb[0].mxu0 %v2279
    %v7239 = vpop.f32.mrb[0].mxu0
    %v7240 = vadd.f32 %v6951, %v7239
    %v7241 = vpop.f32.mrb[0].mxu0
    %v7242 = vpop.f32.mrb[0].mxu0
    %v7243 = vadd.f32 %v6954, %v7242
    %v7244 = vpop.f32.mrb[0].mxu0
    %7245 = vmatprep.mubr.bf16.mxu0 0
    %7246 = vmatmul.mubr.bf16.gmra.mrb[0].mxu0 %v5383
    %v7247 = vpop.f32.mrb[0].mxu0
    %v7248 = vadd.f32 %v6959, %v7247
    %v7249 = vpop.f32.mrb[0].mxu0
    %v7250 = vpop.f32.mrb[0].mxu0
    %v7251 = vadd.f32 %v6962, %v7250
    %v7252 = vpop.f32.mrb[0].mxu0
    %7253 = vmatprep.mubr.bf16.mxu0 0
    %7254 = vmatmul.mubr.bf16.gmra.mrb[0].mxu0 %v5386
    %v7255 = vpop.f32.mrb[0].mxu0
    %v7256 = vadd.f32 %v6967, %v7255
    %v7257 = vpop.f32.mrb[0].mxu0
    %v7258 = vpop.f32.mrb[0].mxu0
    %v7259 = vadd.f32 %v6970, %v7258
    %v7260 = vpop.f32.mrb[0].mxu0
    %7261 = vmatprep.mubr.bf16.mxu0 0
    %7262 = vmatmul.mubr.bf16.gmra.mrb[0].mxu0 %v5389
    %v7263 = vpop.f32.mrb[0].mxu0
    %v7264 = vadd.f32 %v6975, %v7263
    %v7265 = vpop.f32.mrb[0].mxu0
    %v7266 = vpop.f32.mrb[0].mxu0
    %v7267 = vadd.f32 %v6978, %v7266
    %v7268 = vpop.f32.mrb[0].mxu0
    %7269 = vmatprep.mubr.bf16.mxu0 0
    %7270 = vmatmul.mubr.bf16.gmra.mrb[0].mxu0 %v5392
    %v7271 = vpop.f32.mrb[0].mxu0
    %v7272 = vadd.f32 %v6983, %v7271
    %v7273 = vpop.f32.mrb[0].mxu0
    %v7274 = vpop.f32.mrb[0].mxu0
    %v7275 = vadd.f32 %v6986, %v7274
    %v7276 = vpop.f32.mrb[0].mxu0
    %7277 = vmatprep.mubr.bf16.mxu0 0
    %7278 = vmatmul.mubr.bf16.gmra.mrb[0].mxu0 %v5395
    %v7279 = vpop.f32.mrb[0].mxu0
    %v7280 = vadd.f32 %v6991, %v7279
    %v7281 = vpop.f32.mrb[0].mxu0
    %v7282 = vpop.f32.mrb[0].mxu0
    %v7283 = vadd.f32 %v6994, %v7282
    %v7284 = vpop.f32.mrb[0].mxu0
    %7285 = vmatprep.mubr.bf16.mxu0 0
    %7286 = vmatmul.mubr.bf16.gmra.mrb[0].mxu0 %v5398
    %v7287 = vpop.f32.mrb[0].mxu0
    %v7288 = vadd.f32 %v6999, %v7287
    %v7289 = vpop.f32.mrb[0].mxu0
    %v7290 = vpop.f32.mrb[0].mxu0
    %v7291 = vadd.f32 %v7002, %v7290
    %v7292 = vpop.f32.mrb[0].mxu0
    %7293 = vmatprep.mubr.bf16.mxu0 0
    %7294 = vmatmul.mubr.bf16.gmra.mrb[0].mxu0 %v5401
    %v7295 = vpop.f32.mrb[0].mxu0
    %v7296 = vadd.f32 %v7007, %v7295
    %v7297 = vpop.f32.mrb[0].mxu0
    %v7298 = vpop.f32.mrb[0].mxu0
    %v7299 = vadd.f32 %v7010, %v7298
    %v7300 = vpop.f32.mrb[0].mxu0
    %7301 = vmatprep.mubr.bf16.mxu0 0
    %7302 = vmatmul.mubr.bf16.gmra.mrb[0].mxu0 %v5404
    %v7303 = vpop.f32.mrb[0].mxu0
    %v7304 = vadd.f32 %v7015, %v7303
    %v7305 = vpop.f32.mrb[0].mxu0
    %v7306 = vpop.f32.mrb[0].mxu0
    %v7307 = vadd.f32 %v7018, %v7306
    %v7308 = vpop.f32.mrb[0].mxu0
    %7309 = vmatprep.mubr.bf16.mxu0 0
    %7310 = vmatmul.mubr.bf16.gmra.mrb[0].mxu0 %v5407
    %v7311 = vpop.f32.mrb[0].mxu0
    %v7312 = vadd.f32 %v7023, %v7311
    %v7313 = vpop.f32.mrb[0].mxu0
    %v7314 = vpop.f32.mrb[0].mxu0
    %v7315 = vadd.f32 %v7026, %v7314
    %v7316 = vpop.f32.mrb[0].mxu0
    %7317 = vmatprep.mubr.bf16.mxu0 0
    %7318 = vmatmul.mubr.bf16.gmra.mrb[0].mxu0 %v5410
    %v7319 = vpop.f32.mrb[0].mxu0
    %v7320 = vadd.f32 %v7031, %v7319
    %v7321 = vpop.f32.mrb[0].mxu0
    %v7322 = vpop.f32.mrb[0].mxu0
    %v7323 = vadd.f32 %v7034, %v7322
    %v7324 = vpop.f32.mrb[0].mxu0
    %7325 = vmatprep.mubr.bf16.mxu0 0
    %7326 = vmatmul.mubr.bf16.gmra.mrb[0].mxu0 %v5413
    %v7327 = vpop.f32.mrb[0].mxu0
    %v7328 = vadd.f32 %v7039, %v7327
    %v7329 = vpop.f32.mrb[0].mxu0
    %v7330 = vpop.f32.mrb[0].mxu0
    %v7331 = vadd.f32 %v7042, %v7330
    %v7332 = vpop.f32.mrb[0].mxu0
    %7333 = vmatprep.mubr.bf16.mxu0 0
    %7334 = vmatmul.mubr.bf16.gmra.mrb[0].mxu0 %v5416
    %v7335 = vpop.f32.mrb[0].mxu0
    %v7336 = vadd.f32 %v7047, %v7335
    %v7337 = vpop.f32.mrb[0].mxu0
    %v7338 = vpop.f32.mrb[0].mxu0
    %v7339 = vadd.f32 %v7050, %v7338
    %v7340 = vpop.f32.mrb[0].mxu0
    %7341 = vmatprep.mubr.bf16.mxu0 0
    %7342 = vmatmul.mubr.bf16.gmra.mrb[0].mxu0 %v5419
    %v7343 = vpop.f32.mrb[0].mxu0
    %v7344 = vadd.f32 %v7055, %v7343
    %v7345 = vpop.f32.mrb[0].mxu0
    %v7346 = vpop.f32.mrb[0].mxu0
    %v7347 = vadd.f32 %v7058, %v7346
    %v7348 = vpop.f32.mrb[0].mxu0
    %7349 = vmatprep.mubr.bf16.mxu0 0
    %7350 = vmatmul.mubr.bf16.gmra.mrb[0].mxu0 %v5422
    %v7351 = vpop.f32.mrb[0].mxu0
    %v7352 = vadd.f32 %v7063, %v7351
    %v7353 = vpop.f32.mrb[0].mxu0
    %v7354 = vpop.f32.mrb[0].mxu0
    %v7355 = vadd.f32 %v7066, %v7354
    %v7356 = vpop.f32.mrb[0].mxu0
    %7357 = vmatprep.mubr.bf16.mxu0 0
    %7358 = vmatmul.mubr.bf16.gmra.mrb[0].mxu0 %v5488
    %v7359 = vpop.f32.mrb[0].mxu0
    %v7360 = vadd.f32 %v7071, %v7359
    %v7361 = vpop.f32.mrb[0].mxu0
    %v7362 = vpop.f32.mrb[0].mxu0
    %v7363 = vadd.f32 %v7074, %v7362
    %v7364 = vpop.f32.mrb[0].mxu0
    %7365 = vmatprep.mubr.bf16.mxu0 0
    %7366 = vmatmul.mubr.bf16.gmra.mrb[0].mxu0 %v2279
    %v7367 = vpop.f32.mrb[0].mxu0
    %v7368 = vadd.f32 %v7079, %v7367
    %v7369 = vpop.f32.mrb[0].mxu0
    %v7370 = vpop.f32.mrb[0].mxu0
    %v7371 = vadd.f32 %v7082, %v7370
    %v7372 = vpop.f32.mrb[0].mxu0
    %7373 = vdwg.mxu0
    %v7374 = vmax.f32 %v7120, 0.0
    %v7375 = vmax.f32 %v7123, 0.0
    %v7376 = vmax.f32 %v7128, 0.0
    %v7377 = vmax.f32 %v7131, 0.0
    %v7378 = vmax.f32 %v7136, 0.0
    %v7379 = vmax.f32 %v7139, 0.0
    %v7380 = vmax.f32 %v7144, 0.0
    %v7381 = vmax.f32 %v7147, 0.0
    %v7382 = vmax.f32 %v7152, 0.0
    %v7383 = vmax.f32 %v7155, 0.0
    %v7384 = vmax.f32 %v7160, 0.0
    %v7385 = vmax.f32 %v7163, 0.0
    %v7386 = vmax.f32 %v7168, 0.0
    %v7387 = vmax.f32 %v7171, 0.0
    %v7388 = vmax.f32 %v7176, 0.0
    %v7389 = vmax.f32 %v7179, 0.0
    %v7390 = vmax.f32 %v7184, 0.0
    %v7391 = vmax.f32 %v7187, 0.0
    %v7392 = vmax.f32 %v7192, 0.0
    %v7393 = vmax.f32 %v7195, 0.0
    %v7394 = vmax.f32 %v7200, 0.0
    %v7395 = vmax.f32 %v7203, 0.0
    %v7396 = vmax.f32 %v7208, 0.0
    %v7397 = vmax.f32 %v7211, 0.0
    %v7398 = vmax.f32 %v7216, 0.0
    %v7399 = vmax.f32 %v7219, 0.0
    %v7400 = vmax.f32 %v7224, 0.0
    %v7401 = vmax.f32 %v7227, 0.0
    %v7402 = vmax.f32 %v7232, 0.0
    %v7403 = vmax.f32 %v7235, 0.0
    %v7404 = vmax.f32 %v7240, 0.0
    %v7405 = vmax.f32 %v7243, 0.0
    %v7406 = vmax.f32 %v7248, 0.0
    %v7407 = vmax.f32 %v7251, 0.0
    %v7408 = vmax.f32 %v7256, 0.0
    %v7409 = vmax.f32 %v7259, 0.0
    %v7410 = vmax.f32 %v7264, 0.0
    %v7411 = vmax.f32 %v7267, 0.0
    %v7412 = vmax.f32 %v7272, 0.0
    %v7413 = vmax.f32 %v7275, 0.0
    %v7414 = vmax.f32 %v7280, 0.0
    %v7415 = vmax.f32 %v7283, 0.0
    %v7416 = vmax.f32 %v7288, 0.0
    %v7417 = vmax.f32 %v7291, 0.0
    %v7418 = vmax.f32 %v7296, 0.0
    %v7419 = vmax.f32 %v7299, 0.0
    %v7420 = vmax.f32 %v7304, 0.0
    %v7421 = vmax.f32 %v7307, 0.0
    %v7422 = vmax.f32 %v7312, 0.0
    %v7423 = vmax.f32 %v7315, 0.0
    %v7424 = vmax.f32 %v7320, 0.0
    %v7425 = vmax.f32 %v7323, 0.0
    %v7426 = vmax.f32 %v7328, 0.0
    %v7427 = vmax.f32 %v7331, 0.0
    %v7428 = vmax.f32 %v7336, 0.0
    %v7429 = vmax.f32 %v7339, 0.0
    %v7430 = vmax.f32 %v7344, 0.0
    %v7431 = vmax.f32 %v7347, 0.0
    %v7432 = vmax.f32 %v7352, 0.0
    %v7433 = vmax.f32 %v7355, 0.0
    %v7434 = vmax.f32 %v7360, 0.0
    %v7435 = vmax.f32 %v7363, 0.0
    %v7436 = vmax.f32 %v7368, 0.0
    %v7437 = vmax.f32 %v7371, 0.0
    %v7439 = vshrl.u32 4286578559, 16
    %v7441 = vrot.slane %v7439, 7
    %v7442 = vshll.u32 4286578559, 16
    %v7444 = vor.u32 %v7441, %v7442
    %v7445 = vshrl.u32 %v245, 16
    %v7447 = vrot.slane %v7445, 7
    %v7448 = vshll.u32 %v245, 16
    %v7450 = vor.u32 %v7447, %v7448
    %v7451 = vshrl.u32 %v246, 16
    %v7453 = vrot.slane %v7451, 7
    %v7454 = vshll.u32 %v246, 16
    %v7456 = vor.u32 %v7453, %v7454
    %v7457 = vshrl.u32 %v247, 16
    %v7459 = vrot.slane %v7457, 7
    %v7460 = vshll.u32 %v247, 16
    %v7462 = vor.u32 %v7459, %v7460
    %v7463 = vshrl.u32 %v248, 16
    %v7465 = vrot.slane %v7463, 7
    %v7466 = vshll.u32 %v248, 16
    %v7468 = vor.u32 %v7465, %v7466
    %v7469 = vshrl.u32 %v249, 16
    %v7471 = vrot.slane %v7469, 7
    %v7472 = vshll.u32 %v249, 16
    %v7474 = vor.u32 %v7471, %v7472
    %v7475 = vshrl.u32 %v250, 16
    %v7477 = vrot.slane %v7475, 7
    %v7478 = vshll.u32 %v250, 16
    %v7480 = vor.u32 %v7477, %v7478
    %v7481 = vshrl.u32 %v251, 16
    %v7483 = vrot.slane %v7481, 7
    %v7484 = vshll.u32 %v251, 16
    %v7486 = vor.u32 %v7483, %v7484
    %v7487 = vshrl.u32 %v252, 16
    %v7489 = vrot.slane %v7487, 7
    %v7490 = vshll.u32 %v252, 16
    %v7492 = vor.u32 %v7489, %v7490
    %v7493 = vshrl.u32 %v253, 16
    %v7495 = vrot.slane %v7493, 7
    %v7496 = vshll.u32 %v253, 16
    %v7498 = vor.u32 %v7495, %v7496
    %v7499 = vshrl.u32 %v254, 16
    %v7501 = vrot.slane %v7499, 7
    %v7502 = vshll.u32 %v254, 16
    %v7504 = vor.u32 %v7501, %v7502
    %v7505 = vshrl.u32 %v255, 16
    %v7507 = vrot.slane %v7505, 7
    %v7508 = vshll.u32 %v255, 16
    %v7510 = vor.u32 %v7507, %v7508
    %v7511 = vshrl.u32 %v256, 16
    %v7513 = vrot.slane %v7511, 7
    %v7514 = vshll.u32 %v256, 16
    %v7516 = vor.u32 %v7513, %v7514
    %v7517 = vshrl.u32 %v257, 16
    %v7519 = vrot.slane %v7517, 7
    %v7520 = vshll.u32 %v257, 16
    %v7522 = vor.u32 %v7519, %v7520
    %v7523 = vshrl.u32 %v258, 16
    %v7525 = vrot.slane %v7523, 7
    %v7526 = vshll.u32 %v258, 16
    %v7528 = vor.u32 %v7525, %v7526
    %v7529 = vshrl.u32 %v259, 16
    %v7531 = vrot.slane %v7529, 7
    %v7532 = vshll.u32 %v259, 16
    %v7534 = vor.u32 %v7531, %v7532
    %v7535 = vshrl.u32 %v260, 16
    %v7537 = vrot.slane %v7535, 7
    %v7538 = vshll.u32 %v260, 16
    %v7540 = vor.u32 %v7537, %v7538
    %v7541 = vshrl.u32 %v261, 16
    %v7543 = vrot.slane %v7541, 7
    %v7544 = vshll.u32 %v261, 16
    %v7546 = vor.u32 %v7543, %v7544
    %v7547 = vshrl.u32 %v262, 16
    %v7549 = vrot.slane %v7547, 7
    %v7550 = vshll.u32 %v262, 16
    %v7552 = vor.u32 %v7549, %v7550
    %v7553 = vshrl.u32 %v263, 16
    %v7555 = vrot.slane %v7553, 7
    %v7556 = vshll.u32 %v263, 16
    %v7558 = vor.u32 %v7555, %v7556
    %v7559 = vshrl.u32 %v264, 16
    %v7561 = vrot.slane %v7559, 7
    %v7562 = vshll.u32 %v264, 16
    %v7564 = vor.u32 %v7561, %v7562
    %v7565 = vshrl.u32 %v265, 16
    %v7567 = vrot.slane %v7565, 7
    %v7568 = vshll.u32 %v265, 16
    %v7570 = vor.u32 %v7567, %v7568
    %v7571 = vshrl.u32 %v266, 16
    %v7573 = vrot.slane %v7571, 7
    %v7574 = vshll.u32 %v266, 16
    %v7576 = vor.u32 %v7573, %v7574
    %v7577 = vshrl.u32 %v267, 16
    %v7579 = vrot.slane %v7577, 7
    %v7580 = vshll.u32 %v267, 16
    %v7582 = vor.u32 %v7579, %v7580
    %v7583 = vshrl.u32 %v268, 16
    %v7585 = vrot.slane %v7583, 7
    %v7586 = vshll.u32 %v268, 16
    %v7588 = vor.u32 %v7585, %v7586
    %v7589 = vshrl.u32 %v269, 16
    %v7591 = vrot.slane %v7589, 7
    %v7592 = vshll.u32 %v269, 16
    %v7594 = vor.u32 %v7591, %v7592
    %v7595 = vshrl.u32 %v270, 16
    %v7597 = vrot.slane %v7595, 7
    %v7598 = vshll.u32 %v270, 16
    %v7600 = vor.u32 %v7597, %v7598
    %v7601 = vshrl.u32 %v271, 16
    %v7603 = vrot.slane %v7601, 7
    %v7604 = vshll.u32 %v271, 16
    %v7606 = vor.u32 %v7603, %v7604
    %v7607 = vshrl.u32 %v272, 16
    %v7609 = vrot.slane %v7607, 7
    %v7610 = vshll.u32 %v272, 16
    %v7612 = vor.u32 %v7609, %v7610
    %v7613 = vshrl.u32 %v273, 16
    %v7615 = vrot.slane %v7613, 7
    %v7616 = vshll.u32 %v273, 16
    %v7618 = vor.u32 %v7615, %v7616
    %v7619 = vshrl.u32 %v274, 16
    %v7621 = vrot.slane %v7619, 7
    %v7622 = vshll.u32 %v274, 16
    %v7624 = vor.u32 %v7621, %v7622
    %v7625 = vshrl.u32 %v275, 16
    %v7627 = vrot.slane %v7625, 7
    %v7628 = vshll.u32 %v275, 16
    %v7630 = vor.u32 %v7627, %v7628
    %v7631 = vshrl.u32 %v276, 16
    %v7633 = vrot.slane %v7631, 7
    %v7634 = vshll.u32 %v276, 16
    %v7636 = vor.u32 %v7633, %v7634
    %v7703 = vsel %vm1743, 4286578559, %v7444
    %v7704 = vsel %vm1743, 4286578559, %v7450
    %v7705 = vsel %vm1743, 4286578559, %v7456
    %v7706 = vsel %vm1743, 4286578559, %v7462
    %v7707 = vsel %vm1743, 4286578559, %v7468
    %v7708 = vsel %vm1743, 4286578559, %v7474
    %v7709 = vsel %vm1743, 4286578559, %v7480
    %v7710 = vsel %vm1743, 4286578559, %v7486
    %v7711 = vsel %vm1743, 4286578559, %v7492
    %v7712 = vsel %vm1743, 4286578559, %v7498
    %v7713 = vsel %vm1743, 4286578559, %v7504
    %v7714 = vsel %vm1743, 4286578559, %v7510
    %v7715 = vsel %vm1743, 4286578559, %v7516
    %v7716 = vsel %vm1743, 4286578559, %v7522
    %v7717 = vsel %vm1743, 4286578559, %v7528
    %v7718 = vsel %vm1743, 4286578559, %v7534
    %v7719 = vsel %vm1743, 4286578559, %v7540
    %v7720 = vsel %vm1743, 4286578559, %v7546
    %v7721 = vsel %vm1743, 4286578559, %v7552
    %v7722 = vsel %vm1743, 4286578559, %v7558
    %v7723 = vsel %vm1743, 4286578559, %v7564
    %v7724 = vsel %vm1743, 4286578559, %v7570
    %v7725 = vsel %vm1743, 4286578559, %v7576
    %v7726 = vsel %vm1743, 4286578559, %v7582
    %v7727 = vsel %vm1743, 4286578559, %v7588
    %v7728 = vsel %vm1743, 4286578559, %v7594
    %v7729 = vsel %vm1743, 4286578559, %v7600
    %v7730 = vsel %vm1743, 4286578559, %v7606
    %v7731 = vsel %vm1743, 4286578559, %v7612
    %v7732 = vsel %vm1743, 4286578559, %v7618
    %v7733 = vsel %vm1743, 4286578559, %v7624
    %v7734 = vsel %vm1743, 4286578559, %v7630
    %v7735 = vsel %vm1743, 4286578559, %v7636
    %v7736 = vsel %vm1743, %v7441, 4286578559
    %v7737 = vsel %vm1743, %v7447, 4286578559
    %v7738 = vsel %vm1743, %v7453, 4286578559
    %v7739 = vsel %vm1743, %v7459, 4286578559
    %v7740 = vsel %vm1743, %v7465, 4286578559
    %v7741 = vsel %vm1743, %v7471, 4286578559
    %v7742 = vsel %vm1743, %v7477, 4286578559
    %v7743 = vsel %vm1743, %v7483, 4286578559
    %v7744 = vsel %vm1743, %v7489, 4286578559
    %v7745 = vsel %vm1743, %v7495, 4286578559
    %v7746 = vsel %vm1743, %v7501, 4286578559
    %v7747 = vsel %vm1743, %v7507, 4286578559
    %v7748 = vsel %vm1743, %v7513, 4286578559
    %v7749 = vsel %vm1743, %v7519, 4286578559
    %v7750 = vsel %vm1743, %v7525, 4286578559
    %v7751 = vsel %vm1743, %v7531, 4286578559
    %v7752 = vsel %vm1743, %v7537, 4286578559
    %v7753 = vsel %vm1743, %v7543, 4286578559
    %v7754 = vsel %vm1743, %v7549, 4286578559
    %v7755 = vsel %vm1743, %v7555, 4286578559
    %v7756 = vsel %vm1743, %v7561, 4286578559
    %v7757 = vsel %vm1743, %v7567, 4286578559
    %v7758 = vsel %vm1743, %v7573, 4286578559
    %v7759 = vsel %vm1743, %v7579, 4286578559
    %v7760 = vsel %vm1743, %v7585, 4286578559
    %v7761 = vsel %vm1743, %v7591, 4286578559
    %v7762 = vsel %vm1743, %v7597, 4286578559
    %v7763 = vsel %vm1743, %v7603, 4286578559
    %v7764 = vsel %vm1743, %v7609, 4286578559
    %v7765 = vsel %vm1743, %v7615, 4286578559
    %v7766 = vsel %vm1743, %v7621, 4286578559
    %v7767 = vsel %vm1743, %v7627, 4286578559
    %v7768 = vsel %vm1743, %v7633, 4286578559
    %v7770 = vshrl.u32 %v7703, 16
    %v7772 = vshll.u32 %v7703, 16
    %v7774 = vrot.slane %v7772, 1
    %v7775 = vor.u32 %v7770, %v7774
    %v7777 = vshll.u32 %v7736, 16
    %v7779 = vrot.slane %v7777, 1
    %v7780 = vsel %vm1810, %v7775, %v7779
    %v7782 = vshrl.u32 %v7704, 16
    %v7784 = vshll.u32 %v7704, 16
    %v7786 = vrot.slane %v7784, 1
    %v7787 = vor.u32 %v7782, %v7786
    %v7789 = vshll.u32 %v7737, 16
    %v7791 = vrot.slane %v7789, 1
    %v7792 = vsel %vm1810, %v7787, %v7791
    %v7794 = vshrl.u32 %v7705, 16
    %v7796 = vshll.u32 %v7705, 16
    %v7798 = vrot.slane %v7796, 1
    %v7799 = vor.u32 %v7794, %v7798
    %v7801 = vshll.u32 %v7738, 16
    %v7803 = vrot.slane %v7801, 1
    %v7804 = vsel %vm1810, %v7799, %v7803
    %v7806 = vshrl.u32 %v7706, 16
    %v7808 = vshll.u32 %v7706, 16
    %v7810 = vrot.slane %v7808, 1
    %v7811 = vor.u32 %v7806, %v7810
    %v7813 = vshll.u32 %v7739, 16
    %v7815 = vrot.slane %v7813, 1
    %v7816 = vsel %vm1810, %v7811, %v7815
    %v7818 = vshrl.u32 %v7707, 16
    %v7820 = vshll.u32 %v7707, 16
    %v7822 = vrot.slane %v7820, 1
    %v7823 = vor.u32 %v7818, %v7822
    %v7825 = vshll.u32 %v7740, 16
    %v7827 = vrot.slane %v7825, 1
    %v7828 = vsel %vm1810, %v7823, %v7827
    %v7830 = vshrl.u32 %v7708, 16
    %v7832 = vshll.u32 %v7708, 16
    %v7834 = vrot.slane %v7832, 1
    %v7835 = vor.u32 %v7830, %v7834
    %v7837 = vshll.u32 %v7741, 16
    %v7839 = vrot.slane %v7837, 1
    %v7840 = vsel %vm1810, %v7835, %v7839
    %v7842 = vshrl.u32 %v7709, 16
    %v7844 = vshll.u32 %v7709, 16
    %v7846 = vrot.slane %v7844, 1
    %v7847 = vor.u32 %v7842, %v7846
    %v7849 = vshll.u32 %v7742, 16
    %v7851 = vrot.slane %v7849, 1
    %v7852 = vsel %vm1810, %v7847, %v7851
    %v7854 = vshrl.u32 %v7710, 16
    %v7856 = vshll.u32 %v7710, 16
    %v7858 = vrot.slane %v7856, 1
    %v7859 = vor.u32 %v7854, %v7858
    %v7861 = vshll.u32 %v7743, 16
    %v7863 = vrot.slane %v7861, 1
    %v7864 = vsel %vm1810, %v7859, %v7863
    %v7866 = vshrl.u32 %v7711, 16
    %v7868 = vshll.u32 %v7711, 16
    %v7870 = vrot.slane %v7868, 1
    %v7871 = vor.u32 %v7866, %v7870
    %v7873 = vshll.u32 %v7744, 16
    %v7875 = vrot.slane %v7873, 1
    %v7876 = vsel %vm1810, %v7871, %v7875
    %v7878 = vshrl.u32 %v7712, 16
    %v7880 = vshll.u32 %v7712, 16
    %v7882 = vrot.slane %v7880, 1
    %v7883 = vor.u32 %v7878, %v7882
    %v7885 = vshll.u32 %v7745, 16
    %v7887 = vrot.slane %v7885, 1
    %v7888 = vsel %vm1810, %v7883, %v7887
    %v7890 = vshrl.u32 %v7713, 16
    %v7892 = vshll.u32 %v7713, 16
    %v7894 = vrot.slane %v7892, 1
    %v7895 = vor.u32 %v7890, %v7894
    %v7897 = vshll.u32 %v7746, 16
    %v7899 = vrot.slane %v7897, 1
    %v7900 = vsel %vm1810, %v7895, %v7899
    %v7902 = vshrl.u32 %v7714, 16
    %v7904 = vshll.u32 %v7714, 16
    %v7906 = vrot.slane %v7904, 1
    %v7907 = vor.u32 %v7902, %v7906
    %v7909 = vshll.u32 %v7747, 16
    %v7911 = vrot.slane %v7909, 1
    %v7912 = vsel %vm1810, %v7907, %v7911
    %v7914 = vshrl.u32 %v7715, 16
    %v7916 = vshll.u32 %v7715, 16
    %v7918 = vrot.slane %v7916, 1
    %v7919 = vor.u32 %v7914, %v7918
    %v7921 = vshll.u32 %v7748, 16
    %v7923 = vrot.slane %v7921, 1
    %v7924 = vsel %vm1810, %v7919, %v7923
    %v7926 = vshrl.u32 %v7716, 16
    %v7928 = vshll.u32 %v7716, 16
    %v7930 = vrot.slane %v7928, 1
    %v7931 = vor.u32 %v7926, %v7930
    %v7933 = vshll.u32 %v7749, 16
    %v7935 = vrot.slane %v7933, 1
    %v7936 = vsel %vm1810, %v7931, %v7935
    %v7938 = vshrl.u32 %v7717, 16
    %v7940 = vshll.u32 %v7717, 16
    %v7942 = vrot.slane %v7940, 1
    %v7943 = vor.u32 %v7938, %v7942
    %v7945 = vshll.u32 %v7750, 16
    %v7947 = vrot.slane %v7945, 1
    %v7948 = vsel %vm1810, %v7943, %v7947
    %v7950 = vshrl.u32 %v7718, 16
    %v7952 = vshll.u32 %v7718, 16
    %v7954 = vrot.slane %v7952, 1
    %v7955 = vor.u32 %v7950, %v7954
    %v7957 = vshll.u32 %v7751, 16
    %v7959 = vrot.slane %v7957, 1
    %v7960 = vsel %vm1810, %v7955, %v7959
    %v7962 = vshrl.u32 %v7719, 16
    %v7964 = vshll.u32 %v7719, 16
    %v7966 = vrot.slane %v7964, 1
    %v7967 = vor.u32 %v7962, %v7966
    %v7969 = vshll.u32 %v7752, 16
    %v7971 = vrot.slane %v7969, 1
    %v7972 = vsel %vm1810, %v7967, %v7971
    %v7974 = vshrl.u32 %v7720, 16
    %v7976 = vshll.u32 %v7720, 16
    %v7978 = vrot.slane %v7976, 1
    %v7979 = vor.u32 %v7974, %v7978
    %v7981 = vshll.u32 %v7753, 16
    %v7983 = vrot.slane %v7981, 1
    %v7984 = vsel %vm1810, %v7979, %v7983
    %v7986 = vshrl.u32 %v7721, 16
    %v7988 = vshll.u32 %v7721, 16
    %v7990 = vrot.slane %v7988, 1
    %v7991 = vor.u32 %v7986, %v7990
    %v7993 = vshll.u32 %v7754, 16
    %v7995 = vrot.slane %v7993, 1
    %v7996 = vsel %vm1810, %v7991, %v7995
    %v7998 = vshrl.u32 %v7722, 16
    %v8000 = vshll.u32 %v7722, 16
    %v8002 = vrot.slane %v8000, 1
    %v8003 = vor.u32 %v7998, %v8002
    %v8005 = vshll.u32 %v7755, 16
    %v8007 = vrot.slane %v8005, 1
    %v8008 = vsel %vm1810, %v8003, %v8007
    %v8010 = vshrl.u32 %v7723, 16
    %v8012 = vshll.u32 %v7723, 16
    %v8014 = vrot.slane %v8012, 1
    %v8015 = vor.u32 %v8010, %v8014
    %v8017 = vshll.u32 %v7756, 16
    %v8019 = vrot.slane %v8017, 1
    %v8020 = vsel %vm1810, %v8015, %v8019
    %v8022 = vshrl.u32 %v7724, 16
    %v8024 = vshll.u32 %v7724, 16
    %v8026 = vrot.slane %v8024, 1
    %v8027 = vor.u32 %v8022, %v8026
    %v8029 = vshll.u32 %v7757, 16
    %v8031 = vrot.slane %v8029, 1
    %v8032 = vsel %vm1810, %v8027, %v8031
    %v8034 = vshrl.u32 %v7725, 16
    %v8036 = vshll.u32 %v7725, 16
    %v8038 = vrot.slane %v8036, 1
    %v8039 = vor.u32 %v8034, %v8038
    %v8041 = vshll.u32 %v7758, 16
    %v8043 = vrot.slane %v8041, 1
    %v8044 = vsel %vm1810, %v8039, %v8043
    %v8046 = vshrl.u32 %v7726, 16
    %v8048 = vshll.u32 %v7726, 16
    %v8050 = vrot.slane %v8048, 1
    %v8051 = vor.u32 %v8046, %v8050
    %v8053 = vshll.u32 %v7759, 16
    %v8055 = vrot.slane %v8053, 1
    %v8056 = vsel %vm1810, %v8051, %v8055
    %v8058 = vshrl.u32 %v7727, 16
    %v8060 = vshll.u32 %v7727, 16
    %v8062 = vrot.slane %v8060, 1
    %v8063 = vor.u32 %v8058, %v8062
    %v8065 = vshll.u32 %v7760, 16
    %v8067 = vrot.slane %v8065, 1
    %v8068 = vsel %vm1810, %v8063, %v8067
    %v8070 = vshrl.u32 %v7728, 16
    %v8072 = vshll.u32 %v7728, 16
    %v8074 = vrot.slane %v8072, 1
    %v8075 = vor.u32 %v8070, %v8074
    %v8077 = vshll.u32 %v7761, 16
    %v8079 = vrot.slane %v8077, 1
    %v8080 = vsel %vm1810, %v8075, %v8079
    %v8082 = vshrl.u32 %v7729, 16
    %v8084 = vshll.u32 %v7729, 16
    %v8086 = vrot.slane %v8084, 1
    %v8087 = vor.u32 %v8082, %v8086
    %v8089 = vshll.u32 %v7762, 16
    %v8091 = vrot.slane %v8089, 1
    %v8092 = vsel %vm1810, %v8087, %v8091
    %v8094 = vshrl.u32 %v7730, 16
    %v8096 = vshll.u32 %v7730, 16
    %v8098 = vrot.slane %v8096, 1
    %v8099 = vor.u32 %v8094, %v8098
    %v8101 = vshll.u32 %v7763, 16
    %v8103 = vrot.slane %v8101, 1
    %v8104 = vsel %vm1810, %v8099, %v8103
    %v8106 = vshrl.u32 %v7731, 16
    %v8108 = vshll.u32 %v7731, 16
    %v8110 = vrot.slane %v8108, 1
    %v8111 = vor.u32 %v8106, %v8110
    %v8113 = vshll.u32 %v7764, 16
    %v8115 = vrot.slane %v8113, 1
    %v8116 = vsel %vm1810, %v8111, %v8115
    %v8118 = vshrl.u32 %v7732, 16
    %v8120 = vshll.u32 %v7732, 16
    %v8122 = vrot.slane %v8120, 1
    %v8123 = vor.u32 %v8118, %v8122
    %v8125 = vshll.u32 %v7765, 16
    %v8127 = vrot.slane %v8125, 1
    %v8128 = vsel %vm1810, %v8123, %v8127
    %v8130 = vshrl.u32 %v7733, 16
    %v8132 = vshll.u32 %v7733, 16
    %v8134 = vrot.slane %v8132, 1
    %v8135 = vor.u32 %v8130, %v8134
    %v8137 = vshll.u32 %v7766, 16
    %v8139 = vrot.slane %v8137, 1
    %v8140 = vsel %vm1810, %v8135, %v8139
    %v8142 = vshrl.u32 %v7734, 16
    %v8144 = vshll.u32 %v7734, 16
    %v8146 = vrot.slane %v8144, 1
    %v8147 = vor.u32 %v8142, %v8146
    %v8149 = vshll.u32 %v7767, 16
    %v8151 = vrot.slane %v8149, 1
    %v8152 = vsel %vm1810, %v8147, %v8151
    %v8154 = vshrl.u32 %v7735, 16
    %v8156 = vshll.u32 %v7735, 16
    %v8158 = vrot.slane %v8156, 1
    %v8159 = vor.u32 %v8154, %v8158
    %v8161 = vshll.u32 %v7768, 16
    %v8163 = vrot.slane %v8161, 1
    %v8164 = vsel %vm1810, %v8159, %v8163
    %v8198 = vmax.bf16 %v7703, %v7780
    %v8199 = vmax.bf16 %v7704, %v7792
    %v8200 = vmax.bf16 %v7705, %v7804
    %v8201 = vmax.bf16 %v7706, %v7816
    %v8202 = vmax.bf16 %v7707, %v7828
    %v8203 = vmax.bf16 %v7708, %v7840
    %v8204 = vmax.bf16 %v7709, %v7852
    %v8205 = vmax.bf16 %v7710, %v7864
    %v8206 = vmax.bf16 %v7711, %v7876
    %v8207 = vmax.bf16 %v7712, %v7888
    %v8208 = vmax.bf16 %v7713, %v7900
    %v8209 = vmax.bf16 %v7714, %v7912
    %v8210 = vmax.bf16 %v7715, %v7924
    %v8211 = vmax.bf16 %v7716, %v7936
    %v8212 = vmax.bf16 %v7717, %v7948
    %v8213 = vmax.bf16 %v7718, %v7960
    %v8214 = vmax.bf16 %v7719, %v7972
    %v8215 = vmax.bf16 %v7720, %v7984
    %v8216 = vmax.bf16 %v7721, %v7996
    %v8217 = vmax.bf16 %v7722, %v8008
    %v8218 = vmax.bf16 %v7723, %v8020
    %v8219 = vmax.bf16 %v7724, %v8032
    %v8220 = vmax.bf16 %v7725, %v8044
    %v8221 = vmax.bf16 %v7726, %v8056
    %v8222 = vmax.bf16 %v7727, %v8068
    %v8223 = vmax.bf16 %v7728, %v8080
    %v8224 = vmax.bf16 %v7729, %v8092
    %v8225 = vmax.bf16 %v7730, %v8104
    %v8226 = vmax.bf16 %v7731, %v8116
    %v8227 = vmax.bf16 %v7732, %v8128
    %v8228 = vmax.bf16 %v7733, %v8140
    %v8229 = vmax.bf16 %v7734, %v8152
    %v8230 = vmax.bf16 %v7735, %v8164
    %v8297 = vrot.slane %v7703, 1
    %v8298 = vrot.slane %v7736, 1
    %v8299 = vsel %vm2276, %v8297, %v8298
    %v8300 = vrot.slane %v7704, 1
    %v8301 = vrot.slane %v7737, 1
    %v8302 = vsel %vm2276, %v8300, %v8301
    %v8303 = vrot.slane %v7705, 1
    %v8304 = vrot.slane %v7738, 1
    %v8305 = vsel %vm2276, %v8303, %v8304
    %v8306 = vrot.slane %v7706, 1
    %v8307 = vrot.slane %v7739, 1
    %v8308 = vsel %vm2276, %v8306, %v8307
    %v8309 = vrot.slane %v7707, 1
    %v8310 = vrot.slane %v7740, 1
    %v8311 = vsel %vm2276, %v8309, %v8310
    %v8312 = vrot.slane %v7708, 1
    %v8313 = vrot.slane %v7741, 1
    %v8314 = vsel %vm2276, %v8312, %v8313
    %v8315 = vrot.slane %v7709, 1
    %v8316 = vrot.slane %v7742, 1
    %v8317 = vsel %vm2276, %v8315, %v8316
    %v8318 = vrot.slane %v7710, 1
    %v8319 = vrot.slane %v7743, 1
    %v8320 = vsel %vm2276, %v8318, %v8319
    %v8321 = vrot.slane %v7711, 1
    %v8322 = vrot.slane %v7744, 1
    %v8323 = vsel %vm2276, %v8321, %v8322
    %v8324 = vrot.slane %v7712, 1
    %v8325 = vrot.slane %v7745, 1
    %v8326 = vsel %vm2276, %v8324, %v8325
    %v8327 = vrot.slane %v7713, 1
    %v8328 = vrot.slane %v7746, 1
    %v8329 = vsel %vm2276, %v8327, %v8328
    %v8330 = vrot.slane %v7714, 1
    %v8331 = vrot.slane %v7747, 1
    %v8332 = vsel %vm2276, %v8330, %v8331
    %v8333 = vrot.slane %v7715, 1
    %v8334 = vrot.slane %v7748, 1
    %v8335 = vsel %vm2276, %v8333, %v8334
    %v8336 = vrot.slane %v7716, 1
    %v8337 = vrot.slane %v7749, 1
    %v8338 = vsel %vm2276, %v8336, %v8337
    %v8339 = vrot.slane %v7717, 1
    %v8340 = vrot.slane %v7750, 1
    %v8341 = vsel %vm2276, %v8339, %v8340
    %v8342 = vrot.slane %v7718, 1
    %v8343 = vrot.slane %v7751, 1
    %v8344 = vsel %vm2276, %v8342, %v8343
    %v8345 = vrot.slane %v7719, 1
    %v8346 = vrot.slane %v7752, 1
    %v8347 = vsel %vm2276, %v8345, %v8346
    %v8348 = vrot.slane %v7720, 1
    %v8349 = vrot.slane %v7753, 1
    %v8350 = vsel %vm2276, %v8348, %v8349
    %v8351 = vrot.slane %v7721, 1
    %v8352 = vrot.slane %v7754, 1
    %v8353 = vsel %vm2276, %v8351, %v8352
    %v8354 = vrot.slane %v7722, 1
    %v8355 = vrot.slane %v7755, 1
    %v8356 = vsel %vm2276, %v8354, %v8355
    %v8357 = vrot.slane %v7723, 1
    %v8358 = vrot.slane %v7756, 1
    %v8359 = vsel %vm2276, %v8357, %v8358
    %v8360 = vrot.slane %v7724, 1
    %v8361 = vrot.slane %v7757, 1
    %v8362 = vsel %vm2276, %v8360, %v8361
    %v8363 = vrot.slane %v7725, 1
    %v8364 = vrot.slane %v7758, 1
    %v8365 = vsel %vm2276, %v8363, %v8364
    %v8366 = vrot.slane %v7726, 1
    %v8367 = vrot.slane %v7759, 1
    %v8368 = vsel %vm2276, %v8366, %v8367
    %v8369 = vrot.slane %v7727, 1
    %v8370 = vrot.slane %v7760, 1
    %v8371 = vsel %vm2276, %v8369, %v8370
    %v8372 = vrot.slane %v7728, 1
    %v8373 = vrot.slane %v7761, 1
    %v8374 = vsel %vm2276, %v8372, %v8373
    %v8375 = vrot.slane %v7729, 1
    %v8376 = vrot.slane %v7762, 1
    %v8377 = vsel %vm2276, %v8375, %v8376
    %v8378 = vrot.slane %v7730, 1
    %v8379 = vrot.slane %v7763, 1
    %v8380 = vsel %vm2276, %v8378, %v8379
    %v8381 = vrot.slane %v7731, 1
    %v8382 = vrot.slane %v7764, 1
    %v8383 = vsel %vm2276, %v8381, %v8382
    %v8384 = vrot.slane %v7732, 1
    %v8385 = vrot.slane %v7765, 1
    %v8386 = vsel %vm2276, %v8384, %v8385
    %v8387 = vrot.slane %v7733, 1
    %v8388 = vrot.slane %v7766, 1
    %v8389 = vsel %vm2276, %v8387, %v8388
    %v8390 = vrot.slane %v7734, 1
    %v8391 = vrot.slane %v7767, 1
    %v8392 = vsel %vm2276, %v8390, %v8391
    %v8393 = vrot.slane %v7735, 1
    %v8394 = vrot.slane %v7768, 1
    %v8395 = vsel %vm2276, %v8393, %v8394
    %v8429 = vmax.bf16 %v8198, %v8299
    %v8430 = vmax.bf16 %v8199, %v8302
    %v8431 = vmax.bf16 %v8200, %v8305
    %v8432 = vmax.bf16 %v8201, %v8308
    %v8433 = vmax.bf16 %v8202, %v8311
    %v8434 = vmax.bf16 %v8203, %v8314
    %v8435 = vmax.bf16 %v8204, %v8317
    %v8436 = vmax.bf16 %v8205, %v8320
    %v8437 = vmax.bf16 %v8206, %v8323
    %v8438 = vmax.bf16 %v8207, %v8326
    %v8439 = vmax.bf16 %v8208, %v8329
    %v8440 = vmax.bf16 %v8209, %v8332
    %v8441 = vmax.bf16 %v8210, %v8335
    %v8442 = vmax.bf16 %v8211, %v8338
    %v8443 = vmax.bf16 %v8212, %v8341
    %v8444 = vmax.bf16 %v8213, %v8344
    %v8445 = vmax.bf16 %v8214, %v8347
    %v8446 = vmax.bf16 %v8215, %v8350
    %v8447 = vmax.bf16 %v8216, %v8353
    %v8448 = vmax.bf16 %v8217, %v8356
    %v8449 = vmax.bf16 %v8218, %v8359
    %v8450 = vmax.bf16 %v8219, %v8362
    %v8451 = vmax.bf16 %v8220, %v8365
    %v8452 = vmax.bf16 %v8221, %v8368
    %v8453 = vmax.bf16 %v8222, %v8371
    %v8454 = vmax.bf16 %v8223, %v8374
    %v8455 = vmax.bf16 %v8224, %v8377
    %v8456 = vmax.bf16 %v8225, %v8380
    %v8457 = vmax.bf16 %v8226, %v8383
    %v8458 = vmax.bf16 %v8227, %v8386
    %v8459 = vmax.bf16 %v8228, %v8389
    %v8460 = vmax.bf16 %v8229, %v8392
    %v8461 = vmax.bf16 %v8230, %v8395
    %v8462 = vmax.bf16 %v8429, %v8430
    %v8463 = vmax.bf16 %v8430, %v8431
    %v8464 = vmax.bf16 %v8431, %v8432
    %v8465 = vmax.bf16 %v8432, %v8433
    %v8466 = vmax.bf16 %v8433, %v8434
    %v8467 = vmax.bf16 %v8434, %v8435
    %v8468 = vmax.bf16 %v8435, %v8436
    %v8469 = vmax.bf16 %v8436, %v8437
    %v8470 = vmax.bf16 %v8437, %v8438
    %v8471 = vmax.bf16 %v8438, %v8439
    %v8472 = vmax.bf16 %v8439, %v8440
    %v8473 = vmax.bf16 %v8440, %v8441
    %v8474 = vmax.bf16 %v8441, %v8442
    %v8475 = vmax.bf16 %v8442, %v8443
    %v8476 = vmax.bf16 %v8443, %v8444
    %v8477 = vmax.bf16 %v8444, %v8445
    %v8478 = vmax.bf16 %v8429, %v8446
    %v8479 = vmax.bf16 %v8446, %v8447
    %v8480 = vmax.bf16 %v8447, %v8448
    %v8481 = vmax.bf16 %v8448, %v8449
    %v8482 = vmax.bf16 %v8449, %v8450
    %v8483 = vmax.bf16 %v8450, %v8451
    %v8484 = vmax.bf16 %v8451, %v8452
    %v8485 = vmax.bf16 %v8452, %v8453
    %v8486 = vmax.bf16 %v8453, %v8454
    %v8487 = vmax.bf16 %v8454, %v8455
    %v8488 = vmax.bf16 %v8455, %v8456
    %v8489 = vmax.bf16 %v8456, %v8457
    %v8490 = vmax.bf16 %v8457, %v8458
    %v8491 = vmax.bf16 %v8458, %v8459
    %v8492 = vmax.bf16 %v8459, %v8460
    %v8493 = vmax.bf16 %v8460, %v8461
    %v8494 = vmax.bf16 %v8462, %v8431
    %v8495 = vmax.bf16 %v8463, %v8432
    %v8496 = vmax.bf16 %v8464, %v8433
    %v8497 = vmax.bf16 %v8465, %v8434
    %v8498 = vmax.bf16 %v8466, %v8435
    %v8499 = vmax.bf16 %v8467, %v8436
    %v8500 = vmax.bf16 %v8468, %v8437
    %v8501 = vmax.bf16 %v8469, %v8438
    %v8502 = vmax.bf16 %v8470, %v8439
    %v8503 = vmax.bf16 %v8471, %v8440
    %v8504 = vmax.bf16 %v8472, %v8441
    %v8505 = vmax.bf16 %v8473, %v8442
    %v8506 = vmax.bf16 %v8474, %v8443
    %v8507 = vmax.bf16 %v8475, %v8444
    %v8508 = vmax.bf16 %v8476, %v8445
    %v8509 = vmax.bf16 %v8477, %v8429
    %v8510 = vmax.bf16 %v8478, %v8447
    %v8511 = vmax.bf16 %v8479, %v8448
    %v8512 = vmax.bf16 %v8480, %v8449
    %v8513 = vmax.bf16 %v8481, %v8450
    %v8514 = vmax.bf16 %v8482, %v8451
    %v8515 = vmax.bf16 %v8483, %v8452
    %v8516 = vmax.bf16 %v8484, %v8453
    %v8517 = vmax.bf16 %v8485, %v8454
    %v8518 = vmax.bf16 %v8486, %v8455
    %v8519 = vmax.bf16 %v8487, %v8456
    %v8520 = vmax.bf16 %v8488, %v8457
    %v8521 = vmax.bf16 %v8489, %v8458
    %v8522 = vmax.bf16 %v8490, %v8459
    %v8523 = vmax.bf16 %v8491, %v8460
    %v8524 = vmax.bf16 %v8492, %v8461
    %v8525 = vmax.bf16 %v8493, %v8429
    %v8526 = vld [vmem:[%s7] sm:$0x3]
    %v8527 = vld [vmem:[%s8] sm:$0x1]
    %v8529 = vlaneseq
    %v8530 = vshrl.u32 %v8529, 7
    %v8531 = vsub.s32 0, %v8530
    %v8532 = vrot.slane %v8527, %v8531
    %v8535 = vsel %vm294, %v8494, 0
    %v8538 = vsel %vm294, %v8495, 0
    %v8541 = vsel %vm294, %v8496, 0
    %v8544 = vsel %vm294, %v8497, 0
    %v8547 = vsel %vm294, %v8498, 0
    %v8550 = vsel %vm294, %v8499, 0
    %v8553 = vsel %vm294, %v8500, 0
    %v8556 = vsel %vm294, %v8501, 0
    %v8559 = vsel %vm294, %v8502, 0
    %v8562 = vsel %vm294, %v8503, 0
    %v8565 = vsel %vm294, %v8504, 0
    %v8568 = vsel %vm294, %v8505, 0
    %v8571 = vsel %vm294, %v8506, 0
    %v8574 = vsel %vm294, %v8507, 0
    %v8577 = vsel %vm294, %v8508, 0
    %v8580 = vsel %vm294, %v8509, 0
    %v8583 = vsel %vm294, %v8510, 0
    %v8586 = vsel %vm294, %v8511, 0
    %v8589 = vsel %vm294, %v8512, 0
    %v8592 = vsel %vm294, %v8513, 0
    %v8595 = vsel %vm294, %v8514, 0
    %v8598 = vsel %vm294, %v8515, 0
    %v8601 = vsel %vm294, %v8516, 0
    %v8604 = vsel %vm294, %v8517, 0
    %v8607 = vsel %vm294, %v8518, 0
    %v8610 = vsel %vm294, %v8519, 0
    %v8613 = vsel %vm294, %v8520, 0
    %v8616 = vsel %vm294, %v8521, 0
    %v8619 = vsel %vm294, %v8522, 0
    %v8622 = vsel %vm294, %v8523, 0
    %v8625 = vsel %vm294, %v8524, 0
    %v8628 = vsel %vm294, %v8525, 0
    %v8631 = vsel %vm391, %v8526, 0
    %8633 = vmatprep.subr.bf16.mxu0 0
    %8634 = vmatpush1.bf16.msra.mxu0 %v8631
    %8635 = vmatprep.subr.bf16.mxu0 0
    %8636 = vmatpush1.bf16.msra.mxu0 0
    %8637 = vmatprep.subr.bf16.mxu0 0
    %8638 = vmatpush1.bf16.msra.mxu0 0
    %8639 = vmatprep.subr.bf16.mxu0 0
    %8640 = vmatpush1.bf16.msra.mxu0 0
    %8641 = vmatprep.subr.bf16.mxu0 0
    %8642 = vmatpush1.bf16.msra.mxu0 0
    %8643 = vmatprep.subr.bf16.mxu0 0
    %8644 = vmatpush1.bf16.msra.mxu0 0
    %8645 = vmatprep.subr.bf16.mxu0 0
    %8646 = vmatpush1.bf16.msra.mxu0 0
    %8647 = vmatprep.subr.bf16.mxu0 0
    %8648 = vmatpush1.bf16.msra.mxu0 0
    %8649 = vmatprep.subr.bf16.mxu0 0
    %8650 = vmatpush1.bf16.msra.mxu0 0
    %8651 = vmatprep.subr.bf16.mxu0 0
    %8652 = vmatpush1.bf16.msra.mxu0 0
    %8653 = vmatprep.subr.bf16.mxu0 0
    %8654 = vmatpush1.bf16.msra.mxu0 0
    %8655 = vmatprep.subr.bf16.mxu0 0
    %8656 = vmatpush1.bf16.msra.mxu0 0
    %8657 = vmatprep.subr.bf16.mxu0 0
    %8658 = vmatpush1.bf16.msra.mxu0 0
    %8659 = vmatprep.subr.bf16.mxu0 0
    %8660 = vmatpush1.bf16.msra.mxu0 0
    %8661 = vmatprep.subr.bf16.mxu0 0
    %8662 = vmatpush1.bf16.msra.mxu0 0
    %8663 = vmatprep.subr.bf16.mxu0 0
    %8664 = vmatpush1.bf16.msra.mxu0 0
    %8665 = vmatprep.mubr.bf16.mxu0 0
    %8666 = vmatmul.mubr.bf16.gmra.mrb[0].mxu0 %v8535
    %v8667 = vpop.f32.mrb[0].mxu0
    %v8668 = vadd.f32 %v8532, %v8667
    %v8669 = vpop.f32.mrb[0].mxu0
    %v8670 = vpop.f32.mrb[0].mxu0
    %v8671 = vadd.f32 %v8532, %v8670
    %v8672 = vpop.f32.mrb[0].mxu0
    %8673 = vmatprep.mubr.bf16.mxu0 0
    %8674 = vmatmul.mubr.bf16.gmra.mrb[0].mxu0 %v8538
    %v8675 = vpop.f32.mrb[0].mxu0
    %v8676 = vadd.f32 %v8532, %v8675
    %v8677 = vpop.f32.mrb[0].mxu0
    %v8678 = vpop.f32.mrb[0].mxu0
    %v8679 = vadd.f32 %v8532, %v8678
    %v8680 = vpop.f32.mrb[0].mxu0
    %8681 = vmatprep.mubr.bf16.mxu0 0
    %8682 = vmatmul.mubr.bf16.gmra.mrb[0].mxu0 %v8541
    %v8683 = vpop.f32.mrb[0].mxu0
    %v8684 = vadd.f32 %v8532, %v8683
    %v8685 = vpop.f32.mrb[0].mxu0
    %v8686 = vpop.f32.mrb[0].mxu0
    %v8687 = vadd.f32 %v8532, %v8686
    %v8688 = vpop.f32.mrb[0].mxu0
    %8689 = vmatprep.mubr.bf16.mxu0 0
    %8690 = vmatmul.mubr.bf16.gmra.mrb[0].mxu0 %v8544
    %v8691 = vpop.f32.mrb[0].mxu0
    %v8692 = vadd.f32 %v8532, %v8691
    %v8693 = vpop.f32.mrb[0].mxu0
    %v8694 = vpop.f32.mrb[0].mxu0
    %v8695 = vadd.f32 %v8532, %v8694
    %v8696 = vpop.f32.mrb[0].mxu0
    %8697 = vmatprep.mubr.bf16.mxu0 0
    %8698 = vmatmul.mubr.bf16.gmra.mrb[0].mxu0 %v8547
    %v8699 = vpop.f32.mrb[0].mxu0
    %v8700 = vadd.f32 %v8532, %v8699
    %v8701 = vpop.f32.mrb[0].mxu0
    %v8702 = vpop.f32.mrb[0].mxu0
    %v8703 = vadd.f32 %v8532, %v8702
    %v8704 = vpop.f32.mrb[0].mxu0
    %8705 = vmatprep.mubr.bf16.mxu0 0
    %8706 = vmatmul.mubr.bf16.gmra.mrb[0].mxu0 %v8550
    %v8707 = vpop.f32.mrb[0].mxu0
    %v8708 = vadd.f32 %v8532, %v8707
    %v8709 = vpop.f32.mrb[0].mxu0
    %v8710 = vpop.f32.mrb[0].mxu0
    %v8711 = vadd.f32 %v8532, %v8710
    %v8712 = vpop.f32.mrb[0].mxu0
    %8713 = vmatprep.mubr.bf16.mxu0 0
    %8714 = vmatmul.mubr.bf16.gmra.mrb[0].mxu0 %v8553
    %v8715 = vpop.f32.mrb[0].mxu0
    %v8716 = vadd.f32 %v8532, %v8715
    %v8717 = vpop.f32.mrb[0].mxu0
    %v8718 = vpop.f32.mrb[0].mxu0
    %v8719 = vadd.f32 %v8532, %v8718
    %v8720 = vpop.f32.mrb[0].mxu0
    %8721 = vmatprep.mubr.bf16.mxu0 0
    %8722 = vmatmul.mubr.bf16.gmra.mrb[0].mxu0 %v8556
    %v8723 = vpop.f32.mrb[0].mxu0
    %v8724 = vadd.f32 %v8532, %v8723
    %v8725 = vpop.f32.mrb[0].mxu0
    %v8726 = vpop.f32.mrb[0].mxu0
    %v8727 = vadd.f32 %v8532, %v8726
    %v8728 = vpop.f32.mrb[0].mxu0
    %8729 = vmatprep.mubr.bf16.mxu0 0
    %8730 = vmatmul.mubr.bf16.gmra.mrb[0].mxu0 %v8559
    %v8731 = vpop.f32.mrb[0].mxu0
    %v8732 = vadd.f32 %v8532, %v8731
    %v8733 = vpop.f32.mrb[0].mxu0
    %v8734 = vpop.f32.mrb[0].mxu0
    %v8735 = vadd.f32 %v8532, %v8734
    %v8736 = vpop.f32.mrb[0].mxu0
    %8737 = vmatprep.mubr.bf16.mxu0 0
    %8738 = vmatmul.mubr.bf16.gmra.mrb[0].mxu0 %v8562
    %v8739 = vpop.f32.mrb[0].mxu0
    %v8740 = vadd.f32 %v8532, %v8739
    %v8741 = vpop.f32.mrb[0].mxu0
    %v8742 = vpop.f32.mrb[0].mxu0
    %v8743 = vadd.f32 %v8532, %v8742
    %v8744 = vpop.f32.mrb[0].mxu0
    %8745 = vmatprep.mubr.bf16.mxu0 0
    %8746 = vmatmul.mubr.bf16.gmra.mrb[0].mxu0 %v8565
    %v8747 = vpop.f32.mrb[0].mxu0
    %v8748 = vadd.f32 %v8532, %v8747
    %v8749 = vpop.f32.mrb[0].mxu0
    %v8750 = vpop.f32.mrb[0].mxu0
    %v8751 = vadd.f32 %v8532, %v8750
    %v8752 = vpop.f32.mrb[0].mxu0
    %8753 = vmatprep.mubr.bf16.mxu0 0
    %8754 = vmatmul.mubr.bf16.gmra.mrb[0].mxu0 %v8568
    %v8755 = vpop.f32.mrb[0].mxu0
    %v8756 = vadd.f32 %v8532, %v8755
    %v8757 = vpop.f32.mrb[0].mxu0
    %v8758 = vpop.f32.mrb[0].mxu0
    %v8759 = vadd.f32 %v8532, %v8758
    %v8760 = vpop.f32.mrb[0].mxu0
    %8761 = vmatprep.mubr.bf16.mxu0 0
    %8762 = vmatmul.mubr.bf16.gmra.mrb[0].mxu0 %v8571
    %v8763 = vpop.f32.mrb[0].mxu0
    %v8764 = vadd.f32 %v8532, %v8763
    %v8765 = vpop.f32.mrb[0].mxu0
    %v8766 = vpop.f32.mrb[0].mxu0
    %v8767 = vadd.f32 %v8532, %v8766
    %v8768 = vpop.f32.mrb[0].mxu0
    %8769 = vmatprep.mubr.bf16.mxu0 0
    %8770 = vmatmul.mubr.bf16.gmra.mrb[0].mxu0 %v8574
    %v8771 = vpop.f32.mrb[0].mxu0
    %v8772 = vadd.f32 %v8532, %v8771
    %v8773 = vpop.f32.mrb[0].mxu0
    %v8774 = vpop.f32.mrb[0].mxu0
    %v8775 = vadd.f32 %v8532, %v8774
    %v8776 = vpop.f32.mrb[0].mxu0
    %8777 = vmatprep.mubr.bf16.mxu0 0
    %8778 = vmatmul.mubr.bf16.gmra.mrb[0].mxu0 %v8577
    %v8779 = vpop.f32.mrb[0].mxu0
    %v8780 = vadd.f32 %v8532, %v8779
    %v8781 = vpop.f32.mrb[0].mxu0
    %v8782 = vpop.f32.mrb[0].mxu0
    %v8783 = vadd.f32 %v8532, %v8782
    %v8784 = vpop.f32.mrb[0].mxu0
    %8785 = vmatprep.mubr.bf16.mxu0 0
    %8786 = vmatmul.mubr.bf16.gmra.mrb[0].mxu0 %v8580
    %v8787 = vpop.f32.mrb[0].mxu0
    %v8788 = vadd.f32 %v8532, %v8787
    %v8789 = vpop.f32.mrb[0].mxu0
    %v8790 = vpop.f32.mrb[0].mxu0
    %v8791 = vadd.f32 %v8532, %v8790
    %v8792 = vpop.f32.mrb[0].mxu0
    %8793 = vmatprep.mubr.bf16.mxu0 0
    %8794 = vmatmul.mubr.bf16.gmra.mrb[0].mxu0 %v8583
    %v8795 = vpop.f32.mrb[0].mxu0
    %v8796 = vadd.f32 %v8532, %v8795
    %v8797 = vpop.f32.mrb[0].mxu0
    %v8798 = vpop.f32.mrb[0].mxu0
    %v8799 = vadd.f32 %v8532, %v8798
    %v8800 = vpop.f32.mrb[0].mxu0
    %8801 = vmatprep.mubr.bf16.mxu0 0
    %8802 = vmatmul.mubr.bf16.gmra.mrb[0].mxu0 %v8586
    %v8803 = vpop.f32.mrb[0].mxu0
    %v8804 = vadd.f32 %v8532, %v8803
    %v8805 = vpop.f32.mrb[0].mxu0
    %v8806 = vpop.f32.mrb[0].mxu0
    %v8807 = vadd.f32 %v8532, %v8806
    %v8808 = vpop.f32.mrb[0].mxu0
    %8809 = vmatprep.mubr.bf16.mxu0 0
    %8810 = vmatmul.mubr.bf16.gmra.mrb[0].mxu0 %v8589
    %v8811 = vpop.f32.mrb[0].mxu0
    %v8812 = vadd.f32 %v8532, %v8811
    %v8813 = vpop.f32.mrb[0].mxu0
    %v8814 = vpop.f32.mrb[0].mxu0
    %v8815 = vadd.f32 %v8532, %v8814
    %v8816 = vpop.f32.mrb[0].mxu0
    %8817 = vmatprep.mubr.bf16.mxu0 0
    %8818 = vmatmul.mubr.bf16.gmra.mrb[0].mxu0 %v8592
    %v8819 = vpop.f32.mrb[0].mxu0
    %v8820 = vadd.f32 %v8532, %v8819
    %v8821 = vpop.f32.mrb[0].mxu0
    %v8822 = vpop.f32.mrb[0].mxu0
    %v8823 = vadd.f32 %v8532, %v8822
    %v8824 = vpop.f32.mrb[0].mxu0
    %8825 = vmatprep.mubr.bf16.mxu0 0
    %8826 = vmatmul.mubr.bf16.gmra.mrb[0].mxu0 %v8595
    %v8827 = vpop.f32.mrb[0].mxu0
    %v8828 = vadd.f32 %v8532, %v8827
    %v8829 = vpop.f32.mrb[0].mxu0
    %v8830 = vpop.f32.mrb[0].mxu0
    %v8831 = vadd.f32 %v8532, %v8830
    %v8832 = vpop.f32.mrb[0].mxu0
    %8833 = vmatprep.mubr.bf16.mxu0 0
    %8834 = vmatmul.mubr.bf16.gmra.mrb[0].mxu0 %v8598
    %v8835 = vpop.f32.mrb[0].mxu0
    %v8836 = vadd.f32 %v8532, %v8835
    %v8837 = vpop.f32.mrb[0].mxu0
    %v8838 = vpop.f32.mrb[0].mxu0
    %v8839 = vadd.f32 %v8532, %v8838
    %v8840 = vpop.f32.mrb[0].mxu0
    %8841 = vmatprep.mubr.bf16.mxu0 0
    %8842 = vmatmul.mubr.bf16.gmra.mrb[0].mxu0 %v8601
    %v8843 = vpop.f32.mrb[0].mxu0
    %v8844 = vadd.f32 %v8532, %v8843
    %v8845 = vpop.f32.mrb[0].mxu0
    %v8846 = vpop.f32.mrb[0].mxu0
    %v8847 = vadd.f32 %v8532, %v8846
    %v8848 = vpop.f32.mrb[0].mxu0
    %8849 = vmatprep.mubr.bf16.mxu0 0
    %8850 = vmatmul.mubr.bf16.gmra.mrb[0].mxu0 %v8604
    %v8851 = vpop.f32.mrb[0].mxu0
    %v8852 = vadd.f32 %v8532, %v8851
    %v8853 = vpop.f32.mrb[0].mxu0
    %v8854 = vpop.f32.mrb[0].mxu0
    %v8855 = vadd.f32 %v8532, %v8854
    %v8856 = vpop.f32.mrb[0].mxu0
    %8857 = vmatprep.mubr.bf16.mxu0 0
    %8858 = vmatmul.mubr.bf16.gmra.mrb[0].mxu0 %v8607
    %v8859 = vpop.f32.mrb[0].mxu0
    %v8860 = vadd.f32 %v8532, %v8859
    %v8861 = vpop.f32.mrb[0].mxu0
    %v8862 = vpop.f32.mrb[0].mxu0
    %v8863 = vadd.f32 %v8532, %v8862
    %v8864 = vpop.f32.mrb[0].mxu0
    %8865 = vmatprep.mubr.bf16.mxu0 0
    %8866 = vmatmul.mubr.bf16.gmra.mrb[0].mxu0 %v8610
    %v8867 = vpop.f32.mrb[0].mxu0
    %v8868 = vadd.f32 %v8532, %v8867
    %v8869 = vpop.f32.mrb[0].mxu0
    %v8870 = vpop.f32.mrb[0].mxu0
    %v8871 = vadd.f32 %v8532, %v8870
    %v8872 = vpop.f32.mrb[0].mxu0
    %8873 = vmatprep.mubr.bf16.mxu0 0
    %8874 = vmatmul.mubr.bf16.gmra.mrb[0].mxu0 %v8613
    %v8875 = vpop.f32.mrb[0].mxu0
    %v8876 = vadd.f32 %v8532, %v8875
    %v8877 = vpop.f32.mrb[0].mxu0
    %v8878 = vpop.f32.mrb[0].mxu0
    %v8879 = vadd.f32 %v8532, %v8878
    %v8880 = vpop.f32.mrb[0].mxu0
    %8881 = vmatprep.mubr.bf16.mxu0 0
    %8882 = vmatmul.mubr.bf16.gmra.mrb[0].mxu0 %v8616
    %v8883 = vpop.f32.mrb[0].mxu0
    %v8884 = vadd.f32 %v8532, %v8883
    %v8885 = vpop.f32.mrb[0].mxu0
    %v8886 = vpop.f32.mrb[0].mxu0
    %v8887 = vadd.f32 %v8532, %v8886
    %v8888 = vpop.f32.mrb[0].mxu0
    %8889 = vmatprep.mubr.bf16.mxu0 0
    %8890 = vmatmul.mubr.bf16.gmra.mrb[0].mxu0 %v8619
    %v8891 = vpop.f32.mrb[0].mxu0
    %v8892 = vadd.f32 %v8532, %v8891
    %v8893 = vpop.f32.mrb[0].mxu0
    %v8894 = vpop.f32.mrb[0].mxu0
    %v8895 = vadd.f32 %v8532, %v8894
    %v8896 = vpop.f32.mrb[0].mxu0
    %8897 = vmatprep.mubr.bf16.mxu0 0
    %8898 = vmatmul.mubr.bf16.gmra.mrb[0].mxu0 %v8622
    %v8899 = vpop.f32.mrb[0].mxu0
    %v8900 = vadd.f32 %v8532, %v8899
    %v8901 = vpop.f32.mrb[0].mxu0
    %v8902 = vpop.f32.mrb[0].mxu0
    %v8903 = vadd.f32 %v8532, %v8902
    %v8904 = vpop.f32.mrb[0].mxu0
    %8905 = vmatprep.mubr.bf16.mxu0 0
    %8906 = vmatmul.mubr.bf16.gmra.mrb[0].mxu0 %v8625
    %v8907 = vpop.f32.mrb[0].mxu0
    %v8908 = vadd.f32 %v8532, %v8907
    %v8909 = vpop.f32.mrb[0].mxu0
    %v8910 = vpop.f32.mrb[0].mxu0
    %v8911 = vadd.f32 %v8532, %v8910
    %v8912 = vpop.f32.mrb[0].mxu0
    %8913 = vmatprep.mubr.bf16.mxu0 0
    %8914 = vmatmul.mubr.bf16.gmra.mrb[0].mxu0 %v8628
    %v8915 = vpop.f32.mrb[0].mxu0
    %v8916 = vadd.f32 %v8532, %v8915
    %v8917 = vpop.f32.mrb[0].mxu0
    %v8918 = vpop.f32.mrb[0].mxu0
    %v8919 = vadd.f32 %v8532, %v8918
    %v8920 = vpop.f32.mrb[0].mxu0
    %8921 = vdwg.mxu0
    %v8922 = vmax.f32 %v8668, 0.0
    %v8923 = vmax.f32 %v8671, 0.0
    %v8924 = vmax.f32 %v8676, 0.0
    %v8925 = vmax.f32 %v8679, 0.0
    %v8926 = vmax.f32 %v8684, 0.0
    %v8927 = vmax.f32 %v8687, 0.0
    %v8928 = vmax.f32 %v8692, 0.0
    %v8929 = vmax.f32 %v8695, 0.0
    %v8930 = vmax.f32 %v8700, 0.0
    %v8931 = vmax.f32 %v8703, 0.0
    %v8932 = vmax.f32 %v8708, 0.0
    %v8933 = vmax.f32 %v8711, 0.0
    %v8934 = vmax.f32 %v8716, 0.0
    %v8935 = vmax.f32 %v8719, 0.0
    %v8936 = vmax.f32 %v8724, 0.0
    %v8937 = vmax.f32 %v8727, 0.0
    %v8938 = vmax.f32 %v8732, 0.0
    %v8939 = vmax.f32 %v8735, 0.0
    %v8940 = vmax.f32 %v8740, 0.0
    %v8941 = vmax.f32 %v8743, 0.0
    %v8942 = vmax.f32 %v8748, 0.0
    %v8943 = vmax.f32 %v8751, 0.0
    %v8944 = vmax.f32 %v8756, 0.0
    %v8945 = vmax.f32 %v8759, 0.0
    %v8946 = vmax.f32 %v8764, 0.0
    %v8947 = vmax.f32 %v8767, 0.0
    %v8948 = vmax.f32 %v8772, 0.0
    %v8949 = vmax.f32 %v8775, 0.0
    %v8950 = vmax.f32 %v8780, 0.0
    %v8951 = vmax.f32 %v8783, 0.0
    %v8952 = vmax.f32 %v8788, 0.0
    %v8953 = vmax.f32 %v8791, 0.0
    %v8954 = vmax.f32 %v8796, 0.0
    %v8955 = vmax.f32 %v8799, 0.0
    %v8956 = vmax.f32 %v8804, 0.0
    %v8957 = vmax.f32 %v8807, 0.0
    %v8958 = vmax.f32 %v8812, 0.0
    %v8959 = vmax.f32 %v8815, 0.0
    %v8960 = vmax.f32 %v8820, 0.0
    %v8961 = vmax.f32 %v8823, 0.0
    %v8962 = vmax.f32 %v8828, 0.0
    %v8963 = vmax.f32 %v8831, 0.0
    %v8964 = vmax.f32 %v8836, 0.0
    %v8965 = vmax.f32 %v8839, 0.0
    %v8966 = vmax.f32 %v8844, 0.0
    %v8967 = vmax.f32 %v8847, 0.0
    %v8968 = vmax.f32 %v8852, 0.0
    %v8969 = vmax.f32 %v8855, 0.0
    %v8970 = vmax.f32 %v8860, 0.0
    %v8971 = vmax.f32 %v8863, 0.0
    %v8972 = vmax.f32 %v8868, 0.0
    %v8973 = vmax.f32 %v8871, 0.0
    %v8974 = vmax.f32 %v8876, 0.0
    %v8975 = vmax.f32 %v8879, 0.0
    %v8976 = vmax.f32 %v8884, 0.0
    %v8977 = vmax.f32 %v8887, 0.0
    %v8978 = vmax.f32 %v8892, 0.0
    %v8979 = vmax.f32 %v8895, 0.0
    %v8980 = vmax.f32 %v8900, 0.0
    %v8981 = vmax.f32 %v8903, 0.0
    %v8982 = vmax.f32 %v8908, 0.0
    %v8983 = vmax.f32 %v8911, 0.0
    %v8984 = vmax.f32 %v8916, 0.0
    %v8985 = vmax.f32 %v8919, 0.0
    %9050 = vrot.lane.b32.xlu0 %v4322, 8
    %v9051 = vpop.permute.xlu0 %9050
    %9052 = vrot.lane.b32.xlu0 %v4323, 8
    %v9053 = vpop.permute.xlu0 %9052
    %9054 = vrot.lane.b32.xlu0 %v4324, 8
    %v9055 = vpop.permute.xlu0 %9054
    %9056 = vrot.lane.b32.xlu0 %v4325, 8
    %v9057 = vpop.permute.xlu0 %9056
    %9058 = vrot.lane.b32.xlu0 %v4326, 8
    %v9059 = vpop.permute.xlu0 %9058
    %9060 = vrot.lane.b32.xlu0 %v4327, 8
    %v9061 = vpop.permute.xlu0 %9060
    %9062 = vrot.lane.b32.xlu0 %v4328, 8
    %v9063 = vpop.permute.xlu0 %9062
    %9064 = vrot.lane.b32.xlu0 %v4329, 8
    %v9065 = vpop.permute.xlu0 %9064
    %9066 = vrot.lane.b32.xlu0 %v4330, 8
    %v9067 = vpop.permute.xlu0 %9066
    %9068 = vrot.lane.b32.xlu0 %v4331, 8
    %v9069 = vpop.permute.xlu0 %9068
    %9070 = vrot.lane.b32.xlu0 %v4332, 8
    %v9071 = vpop.permute.xlu0 %9070
    %9072 = vrot.lane.b32.xlu0 %v4333, 8
    %v9073 = vpop.permute.xlu0 %9072
    %9074 = vrot.lane.b32.xlu0 %v4334, 8
    %v9075 = vpop.permute.xlu0 %9074
    %9076 = vrot.lane.b32.xlu0 %v4335, 8
    %v9077 = vpop.permute.xlu0 %9076
    %9078 = vrot.lane.b32.xlu0 %v4336, 8
    %v9079 = vpop.permute.xlu0 %9078
    %9080 = vrot.lane.b32.xlu0 %v4337, 8
    %v9081 = vpop.permute.xlu0 %9080
    %9082 = vrot.lane.b32.xlu0 %v4338, 8
    %v9083 = vpop.permute.xlu0 %9082
    %9084 = vrot.lane.b32.xlu0 %v4339, 8
    %v9085 = vpop.permute.xlu0 %9084
    %9086 = vrot.lane.b32.xlu0 %v4340, 8
    %v9087 = vpop.permute.xlu0 %9086
    %9088 = vrot.lane.b32.xlu0 %v4341, 8
    %v9089 = vpop.permute.xlu0 %9088
    %9090 = vrot.lane.b32.xlu0 %v4342, 8
    %v9091 = vpop.permute.xlu0 %9090
    %9092 = vrot.lane.b32.xlu0 %v4343, 8
    %v9093 = vpop.permute.xlu0 %9092
    %9094 = vrot.lane.b32.xlu0 %v4344, 8
    %v9095 = vpop.permute.xlu0 %9094
    %9096 = vrot.lane.b32.xlu0 %v4345, 8
    %v9097 = vpop.permute.xlu0 %9096
    %9098 = vrot.lane.b32.xlu0 %v4346, 8
    %v9099 = vpop.permute.xlu0 %9098
    %9100 = vrot.lane.b32.xlu0 %v4347, 8
    %v9101 = vpop.permute.xlu0 %9100
    %9102 = vrot.lane.b32.xlu0 %v4348, 8
    %v9103 = vpop.permute.xlu0 %9102
    %9104 = vrot.lane.b32.xlu0 %v4349, 8
    %v9105 = vpop.permute.xlu0 %9104
    %9106 = vrot.lane.b32.xlu0 %v4350, 8
    %v9107 = vpop.permute.xlu0 %9106
    %9108 = vrot.lane.b32.xlu0 %v4351, 8
    %v9109 = vpop.permute.xlu0 %9108
    %9110 = vrot.lane.b32.xlu0 %v4352, 8
    %v9111 = vpop.permute.xlu0 %9110
    %9112 = vrot.lane.b32.xlu0 %v4353, 8
    %v9113 = vpop.permute.xlu0 %9112
    %9114 = vrot.lane.b32.xlu0 %v4354, 8
    %v9115 = vpop.permute.xlu0 %9114
    %9116 = vrot.lane.b32.xlu0 %v4355, 8
    %v9117 = vpop.permute.xlu0 %9116
    %9118 = vrot.lane.b32.xlu0 %v4356, 8
    %v9119 = vpop.permute.xlu0 %9118
    %9120 = vrot.lane.b32.xlu0 %v4357, 8
    %v9121 = vpop.permute.xlu0 %9120
    %9122 = vrot.lane.b32.xlu0 %v4358, 8
    %v9123 = vpop.permute.xlu0 %9122
    %9124 = vrot.lane.b32.xlu0 %v4359, 8
    %v9125 = vpop.permute.xlu0 %9124
    %9126 = vrot.lane.b32.xlu0 %v4360, 8
    %v9127 = vpop.permute.xlu0 %9126
    %9128 = vrot.lane.b32.xlu0 %v4361, 8
    %v9129 = vpop.permute.xlu0 %9128
    %9130 = vrot.lane.b32.xlu0 %v4362, 8
    %v9131 = vpop.permute.xlu0 %9130
    %9132 = vrot.lane.b32.xlu0 %v4363, 8
    %v9133 = vpop.permute.xlu0 %9132
    %9134 = vrot.lane.b32.xlu0 %v4364, 8
    %v9135 = vpop.permute.xlu0 %9134
    %9136 = vrot.lane.b32.xlu0 %v4365, 8
    %v9137 = vpop.permute.xlu0 %9136
    %9138 = vrot.lane.b32.xlu0 %v4366, 8
    %v9139 = vpop.permute.xlu0 %9138
    %9140 = vrot.lane.b32.xlu0 %v4367, 8
    %v9141 = vpop.permute.xlu0 %9140
    %9142 = vrot.lane.b32.xlu0 %v4368, 8
    %v9143 = vpop.permute.xlu0 %9142
    %9144 = vrot.lane.b32.xlu0 %v4369, 8
    %v9145 = vpop.permute.xlu0 %9144
    %9146 = vrot.lane.b32.xlu0 %v4370, 8
    %v9147 = vpop.permute.xlu0 %9146
    %9148 = vrot.lane.b32.xlu0 %v4371, 8
    %v9149 = vpop.permute.xlu0 %9148
    %9150 = vrot.lane.b32.xlu0 %v4372, 8
    %v9151 = vpop.permute.xlu0 %9150
    %9152 = vrot.lane.b32.xlu0 %v4373, 8
    %v9153 = vpop.permute.xlu0 %9152
    %9154 = vrot.lane.b32.xlu0 %v4374, 8
    %v9155 = vpop.permute.xlu0 %9154
    %9156 = vrot.lane.b32.xlu0 %v4375, 8
    %v9157 = vpop.permute.xlu0 %9156
    %9158 = vrot.lane.b32.xlu0 %v4376, 8
    %v9159 = vpop.permute.xlu0 %9158
    %9160 = vrot.lane.b32.xlu0 %v4377, 8
    %v9161 = vpop.permute.xlu0 %9160
    %9162 = vrot.lane.b32.xlu0 %v4378, 8
    %v9163 = vpop.permute.xlu0 %9162
    %9164 = vrot.lane.b32.xlu0 %v4379, 8
    %v9165 = vpop.permute.xlu0 %9164
    %9166 = vrot.lane.b32.xlu0 %v4380, 8
    %v9167 = vpop.permute.xlu0 %9166
    %9168 = vrot.lane.b32.xlu0 %v4381, 8
    %v9169 = vpop.permute.xlu0 %9168
    %9170 = vrot.lane.b32.xlu0 %v4382, 8
    %v9171 = vpop.permute.xlu0 %9170
    %9172 = vrot.lane.b32.xlu0 %v4383, 8
    %v9173 = vpop.permute.xlu0 %9172
    %9174 = vrot.lane.b32.xlu0 %v4384, 8
    %v9175 = vpop.permute.xlu0 %9174
    %9176 = vrot.lane.b32.xlu0 %v4385, 8
    %v9177 = vpop.permute.xlu0 %9176
    %9306 = vrot.lane.b32.xlu0 %v7374, 16
    %v9307 = vpop.permute.xlu0 %9306
    %9308 = vrot.lane.b32.xlu0 %v7375, 16
    %v9309 = vpop.permute.xlu0 %9308
    %9310 = vrot.lane.b32.xlu0 %v7376, 16
    %v9311 = vpop.permute.xlu0 %9310
    %9312 = vrot.lane.b32.xlu0 %v7377, 16
    %v9313 = vpop.permute.xlu0 %9312
    %9314 = vrot.lane.b32.xlu0 %v7378, 16
    %v9315 = vpop.permute.xlu0 %9314
    %9316 = vrot.lane.b32.xlu0 %v7379, 16
    %v9317 = vpop.permute.xlu0 %9316
    %9318 = vrot.lane.b32.xlu0 %v7380, 16
    %v9319 = vpop.permute.xlu0 %9318
    %9320 = vrot.lane.b32.xlu0 %v7381, 16
    %v9321 = vpop.permute.xlu0 %9320
    %9322 = vrot.lane.b32.xlu0 %v7382, 16
    %v9323 = vpop.permute.xlu0 %9322
    %9324 = vrot.lane.b32.xlu0 %v7383, 16
    %v9325 = vpop.permute.xlu0 %9324
    %9326 = vrot.lane.b32.xlu0 %v7384, 16
    %v9327 = vpop.permute.xlu0 %9326
    %9328 = vrot.lane.b32.xlu0 %v7385, 16
    %v9329 = vpop.permute.xlu0 %9328
    %9330 = vrot.lane.b32.xlu0 %v7386, 16
    %v9331 = vpop.permute.xlu0 %9330
    %9332 = vrot.lane.b32.xlu0 %v7387, 16
    %v9333 = vpop.permute.xlu0 %9332
    %9334 = vrot.lane.b32.xlu0 %v7388, 16
    %v9335 = vpop.permute.xlu0 %9334
    %9336 = vrot.lane.b32.xlu0 %v7389, 16
    %v9337 = vpop.permute.xlu0 %9336
    %9338 = vrot.lane.b32.xlu0 %v7390, 16
    %v9339 = vpop.permute.xlu0 %9338
    %9340 = vrot.lane.b32.xlu0 %v7391, 16
    %v9341 = vpop.permute.xlu0 %9340
    %9342 = vrot.lane.b32.xlu0 %v7392, 16
    %v9343 = vpop.permute.xlu0 %9342
    %9344 = vrot.lane.b32.xlu0 %v7393, 16
    %v9345 = vpop.permute.xlu0 %9344
    %9346 = vrot.lane.b32.xlu0 %v7394, 16
    %v9347 = vpop.permute.xlu0 %9346
    %9348 = vrot.lane.b32.xlu0 %v7395, 16
    %v9349 = vpop.permute.xlu0 %9348
    %9350 = vrot.lane.b32.xlu0 %v7396, 16
    %v9351 = vpop.permute.xlu0 %9350
    %9352 = vrot.lane.b32.xlu0 %v7397, 16
    %v9353 = vpop.permute.xlu0 %9352
    %9354 = vrot.lane.b32.xlu0 %v7398, 16
    %v9355 = vpop.permute.xlu0 %9354
    %9356 = vrot.lane.b32.xlu0 %v7399, 16
    %v9357 = vpop.permute.xlu0 %9356
    %9358 = vrot.lane.b32.xlu0 %v7400, 16
    %v9359 = vpop.permute.xlu0 %9358
    %9360 = vrot.lane.b32.xlu0 %v7401, 16
    %v9361 = vpop.permute.xlu0 %9360
    %9362 = vrot.lane.b32.xlu0 %v7402, 16
    %v9363 = vpop.permute.xlu0 %9362
    %9364 = vrot.lane.b32.xlu0 %v7403, 16
    %v9365 = vpop.permute.xlu0 %9364
    %9366 = vrot.lane.b32.xlu0 %v7404, 16
    %v9367 = vpop.permute.xlu0 %9366
    %9368 = vrot.lane.b32.xlu0 %v7405, 16
    %v9369 = vpop.permute.xlu0 %9368
    %9370 = vrot.lane.b32.xlu0 %v7406, 16
    %v9371 = vpop.permute.xlu0 %9370
    %9372 = vrot.lane.b32.xlu0 %v7407, 16
    %v9373 = vpop.permute.xlu0 %9372
    %9374 = vrot.lane.b32.xlu0 %v7408, 16
    %v9375 = vpop.permute.xlu0 %9374
    %9376 = vrot.lane.b32.xlu0 %v7409, 16
    %v9377 = vpop.permute.xlu0 %9376
    %9378 = vrot.lane.b32.xlu0 %v7410, 16
    %v9379 = vpop.permute.xlu0 %9378
    %9380 = vrot.lane.b32.xlu0 %v7411, 16
    %v9381 = vpop.permute.xlu0 %9380
    %9382 = vrot.lane.b32.xlu0 %v7412, 16
    %v9383 = vpop.permute.xlu0 %9382
    %9384 = vrot.lane.b32.xlu0 %v7413, 16
    %v9385 = vpop.permute.xlu0 %9384
    %9386 = vrot.lane.b32.xlu0 %v7414, 16
    %v9387 = vpop.permute.xlu0 %9386
    %9388 = vrot.lane.b32.xlu0 %v7415, 16
    %v9389 = vpop.permute.xlu0 %9388
    %9390 = vrot.lane.b32.xlu0 %v7416, 16
    %v9391 = vpop.permute.xlu0 %9390
    %9392 = vrot.lane.b32.xlu0 %v7417, 16
    %v9393 = vpop.permute.xlu0 %9392
    %9394 = vrot.lane.b32.xlu0 %v7418, 16
    %v9395 = vpop.permute.xlu0 %9394
    %9396 = vrot.lane.b32.xlu0 %v7419, 16
    %v9397 = vpop.permute.xlu0 %9396
    %9398 = vrot.lane.b32.xlu0 %v7420, 16
    %v9399 = vpop.permute.xlu0 %9398
    %9400 = vrot.lane.b32.xlu0 %v7421, 16
    %v9401 = vpop.permute.xlu0 %9400
    %9402 = vrot.lane.b32.xlu0 %v7422, 16
    %v9403 = vpop.permute.xlu0 %9402
    %9404 = vrot.lane.b32.xlu0 %v7423, 16
    %v9405 = vpop.permute.xlu0 %9404
    %9406 = vrot.lane.b32.xlu0 %v7424, 16
    %v9407 = vpop.permute.xlu0 %9406
    %9408 = vrot.lane.b32.xlu0 %v7425, 16
    %v9409 = vpop.permute.xlu0 %9408
    %9410 = vrot.lane.b32.xlu0 %v7426, 16
    %v9411 = vpop.permute.xlu0 %9410
    %9412 = vrot.lane.b32.xlu0 %v7427, 16
    %v9413 = vpop.permute.xlu0 %9412
    %9414 = vrot.lane.b32.xlu0 %v7428, 16
    %v9415 = vpop.permute.xlu0 %9414
    %9416 = vrot.lane.b32.xlu0 %v7429, 16
    %v9417 = vpop.permute.xlu0 %9416
    %9418 = vrot.lane.b32.xlu0 %v7430, 16
    %v9419 = vpop.permute.xlu0 %9418
    %9420 = vrot.lane.b32.xlu0 %v7431, 16
    %v9421 = vpop.permute.xlu0 %9420
    %9422 = vrot.lane.b32.xlu0 %v7432, 16
    %v9423 = vpop.permute.xlu0 %9422
    %9424 = vrot.lane.b32.xlu0 %v7433, 16
    %v9425 = vpop.permute.xlu0 %9424
    %9426 = vrot.lane.b32.xlu0 %v7434, 16
    %v9427 = vpop.permute.xlu0 %9426
    %9428 = vrot.lane.b32.xlu0 %v7435, 16
    %v9429 = vpop.permute.xlu0 %9428
    %9430 = vrot.lane.b32.xlu0 %v7436, 16
    %v9431 = vpop.permute.xlu0 %9430
    %9432 = vrot.lane.b32.xlu0 %v7437, 16
    %v9433 = vpop.permute.xlu0 %9432
    %9562 = vrot.lane.b32.xlu0 %v8922, 24
    %v9563 = vpop.permute.xlu0 %9562
    %9564 = vrot.lane.b32.xlu0 %v8923, 24
    %v9565 = vpop.permute.xlu0 %9564
    %9566 = vrot.lane.b32.xlu0 %v8924, 24
    %v9567 = vpop.permute.xlu0 %9566
    %9568 = vrot.lane.b32.xlu0 %v8925, 24
    %v9569 = vpop.permute.xlu0 %9568
    %9570 = vrot.lane.b32.xlu0 %v8926, 24
    %v9571 = vpop.permute.xlu0 %9570
    %9572 = vrot.lane.b32.xlu0 %v8927, 24
    %v9573 = vpop.permute.xlu0 %9572
    %9574 = vrot.lane.b32.xlu0 %v8928, 24
    %v9575 = vpop.permute.xlu0 %9574
    %9576 = vrot.lane.b32.xlu0 %v8929, 24
    %v9577 = vpop.permute.xlu0 %9576
    %9578 = vrot.lane.b32.xlu0 %v8930, 24
    %v9579 = vpop.permute.xlu0 %9578
    %9580 = vrot.lane.b32.xlu0 %v8931, 24
    %v9581 = vpop.permute.xlu0 %9580
    %9582 = vrot.lane.b32.xlu0 %v8932, 24
    %v9583 = vpop.permute.xlu0 %9582
    %9584 = vrot.lane.b32.xlu0 %v8933, 24
    %v9585 = vpop.permute.xlu0 %9584
    %9586 = vrot.lane.b32.xlu0 %v8934, 24
    %v9587 = vpop.permute.xlu0 %9586
    %9588 = vrot.lane.b32.xlu0 %v8935, 24
    %v9589 = vpop.permute.xlu0 %9588
    %9590 = vrot.lane.b32.xlu0 %v8936, 24
    %v9591 = vpop.permute.xlu0 %9590
    %9592 = vrot.lane.b32.xlu0 %v8937, 24
    %v9593 = vpop.permute.xlu0 %9592
    %9594 = vrot.lane.b32.xlu0 %v8938, 24
    %v9595 = vpop.permute.xlu0 %9594
    %9596 = vrot.lane.b32.xlu0 %v8939, 24
    %v9597 = vpop.permute.xlu0 %9596
    %9598 = vrot.lane.b32.xlu0 %v8940, 24
    %v9599 = vpop.permute.xlu0 %9598
    %9600 = vrot.lane.b32.xlu0 %v8941, 24
    %v9601 = vpop.permute.xlu0 %9600
    %9602 = vrot.lane.b32.xlu0 %v8942, 24
    %v9603 = vpop.permute.xlu0 %9602
    %9604 = vrot.lane.b32.xlu0 %v8943, 24
    %v9605 = vpop.permute.xlu0 %9604
    %9606 = vrot.lane.b32.xlu0 %v8944, 24
    %v9607 = vpop.permute.xlu0 %9606
    %9608 = vrot.lane.b32.xlu0 %v8945, 24
    %v9609 = vpop.permute.xlu0 %9608
    %9610 = vrot.lane.b32.xlu0 %v8946, 24
    %v9611 = vpop.permute.xlu0 %9610
    %9612 = vrot.lane.b32.xlu0 %v8947, 24
    %v9613 = vpop.permute.xlu0 %9612
    %9614 = vrot.lane.b32.xlu0 %v8948, 24
    %v9615 = vpop.permute.xlu0 %9614
    %9616 = vrot.lane.b32.xlu0 %v8949, 24
    %v9617 = vpop.permute.xlu0 %9616
    %9618 = vrot.lane.b32.xlu0 %v8950, 24
    %v9619 = vpop.permute.xlu0 %9618
    %9620 = vrot.lane.b32.xlu0 %v8951, 24
    %v9621 = vpop.permute.xlu0 %9620
    %9622 = vrot.lane.b32.xlu0 %v8952, 24
    %v9623 = vpop.permute.xlu0 %9622
    %9624 = vrot.lane.b32.xlu0 %v8953, 24
    %v9625 = vpop.permute.xlu0 %9624
    %9626 = vrot.lane.b32.xlu0 %v8954, 24
    %v9627 = vpop.permute.xlu0 %9626
    %9628 = vrot.lane.b32.xlu0 %v8955, 24
    %v9629 = vpop.permute.xlu0 %9628
    %9630 = vrot.lane.b32.xlu0 %v8956, 24
    %v9631 = vpop.permute.xlu0 %9630
    %9632 = vrot.lane.b32.xlu0 %v8957, 24
    %v9633 = vpop.permute.xlu0 %9632
    %9634 = vrot.lane.b32.xlu0 %v8958, 24
    %v9635 = vpop.permute.xlu0 %9634
    %9636 = vrot.lane.b32.xlu0 %v8959, 24
    %v9637 = vpop.permute.xlu0 %9636
    %9638 = vrot.lane.b32.xlu0 %v8960, 24
    %v9639 = vpop.permute.xlu0 %9638
    %9640 = vrot.lane.b32.xlu0 %v8961, 24
    %v9641 = vpop.permute.xlu0 %9640
    %9642 = vrot.lane.b32.xlu0 %v8962, 24
    %v9643 = vpop.permute.xlu0 %9642
    %9644 = vrot.lane.b32.xlu0 %v8963, 24
    %v9645 = vpop.permute.xlu0 %9644
    %9646 = vrot.lane.b32.xlu0 %v8964, 24
    %v9647 = vpop.permute.xlu0 %9646
    %9648 = vrot.lane.b32.xlu0 %v8965, 24
    %v9649 = vpop.permute.xlu0 %9648
    %9650 = vrot.lane.b32.xlu0 %v8966, 24
    %v9651 = vpop.permute.xlu0 %9650
    %9652 = vrot.lane.b32.xlu0 %v8967, 24
    %v9653 = vpop.permute.xlu0 %9652
    %9654 = vrot.lane.b32.xlu0 %v8968, 24
    %v9655 = vpop.permute.xlu0 %9654
    %9656 = vrot.lane.b32.xlu0 %v8969, 24
    %v9657 = vpop.permute.xlu0 %9656
    %9658 = vrot.lane.b32.xlu0 %v8970, 24
    %v9659 = vpop.permute.xlu0 %9658
    %9660 = vrot.lane.b32.xlu0 %v8971, 24
    %v9661 = vpop.permute.xlu0 %9660
    %9662 = vrot.lane.b32.xlu0 %v8972, 24
    %v9663 = vpop.permute.xlu0 %9662
    %9664 = vrot.lane.b32.xlu0 %v8973, 24
    %v9665 = vpop.permute.xlu0 %9664
    %9666 = vrot.lane.b32.xlu0 %v8974, 24
    %v9667 = vpop.permute.xlu0 %9666
    %9668 = vrot.lane.b32.xlu0 %v8975, 24
    %v9669 = vpop.permute.xlu0 %9668
    %9670 = vrot.lane.b32.xlu0 %v8976, 24
    %v9671 = vpop.permute.xlu0 %9670
    %9672 = vrot.lane.b32.xlu0 %v8977, 24
    %v9673 = vpop.permute.xlu0 %9672
    %9674 = vrot.lane.b32.xlu0 %v8978, 24
    %v9675 = vpop.permute.xlu0 %9674
    %9676 = vrot.lane.b32.xlu0 %v8979, 24
    %v9677 = vpop.permute.xlu0 %9676
    %9678 = vrot.lane.b32.xlu0 %v8980, 24
    %v9679 = vpop.permute.xlu0 %9678
    %9680 = vrot.lane.b32.xlu0 %v8981, 24
    %v9681 = vpop.permute.xlu0 %9680
    %9682 = vrot.lane.b32.xlu0 %v8982, 24
    %v9683 = vpop.permute.xlu0 %9682
    %9684 = vrot.lane.b32.xlu0 %v8983, 24
    %v9685 = vpop.permute.xlu0 %9684
    %9686 = vrot.lane.b32.xlu0 %v8984, 24
    %v9687 = vpop.permute.xlu0 %9686
    %9688 = vrot.lane.b32.xlu0 %v8985, 24
    %v9689 = vpop.permute.xlu0 %9688
    %vm9754 = vcmask 64512
    %v9755 = vsel %vm9754, %v1045, %v9051
    %v9756 = vsel %vm9754, %v1048, %v9053
    %v9757 = vsel %vm9754, %v1051, %v9055
    %v9758 = vsel %vm9754, %v1054, %v9057
    %v9759 = vsel %vm9754, %v1057, %v9059
    %v9760 = vsel %vm9754, %v1060, %v9061
    %v9761 = vsel %vm9754, %v1063, %v9063
    %v9762 = vsel %vm9754, %v1066, %v9065
    %v9763 = vsel %vm9754, %v1069, %v9067
    %v9764 = vsel %vm9754, %v1072, %v9069
    %v9765 = vsel %vm9754, %v1075, %v9071
    %v9766 = vsel %vm9754, %v1078, %v9073
    %v9767 = vsel %vm9754, %v1081, %v9075
    %v9768 = vsel %vm9754, %v1084, %v9077
    %v9769 = vsel %vm9754, %v1087, %v9079
    %v9770 = vsel %vm9754, %v1090, %v9081
    %v9771 = vsel %vm9754, %v1093, %v9083
    %v9772 = vsel %vm9754, %v1096, %v9085
    %v9773 = vsel %vm9754, %v1099, %v9087
    %v9774 = vsel %vm9754, %v1102, %v9089
    %v9775 = vsel %vm9754, %v1105, %v9091
    %v9776 = vsel %vm9754, %v1108, %v9093
    %v9777 = vsel %vm9754, %v1111, %v9095
    %v9778 = vsel %vm9754, %v1114, %v9097
    %v9779 = vsel %vm9754, %v1117, %v9099
    %v9780 = vsel %vm9754, %v1120, %v9101
    %v9781 = vsel %vm9754, %v1123, %v9103
    %v9782 = vsel %vm9754, %v1126, %v9105
    %v9783 = vsel %vm9754, %v1129, %v9107
    %v9784 = vsel %vm9754, %v1132, %v9109
    %v9785 = vsel %vm9754, %v1135, %v9111
    %v9786 = vsel %vm9754, %v1138, %v9113
    %v9787 = vsel %vm9754, %v1141, %v9115
    %v9788 = vsel %vm9754, %v1144, %v9117
    %v9789 = vsel %vm9754, %v1147, %v9119
    %v9790 = vsel %vm9754, %v1150, %v9121
    %v9791 = vsel %vm9754, %v1153, %v9123
    %v9792 = vsel %vm9754, %v1156, %v9125
    %v9793 = vsel %vm9754, %v1159, %v9127
    %v9794 = vsel %vm9754, %v1162, %v9129
    %v9795 = vsel %vm9754, %v1165, %v9131
    %v9796 = vsel %vm9754, %v1168, %v9133
    %v9797 = vsel %vm9754, %v1171, %v9135
    %v9798 = vsel %vm9754, %v1174, %v9137
    %v9799 = vsel %vm9754, %v1177, %v9139
    %v9800 = vsel %vm9754, %v1180, %v9141
    %v9801 = vsel %vm9754, %v1183, %v9143
    %v9802 = vsel %vm9754, %v1186, %v9145
    %v9803 = vsel %vm9754, %v1189, %v9147
    %v9804 = vsel %vm9754, %v1192, %v9149
    %v9805 = vsel %vm9754, %v1195, %v9151
    %v9806 = vsel %vm9754, %v1198, %v9153
    %v9807 = vsel %vm9754, %v1201, %v9155
    %v9808 = vsel %vm9754, %v1204, %v9157
    %v9809 = vsel %vm9754, %v1207, %v9159
    %v9810 = vsel %vm9754, %v1210, %v9161
    %v9811 = vsel %vm9754, %v1213, %v9163
    %v9812 = vsel %vm9754, %v1216, %v9165
    %v9813 = vsel %vm9754, %v1219, %v9167
    %v9814 = vsel %vm9754, %v1222, %v9169
    %v9815 = vsel %vm9754, %v1225, %v9171
    %v9816 = vsel %vm9754, %v1228, %v9173
    %v9817 = vsel %vm9754, %v1231, %v9175
    %v9818 = vsel %vm9754, %v1234, %v9177
    %vm9819 = vcmask 130048
    %v9820 = vsel %vm9819, %v9755, %v9307
    %v9821 = vsel %vm9819, %v9756, %v9309
    %v9822 = vsel %vm9819, %v9757, %v9311
    %v9823 = vsel %vm9819, %v9758, %v9313
    %v9824 = vsel %vm9819, %v9759, %v9315
    %v9825 = vsel %vm9819, %v9760, %v9317
    %v9826 = vsel %vm9819, %v9761, %v9319
    %v9827 = vsel %vm9819, %v9762, %v9321
    %v9828 = vsel %vm9819, %v9763, %v9323
    %v9829 = vsel %vm9819, %v9764, %v9325
    %v9830 = vsel %vm9819, %v9765, %v9327
    %v9831 = vsel %vm9819, %v9766, %v9329
    %v9832 = vsel %vm9819, %v9767, %v9331
    %v9833 = vsel %vm9819, %v9768, %v9333
    %v9834 = vsel %vm9819, %v9769, %v9335
    %v9835 = vsel %vm9819, %v9770, %v9337
    %v9836 = vsel %vm9819, %v9771, %v9339
    %v9837 = vsel %vm9819, %v9772, %v9341
    %v9838 = vsel %vm9819, %v9773, %v9343
    %v9839 = vsel %vm9819, %v9774, %v9345
    %v9840 = vsel %vm9819, %v9775, %v9347
    %v9841 = vsel %vm9819, %v9776, %v9349
    %v9842 = vsel %vm9819, %v9777, %v9351
    %v9843 = vsel %vm9819, %v9778, %v9353
    %v9844 = vsel %vm9819, %v9779, %v9355
    %v9845 = vsel %vm9819, %v9780, %v9357
    %v9846 = vsel %vm9819, %v9781, %v9359
    %v9847 = vsel %vm9819, %v9782, %v9361
    %v9848 = vsel %vm9819, %v9783, %v9363
    %v9849 = vsel %vm9819, %v9784, %v9365
    %v9850 = vsel %vm9819, %v9785, %v9367
    %v9851 = vsel %vm9819, %v9786, %v9369
    %v9852 = vsel %vm9819, %v9787, %v9371
    %v9853 = vsel %vm9819, %v9788, %v9373
    %v9854 = vsel %vm9819, %v9789, %v9375
    %v9855 = vsel %vm9819, %v9790, %v9377
    %v9856 = vsel %vm9819, %v9791, %v9379
    %v9857 = vsel %vm9819, %v9792, %v9381
    %v9858 = vsel %vm9819, %v9793, %v9383
    %v9859 = vsel %vm9819, %v9794, %v9385
    %v9860 = vsel %vm9819, %v9795, %v9387
    %v9861 = vsel %vm9819, %v9796, %v9389
    %v9862 = vsel %vm9819, %v9797, %v9391
    %v9863 = vsel %vm9819, %v9798, %v9393
    %v9864 = vsel %vm9819, %v9799, %v9395
    %v9865 = vsel %vm9819, %v9800, %v9397
    %v9866 = vsel %vm9819, %v9801, %v9399
    %v9867 = vsel %vm9819, %v9802, %v9401
    %v9868 = vsel %vm9819, %v9803, %v9403
    %v9869 = vsel %vm9819, %v9804, %v9405
    %v9870 = vsel %vm9819, %v9805, %v9407
    %v9871 = vsel %vm9819, %v9806, %v9409
    %v9872 = vsel %vm9819, %v9807, %v9411
    %v9873 = vsel %vm9819, %v9808, %v9413
    %v9874 = vsel %vm9819, %v9809, %v9415
    %v9875 = vsel %vm9819, %v9810, %v9417
    %v9876 = vsel %vm9819, %v9811, %v9419
    %v9877 = vsel %vm9819, %v9812, %v9421
    %v9878 = vsel %vm9819, %v9813, %v9423
    %v9879 = vsel %vm9819, %v9814, %v9425
    %v9880 = vsel %vm9819, %v9815, %v9427
    %v9881 = vsel %vm9819, %v9816, %v9429
    %v9882 = vsel %vm9819, %v9817, %v9431
    %v9883 = vsel %vm9819, %v9818, %v9433
    %vm9884 = vcmask 195584
    %v9885 = vsel %vm9884, %v9820, %v9563
    %v9886 = vsel %vm9884, %v9821, %v9565
    %v9887 = vsel %vm9884, %v9822, %v9567
    %v9888 = vsel %vm9884, %v9823, %v9569
    %v9889 = vsel %vm9884, %v9824, %v9571
    %v9890 = vsel %vm9884, %v9825, %v9573
    %v9891 = vsel %vm9884, %v9826, %v9575
    %v9892 = vsel %vm9884, %v9827, %v9577
    %v9893 = vsel %vm9884, %v9828, %v9579
    %v9894 = vsel %vm9884, %v9829, %v9581
    %v9895 = vsel %vm9884, %v9830, %v9583
    %v9896 = vsel %vm9884, %v9831, %v9585
    %v9897 = vsel %vm9884, %v9832, %v9587
    %v9898 = vsel %vm9884, %v9833, %v9589
    %v9899 = vsel %vm9884, %v9834, %v9591
    %v9900 = vsel %vm9884, %v9835, %v9593
    %v9901 = vsel %vm9884, %v9836, %v9595
    %v9902 = vsel %vm9884, %v9837, %v9597
    %v9903 = vsel %vm9884, %v9838, %v9599
    %v9904 = vsel %vm9884, %v9839, %v9601
    %v9905 = vsel %vm9884, %v9840, %v9603
    %v9906 = vsel %vm9884, %v9841, %v9605
    %v9907 = vsel %vm9884, %v9842, %v9607
    %v9908 = vsel %vm9884, %v9843, %v9609
    %v9909 = vsel %vm9884, %v9844, %v9611
    %v9910 = vsel %vm9884, %v9845, %v9613
    %v9911 = vsel %vm9884, %v9846, %v9615
    %v9912 = vsel %vm9884, %v9847, %v9617
    %v9913 = vsel %vm9884, %v9848, %v9619
    %v9914 = vsel %vm9884, %v9849, %v9621
    %v9915 = vsel %vm9884, %v9850, %v9623
    %v9916 = vsel %vm9884, %v9851, %v9625
    %v9917 = vsel %vm9884, %v9852, %v9627
    %v9918 = vsel %vm9884, %v9853, %v9629
    %v9919 = vsel %vm9884, %v9854, %v9631
    %v9920 = vsel %vm9884, %v9855, %v9633
    %v9921 = vsel %vm9884, %v9856, %v9635
    %v9922 = vsel %vm9884, %v9857, %v9637
    %v9923 = vsel %vm9884, %v9858, %v9639
    %v9924 = vsel %vm9884, %v9859, %v9641
    %v9925 = vsel %vm9884, %v9860, %v9643
    %v9926 = vsel %vm9884, %v9861, %v9645
    %v9927 = vsel %vm9884, %v9862, %v9647
    %v9928 = vsel %vm9884, %v9863, %v9649
    %v9929 = vsel %vm9884, %v9864, %v9651
    %v9930 = vsel %vm9884, %v9865, %v9653
    %v9931 = vsel %vm9884, %v9866, %v9655
    %v9932 = vsel %vm9884, %v9867, %v9657
    %v9933 = vsel %vm9884, %v9868, %v9659
    %v9934 = vsel %vm9884, %v9869, %v9661
    %v9935 = vsel %vm9884, %v9870, %v9663
    %v9936 = vsel %vm9884, %v9871, %v9665
    %v9937 = vsel %vm9884, %v9872, %v9667
    %v9938 = vsel %vm9884, %v9873, %v9669
    %v9939 = vsel %vm9884, %v9874, %v9671
    %v9940 = vsel %vm9884, %v9875, %v9673
    %v9941 = vsel %vm9884, %v9876, %v9675
    %v9942 = vsel %vm9884, %v9877, %v9677
    %v9943 = vsel %vm9884, %v9878, %v9679
    %v9944 = vsel %vm9884, %v9879, %v9681
    %v9945 = vsel %vm9884, %v9880, %v9683
    %v9946 = vsel %vm9884, %v9881, %v9685
    %v9947 = vsel %vm9884, %v9882, %v9687
    %v9948 = vsel %vm9884, %v9883, %v9689
    %v9949 = vpack.c.bf16 %v9886, %v9885
    %v9950 = vpack.c.bf16 %v9888, %v9887
    %v9951 = vpack.c.bf16 %v9890, %v9889
    %v9952 = vpack.c.bf16 %v9892, %v9891
    %v9953 = vpack.c.bf16 %v9894, %v9893
    %v9954 = vpack.c.bf16 %v9896, %v9895
    %v9955 = vpack.c.bf16 %v9898, %v9897
    %v9956 = vpack.c.bf16 %v9900, %v9899
    %v9957 = vpack.c.bf16 %v9902, %v9901
    %v9958 = vpack.c.bf16 %v9904, %v9903
    %v9959 = vpack.c.bf16 %v9906, %v9905
    %v9960 = vpack.c.bf16 %v9908, %v9907
    %v9961 = vpack.c.bf16 %v9910, %v9909
    %v9962 = vpack.c.bf16 %v9912, %v9911
    %v9963 = vpack.c.bf16 %v9914, %v9913
    %v9964 = vpack.c.bf16 %v9916, %v9915
    %v9965 = vpack.c.bf16 %v9918, %v9917
    %v9966 = vpack.c.bf16 %v9920, %v9919
    %v9967 = vpack.c.bf16 %v9922, %v9921
    %v9968 = vpack.c.bf16 %v9924, %v9923
    %v9969 = vpack.c.bf16 %v9926, %v9925
    %v9970 = vpack.c.bf16 %v9928, %v9927
    %v9971 = vpack.c.bf16 %v9930, %v9929
    %v9972 = vpack.c.bf16 %v9932, %v9931
    %v9973 = vpack.c.bf16 %v9934, %v9933
    %v9974 = vpack.c.bf16 %v9936, %v9935
    %v9975 = vpack.c.bf16 %v9938, %v9937
    %v9976 = vpack.c.bf16 %v9940, %v9939
    %v9977 = vpack.c.bf16 %v9942, %v9941
    %v9978 = vpack.c.bf16 %v9944, %v9943
    %v9979 = vpack.c.bf16 %v9946, %v9945
    %v9980 = vpack.c.bf16 %v9948, %v9947
    %v10013 = vunpack.c.l.b16 %v9949
    %v10014 = vunpack.c.h.b16 %v9949
    %v10015 = vunpack.c.l.b16 %v9950
    %v10016 = vunpack.c.h.b16 %v9950
    %v10017 = vunpack.c.l.b16 %v9951
    %v10018 = vunpack.c.h.b16 %v9951
    %v10019 = vunpack.c.l.b16 %v9952
    %v10020 = vunpack.c.h.b16 %v9952
    %v10021 = vunpack.c.l.b16 %v9953
    %v10022 = vunpack.c.h.b16 %v9953
    %v10023 = vunpack.c.l.b16 %v9954
    %v10024 = vunpack.c.h.b16 %v9954
    %v10025 = vunpack.c.l.b16 %v9955
    %v10026 = vunpack.c.h.b16 %v9955
    %v10027 = vunpack.c.l.b16 %v9956
    %v10028 = vunpack.c.h.b16 %v9956
    %v10029 = vunpack.c.l.b16 %v9957
    %v10030 = vunpack.c.h.b16 %v9957
    %v10031 = vunpack.c.l.b16 %v9958
    %v10032 = vunpack.c.h.b16 %v9958
    %v10033 = vunpack.c.l.b16 %v9959
    %v10034 = vunpack.c.h.b16 %v9959
    %v10035 = vunpack.c.l.b16 %v9960
    %v10036 = vunpack.c.h.b16 %v9960
    %v10037 = vunpack.c.l.b16 %v9961
    %v10038 = vunpack.c.h.b16 %v9961
    %v10039 = vunpack.c.l.b16 %v9962
    %v10040 = vunpack.c.h.b16 %v9962
    %v10041 = vunpack.c.l.b16 %v9963
    %v10042 = vunpack.c.h.b16 %v9963
    %v10043 = vunpack.c.l.b16 %v9964
    %v10044 = vunpack.c.h.b16 %v9964
    %v10045 = vunpack.c.l.b16 %v9965
    %v10046 = vunpack.c.h.b16 %v9965
    %v10047 = vunpack.c.l.b16 %v9966
    %v10048 = vunpack.c.h.b16 %v9966
    %v10049 = vunpack.c.l.b16 %v9967
    %v10050 = vunpack.c.h.b16 %v9967
    %v10051 = vunpack.c.l.b16 %v9968
    %v10052 = vunpack.c.h.b16 %v9968
    %v10053 = vunpack.c.l.b16 %v9969
    %v10054 = vunpack.c.h.b16 %v9969
    %v10055 = vunpack.c.l.b16 %v9970
    %v10056 = vunpack.c.h.b16 %v9970
    %v10057 = vunpack.c.l.b16 %v9971
    %v10058 = vunpack.c.h.b16 %v9971
    %v10059 = vunpack.c.l.b16 %v9972
    %v10060 = vunpack.c.h.b16 %v9972
    %v10061 = vunpack.c.l.b16 %v9973
    %v10062 = vunpack.c.h.b16 %v9973
    %v10063 = vunpack.c.l.b16 %v9974
    %v10064 = vunpack.c.h.b16 %v9974
    %v10065 = vunpack.c.l.b16 %v9975
    %v10066 = vunpack.c.h.b16 %v9975
    %v10067 = vunpack.c.l.b16 %v9976
    %v10068 = vunpack.c.h.b16 %v9976
    %v10069 = vunpack.c.l.b16 %v9977
    %v10070 = vunpack.c.h.b16 %v9977
    %v10071 = vunpack.c.l.b16 %v9978
    %v10072 = vunpack.c.h.b16 %v9978
    %v10073 = vunpack.c.l.b16 %v9979
    %v10074 = vunpack.c.h.b16 %v9979
    %v10075 = vunpack.c.l.b16 %v9980
    %v10076 = vunpack.c.h.b16 %v9980
    %v10077 = vpack.c.b16 %v10013, %v10013
    %v10078 = vpack.c.b16 %v10014, %v10014
    %v10079 = vpack.c.b16 %v10015, %v10015
    %v10080 = vpack.c.b16 %v10016, %v10016
    %v10081 = vpack.c.b16 %v10017, %v10017
    %v10082 = vpack.c.b16 %v10018, %v10018
    %v10083 = vpack.c.b16 %v10019, %v10019
    %v10084 = vpack.c.b16 %v10020, %v10020
    %v10085 = vpack.c.b16 %v10021, %v10021
    %v10086 = vpack.c.b16 %v10022, %v10022
    %v10087 = vpack.c.b16 %v10023, %v10023
    %v10088 = vpack.c.b16 %v10024, %v10024
    %v10089 = vpack.c.b16 %v10025, %v10025
    %v10090 = vpack.c.b16 %v10026, %v10026
    %v10091 = vpack.c.b16 %v10027, %v10027
    %v10092 = vpack.c.b16 %v10028, %v10028
    %v10093 = vpack.c.b16 %v10029, %v10029
    %v10094 = vpack.c.b16 %v10030, %v10030
    %v10095 = vpack.c.b16 %v10031, %v10031
    %v10096 = vpack.c.b16 %v10032, %v10032
    %v10097 = vpack.c.b16 %v10033, %v10033
    %v10098 = vpack.c.b16 %v10034, %v10034
    %v10099 = vpack.c.b16 %v10035, %v10035
    %v10100 = vpack.c.b16 %v10036, %v10036
    %v10101 = vpack.c.b16 %v10037, %v10037
    %v10102 = vpack.c.b16 %v10038, %v10038
    %v10103 = vpack.c.b16 %v10039, %v10039
    %v10104 = vpack.c.b16 %v10040, %v10040
    %v10105 = vpack.c.b16 %v10041, %v10041
    %v10106 = vpack.c.b16 %v10042, %v10042
    %v10107 = vpack.c.b16 %v10043, %v10043
    %v10108 = vpack.c.b16 %v10044, %v10044
    %v10109 = vpack.c.b16 %v10045, %v10045
    %v10110 = vpack.c.b16 %v10046, %v10046
    %v10111 = vpack.c.b16 %v10047, %v10047
    %v10112 = vpack.c.b16 %v10048, %v10048
    %v10113 = vpack.c.b16 %v10049, %v10049
    %v10114 = vpack.c.b16 %v10050, %v10050
    %v10115 = vpack.c.b16 %v10051, %v10051
    %v10116 = vpack.c.b16 %v10052, %v10052
    %v10117 = vpack.c.b16 %v10053, %v10053
    %v10118 = vpack.c.b16 %v10054, %v10054
    %v10119 = vpack.c.b16 %v10055, %v10055
    %v10120 = vpack.c.b16 %v10056, %v10056
    %v10121 = vpack.c.b16 %v10057, %v10057
    %v10122 = vpack.c.b16 %v10058, %v10058
    %v10123 = vpack.c.b16 %v10059, %v10059
    %v10124 = vpack.c.b16 %v10060, %v10060
    %v10125 = vpack.c.b16 %v10061, %v10061
    %v10126 = vpack.c.b16 %v10062, %v10062
    %v10127 = vpack.c.b16 %v10063, %v10063
    %v10128 = vpack.c.b16 %v10064, %v10064
    %v10129 = vpack.c.b16 %v10065, %v10065
    %v10130 = vpack.c.b16 %v10066, %v10066
    %v10131 = vpack.c.b16 %v10067, %v10067
    %v10132 = vpack.c.b16 %v10068, %v10068
    %v10133 = vpack.c.b16 %v10069, %v10069
    %v10134 = vpack.c.b16 %v10070, %v10070
    %v10135 = vpack.c.b16 %v10071, %v10071
    %v10136 = vpack.c.b16 %v10072, %v10072
    %v10137 = vpack.c.b16 %v10073, %v10073
    %v10138 = vpack.c.b16 %v10074, %v10074
    %v10139 = vpack.c.b16 %v10075, %v10075
    %v10140 = vpack.c.b16 %v10076, %v10076
    %vm10205 = vcmask 257024
    %10206 = vst.msk [vmem:[#allocation2] sm:$0xf] %vm10205, %v10077
    %10207 = vst.msk [vmem:[#allocation2 + $0x4] sm:$0xf] %vm10205, %v10078
    %10208 = vst.msk [vmem:[#allocation2 + $0x8] sm:$0xf] %vm10205, %v10079
    %10209 = vst.msk [vmem:[#allocation2 + $0xc] sm:$0xf] %vm10205, %v10080
    %10210 = vst.msk [vmem:[#allocation2 + $0x10] sm:$0xf] %vm10205, %v10081
    %10211 = vst.msk [vmem:[#allocation2 + $0x14] sm:$0xf] %vm10205, %v10082
    %10212 = vst.msk [vmem:[#allocation2 + $0x18] sm:$0xf] %vm10205, %v10083
    %10213 = vst.msk [vmem:[#allocation2 + $0x1c] sm:$0xf] %vm10205, %v10084
    %10214 = vst.msk [vmem:[#allocation2 + $0x20] sm:$0xf] %vm10205, %v10085
    %10215 = vst.msk [vmem:[#allocation2 + $0x24] sm:$0xf] %vm10205, %v10086
    %10216 = vst.msk [vmem:[#allocation2 + $0x28] sm:$0xf] %vm10205, %v10087
    %10217 = vst.msk [vmem:[#allocation2 + $0x2c] sm:$0xf] %vm10205, %v10088
    %10218 = vst.msk [vmem:[#allocation2 + $0x30] sm:$0xf] %vm10205, %v10089
    %10219 = vst.msk [vmem:[#allocation2 + $0x34] sm:$0xf] %vm10205, %v10090
    %10220 = vst.msk [vmem:[#allocation2 + $0x38] sm:$0xf] %vm10205, %v10091
    %10221 = vst.msk [vmem:[#allocation2 + $0x3c] sm:$0xf] %vm10205, %v10092
    %10222 = vst.msk [vmem:[#allocation2 + $0x40] sm:$0xf] %vm10205, %v10093
    %10223 = vst.msk [vmem:[#allocation2 + $0x44] sm:$0xf] %vm10205, %v10094
    %10224 = vst.msk [vmem:[#allocation2 + $0x48] sm:$0xf] %vm10205, %v10095
    %10225 = vst.msk [vmem:[#allocation2 + $0x4c] sm:$0xf] %vm10205, %v10096
    %10226 = vst.msk [vmem:[#allocation2 + $0x50] sm:$0xf] %vm10205, %v10097
    %10227 = vst.msk [vmem:[#allocation2 + $0x54] sm:$0xf] %vm10205, %v10098
    %10228 = vst.msk [vmem:[#allocation2 + $0x58] sm:$0xf] %vm10205, %v10099
    %10229 = vst.msk [vmem:[#allocation2 + $0x5c] sm:$0xf] %vm10205, %v10100
    %10230 = vst.msk [vmem:[#allocation2 + $0x60] sm:$0xf] %vm10205, %v10101
    %10231 = vst.msk [vmem:[#allocation2 + $0x64] sm:$0xf] %vm10205, %v10102
    %10232 = vst.msk [vmem:[#allocation2 + $0x68] sm:$0xf] %vm10205, %v10103
    %10233 = vst.msk [vmem:[#allocation2 + $0x6c] sm:$0xf] %vm10205, %v10104
    %10234 = vst.msk [vmem:[#allocation2 + $0x70] sm:$0xf] %vm10205, %v10105
    %10235 = vst.msk [vmem:[#allocation2 + $0x74] sm:$0xf] %vm10205, %v10106
    %10236 = vst.msk [vmem:[#allocation2 + $0x78] sm:$0xf] %vm10205, %v10107
    %10237 = vst.msk [vmem:[#allocation2 + $0x7c] sm:$0xf] %vm10205, %v10108
    %10238 = vst.msk [vmem:[#allocation2 + $0x80] sm:$0xf] %vm10205, %v10109
    %10239 = vst.msk [vmem:[#allocation2 + $0x84] sm:$0xf] %vm10205, %v10110
    %10240 = vst.msk [vmem:[#allocation2 + $0x88] sm:$0xf] %vm10205, %v10111
    %10241 = vst.msk [vmem:[#allocation2 + $0x8c] sm:$0xf] %vm10205, %v10112
    %10242 = vst.msk [vmem:[#allocation2 + $0x90] sm:$0xf] %vm10205, %v10113
    %10243 = vst.msk [vmem:[#allocation2 + $0x94] sm:$0xf] %vm10205, %v10114
    %10244 = vst.msk [vmem:[#allocation2 + $0x98] sm:$0xf] %vm10205, %v10115
    %10245 = vst.msk [vmem:[#allocation2 + $0x9c] sm:$0xf] %vm10205, %v10116
    %10246 = vst.msk [vmem:[#allocation2 + $0xa0] sm:$0xf] %vm10205, %v10117
    %10247 = vst.msk [vmem:[#allocation2 + $0xa4] sm:$0xf] %vm10205, %v10118
    %10248 = vst.msk [vmem:[#allocation2 + $0xa8] sm:$0xf] %vm10205, %v10119
    %10249 = vst.msk [vmem:[#allocation2 + $0xac] sm:$0xf] %vm10205, %v10120
    %10250 = vst.msk [vmem:[#allocation2 + $0xb0] sm:$0xf] %vm10205, %v10121
    %10251 = vst.msk [vmem:[#allocation2 + $0xb4] sm:$0xf] %vm10205, %v10122
    %10252 = vst.msk [vmem:[#allocation2 + $0xb8] sm:$0xf] %vm10205, %v10123
    %10253 = vst.msk [vmem:[#allocation2 + $0xbc] sm:$0xf] %vm10205, %v10124
    %10254 = vst.msk [vmem:[#allocation2 + $0xc0] sm:$0xf] %vm10205, %v10125
    %10255 = vst.msk [vmem:[#allocation2 + $0xc4] sm:$0xf] %vm10205, %v10126
    %10256 = vst.msk [vmem:[#allocation2 + $0xc8] sm:$0xf] %vm10205, %v10127
    %10257 = vst.msk [vmem:[#allocation2 + $0xcc] sm:$0xf] %vm10205, %v10128
    %10258 = vst.msk [vmem:[#allocation2 + $0xd0] sm:$0xf] %vm10205, %v10129
    %10259 = vst.msk [vmem:[#allocation2 + $0xd4] sm:$0xf] %vm10205, %v10130
    %10260 = vst.msk [vmem:[#allocation2 + $0xd8] sm:$0xf] %vm10205, %v10131
    %10261 = vst.msk [vmem:[#allocation2 + $0xdc] sm:$0xf] %vm10205, %v10132
    %10262 = vst.msk [vmem:[#allocation2 + $0xe0] sm:$0xf] %vm10205, %v10133
    %10263 = vst.msk [vmem:[#allocation2 + $0xe4] sm:$0xf] %vm10205, %v10134
    %10264 = vst.msk [vmem:[#allocation2 + $0xe8] sm:$0xf] %vm10205, %v10135
    %10265 = vst.msk [vmem:[#allocation2 + $0xec] sm:$0xf] %vm10205, %v10136
    %10266 = vst.msk [vmem:[#allocation2 + $0xf0] sm:$0xf] %vm10205, %v10137
    %10267 = vst.msk [vmem:[#allocation2 + $0xf4] sm:$0xf] %vm10205, %v10138
    %10268 = vst.msk [vmem:[#allocation2 + $0xf8] sm:$0xf] %vm10205, %v10139
    %10269 = vst.msk [vmem:[#allocation2 + $0xfc] sm:$0xf] %vm10205, %v10140
    // Predicated region
    $region38: #{inception_forward.1} parent=1 // pred_check
      _
    $region39: #{inception_forward.1} parent=1 // pred_check_branch
      %10271 = sbr.rel (0) target = $region41
    $region40: #{inception_forward.1} parent=1 // pred_region
      %s10273 = ssub.s32 4096, 4096
      %10274 = vsyncadd [#allocation3], %s10273
      %s10275 = sshll.u32 [#allocation2], 4
      %s10276 = int_to_ptr.vmem [resolvable:$true] %s10275
      %10281 = dma.vmem_to_hbm [thread:$0]  %s10276, 4096, %s9, [#allocation3], 64, 64, 4
    $region41: #{inception_forward.1} parent=1 // pred_fallthru
      _
    // Predicated region
    $region42: #{inception_forward.1} parent=1 // pred_check
      _
    $region43: #{inception_forward.1} parent=1 // pred_check_branch
      %10283 = sbr.rel (0) target = $region45
    $region44: #{inception_forward.1} parent=1 // pred_region
      %10284 = dma.done [#allocation3], 4096
    $region45: #{inception_forward.1} parent=1 // pred_fallthru
      _
    %10285 = vsyncpa [#allocation3], 1

</llo_original>
